<compile_context>
chip_gen: v6e
topology: v6e:2x2x1
jax: 0.10.0
libtpu: 0.0.40
codegen_flags: <defaults>
</compile_context>

<pallas_src>
import jax
import jax.numpy as jnp
from jax.experimental import pallas as pl
from jax.experimental.pallas import tpu as pltpu

MXU_DTYPE = jnp.bfloat16        # matmul operand dtype; accumulation stays f32
_HALO = 16                      # conv halo block height (bf16 sublane tile)


def _round_up(x, m):
    return ((x + m - 1) // m) * m


def _ceil_div(a, b):
    return -(-a // b)


def _vmem_limit_bytes():
    """Generation-aware scoped-VMEM budget: ~half of physical VMEM
    (128 MiB on v5e/v6e -> 64 MiB, 64 MiB per TC on v7x -> 32 MiB)."""
    cap = 64 * 1024 * 1024
    try:
        cap = int(getattr(pltpu.get_tpu_info(), "vmem_capacity_bytes", cap))
    except Exception:
        pass
    return max(32 * 1024 * 1024, min(cap // 2, 96 * 1024 * 1024))


# ---------------------------------------------------------------------------
# Pallas kernel 1: fused 1x1 projection  (k_p | v_p | q_p) -> one matmul.
#   (Cout, Cin) @ (Cin, tn) per (batch, lane-tile) grid step; weights and bias
#   stay resident; bf16 MXU operands, f32 accumulation, bf16 output.
# ---------------------------------------------------------------------------
def _proj_kernel(x_ref, w_ref, b_ref, o_ref):
    xb = x_ref[0].astype(MXU_DTYPE)                     # (Cin, tn)
    wb = w_ref[...].astype(MXU_DTYPE)                   # (Cout, Cin)
    y = jnp.dot(wb, xb, preferred_element_type=jnp.float32)
    y = y + b_ref[...]                                  # (Cout, 1) broadcast
    o_ref[0] = y.astype(o_ref.dtype)


def project_1x1(x, w, b, out_dtype, vmem_limit):
    """x: (B, Cin, HW), w: (Cout, Cin), b: (Cout, 1) -> (B, Cout, HW)."""
    B, Cin, HW = x.shape
    Cout = w.shape[0]
    in_b = jnp.dtype(x.dtype).itemsize
    out_b = jnp.dtype(out_dtype).itemsize
    c8 = _round_up(Cin, 8)
    o8 = _round_up(Cout, 8)
    # bytes per lane-column: double-buffered in/out blocks + bf16 copies + f32 acc
    per_col = 2 * c8 * in_b + 2 * o8 * out_b + 2 * (c8 + o8) + 4 * o8
    budget = vmem_limit // 2 - (Cout * Cin + Cout) * 8   # resident weights/bias
    tn = max(128, min((budget // per_col) // 128 * 128, 8192))
    if B == 1 and HW > 128:                              # >=2 steps for v7x's 2 TCs
        tn = min(tn, max(128, _round_up(_ceil_div(HW, 2), 128)))
    tn = min(tn, _round_up(HW, 128))
    HWp = _round_up(HW, tn)
    if HWp != HW:
        x = jnp.pad(x, ((0, 0), (0, 0), (0, HWp - HW)))
    out = pl.pallas_call(
        _proj_kernel,
        out_shape=jax.ShapeDtypeStruct((B, Cout, HWp), out_dtype),
        grid_spec=pltpu.PrefetchScalarGridSpec(
            num_scalar_prefetch=0,
            grid=(B, HWp // tn),
            in_specs=[
                pl.BlockSpec((1, Cin, tn), lambda i, j: (i, 0, j)),
                pl.BlockSpec((Cout, Cin), lambda i, j: (0, 0)),
                pl.BlockSpec((Cout, 1), lambda i, j: (0, 0)),
            ],
            out_specs=pl.BlockSpec((1, Cout, tn), lambda i, j: (i, 0, j)),
        ),
        compiler_params=pltpu.CompilerParams(
            dimension_semantics=("parallel", "parallel"),
            vmem_limit_bytes=vmem_limit),
    )(x, w, b)
    return out[:, :, :HW]


# ---------------------------------------------------------------------------
# Pallas kernel 2: 3x3 conv (padding=1) + bias + ReLU, NO HBM im2col.
#   Grid = (batch, row-tiles).  Each step gets a (C, th, W+2) main block plus a
#   halo block of the same padded array; the im2col is built in VMEM (bf16) and
#   fed to one (O, 9C) @ (9C, th*W) MXU matmul with f32 accumulation.  Output
#   blocks are lane-dense (1, O, th*W) whenever th*W % 128 == 0.
# ---------------------------------------------------------------------------
def _conv3_kernel(O, C, th, W, relu, flat_out):
    def kernel(xm_ref, xh_ref, w_ref, b_ref, o_ref):
        xm = xm_ref[0].astype(MXU_DTYPE)                   # (C, th, W+2) bf16
        xh = xh_ref[0][:, :2, :].astype(MXU_DTYPE)         # (C, 2,  W+2) halo rows
        xw = jnp.concatenate([xm, xh], axis=1)             # (C, th+2, W+2) bf16
        cols = []
        for di in range(3):
            for dj in range(3):
                cols.append(xw[:, di:di + th, dj:dj + W])
        # NOTE: when W % 128 == 0 this flatten is layout-preserving; for small W
        # it is an in-VMEM relayout (lane-padding W to 128 would cost ~128/W x
        # memory+compute at small widths, so we accept the relayout there).
        xcol = jnp.concatenate(cols, axis=0).reshape(9 * C, th * W)
        y = jnp.dot(w_ref[...].astype(MXU_DTYPE), xcol,
                    preferred_element_type=jnp.float32)    # (O, th*W)
        y = y + b_ref[...]
        if relu:
            y = jnp.maximum(y, 0.0)
        if flat_out:
            o_ref[0] = y.astype(o_ref.dtype)               # lane-dense store
        else:
            o_ref[0] = y.reshape(O, th, W).astype(o_ref.dtype)
    return kernel


def _pick_row_tile(C, O, H, W, B, in_bytes, out_bytes, vmem_limit):
    Wp = W + 2
    Lp = _round_up(Wp, 128)          # lane padding of the (.., Wp) window blocks
    c8 = _round_up(C, 8)
    # per-output-row VMEM bytes, counting in-kernel transients (review item):
    per_row = (2 * c8 * Lp * in_bytes      # main input block, double-buffered
               + 2 * c8 * Lp * 2           # bf16 window copy
               + 2 * 2 * 9 * C * W         # shifted slices + flat im2col (bf16)
               + 2 * O * W * out_bytes     # output block, double-buffered
               + 2 * 4 * O * W)            # f32 matmul result / relu temp
    budget = vmem_limit // 2 - (9 * C * O * 6 + O * 8)     # resident weights
    th = (budget // max(per_row, 1)) // _HALO * _HALO
    th = max(_HALO, min(th, _round_up(H, _HALO)))
    if B == 1 and H > _HALO:                               # >=2 row tiles for v7x
        th = min(th, max(_HALO, _round_up(_ceil_div(H, 2), _HALO)))
    return th


def conv3x3(x, w, b, relu, out_dtype, vmem_limit):
    """3x3 conv, padding=1, NCHW.  x:(B,C,H,W), w:(O,C,3,3), b:(O,1)."""
    B, C, H, W = x.shape
    O = w.shape[0]
    Wp = W + 2
    th = _pick_row_tile(C, O, H, W, B, jnp.dtype(x.dtype).itemsize,
                        jnp.dtype(out_dtype).itemsize, vmem_limit)
    assert th % _HALO == 0   # halo index_map below relies on this
    nrt = _ceil_div(H, th)
    H_main = nrt * th
    bot = H_main + (_HALO - 1) - H
    xp = jnp.pad(x, ((0, 0), (0, 0), (1, bot), (1, 1)))    # (B,C,H_main+_HALO,Wp)
    w_col = jnp.transpose(w, (0, 2, 3, 1)).reshape(O, 9 * C)

    flat_out = (th * W) % 128 == 0          # lane-dense output whenever possible
    if flat_out:
        out_shape = jax.ShapeDtypeStruct((B, O, H_main * W), out_dtype)
        out_spec = pl.BlockSpec((1, O, th * W), lambda bb, r: (bb, 0, r))
    else:
        out_shape = jax.ShapeDtypeStruct((B, O, H_main, W), out_dtype)
        out_spec = pl.BlockSpec((1, O, th, W), lambda bb, r: (bb, 0, r, 0))

    out = pl.pallas_call(
        _conv3_kernel(O, C, th, W, relu, flat_out),
        out_shape=out_shape,
        grid_spec=pltpu.PrefetchScalarGridSpec(
            num_scalar_prefetch=0,
            grid=(B, nrt),
            in_specs=[
                # main row tile
                pl.BlockSpec((1, C, th, Wp), lambda bb, r: (bb, 0, r, 0)),
                # halo block starting at padded row (r+1)*th of the same array
                pl.BlockSpec((1, C, _HALO, Wp),
                             lambda bb, r: (bb, 0, (r + 1) * (th // _HALO), 0)),
                pl.BlockSpec((O, 9 * C), lambda bb, r: (0, 0)),
                pl.BlockSpec((O, 1), lambda bb, r: (0, 0)),
            ],
            out_specs=out_spec,
        ),
        compiler_params=pltpu.CompilerParams(
            dimension_semantics=("parallel", "parallel"),
            vmem_limit_bytes=vmem_limit),
    )(xp, xp, w_col, b)
    if flat_out:
        out = out.reshape(B, O, H_main, W)
    return out[:, :, :H, :]


# ---------------------------------------------------------------------------
# Pallas kernel 3: pixel-attention core, channel-first / lane-dense.
#   k, v : (P, D, tn) bf16   q : (D, tn) bf16   m : (P, tn) bf16  out : (D, tn)
#   Per-tap D-contractions use lazy bf16->f32 casts; the whole softmax chain
#   runs once on a packed (P, tn) block; normalisation via pl.reciprocal (EUP).
# ---------------------------------------------------------------------------
def _attn_kernel_factory(P, D):
    def kernel(k_ref, v_ref, q_ref, m_ref, o_ref):
        q = q_ref[...].astype(jnp.float32)                 # (D, tn)
        # lazy per-tap casts: only one (D, tn) f32 tap live at a time
        rows = []
        for p in range(P):
            kp = k_ref[p].astype(jnp.float32)              # (D, tn)
            rows.append(jnp.sum(kp * q, axis=0, keepdims=True))   # (1, tn)
        logits = jnp.concatenate(rows, axis=0)             # (P, tn) packed
        logits = logits * m_ref[...].astype(jnp.float32) * 0.125
        mx = jnp.max(logits, axis=0, keepdims=True)        # (1, tn)
        es = jnp.exp(logits - mx)                          # (P, tn) one EUP pass
        denom = jnp.sum(es, axis=0, keepdims=True)         # (1, tn)
        wgt = es * pl.reciprocal(denom, approx=True)       # normalise once
        acc = wgt[0:1, :] * v_ref[0].astype(jnp.float32)   # (D, tn)
        for p in range(1, P):
            acc = acc + wgt[p:p + 1, :] * v_ref[p].astype(jnp.float32)
        o_ref[...] = acc.astype(o_ref.dtype)
    return kernel


def _attn_tile(N, P, D, vmem_limit):
    d16 = _round_up(D, 16)
    p16 = _round_up(P, 16)
    d8 = _round_up(D, 8)
    p8 = _round_up(P, 8)
    # bytes per pixel column (tn must scale with D): double-buffered bf16 blocks
    # (sublane padding included) + in-kernel f32 transients.
    per_col = (8 * P * d16                 # k + v bf16 blocks, double-buffered
               + 4 * d16 + 4 * d16         # q / out bf16 blocks, double-buffered
               + 4 * p16                   # mask bf16 block, double-buffered
               + 4 * (3 * d8 + 4 * p8))    # f32 transients (q, tap, acc, softmax)
    budget = vmem_limit // 2
    tn = max(128, min((budget // per_col) // 128 * 128, 32768))
    if tn >= N and N > 128:                # >=2 grid steps for v7x's 2 TCs
        tn = max(128, _round_up(_ceil_div(N, 2), 128))
    tn = min(tn, _round_up(N, 128))
    return tn


def pixel_attention_core(kT, vT, qT, mT, P, D, vmem_limit):
    """kT/vT: (P, D, N) bf16, qT: (D, N) bf16, mT: (P, N) bf16 -> (D, N) bf16."""
    N = qT.shape[-1]
    tn = _attn_tile(N, P, D, vmem_limit)
    Npad = _round_up(N, tn)
    if Npad != N:
        pn = Npad - N
        kT = jnp.pad(kT, ((0, 0), (0, 0), (0, pn)))
        vT = jnp.pad(vT, ((0, 0), (0, 0), (0, pn)))
        qT = jnp.pad(qT, ((0, 0), (0, pn)))
        mT = jnp.pad(mT, ((0, 0), (0, pn)))
    out = pl.pallas_call(
        _attn_kernel_factory(P, D),
        out_shape=jax.ShapeDtypeStruct((D, Npad), jnp.bfloat16),
        grid_spec=pltpu.PrefetchScalarGridSpec(
            num_scalar_prefetch=0,
            grid=(Npad // tn,),
            in_specs=[
                pl.BlockSpec((P, D, tn), lambda i: (0, 0, i)),
                pl.BlockSpec((P, D, tn), lambda i: (0, 0, i)),
                pl.BlockSpec((D, tn), lambda i: (0, i)),
                pl.BlockSpec((P, tn), lambda i: (0, i)),
            ],
            out_specs=pl.BlockSpec((D, tn), lambda i: (0, i)),
        ),
        compiler_params=pltpu.CompilerParams(
            dimension_semantics=("parallel",),
            vmem_limit_bytes=vmem_limit),
    )(kT, vT, qT, mT)
    return out[:, :N]


# ---------------------------------------------------------------------------
# Full forward pass (glue in plain JAX, hot paths in Pallas).
# ---------------------------------------------------------------------------
def pixel_attention_forward(x, params, kernel_range=(3, 3), shift=1):
    B, D, H, W = x.shape
    h_half, w_half = kernel_range[0] // 2, kernel_range[1] // 2
    P = kernel_range[0] * kernel_range[1]
    HW = H * W
    N = B * H * W
    vmem_limit = _vmem_limit_bytes()

    # fused k/v/q 1x1 projections: x is read once, one MXU matmul, bf16 out.
    w_qkv = jnp.concatenate(
        [params["k_p_w"], params["v_p_w"], params["q_p_w"]], axis=0)
    b_qkv = jnp.concatenate(
        [params["k_p_b"], params["v_p_b"], params["q_p_b"]], axis=0)
    proj = project_1x1(x.reshape(B, D, HW), w_qkv, b_qkv,
                       out_dtype=jnp.bfloat16, vmem_limit=vmem_limit)
    x_k = proj[:, :P * D, :].reshape(B, P * D, H, W)
    x_v = proj[:, P * D:2 * P * D, :].reshape(B, P * D, H, W)
    x_q = proj[:, 2 * P * D:, :]                             # (B, D, HW) bf16

    # neighbour-shift gather + scramble (XLA glue, bf16).
    # TODO(synk): fuse this shift-gather + scramble-transpose into the attention
    # kernel (per-tap halo'd reads from x_k/x_v with memory_space=pl.ANY) so the
    # (P*D, N) stacks never round-trip HBM; this is the remaining glue traffic.
    ph, pw = h_half * shift, w_half * shift
    pad_cfg = ((0, 0), (0, 0), (ph, ph), (pw, pw))
    x_k_pad = jnp.pad(x_k, pad_cfg)
    x_v_pad = jnp.pad(x_v, pad_cfg)

    k_ls, v_ls = [], []
    layer = 0
    for i in range(-h_half, h_half + 1):
        for j in range(-w_half, w_half + 1):
            r0 = ph + i * shift
            c0 = pw + j * shift
            k_ls.append(x_k_pad[:, layer * D:(layer + 1) * D, r0:r0 + H, c0:c0 + W])
            v_ls.append(x_v_pad[:, layer * D:(layer + 1) * D, r0:r0 + H, c0:c0 + W])
            layer += 1

    # Raw row-major reinterpretation of the (B,P,D,H,W) stack into (N, P*D):
    # reproduces the PyTorch `.view()` (no permute) bit-exactly.  The transpose
    # below is wrapper-side layout plumbing for lane-dense (..., N) kernel tiles.
    k_scr = jnp.stack(k_ls, axis=1).reshape(N, P * D)            # bf16
    v_scr = jnp.stack(v_ls, axis=1).reshape(N, P * D)            # bf16
    kT = jnp.transpose(k_scr).reshape(P, D, N)
    vT = jnp.transpose(v_scr).reshape(P, D, N)
    qT = jnp.transpose(x_q.reshape(N, D))                        # (D, N) bf16

    # scrambled attention mask, built analytically (no pad/slice/stack/transpose
    # HBM passes): the mask value depends only on the in-batch scrambled index,
    # so a tiny (P, HW) bf16 table tiled across the batch is exact.
    yy = jnp.arange(H)[:, None]
    xx = jnp.arange(W)[None, :]
    taps = []
    for i in range(-h_half, h_half + 1):
        for j in range(-w_half, w_half + 1):
            ok = ((yy + i * shift >= 0) & (yy + i * shift < H) &
                  (xx + j * shift >= 0) & (xx + j * shift < W))
            taps.append(ok)
    m_one = jnp.stack(taps, axis=0).astype(jnp.bfloat16)         # (P, H, W)
    M9 = jnp.transpose(m_one.reshape(P * HW).reshape(HW, P))     # (P, HW) scrambled
    mT = jnp.tile(M9, (1, B))                                    # (P, N) bf16

    out_T = pixel_attention_core(kT, vT, qT, mT, P, D, vmem_limit)   # (D, N) bf16
    t = jnp.transpose(out_T).reshape(B, D, H, W)                 # torch raw view

    # use_res=False, use_bn=False (module defaults): t = _res, no bn/residual.
    t = conv3x3(t, params["ff1_w"], params["ff1_b"], relu=True,
                out_dtype=jnp.bfloat16, vmem_limit=vmem_limit)
    t = conv3x3(t, params["ff2_w"], params["ff2_b"], relu=True,
                out_dtype=jnp.bfloat16, vmem_limit=vmem_limit)
    t = conv3x3(t, params["ff3_w"], params["ff3_b"], relu=True,
                out_dtype=jnp.float32, vmem_limit=vmem_limit)
    return t


# ---------------------------------------------------------------------------
# Deterministic parameter initialization (shapes from PixelAttention.__init__).
# ---------------------------------------------------------------------------
def init_params(key, D):
    n_p = 9
    ks = jax.random.split(key, 12)

    def w(k, shape, fan_in):
        return jax.random.normal(k, shape, jnp.float32) / jnp.sqrt(float(fan_in))

    return {
        "k_p_w": w(ks[0], (D * n_p, D), D), "k_p_b": w(ks[1], (D * n_p, 1), D),
        "v_p_w": w(ks[2], (D * n_p, D), D), "v_p_b": w(ks[3], (D * n_p, 1), D),
        "q_p_w": w(ks[4], (D, D), D),        "q_p_b": w(ks[5], (D, 1), D),
        "ff1_w": w(ks[6], (D, D, 3, 3), D * 9),          "ff1_b": w(ks[7], (D, 1), D * 9),
        "ff2_w": w(ks[8], (2 * D, D, 3, 3), D * 9),      "ff2_b": w(ks[9], (2 * D, 1), D * 9),
        "ff3_w": w(ks[10], (D, 2 * D, 3, 3), 2 * D * 9), "ff3_b": w(ks[11], (D, 1), 2 * D * 9),
    }


if __name__ == "__main__":
    key = jax.random.PRNGKey(0)
    k_x, k_p = jax.random.split(key)

    B, D, H, W = 2, 4, 16, 16
    x = jax.random.normal(k_x, (B, D, H, W), jnp.float32)
    params = init_params(k_p, D)

    fwd = jax.jit(pixel_attention_forward)
    out = fwd(x, params)
    out = jax.block_until_ready(out)

    assert out.shape == (B, D, H, W), out.shape
    assert out.dtype == jnp.float32
    assert bool(jnp.all(jnp.isfinite(out)))
    print("KERNEL_OK")
</pallas_src>

<mosaic_0001>
module attributes {stable_mosaic.version = 11 : i64} {
  func.func @_proj_kernel(%arg0: i32, %arg1: i32, %arg2: memref<1x4x256xf32, #tpu.memory_space<vmem>>, %arg3: memref<76x4xf32, #tpu.memory_space<vmem>>, %arg4: memref<76x1xf32, #tpu.memory_space<vmem>>, %arg5: memref<1x76x256xbf16, #tpu.memory_space<vmem>>) attributes {dimension_semantics = [#tpu.dimension_semantics<parallel>, #tpu.dimension_semantics<parallel>], iteration_bounds = array<i64: 2, 1>, scalar_prefetch = 0 : i64, scratch_operands = 0 : i64, tpu.core_type = #tpu.core_type<tc>, window_params = [{transform_indices = @transform_0, window_bounds = array<i64: 1, 4, 256>}, {pipeline_mode = #tpu.pipeline_mode<synchronous>, transform_indices = @transform_1, window_bounds = array<i64: 76, 4>}, {pipeline_mode = #tpu.pipeline_mode<synchronous>, transform_indices = @transform_2, window_bounds = array<i64: 76, 1>}, {transform_indices = @transform_3, window_bounds = array<i64: 1, 76, 256>}]} {
    %c0 = arith.constant 0 : index
    %c0_0 = arith.constant 0 : index
    %c0_1 = arith.constant 0 : index
    %0 = vector.load %arg2[%c0, %c0_0, %c0_1] : memref<1x4x256xf32, #tpu.memory_space<vmem>>, vector<1x4x256xf32>
    %1 = vector.shape_cast %0 : vector<1x4x256xf32> to vector<4x256xf32>
    %2 = arith.truncf %1 : vector<4x256xf32> to vector<4x256xbf16>
    %c0_2 = arith.constant 0 : index
    %c0_3 = arith.constant 0 : index
    %3 = vector.load %arg3[%c0_2, %c0_3] : memref<76x4xf32, #tpu.memory_space<vmem>>, vector<76x4xf32>
    %4 = arith.truncf %3 : vector<76x4xf32> to vector<76x4xbf16>
    %cst = arith.constant dense<0.000000e+00> : vector<76x256xf32>
    %5 = tpu.matmul %4, %2, %cst {dimension_numbers = #tpu.dot_dimension_numbers<[1], [0], [0], [1], [0, 0, 1, 1], [], []>} : vector<76x4xbf16>, vector<4x256xbf16>, vector<76x256xf32> -> vector<76x256xf32>
    %c0_4 = arith.constant 0 : index
    %c0_5 = arith.constant 0 : index
    %6 = vector.load %arg4[%c0_4, %c0_5] : memref<76x1xf32, #tpu.memory_space<vmem>>, vector<76x1xf32>
    %7 = vector.broadcast %6 : vector<76x1xf32> to vector<76x256xf32>
    %8 = arith.addf %5, %7 : vector<76x256xf32>
    %9 = arith.truncf %8 : vector<76x256xf32> to vector<76x256xbf16>
    %c0_6 = arith.constant 0 : index
    %c0_7 = arith.constant 0 : index
    %c0_8 = arith.constant 0 : index
    %10 = vector.load %arg5[%c0_6, %c0_7, %c0_8] : memref<1x76x256xbf16, #tpu.memory_space<vmem>>, vector<1x76x256xbf16>
    %11 = vector.shape_cast %10 : vector<1x76x256xbf16> to vector<76x256xbf16>
    %12 = vector.shape_cast %9 : vector<76x256xbf16> to vector<1x76x256xbf16>
    tpu.vector_store %arg5[%c0_6, %c0_7, %c0_8], %12 {strides = array<i32>} : memref<1x76x256xbf16, #tpu.memory_space<vmem>>, vector<1x76x256xbf16>,
    return
  }
  func.func @transform_0(%arg0: i32, %arg1: i32) -> (i32, i32, i32) {
    %c0_i32 = arith.constant 0 : i32
    %c0_i32_0 = arith.constant 0 : i32
    return %arg0, %c0_i32, %arg1 : i32, i32, i32
  }
  func.func @transform_1(%arg0: i32, %arg1: i32) -> (i32, i32) {
    %c0_i32 = arith.constant 0 : i32
    %c0_i32_0 = arith.constant 0 : i32
    %c0_i32_1 = arith.constant 0 : i32
    return %c0_i32, %c0_i32_0 : i32, i32
  }
  func.func @transform_2(%arg0: i32, %arg1: i32) -> (i32, i32) {
    %c0_i32 = arith.constant 0 : i32
    %c0_i32_0 = arith.constant 0 : i32
    %c0_i32_1 = arith.constant 0 : i32
    return %c0_i32, %c0_i32_0 : i32, i32
  }
  func.func @transform_3(%arg0: i32, %arg1: i32) -> (i32, i32, i32) {
    %c0_i32 = arith.constant 0 : i32
    %c0_i32_0 = arith.constant 0 : i32
    return %arg0, %c0_i32, %arg1 : i32, i32, i32
  }
}

module attributes {stable_mosaic.version = 11 : i64} {
  func.func @kernel(%arg0: i32, %arg1: memref<9x4x256xbf16, #tpu.memory_space<vmem>>, %arg2: memref<9x4x256xbf16, #tpu.memory_space<vmem>>, %arg3: memref<4x256xbf16, #tpu.memory_space<vmem>>, %arg4: memref<9x256xbf16, #tpu.memory_space<vmem>>, %arg5: memref<4x256xbf16, #tpu.memory_space<vmem>>) attributes {dimension_semantics = [#tpu.dimension_semantics<parallel>], iteration_bounds = array<i64: 2>, scalar_prefetch = 0 : i64, scratch_operands = 0 : i64, tpu.core_type = #tpu.core_type<tc>, window_params = [{transform_indices = @transform_0, window_bounds = array<i64: 9, 4, 256>}, {transform_indices = @transform_1, window_bounds = array<i64: 9, 4, 256>}, {transform_indices = @transform_2, window_bounds = array<i64: 4, 256>}, {transform_indices = @transform_3, window_bounds = array<i64: 9, 256>}, {transform_indices = @transform_4, window_bounds = array<i64: 4, 256>}]} {
    %c0 = arith.constant 0 : index
    %c0_0 = arith.constant 0 : index
    %0 = vector.load %arg3[%c0, %c0_0] : memref<4x256xbf16, #tpu.memory_space<vmem>>, vector<4x256xbf16>
    %1 = arith.extf %0 : vector<4x256xbf16> to vector<4x256xf32>
    %c0_1 = arith.constant 0 : index
    %c0_2 = arith.constant 0 : index
    %c0_3 = arith.constant 0 : index
    %2 = vector.load %arg1[%c0_1, %c0_2, %c0_3] : memref<9x4x256xbf16, #tpu.memory_space<vmem>>, vector<1x4x256xbf16>
    %3 = vector.shape_cast %2 : vector<1x4x256xbf16> to vector<4x256xbf16>
    %4 = arith.extf %3 : vector<4x256xbf16> to vector<4x256xf32>
    %5 = arith.mulf %4, %1 : vector<4x256xf32>
    %cst = arith.constant dense<0.000000e+00> : vector<256xf32>
    %6 = vector.multi_reduction <add>, %5, %cst [0] : vector<4x256xf32> to vector<256xf32>
    %7 = vector.shape_cast %6 : vector<256xf32> to vector<1x256xf32>
    %c1 = arith.constant 1 : index
    %c0_4 = arith.constant 0 : index
    %c0_5 = arith.constant 0 : index
    %8 = vector.load %arg1[%c1, %c0_4, %c0_5] : memref<9x4x256xbf16, #tpu.memory_space<vmem>>, vector<1x4x256xbf16>
    %9 = vector.shape_cast %8 : vector<1x4x256xbf16> to vector<4x256xbf16>
    %10 = arith.extf %9 : vector<4x256xbf16> to vector<4x256xf32>
    %11 = arith.mulf %10, %1 : vector<4x256xf32>
    %cst_6 = arith.constant dense<0.000000e+00> : vector<256xf32>
    %12 = vector.multi_reduction <add>, %11, %cst_6 [0] : vector<4x256xf32> to vector<256xf32>
    %13 = vector.shape_cast %12 : vector<256xf32> to vector<1x256xf32>
    %c2 = arith.constant 2 : index
    %c0_7 = arith.constant 0 : index
    %c0_8 = arith.constant 0 : index
    %14 = vector.load %arg1[%c2, %c0_7, %c0_8] : memref<9x4x256xbf16, #tpu.memory_space<vmem>>, vector<1x4x256xbf16>
    %15 = vector.shape_cast %14 : vector<1x4x256xbf16> to vector<4x256xbf16>
    %16 = arith.extf %15 : vector<4x256xbf16> to vector<4x256xf32>
    %17 = arith.mulf %16, %1 : vector<4x256xf32>
    %cst_9 = arith.constant dense<0.000000e+00> : vector<256xf32>
    %18 = vector.multi_reduction <add>, %17, %cst_9 [0] : vector<4x256xf32> to vector<256xf32>
    %19 = vector.shape_cast %18 : vector<256xf32> to vector<1x256xf32>
    %c3 = arith.constant 3 : index
    %c0_10 = arith.constant 0 : index
    %c0_11 = arith.constant 0 : index
    %20 = vector.load %arg1[%c3, %c0_10, %c0_11] : memref<9x4x256xbf16, #tpu.memory_space<vmem>>, vector<1x4x256xbf16>
    %21 = vector.shape_cast %20 : vector<1x4x256xbf16> to vector<4x256xbf16>
    %22 = arith.extf %21 : vector<4x256xbf16> to vector<4x256xf32>
    %23 = arith.mulf %22, %1 : vector<4x256xf32>
    %cst_12 = arith.constant dense<0.000000e+00> : vector<256xf32>
    %24 = vector.multi_reduction <add>, %23, %cst_12 [0] : vector<4x256xf32> to vector<256xf32>
    %25 = vector.shape_cast %24 : vector<256xf32> to vector<1x256xf32>
    %c4 = arith.constant 4 : index
    %c0_13 = arith.constant 0 : index
    %c0_14 = arith.constant 0 : index
    %26 = vector.load %arg1[%c4, %c0_13, %c0_14] : memref<9x4x256xbf16, #tpu.memory_space<vmem>>, vector<1x4x256xbf16>
    %27 = vector.shape_cast %26 : vector<1x4x256xbf16> to vector<4x256xbf16>
    %28 = arith.extf %27 : vector<4x256xbf16> to vector<4x256xf32>
    %29 = arith.mulf %28, %1 : vector<4x256xf32>
    %cst_15 = arith.constant dense<0.000000e+00> : vector<256xf32>
    %30 = vector.multi_reduction <add>, %29, %cst_15 [0] : vector<4x256xf32> to vector<256xf32>
    %31 = vector.shape_cast %30 : vector<256xf32> to vector<1x256xf32>
    %c5 = arith.constant 5 : index
    %c0_16 = arith.constant 0 : index
    %c0_17 = arith.constant 0 : index
    %32 = vector.load %arg1[%c5, %c0_16, %c0_17] : memref<9x4x256xbf16, #tpu.memory_space<vmem>>, vector<1x4x256xbf16>
    %33 = vector.shape_cast %32 : vector<1x4x256xbf16> to vector<4x256xbf16>
    %34 = arith.extf %33 : vector<4x256xbf16> to vector<4x256xf32>
    %35 = arith.mulf %34, %1 : vector<4x256xf32>
    %cst_18 = arith.constant dense<0.000000e+00> : vector<256xf32>
    %36 = vector.multi_reduction <add>, %35, %cst_18 [0] : vector<4x256xf32> to vector<256xf32>
    %37 = vector.shape_cast %36 : vector<256xf32> to vector<1x256xf32>
    %c6 = arith.constant 6 : index
    %c0_19 = arith.constant 0 : index
    %c0_20 = arith.constant 0 : index
    %38 = vector.load %arg1[%c6, %c0_19, %c0_20] : memref<9x4x256xbf16, #tpu.memory_space<vmem>>, vector<1x4x256xbf16>
    %39 = vector.shape_cast %38 : vector<1x4x256xbf16> to vector<4x256xbf16>
    %40 = arith.extf %39 : vector<4x256xbf16> to vector<4x256xf32>
    %41 = arith.mulf %40, %1 : vector<4x256xf32>
    %cst_21 = arith.constant dense<0.000000e+00> : vector<256xf32>
    %42 = vector.multi_reduction <add>, %41, %cst_21 [0] : vector<4x256xf32> to vector<256xf32>
    %43 = vector.shape_cast %42 : vector<256xf32> to vector<1x256xf32>
    %c7 = arith.constant 7 : index
    %c0_22 = arith.constant 0 : index
    %c0_23 = arith.constant 0 : index
    %44 = vector.load %arg1[%c7, %c0_22, %c0_23] : memref<9x4x256xbf16, #tpu.memory_space<vmem>>, vector<1x4x256xbf16>
    %45 = vector.shape_cast %44 : vector<1x4x256xbf16> to vector<4x256xbf16>
    %46 = arith.extf %45 : vector<4x256xbf16> to vector<4x256xf32>
    %47 = arith.mulf %46, %1 : vector<4x256xf32>
    %cst_24 = arith.constant dense<0.000000e+00> : vector<256xf32>
    %48 = vector.multi_reduction <add>, %47, %cst_24 [0] : vector<4x256xf32> to vector<256xf32>
    %49 = vector.shape_cast %48 : vector<256xf32> to vector<1x256xf32>
    %c8 = arith.constant 8 : index
    %c0_25 = arith.constant 0 : index
    %c0_26 = arith.constant 0 : index
    %50 = vector.load %arg1[%c8, %c0_25, %c0_26] : memref<9x4x256xbf16, #tpu.memory_space<vmem>>, vector<1x4x256xbf16>
    %51 = vector.shape_cast %50 : vector<1x4x256xbf16> to vector<4x256xbf16>
    %52 = arith.extf %51 : vector<4x256xbf16> to vector<4x256xf32>
    %53 = arith.mulf %52, %1 : vector<4x256xf32>
    %cst_27 = arith.constant dense<0.000000e+00> : vector<256xf32>
    %54 = vector.multi_reduction <add>, %53, %cst_27 [0] : vector<4x256xf32> to vector<256xf32>
    %55 = vector.shape_cast %54 : vector<256xf32> to vector<1x256xf32>
    %56 = tpu.concatenate %7, %13, %19, %25, %31, %37, %43, %49, %55 in 0 : vector<1x256xf32>, vector<1x256xf32>, vector<1x256xf32>, vector<1x256xf32>, vector<1x256xf32>, vector<1x256xf32>, vector<1x256xf32>, vector<1x256xf32>, vector<1x256xf32> -> vector<9x256xf32>
    %c0_28 = arith.constant 0 : index
    %c0_29 = arith.constant 0 : index
    %57 = vector.load %arg4[%c0_28, %c0_29] : memref<9x256xbf16, #tpu.memory_space<vmem>>, vector<9x256xbf16>
    %58 = arith.extf %57 : vector<9x256xbf16> to vector<9x256xf32>
    %59 = arith.mulf %56, %58 : vector<9x256xf32>
    %cst_30 = arith.constant 1.250000e-01 : f32
    %60 = vector.broadcast %cst_30 : f32 to vector<9x256xf32>
    %61 = arith.mulf %59, %60 : vector<9x256xf32>
    %cst_31 = arith.constant dense<0xFF800000> : vector<256xf32>
    %62 = vector.multi_reduction <maximumf>, %61, %cst_31 [0] : vector<9x256xf32> to vector<256xf32>
    %63 = vector.shape_cast %62 : vector<256xf32> to vector<1x256xf32>
    %64 = vector.broadcast %63 : vector<1x256xf32> to vector<9x256xf32>
    %65 = arith.subf %61, %64 : vector<9x256xf32>
    %66 = math.exp %65 : vector<9x256xf32>
    %cst_32 = arith.constant dense<0.000000e+00> : vector<256xf32>
    %67 = vector.multi_reduction <add>, %66, %cst_32 [0] : vector<9x256xf32> to vector<256xf32>
    %68 = vector.shape_cast %67 : vector<256xf32> to vector<1x256xf32>
    %69 = tpu.reciprocal %68 {approx = true} : vector<1x256xf32> -> vector<1x256xf32>
    %70 = vector.broadcast %69 : vector<1x256xf32> to vector<9x256xf32>
    %71 = arith.mulf %66, %70 : vector<9x256xf32>
    %72 = vector.extract_strided_slice %71 {offsets = [0, 0], sizes = [1, 256], strides = [1, 1]} : vector<9x256xf32> to vector<1x256xf32>
    %c0_33 = arith.constant 0 : index
    %c0_34 = arith.constant 0 : index
    %c0_35 = arith.constant 0 : index
    %73 = vector.load %arg2[%c0_33, %c0_34, %c0_35] : memref<9x4x256xbf16, #tpu.memory_space<vmem>>, vector<1x4x256xbf16>
    %74 = vector.shape_cast %73 : vector<1x4x256xbf16> to vector<4x256xbf16>
    %75 = arith.extf %74 : vector<4x256xbf16> to vector<4x256xf32>
    %76 = vector.broadcast %72 : vector<1x256xf32> to vector<4x256xf32>
    %77 = arith.mulf %76, %75 : vector<4x256xf32>
    %78 = vector.extract_strided_slice %71 {offsets = [1, 0], sizes = [1, 256], strides = [1, 1]} : vector<9x256xf32> to vector<1x256xf32>
    %c1_36 = arith.constant 1 : index
    %c0_37 = arith.constant 0 : index
    %c0_38 = arith.constant 0 : index
    %79 = vector.load %arg2[%c1_36, %c0_37, %c0_38] : memref<9x4x256xbf16, #tpu.memory_space<vmem>>, vector<1x4x256xbf16>
    %80 = vector.shape_cast %79 : vector<1x4x256xbf16> to vector<4x256xbf16>
    %81 = arith.extf %80 : vector<4x256xbf16> to vector<4x256xf32>
    %82 = vector.broadcast %78 : vector<1x256xf32> to vector<4x256xf32>
    %83 = arith.mulf %82, %81 : vector<4x256xf32>
    %84 = arith.addf %77, %83 : vector<4x256xf32>
    %85 = vector.extract_strided_slice %71 {offsets = [2, 0], sizes = [1, 256], strides = [1, 1]} : vector<9x256xf32> to vector<1x256xf32>
    %c2_39 = arith.constant 2 : index
    %c0_40 = arith.constant 0 : index
    %c0_41 = arith.constant 0 : index
    %86 = vector.load %arg2[%c2_39, %c0_40, %c0_41] : memref<9x4x256xbf16, #tpu.memory_space<vmem>>, vector<1x4x256xbf16>
    %87 = vector.shape_cast %86 : vector<1x4x256xbf16> to vector<4x256xbf16>
    %88 = arith.extf %87 : vector<4x256xbf16> to vector<4x256xf32>
    %89 = vector.broadcast %85 : vector<1x256xf32> to vector<4x256xf32>
    %90 = arith.mulf %89, %88 : vector<4x256xf32>
    %91 = arith.addf %84, %90 : vector<4x256xf32>
    %92 = vector.extract_strided_slice %71 {offsets = [3, 0], sizes = [1, 256], strides = [1, 1]} : vector<9x256xf32> to vector<1x256xf32>
    %c3_42 = arith.constant 3 : index
    %c0_43 = arith.constant 0 : index
    %c0_44 = arith.constant 0 : index
    %93 = vector.load %arg2[%c3_42, %c0_43, %c0_44] : memref<9x4x256xbf16, #tpu.memory_space<vmem>>, vector<1x4x256xbf16>
    %94 = vector.shape_cast %93 : vector<1x4x256xbf16> to vector<4x256xbf16>
    %95 = arith.extf %94 : vector<4x256xbf16> to vector<4x256xf32>
    %96 = vector.broadcast %92 : vector<1x256xf32> to vector<4x256xf32>
    %97 = arith.mulf %96, %95 : vector<4x256xf32>
    %98 = arith.addf %91, %97 : vector<4x256xf32>
    %99 = vector.extract_strided_slice %71 {offsets = [4, 0], sizes = [1, 256], strides = [1, 1]} : vector<9x256xf32> to vector<1x256xf32>
    %c4_45 = arith.constant 4 : index
    %c0_46 = arith.constant 0 : index
    %c0_47 = arith.constant 0 : index
    %100 = vector.load %arg2[%c4_45, %c0_46, %c0_47] : memref<9x4x256xbf16, #tpu.memory_space<vmem>>, vector<1x4x256xbf16>
    %101 = vector.shape_cast %100 : vector<1x4x256xbf16> to vector<4x256xbf16>
    %102 = arith.extf %101 : vector<4x256xbf16> to vector<4x256xf32>
    %103 = vector.broadcast %99 : vector<1x256xf32> to vector<4x256xf32>
    %104 = arith.mulf %103, %102 : vector<4x256xf32>
    %105 = arith.addf %98, %104 : vector<4x256xf32>
    %106 = vector.extract_strided_slice %71 {offsets = [5, 0], sizes = [1, 256], strides = [1, 1]} : vector<9x256xf32> to vector<1x256xf32>
    %c5_48 = arith.constant 5 : index
    %c0_49 = arith.constant 0 : index
    %c0_50 = arith.constant 0 : index
    %107 = vector.load %arg2[%c5_48, %c0_49, %c0_50] : memref<9x4x256xbf16, #tpu.memory_space<vmem>>, vector<1x4x256xbf16>
    %108 = vector.shape_cast %107 : vector<1x4x256xbf16> to vector<4x256xbf16>
    %109 = arith.extf %108 : vector<4x256xbf16> to vector<4x256xf32>
    %110 = vector.broadcast %106 : vector<1x256xf32> to vector<4x256xf32>
    %111 = arith.mulf %110, %109 : vector<4x256xf32>
    %112 = arith.addf %105, %111 : vector<4x256xf32>
    %113 = vector.extract_strided_slice %71 {offsets = [6, 0], sizes = [1, 256], strides = [1, 1]} : vector<9x256xf32> to vector<1x256xf32>
    %c6_51 = arith.constant 6 : index
    %c0_52 = arith.constant 0 : index
    %c0_53 = arith.constant 0 : index
    %114 = vector.load %arg2[%c6_51, %c0_52, %c0_53] : memref<9x4x256xbf16, #tpu.memory_space<vmem>>, vector<1x4x256xbf16>
    %115 = vector.shape_cast %114 : vector<1x4x256xbf16> to vector<4x256xbf16>
    %116 = arith.extf %115 : vector<4x256xbf16> to vector<4x256xf32>
    %117 = vector.broadcast %113 : vector<1x256xf32> to vector<4x256xf32>
    %118 = arith.mulf %117, %116 : vector<4x256xf32>
    %119 = arith.addf %112, %118 : vector<4x256xf32>
    %120 = vector.extract_strided_slice %71 {offsets = [7, 0], sizes = [1, 256], strides = [1, 1]} : vector<9x256xf32> to vector<1x256xf32>
    %c7_54 = arith.constant 7 : index
    %c0_55 = arith.constant 0 : index
    %c0_56 = arith.constant 0 : index
    %121 = vector.load %arg2[%c7_54, %c0_55, %c0_56] : memref<9x4x256xbf16, #tpu.memory_space<vmem>>, vector<1x4x256xbf16>
    %122 = vector.shape_cast %121 : vector<1x4x256xbf16> to vector<4x256xbf16>
    %123 = arith.extf %122 : vector<4x256xbf16> to vector<4x256xf32>
    %124 = vector.broadcast %120 : vector<1x256xf32> to vector<4x256xf32>
    %125 = arith.mulf %124, %123 : vector<4x256xf32>
    %126 = arith.addf %119, %125 : vector<4x256xf32>
    %127 = vector.extract_strided_slice %71 {offsets = [8, 0], sizes = [1, 256], strides = [1, 1]} : vector<9x256xf32> to vector<1x256xf32>
    %c8_57 = arith.constant 8 : index
    %c0_58 = arith.constant 0 : index
    %c0_59 = arith.constant 0 : index
    %128 = vector.load %arg2[%c8_57, %c0_58, %c0_59] : memref<9x4x256xbf16, #tpu.memory_space<vmem>>, vector<1x4x256xbf16>
    %129 = vector.shape_cast %128 : vector<1x4x256xbf16> to vector<4x256xbf16>
    %130 = arith.extf %129 : vector<4x256xbf16> to vector<4x256xf32>
    %131 = vector.broadcast %127 : vector<1x256xf32> to vector<4x256xf32>
    %132 = arith.mulf %131, %130 : vector<4x256xf32>
    %133 = arith.addf %126, %132 : vector<4x256xf32>
    %134 = arith.truncf %133 : vector<4x256xf32> to vector<4x256xbf16>
    %c0_60 = arith.constant 0 : index
    %c0_61 = arith.constant 0 : index
    %135 = vector.load %arg5[%c0_60, %c0_61] : memref<4x256xbf16, #tpu.memory_space<vmem>>, vector<4x256xbf16>
    tpu.vector_store %arg5[%c0_60, %c0_61], %134 {strides = array<i32>} : memref<4x256xbf16, #tpu.memory_space<vmem>>, vector<4x256xbf16>,
    return
  }
  func.func @transform_0(%arg0: i32) -> (i32, i32, i32) {
    %c0_i32 = arith.constant 0 : i32
    %c0_i32_0 = arith.constant 0 : i32
    %c0_i32_1 = arith.constant 0 : i32
    return %c0_i32, %c0_i32_0, %arg0 : i32, i32, i32
  }
  func.func @transform_1(%arg0: i32) -> (i32, i32, i32) {
    %c0_i32 = arith.constant 0 : i32
    %c0_i32_0 = arith.constant 0 : i32
    %c0_i32_1 = arith.constant 0 : i32
    return %c0_i32, %c0_i32_0, %arg0 : i32, i32, i32
  }
  func.func @transform_2(%arg0: i32) -> (i32, i32) {
    %c0_i32 = arith.constant 0 : i32
    %c0_i32_0 = arith.constant 0 : i32
    return %c0_i32, %arg0 : i32, i32
  }
  func.func @transform_3(%arg0: i32) -> (i32, i32) {
    %c0_i32 = arith.constant 0 : i32
    %c0_i32_0 = arith.constant 0 : i32
    return %c0_i32, %arg0 : i32, i32
  }
  func.func @transform_4(%arg0: i32) -> (i32, i32) {
    %c0_i32 = arith.constant 0 : i32
    %c0_i32_0 = arith.constant 0 : i32
    return %c0_i32, %arg0 : i32, i32
  }
}

module attributes {stable_mosaic.version = 11 : i64} {
  func.func @kernel(%arg0: i32, %arg1: i32, %arg2: memref<1x4x16x18xbf16, #tpu.memory_space<vmem>>, %arg3: memref<1x4x16x18xbf16, #tpu.memory_space<vmem>>, %arg4: memref<8x36xf32, #tpu.memory_space<vmem>>, %arg5: memref<8x1xf32, #tpu.memory_space<vmem>>, %arg6: memref<1x8x256xbf16, #tpu.memory_space<vmem>>) attributes {dimension_semantics = [#tpu.dimension_semantics<parallel>, #tpu.dimension_semantics<parallel>], iteration_bounds = array<i64: 2, 1>, scalar_prefetch = 0 : i64, scratch_operands = 0 : i64, tpu.core_type = #tpu.core_type<tc>, window_params = [{transform_indices = @transform_0, window_bounds = array<i64: 1, 4, 16, 18>}, {transform_indices = @transform_1, window_bounds = array<i64: 1, 4, 16, 18>}, {pipeline_mode = #tpu.pipeline_mode<synchronous>, transform_indices = @transform_2, window_bounds = array<i64: 8, 36>}, {pipeline_mode = #tpu.pipeline_mode<synchronous>, transform_indices = @transform_3, window_bounds = array<i64: 8, 1>}, {transform_indices = @transform_4, window_bounds = array<i64: 1, 8, 256>}]} {
    %c0 = arith.constant 0 : index
    %c0_0 = arith.constant 0 : index
    %c0_1 = arith.constant 0 : index
    %c0_2 = arith.constant 0 : index
    %0 = vector.load %arg2[%c0, %c0_0, %c0_1, %c0_2] : memref<1x4x16x18xbf16, #tpu.memory_space<vmem>>, vector<1x4x16x18xbf16>
    %1 = vector.shape_cast %0 : vector<1x4x16x18xbf16> to vector<4x16x18xbf16>
    %c0_3 = arith.constant 0 : index
    %c0_4 = arith.constant 0 : index
    %c0_5 = arith.constant 0 : index
    %c0_6 = arith.constant 0 : index
    %2 = vector.load %arg3[%c0_3, %c0_4, %c0_5, %c0_6] : memref<1x4x16x18xbf16, #tpu.memory_space<vmem>>, vector<1x4x16x18xbf16>
    %3 = vector.shape_cast %2 : vector<1x4x16x18xbf16> to vector<4x16x18xbf16>
    %4 = vector.extract_strided_slice %3 {offsets = [0, 0, 0], sizes = [4, 2, 18], strides = [1, 1, 1]} : vector<4x16x18xbf16> to vector<4x2x18xbf16>
    %5 = tpu.concatenate %1, %4 in 1 : vector<4x16x18xbf16>, vector<4x2x18xbf16> -> vector<4x18x18xbf16>
    %6 = vector.extract_strided_slice %5 {offsets = [0, 0, 0], sizes = [4, 16, 16], strides = [1, 1, 1]} : vector<4x18x18xbf16> to vector<4x16x16xbf16>
    %7 = vector.extract_strided_slice %5 {offsets = [0, 0, 1], sizes = [4, 16, 16], strides = [1, 1, 1]} : vector<4x18x18xbf16> to vector<4x16x16xbf16>
    %8 = vector.extract_strided_slice %5 {offsets = [0, 0, 2], sizes = [4, 16, 16], strides = [1, 1, 1]} : vector<4x18x18xbf16> to vector<4x16x16xbf16>
    %9 = vector.extract_strided_slice %5 {offsets = [0, 1, 0], sizes = [4, 16, 16], strides = [1, 1, 1]} : vector<4x18x18xbf16> to vector<4x16x16xbf16>
    %10 = vector.extract_strided_slice %5 {offsets = [0, 1, 1], sizes = [4, 16, 16], strides = [1, 1, 1]} : vector<4x18x18xbf16> to vector<4x16x16xbf16>
    %11 = vector.extract_strided_slice %5 {offsets = [0, 1, 2], sizes = [4, 16, 16], strides = [1, 1, 1]} : vector<4x18x18xbf16> to vector<4x16x16xbf16>
    %12 = vector.extract_strided_slice %5 {offsets = [0, 2, 0], sizes = [4, 16, 16], strides = [1, 1, 1]} : vector<4x18x18xbf16> to vector<4x16x16xbf16>
    %13 = vector.extract_strided_slice %5 {offsets = [0, 2, 1], sizes = [4, 16, 16], strides = [1, 1, 1]} : vector<4x18x18xbf16> to vector<4x16x16xbf16>
    %14 = vector.extract_strided_slice %5 {offsets = [0, 2, 2], sizes = [4, 16, 16], strides = [1, 1, 1]} : vector<4x18x18xbf16> to vector<4x16x16xbf16>
    %15 = tpu.concatenate %6, %7, %8, %9, %10, %11, %12, %13, %14 in 0 : vector<4x16x16xbf16>, vector<4x16x16xbf16>, vector<4x16x16xbf16>, vector<4x16x16xbf16>, vector<4x16x16xbf16>, vector<4x16x16xbf16>, vector<4x16x16xbf16>, vector<4x16x16xbf16>, vector<4x16x16xbf16> -> vector<36x16x16xbf16>
    %16 = vector.shape_cast %15 : vector<36x16x16xbf16> to vector<36x256xbf16>
    %c0_7 = arith.constant 0 : index
    %c0_8 = arith.constant 0 : index
    %17 = vector.load %arg4[%c0_7, %c0_8] : memref<8x36xf32, #tpu.memory_space<vmem>>, vector<8x36xf32>
    %18 = arith.truncf %17 : vector<8x36xf32> to vector<8x36xbf16>
    %cst = arith.constant dense<0.000000e+00> : vector<8x256xf32>
    %19 = tpu.matmul %18, %16, %cst {dimension_numbers = #tpu.dot_dimension_numbers<[1], [0], [0], [1], [0, 0, 1, 1], [], []>} : vector<8x36xbf16>, vector<36x256xbf16>, vector<8x256xf32> -> vector<8x256xf32>
    %c0_9 = arith.constant 0 : index
    %c0_10 = arith.constant 0 : index
    %20 = vector.load %arg5[%c0_9, %c0_10] : memref<8x1xf32, #tpu.memory_space<vmem>>, vector<8x1xf32>
    %21 = vector.broadcast %20 : vector<8x1xf32> to vector<8x256xf32>
    %22 = arith.addf %19, %21 : vector<8x256xf32>
    %cst_11 = arith.constant 0.000000e+00 : f32
    %23 = vector.broadcast %cst_11 : f32 to vector<8x256xf32>
    %24 = arith.maximumf %22, %23 : vector<8x256xf32>
    %25 = arith.truncf %24 : vector<8x256xf32> to vector<8x256xbf16>
    %c0_12 = arith.constant 0 : index
    %c0_13 = arith.constant 0 : index
    %c0_14 = arith.constant 0 : index
    %26 = vector.load %arg6[%c0_12, %c0_13, %c0_14] : memref<1x8x256xbf16, #tpu.memory_space<vmem>>, vector<1x8x256xbf16>
    %27 = vector.shape_cast %26 : vector<1x8x256xbf16> to vector<8x256xbf16>
    %28 = vector.shape_cast %25 : vector<8x256xbf16> to vector<1x8x256xbf16>
    tpu.vector_store %arg6[%c0_12, %c0_13, %c0_14], %28 {strides = array<i32>} : memref<1x8x256xbf16, #tpu.memory_space<vmem>>, vector<1x8x256xbf16>,
    return
  }
  func.func @transform_0(%arg0: i32, %arg1: i32) -> (i32, i32, i32, i32) {
    %c0_i32 = arith.constant 0 : i32
    %c0_i32_0 = arith.constant 0 : i32
    %c0_i32_1 = arith.constant 0 : i32
    return %arg0, %c0_i32, %arg1, %c0_i32_0 : i32, i32, i32, i32
  }
  func.func @transform_1(%arg0: i32, %arg1: i32) -> (i32, i32, i32, i32) {
    %c1_i32 = arith.constant 1 : i32
    %0 = arith.addi %arg1, %c1_i32 : i32
    %c1_i32_0 = arith.constant 1 : i32
    %1 = arith.muli %0, %c1_i32_0 : i32
    %c0_i32 = arith.constant 0 : i32
    %c0_i32_1 = arith.constant 0 : i32
    %c0_i32_2 = arith.constant 0 : i32
    return %arg0, %c0_i32, %1, %c0_i32_1 : i32, i32, i32, i32
  }
  func.func @transform_2(%arg0: i32, %arg1: i32) -> (i32, i32) {
    %c0_i32 = arith.constant 0 : i32
    %c0_i32_0 = arith.constant 0 : i32
    %c0_i32_1 = arith.constant 0 : i32
    return %c0_i32, %c0_i32_0 : i32, i32
  }
  func.func @transform_3(%arg0: i32, %arg1: i32) -> (i32, i32) {
    %c0_i32 = arith.constant 0 : i32
    %c0_i32_0 = arith.constant 0 : i32
    %c0_i32_1 = arith.constant 0 : i32
    return %c0_i32, %c0_i32_0 : i32, i32
  }
  func.func @transform_4(%arg0: i32, %arg1: i32) -> (i32, i32, i32) {
    %c0_i32 = arith.constant 0 : i32
    %c0_i32_0 = arith.constant 0 : i32
    return %arg0, %c0_i32, %arg1 : i32, i32, i32
  }
}

module attributes {stable_mosaic.version = 11 : i64} {
  func.func @kernel(%arg0: i32, %arg1: i32, %arg2: memref<1x4x16x18xbf16, #tpu.memory_space<vmem>>, %arg3: memref<1x4x16x18xbf16, #tpu.memory_space<vmem>>, %arg4: memref<4x36xf32, #tpu.memory_space<vmem>>, %arg5: memref<4x1xf32, #tpu.memory_space<vmem>>, %arg6: memref<1x4x256xbf16, #tpu.memory_space<vmem>>) attributes {dimension_semantics = [#tpu.dimension_semantics<parallel>, #tpu.dimension_semantics<parallel>], iteration_bounds = array<i64: 2, 1>, scalar_prefetch = 0 : i64, scratch_operands = 0 : i64, tpu.core_type = #tpu.core_type<tc>, window_params = [{transform_indices = @transform_0, window_bounds = array<i64: 1, 4, 16, 18>}, {transform_indices = @transform_1, window_bounds = array<i64: 1, 4, 16, 18>}, {pipeline_mode = #tpu.pipeline_mode<synchronous>, transform_indices = @transform_2, window_bounds = array<i64: 4, 36>}, {pipeline_mode = #tpu.pipeline_mode<synchronous>, transform_indices = @transform_3, window_bounds = array<i64: 4, 1>}, {transform_indices = @transform_4, window_bounds = array<i64: 1, 4, 256>}]} {
    %c0 = arith.constant 0 : index
    %c0_0 = arith.constant 0 : index
    %c0_1 = arith.constant 0 : index
    %c0_2 = arith.constant 0 : index
    %0 = vector.load %arg2[%c0, %c0_0, %c0_1, %c0_2] : memref<1x4x16x18xbf16, #tpu.memory_space<vmem>>, vector<1x4x16x18xbf16>
    %1 = vector.shape_cast %0 : vector<1x4x16x18xbf16> to vector<4x16x18xbf16>
    %c0_3 = arith.constant 0 : index
    %c0_4 = arith.constant 0 : index
    %c0_5 = arith.constant 0 : index
    %c0_6 = arith.constant 0 : index
    %2 = vector.load %arg3[%c0_3, %c0_4, %c0_5, %c0_6] : memref<1x4x16x18xbf16, #tpu.memory_space<vmem>>, vector<1x4x16x18xbf16>
    %3 = vector.shape_cast %2 : vector<1x4x16x18xbf16> to vector<4x16x18xbf16>
    %4 = vector.extract_strided_slice %3 {offsets = [0, 0, 0], sizes = [4, 2, 18], strides = [1, 1, 1]} : vector<4x16x18xbf16> to vector<4x2x18xbf16>
    %5 = tpu.concatenate %1, %4 in 1 : vector<4x16x18xbf16>, vector<4x2x18xbf16> -> vector<4x18x18xbf16>
    %6 = vector.extract_strided_slice %5 {offsets = [0, 0, 0], sizes = [4, 16, 16], strides = [1, 1, 1]} : vector<4x18x18xbf16> to vector<4x16x16xbf16>
    %7 = vector.extract_strided_slice %5 {offsets = [0, 0, 1], sizes = [4, 16, 16], strides = [1, 1, 1]} : vector<4x18x18xbf16> to vector<4x16x16xbf16>
    %8 = vector.extract_strided_slice %5 {offsets = [0, 0, 2], sizes = [4, 16, 16], strides = [1, 1, 1]} : vector<4x18x18xbf16> to vector<4x16x16xbf16>
    %9 = vector.extract_strided_slice %5 {offsets = [0, 1, 0], sizes = [4, 16, 16], strides = [1, 1, 1]} : vector<4x18x18xbf16> to vector<4x16x16xbf16>
    %10 = vector.extract_strided_slice %5 {offsets = [0, 1, 1], sizes = [4, 16, 16], strides = [1, 1, 1]} : vector<4x18x18xbf16> to vector<4x16x16xbf16>
    %11 = vector.extract_strided_slice %5 {offsets = [0, 1, 2], sizes = [4, 16, 16], strides = [1, 1, 1]} : vector<4x18x18xbf16> to vector<4x16x16xbf16>
    %12 = vector.extract_strided_slice %5 {offsets = [0, 2, 0], sizes = [4, 16, 16], strides = [1, 1, 1]} : vector<4x18x18xbf16> to vector<4x16x16xbf16>
    %13 = vector.extract_strided_slice %5 {offsets = [0, 2, 1], sizes = [4, 16, 16], strides = [1, 1, 1]} : vector<4x18x18xbf16> to vector<4x16x16xbf16>
    %14 = vector.extract_strided_slice %5 {offsets = [0, 2, 2], sizes = [4, 16, 16], strides = [1, 1, 1]} : vector<4x18x18xbf16> to vector<4x16x16xbf16>
    %15 = tpu.concatenate %6, %7, %8, %9, %10, %11, %12, %13, %14 in 0 : vector<4x16x16xbf16>, vector<4x16x16xbf16>, vector<4x16x16xbf16>, vector<4x16x16xbf16>, vector<4x16x16xbf16>, vector<4x16x16xbf16>, vector<4x16x16xbf16>, vector<4x16x16xbf16>, vector<4x16x16xbf16> -> vector<36x16x16xbf16>
    %16 = vector.shape_cast %15 : vector<36x16x16xbf16> to vector<36x256xbf16>
    %c0_7 = arith.constant 0 : index
    %c0_8 = arith.constant 0 : index
    %17 = vector.load %arg4[%c0_7, %c0_8] : memref<4x36xf32, #tpu.memory_space<vmem>>, vector<4x36xf32>
    %18 = arith.truncf %17 : vector<4x36xf32> to vector<4x36xbf16>
    %cst = arith.constant dense<0.000000e+00> : vector<4x256xf32>
    %19 = tpu.matmul %18, %16, %cst {dimension_numbers = #tpu.dot_dimension_numbers<[1], [0], [0], [1], [0, 0, 1, 1], [], []>} : vector<4x36xbf16>, vector<36x256xbf16>, vector<4x256xf32> -> vector<4x256xf32>
    %c0_9 = arith.constant 0 : index
    %c0_10 = arith.constant 0 : index
    %20 = vector.load %arg5[%c0_9, %c0_10] : memref<4x1xf32, #tpu.memory_space<vmem>>, vector<4x1xf32>
    %21 = vector.broadcast %20 : vector<4x1xf32> to vector<4x256xf32>
    %22 = arith.addf %19, %21 : vector<4x256xf32>
    %cst_11 = arith.constant 0.000000e+00 : f32
    %23 = vector.broadcast %cst_11 : f32 to vector<4x256xf32>
    %24 = arith.maximumf %22, %23 : vector<4x256xf32>
    %25 = arith.truncf %24 : vector<4x256xf32> to vector<4x256xbf16>
    %c0_12 = arith.constant 0 : index
    %c0_13 = arith.constant 0 : index
    %c0_14 = arith.constant 0 : index
    %26 = vector.load %arg6[%c0_12, %c0_13, %c0_14] : memref<1x4x256xbf16, #tpu.memory_space<vmem>>, vector<1x4x256xbf16>
    %27 = vector.shape_cast %26 : vector<1x4x256xbf16> to vector<4x256xbf16>
    %28 = vector.shape_cast %25 : vector<4x256xbf16> to vector<1x4x256xbf16>
    tpu.vector_store %arg6[%c0_12, %c0_13, %c0_14], %28 {strides = array<i32>} : memref<1x4x256xbf16, #tpu.memory_space<vmem>>, vector<1x4x256xbf16>,
    return
  }
  func.func @transform_0(%arg0: i32, %arg1: i32) -> (i32, i32, i32, i32) {
    %c0_i32 = arith.constant 0 : i32
    %c0_i32_0 = arith.constant 0 : i32
    %c0_i32_1 = arith.constant 0 : i32
    return %arg0, %c0_i32, %arg1, %c0_i32_0 : i32, i32, i32, i32
  }
  func.func @transform_1(%arg0: i32, %arg1: i32) -> (i32, i32, i32, i32) {
    %c1_i32 = arith.constant 1 : i32
    %0 = arith.addi %arg1, %c1_i32 : i32
    %c1_i32_0 = arith.constant 1 : i32
    %1 = arith.muli %0, %c1_i32_0 : i32
    %c0_i32 = arith.constant 0 : i32
    %c0_i32_1 = arith.constant 0 : i32
    %c0_i32_2 = arith.constant 0 : i32
    return %arg0, %c0_i32, %1, %c0_i32_1 : i32, i32, i32, i32
  }
  func.func @transform_2(%arg0: i32, %arg1: i32) -> (i32, i32) {
    %c0_i32 = arith.constant 0 : i32
    %c0_i32_0 = arith.constant 0 : i32
    %c0_i32_1 = arith.constant 0 : i32
    return %c0_i32, %c0_i32_0 : i32, i32
  }
  func.func @transform_3(%arg0: i32, %arg1: i32) -> (i32, i32) {
    %c0_i32 = arith.constant 0 : i32
    %c0_i32_0 = arith.constant 0 : i32
    %c0_i32_1 = arith.constant 0 : i32
    return %c0_i32, %c0_i32_0 : i32, i32
  }
  func.func @transform_4(%arg0: i32, %arg1: i32) -> (i32, i32, i32) {
    %c0_i32 = arith.constant 0 : i32
    %c0_i32_0 = arith.constant 0 : i32
    return %arg0, %c0_i32, %arg1 : i32, i32, i32
  }
}

module attributes {stable_mosaic.version = 11 : i64} {
  func.func @kernel(%arg0: i32, %arg1: i32, %arg2: memref<1x8x16x18xbf16, #tpu.memory_space<vmem>>, %arg3: memref<1x8x16x18xbf16, #tpu.memory_space<vmem>>, %arg4: memref<4x72xf32, #tpu.memory_space<vmem>>, %arg5: memref<4x1xf32, #tpu.memory_space<vmem>>, %arg6: memref<1x4x256xf32, #tpu.memory_space<vmem>>) attributes {dimension_semantics = [#tpu.dimension_semantics<parallel>, #tpu.dimension_semantics<parallel>], iteration_bounds = array<i64: 2, 1>, scalar_prefetch = 0 : i64, scratch_operands = 0 : i64, tpu.core_type = #tpu.core_type<tc>, window_params = [{transform_indices = @transform_0, window_bounds = array<i64: 1, 8, 16, 18>}, {transform_indices = @transform_1, window_bounds = array<i64: 1, 8, 16, 18>}, {pipeline_mode = #tpu.pipeline_mode<synchronous>, transform_indices = @transform_2, window_bounds = array<i64: 4, 72>}, {pipeline_mode = #tpu.pipeline_mode<synchronous>, transform_indices = @transform_3, window_bounds = array<i64: 4, 1>}, {transform_indices = @transform_4, window_bounds = array<i64: 1, 4, 256>}]} {
    %c0 = arith.constant 0 : index
    %c0_0 = arith.constant 0 : index
    %c0_1 = arith.constant 0 : index
    %c0_2 = arith.constant 0 : index
    %0 = vector.load %arg2[%c0, %c0_0, %c0_1, %c0_2] : memref<1x8x16x18xbf16, #tpu.memory_space<vmem>>, vector<1x8x16x18xbf16>
    %1 = vector.shape_cast %0 : vector<1x8x16x18xbf16> to vector<8x16x18xbf16>
    %c0_3 = arith.constant 0 : index
    %c0_4 = arith.constant 0 : index
    %c0_5 = arith.constant 0 : index
    %c0_6 = arith.constant 0 : index
    %2 = vector.load %arg3[%c0_3, %c0_4, %c0_5, %c0_6] : memref<1x8x16x18xbf16, #tpu.memory_space<vmem>>, vector<1x8x16x18xbf16>
    %3 = vector.shape_cast %2 : vector<1x8x16x18xbf16> to vector<8x16x18xbf16>
    %4 = vector.extract_strided_slice %3 {offsets = [0, 0, 0], sizes = [8, 2, 18], strides = [1, 1, 1]} : vector<8x16x18xbf16> to vector<8x2x18xbf16>
    %5 = tpu.concatenate %1, %4 in 1 : vector<8x16x18xbf16>, vector<8x2x18xbf16> -> vector<8x18x18xbf16>
    %6 = vector.extract_strided_slice %5 {offsets = [0, 0, 0], sizes = [8, 16, 16], strides = [1, 1, 1]} : vector<8x18x18xbf16> to vector<8x16x16xbf16>
    %7 = vector.extract_strided_slice %5 {offsets = [0, 0, 1], sizes = [8, 16, 16], strides = [1, 1, 1]} : vector<8x18x18xbf16> to vector<8x16x16xbf16>
    %8 = vector.extract_strided_slice %5 {offsets = [0, 0, 2], sizes = [8, 16, 16], strides = [1, 1, 1]} : vector<8x18x18xbf16> to vector<8x16x16xbf16>
    %9 = vector.extract_strided_slice %5 {offsets = [0, 1, 0], sizes = [8, 16, 16], strides = [1, 1, 1]} : vector<8x18x18xbf16> to vector<8x16x16xbf16>
    %10 = vector.extract_strided_slice %5 {offsets = [0, 1, 1], sizes = [8, 16, 16], strides = [1, 1, 1]} : vector<8x18x18xbf16> to vector<8x16x16xbf16>
    %11 = vector.extract_strided_slice %5 {offsets = [0, 1, 2], sizes = [8, 16, 16], strides = [1, 1, 1]} : vector<8x18x18xbf16> to vector<8x16x16xbf16>
    %12 = vector.extract_strided_slice %5 {offsets = [0, 2, 0], sizes = [8, 16, 16], strides = [1, 1, 1]} : vector<8x18x18xbf16> to vector<8x16x16xbf16>
    %13 = vector.extract_strided_slice %5 {offsets = [0, 2, 1], sizes = [8, 16, 16], strides = [1, 1, 1]} : vector<8x18x18xbf16> to vector<8x16x16xbf16>
    %14 = vector.extract_strided_slice %5 {offsets = [0, 2, 2], sizes = [8, 16, 16], strides = [1, 1, 1]} : vector<8x18x18xbf16> to vector<8x16x16xbf16>
    %15 = tpu.concatenate %6, %7, %8, %9, %10, %11, %12, %13, %14 in 0 : vector<8x16x16xbf16>, vector<8x16x16xbf16>, vector<8x16x16xbf16>, vector<8x16x16xbf16>, vector<8x16x16xbf16>, vector<8x16x16xbf16>, vector<8x16x16xbf16>, vector<8x16x16xbf16>, vector<8x16x16xbf16> -> vector<72x16x16xbf16>
    %16 = vector.shape_cast %15 : vector<72x16x16xbf16> to vector<72x256xbf16>
    %c0_7 = arith.constant 0 : index
    %c0_8 = arith.constant 0 : index
    %17 = vector.load %arg4[%c0_7, %c0_8] : memref<4x72xf32, #tpu.memory_space<vmem>>, vector<4x72xf32>
    %18 = arith.truncf %17 : vector<4x72xf32> to vector<4x72xbf16>
    %cst = arith.constant dense<0.000000e+00> : vector<4x256xf32>
    %19 = tpu.matmul %18, %16, %cst {dimension_numbers = #tpu.dot_dimension_numbers<[1], [0], [0], [1], [0, 0, 1, 1], [], []>} : vector<4x72xbf16>, vector<72x256xbf16>, vector<4x256xf32> -> vector<4x256xf32>
    %c0_9 = arith.constant 0 : index
    %c0_10 = arith.constant 0 : index
    %20 = vector.load %arg5[%c0_9, %c0_10] : memref<4x1xf32, #tpu.memory_space<vmem>>, vector<4x1xf32>
    %21 = vector.broadcast %20 : vector<4x1xf32> to vector<4x256xf32>
    %22 = arith.addf %19, %21 : vector<4x256xf32>
    %cst_11 = arith.constant 0.000000e+00 : f32
    %23 = vector.broadcast %cst_11 : f32 to vector<4x256xf32>
    %24 = arith.maximumf %22, %23 : vector<4x256xf32>
    %c0_12 = arith.constant 0 : index
    %c0_13 = arith.constant 0 : index
    %c0_14 = arith.constant 0 : index
    %25 = vector.load %arg6[%c0_12, %c0_13, %c0_14] : memref<1x4x256xf32, #tpu.memory_space<vmem>>, vector<1x4x256xf32>
    %26 = vector.shape_cast %25 : vector<1x4x256xf32> to vector<4x256xf32>
    %27 = vector.shape_cast %24 : vector<4x256xf32> to vector<1x4x256xf32>
    tpu.vector_store %arg6[%c0_12, %c0_13, %c0_14], %27 {strides = array<i32>} : memref<1x4x256xf32, #tpu.memory_space<vmem>>, vector<1x4x256xf32>,
    return
  }
  func.func @transform_0(%arg0: i32, %arg1: i32) -> (i32, i32, i32, i32) {
    %c0_i32 = arith.constant 0 : i32
    %c0_i32_0 = arith.constant 0 : i32
    %c0_i32_1 = arith.constant 0 : i32
    return %arg0, %c0_i32, %arg1, %c0_i32_0 : i32, i32, i32, i32
  }
  func.func @transform_1(%arg0: i32, %arg1: i32) -> (i32, i32, i32, i32) {
    %c1_i32 = arith.constant 1 : i32
    %0 = arith.addi %arg1, %c1_i32 : i32
    %c1_i32_0 = arith.constant 1 : i32
    %1 = arith.muli %0, %c1_i32_0 : i32
    %c0_i32 = arith.constant 0 : i32
    %c0_i32_1 = arith.constant 0 : i32
    %c0_i32_2 = arith.constant 0 : i32
    return %arg0, %c0_i32, %1, %c0_i32_1 : i32, i32, i32, i32
  }
  func.func @transform_2(%arg0: i32, %arg1: i32) -> (i32, i32) {
    %c0_i32 = arith.constant 0 : i32
    %c0_i32_0 = arith.constant 0 : i32
    %c0_i32_1 = arith.constant 0 : i32
    return %c0_i32, %c0_i32_0 : i32, i32
  }
  func.func @transform_3(%arg0: i32, %arg1: i32) -> (i32, i32) {
    %c0_i32 = arith.constant 0 : i32
    %c0_i32_0 = arith.constant 0 : i32
    %c0_i32_1 = arith.constant 0 : i32
    return %c0_i32, %c0_i32_0 : i32, i32
  }
  func.func @transform_4(%arg0: i32, %arg1: i32) -> (i32, i32, i32) {
    %c0_i32 = arith.constant 0 : i32
    %c0_i32_0 = arith.constant 0 : i32
    return %arg0, %c0_i32, %arg1 : i32, i32, i32
  }
}

</mosaic_0001>

<llo_original>
// kernel: pixel_attention_forward.5
$region0: #{pixel_attention_forward.5}
  #allocation0 [shape = 'u32[]', space=smem, size = 0x4, offset = 0x4, fixed_abs, tag = 'smem constant byte address 0x4 - core index']
  #allocation1 [shape = 'u32[144,128]{1,0:T(1,128)}', space=vmem, size = 0x12000, scoped, tag = 'internal scratch']
  %s0 = inlined_call_operand.vmem [shape: f32[2,4,256], index: 0, kind: input, shape index: {}]
  %s1 = inlined_call_operand.vmem [shape: f32[76,4], index: 1, kind: input, shape index: {}]
  %s2 = inlined_call_operand.vmem [shape: f32[76,1], index: 2, kind: input, shape index: {}]
  %s3 = inlined_call_operand.vmem [shape: bf16[2,76,256], index: 3, kind: output, shape index: {}]
  %s4 = sld [smem:[#allocation0]]
  $region45: #{pixel_attention_forward.5} parent=0
    _
  %s6 = ssub.s32 1, %s4
  %s7 = scalar_select 0, %s6, %s4
  loop: start=0, step=1, limit=4
  $region2: #{pixel_attention_forward.5} parent=0 // loop_pre_header
    _
  $region3: #{pixel_attention_forward.5} parent=0 // loop_header
    %s9 = sphi 0, %s13
    %p10 = scmp.ge.s32.totalorder %s9, 4
    %s16 = sphi 0, %s28
    %s17 = sphi 0, %s24
    %s18 = sphi 0, %s16
    %s19 = sphi 0, %s17
    %s20 = sphi 0, %s18
    %s21 = sphi 0, %s19
    %s33 = sphi 0, %s35
    %s36 = sphi 0, %s33
    %s37 = sphi 0, %s36
    %s53 = sphi 0, %s37
    %s57 = sphi 0, %s57
    %s59 = sphi 0, %s57
    %s60 = sphi 0, %s59
    %s74 = sphi 0, %s60
    %s78 = sphi 0, %s78
    %s80 = sphi 0, %s78
    %s81 = sphi 0, %s80
    %s95 = sphi 0, %s81
    %s103 = sphi 0, %s105
    %s106 = sphi 0, %s103
    %s107 = sphi 0, %s106
    %s123 = sphi 0, %s107
  $region4: #{pixel_attention_forward.5} parent=0 // loop_header_branch
    %12 = sbr.rel (%p10) target = $region8
  $region5: #{pixel_attention_forward.5} parent=0 // loop_body
    %s14 = ssub.s32 %s9, 1
    %s15 = ssub.s32 %s9, 2
    %s22 = sadd.s32 1, %s17
    %p23 = scmp.ge.s32.totalorder %s22, 1
    %s24 = scalar_select %p23, 0, %s22
    %s25 = sadd.s32 1, %s16
    %s26 = scalar_select %p23, %s25, %s16
    %p27 = scmp.ge.s32.totalorder %s26, 2
    %s28 = scalar_select %p27, 0, %s26
    %s29 = ssub.s32 %s16, %s28
    %s30 = ssub.s32 %s17, %s24
    %s31 = sor.u32 %s29, %s30
    %p32 = scmp.eq.s32.totalorder %s31, 0
    %s34 = sadd.s32 %s33, 1
    %s35 = scalar_select %p32, %s33, %s34
    %p38 = pneg %p32
    %p39 = scmp.eq.s32.totalorder %s9, 1
    %p40 = por %p38, %p39
    %p41 = scmp.ne.s32.totalorder %s33, %s36
    %p42 = scmp.eq.s32.totalorder %s9, 0
    %p43 = por %p41, %p42
    %p44 = scmp.ne.s32.totalorder %s33, %s36
    %p45 = scmp.eq.s32.totalorder %s14, 1
    %p46 = por %p44, %p45
    %p47 = scmp.ne.s32.totalorder %s36, %s37
    %p48 = scmp.eq.s32.totalorder %s14, 0
    %p49 = por %p47, %p48
    %p50 = scmp.ne.s32.totalorder %s36, %s37
    %p51 = scmp.eq.s32.totalorder %s15, 1
    %p52 = por %p50, %p51
    %p54 = scmp.ne.s32.totalorder %s37, %s53
    %p55 = scmp.eq.s32.totalorder %s15, 0
    %p56 = por %p54, %p55
    %s58 = sadd.s32 %s57, 1
    %p61 = scmp.eq.s32.totalorder %s9, 1
    %p62 = scmp.ne.s32.totalorder %s57, %s59
    %p63 = scmp.eq.s32.totalorder %s9, 0
    %p64 = por %p62, %p63
    %p65 = scmp.ne.s32.totalorder %s57, %s59
    %p66 = scmp.eq.s32.totalorder %s14, 1
    %p67 = por %p65, %p66
    %p68 = scmp.ne.s32.totalorder %s59, %s60
    %p69 = scmp.eq.s32.totalorder %s14, 0
    %p70 = por %p68, %p69
    %p71 = scmp.ne.s32.totalorder %s59, %s60
    %p72 = scmp.eq.s32.totalorder %s15, 1
    %p73 = por %p71, %p72
    %p75 = scmp.ne.s32.totalorder %s60, %s74
    %p76 = scmp.eq.s32.totalorder %s15, 0
    %p77 = por %p75, %p76
    %s79 = sadd.s32 %s78, 1
    %p82 = scmp.eq.s32.totalorder %s9, 1
    %p83 = scmp.ne.s32.totalorder %s78, %s80
    %p84 = scmp.eq.s32.totalorder %s9, 0
    %p85 = por %p83, %p84
    %p86 = scmp.ne.s32.totalorder %s78, %s80
    %p87 = scmp.eq.s32.totalorder %s14, 1
    %p88 = por %p86, %p87
    %p89 = scmp.ne.s32.totalorder %s80, %s81
    %p90 = scmp.eq.s32.totalorder %s14, 0
    %p91 = por %p89, %p90
    %p92 = scmp.ne.s32.totalorder %s80, %s81
    %p93 = scmp.eq.s32.totalorder %s15, 1
    %p94 = por %p92, %p93
    %p96 = scmp.ne.s32.totalorder %s81, %s95
    %p97 = scmp.eq.s32.totalorder %s15, 0
    %p98 = por %p96, %p97
    %s99 = ssub.s32 %s16, %s28
    %s100 = ssub.s32 %s17, %s24
    %s101 = sor.u32 %s99, %s100
    %p102 = scmp.eq.s32.totalorder %s101, 0
    %s104 = sadd.s32 %s103, 1
    %s105 = scalar_select %p102, %s103, %s104
    %p108 = pneg %p102
    %p109 = scmp.eq.s32.totalorder %s9, 1
    %p110 = por %p108, %p109
    %p111 = scmp.ne.s32.totalorder %s103, %s106
    %p112 = scmp.eq.s32.totalorder %s9, 0
    %p113 = por %p111, %p112
    %p114 = scmp.ne.s32.totalorder %s103, %s106
    %p115 = scmp.eq.s32.totalorder %s14, 1
    %p116 = por %p114, %p115
    %p117 = scmp.ne.s32.totalorder %s106, %s107
    %p118 = scmp.eq.s32.totalorder %s14, 0
    %p119 = por %p117, %p118
    %p120 = scmp.ne.s32.totalorder %s106, %s107
    %p121 = scmp.eq.s32.totalorder %s15, 1
    %p122 = por %p120, %p121
    %p124 = scmp.ne.s32.totalorder %s107, %s123
    %p125 = scmp.eq.s32.totalorder %s15, 0
    %p126 = por %p124, %p125
    %p127 = scmp.le.s32.totalorder 1, %s9
    %p128 = scmp.lt.s32.totalorder %s9, 3
    %p129 = pnand %p127, %p128
    %p130 = pneg %p129
    // Predicated region
    $region9: #{pixel_attention_forward.5} parent=5 // pred_check
      _
    $region10: #{pixel_attention_forward.5} parent=5 // pred_check_branch
      %132 = sbr.rel (%p129) target = $region12
    $region11: #{pixel_attention_forward.5} parent=5 // pred_region
      %s133 = ssub.s32 %s9, 1
      // Predicated region
      $region13: #{pixel_attention_forward.5} parent=11 // pred_check
        %p134 = pneg %p70
      $region14: #{pixel_attention_forward.5} parent=11 // pred_check_branch
        %136 = sbr.rel (%p134) target = $region16
      $region15: #{pixel_attention_forward.5} parent=11 // pred_region
        _
      $region16: #{pixel_attention_forward.5} parent=11 // pred_fallthru
        _
      // Predicated region
      $region17: #{pixel_attention_forward.5} parent=11 // pred_check
        %p137 = pneg %p91
      $region18: #{pixel_attention_forward.5} parent=11 // pred_check_branch
        %139 = sbr.rel (%p137) target = $region20
      $region19: #{pixel_attention_forward.5} parent=11 // pred_region
        _
      $region20: #{pixel_attention_forward.5} parent=11 // pred_fallthru
        _
    $region12: #{pixel_attention_forward.5} parent=5 // pred_fallthru
      _
    %p140 = scmp.lt.s32.totalorder %s9, 2
    // Predicated region
    $region21: #{pixel_attention_forward.5} parent=5 // pred_check
      %p141 = pneg %p140
    $region22: #{pixel_attention_forward.5} parent=5 // pred_check_branch
      %143 = sbr.rel (%p141) target = $region24
    $region23: #{pixel_attention_forward.5} parent=5 // pred_region
      // Predicated region
      $region25: #{pixel_attention_forward.5} parent=23 // pred_check
        %p144 = pneg %p43
      $region26: #{pixel_attention_forward.5} parent=23 // pred_check_branch
        %146 = sbr.rel (%p144) target = $region28
      $region27: #{pixel_attention_forward.5} parent=23 // pred_region
        %s147 = smul.u32 2, %s17
        %p148 = scmp.lt.s32.totalorder %s16, 1
        %s149 = scalar_select %p148, %s16, 1
        %p150 = scmp.lt.s32.totalorder %s147, 1
        %s151 = scalar_select %p150, %s147, 1
        %s152 = smul.addr %s149, 2
        %s153 = sadd.s32 %s151, %s152
        %s154 = smul.addr %s153, 4
        %s155 = scalar_lea.vmem %s0, %s154
        %s156 = smul.u32 2, %s17
      $region28: #{pixel_attention_forward.5} parent=23 // pred_fallthru
        _
    $region24: #{pixel_attention_forward.5} parent=5 // pred_fallthru
      _
    %p157 = scmp.le.s32.totalorder 1, %s9
    %p158 = scmp.lt.s32.totalorder %s9, 3
    %p159 = pnand %p157, %p158
    %p160 = pneg %p159
    // Predicated region
    $region29: #{pixel_attention_forward.5} parent=5 // pred_check
      _
    $region30: #{pixel_attention_forward.5} parent=5 // pred_check_branch
      %162 = sbr.rel (%p159) target = $region32
    $region31: #{pixel_attention_forward.5} parent=5 // pred_region
      %s163 = ssub.s32 %s9, 1
      %s164 = smul.u32 2, %s19
      %p165 = scmp.lt.s32.totalorder %s18, 1
      %s166 = scalar_select %p165, %s18, 1
      %p167 = scmp.lt.s32.totalorder %s164, 1
      %s168 = scalar_select %p167, %s164, 1
      %s169 = smul.addr %s166, 2
      %s170 = sadd.s32 %s168, %s169
      %s171 = smul.addr %s170, 4
      %s172 = scalar_lea.vmem %s0, %s171
      %p173 = pneg %p49
      %p174 = pneg %p46
      %p175 = pneg %p70
      %p176 = pneg %p67
      %p177 = pneg %p91
      %p178 = pneg %p88
      %p179 = pneg %p119
      %p180 = pneg %p116
      %s181 = smul.u32 2, %s19
      %p182 = scmp.lt.s32.totalorder %s18, 1
      %s183 = scalar_select %p182, %s18, 1
      %p184 = scmp.lt.s32.totalorder %s181, 1
      %s185 = scalar_select %p184, %s181, 1
      %s186 = smul.addr %s183, 20
      %s187 = sadd.s32 %s185, %s186
      %s188 = smul.addr %s187, 4
      %s189 = scalar_lea.vmem %s3, %s188
      %s190 = smul.u32 2, %s19
      %p191 = scmp.lt.s32.totalorder %s18, 1
      %s192 = scalar_select %p191, %s18, 1
      %p193 = scmp.lt.s32.totalorder %s190, 1
      %s194 = scalar_select %p193, %s190, 1
      %s195 = smul.addr %s192, 2
      %s196 = sadd.s32 %s194, %s195
      %s197 = smul.addr %s196, 4
      %s198 = scalar_lea.vmem %s0, %s197
      %s199 = smul.u32 2, %s19
      %s200 = smul.u32 2, %s19
      %p201 = scmp.lt.s32.totalorder %s18, 1
      %s202 = scalar_select %p201, %s18, 1
      %p203 = scmp.lt.s32.totalorder %s200, 1
      %s204 = scalar_select %p203, %s200, 1
      %s205 = smul.addr %s202, 20
      %s206 = sadd.s32 %s204, %s205
      %s207 = smul.addr %s206, 4
      %s208 = scalar_lea.vmem %s3, %s207
      %s209 = smul.u32 2, %s19
      %v211 = vld [vmem:[%s198] sm:$0xff]
      %v213 = vcombine.high %v211, %v211
      %v215 = vpack.c.bf16 %v211, %v211
      %v216 = vpack.c.bf16 %v213, %v213
      %v217 = vld [vmem:[%s1] sm:$0xff]
      %v218 = vld [vmem:[%s1 + $0x8] sm:$0xff]
      %v219 = vld [vmem:[%s1 + $0x10] sm:$0xff]
      %v220 = vld [vmem:[%s1 + $0x18] sm:$0xff]
      %v221 = vld [vmem:[%s1 + $0x20] sm:$0xff]
      %v222 = vld [vmem:[%s1 + $0x28] sm:$0xff]
      %v223 = vld [vmem:[%s1 + $0x30] sm:$0xff]
      %v224 = vld [vmem:[%s1 + $0x38] sm:$0xff]
      %v225 = vld [vmem:[%s1 + $0x40] sm:$0xff]
      %v226 = vld [vmem:[%s1 + $0x48] sm:$0xf]
      %v227 = vpack.c.bf16 %v218, %v217
      %v228 = vpack.c.bf16 %v220, %v219
      %v229 = vpack.c.bf16 %v222, %v221
      %v230 = vpack.c.bf16 %v224, %v223
      %v231 = vpack.c.bf16 %v226, %v225
      %v232 = vld [vmem:[%s2] sm:$0xff]
      %v233 = vld [vmem:[%s2 + $0x8] sm:$0xff]
      %v234 = vld [vmem:[%s2 + $0x10] sm:$0xff]
      %v235 = vld [vmem:[%s2 + $0x18] sm:$0xff]
      %v236 = vld [vmem:[%s2 + $0x20] sm:$0xff]
      %v237 = vld [vmem:[%s2 + $0x28] sm:$0xff]
      %v238 = vld [vmem:[%s2 + $0x30] sm:$0xff]
      %v239 = vld [vmem:[%s2 + $0x38] sm:$0xff]
      %v240 = vld [vmem:[%s2 + $0x40] sm:$0xff]
      %v241 = vld [vmem:[%s2 + $0x48] sm:$0xf]
      %243 = vset.pattern.permute.xlu0 0
      %244 = vperm.xlu0 %243, %v232
      %v245 = vpop.permute.xlu0 %244
      %248 = vset.pattern.permute.xlu0 0
      %249 = vperm.xlu0 %248, %v233
      %v250 = vpop.permute.xlu0 %249
      %253 = vset.pattern.permute.xlu0 0
      %254 = vperm.xlu0 %253, %v234
      %v255 = vpop.permute.xlu0 %254
      %258 = vset.pattern.permute.xlu0 0
      %259 = vperm.xlu0 %258, %v235
      %v260 = vpop.permute.xlu0 %259
      %263 = vset.pattern.permute.xlu0 0
      %264 = vperm.xlu0 %263, %v236
      %v265 = vpop.permute.xlu0 %264
      %268 = vset.pattern.permute.xlu0 0
      %269 = vperm.xlu0 %268, %v237
      %v270 = vpop.permute.xlu0 %269
      %273 = vset.pattern.permute.xlu0 0
      %274 = vperm.xlu0 %273, %v238
      %v275 = vpop.permute.xlu0 %274
      %278 = vset.pattern.permute.xlu0 0
      %279 = vperm.xlu0 %278, %v239
      %v280 = vpop.permute.xlu0 %279
      %283 = vset.pattern.permute.xlu0 0
      %284 = vperm.xlu0 %283, %v240
      %v285 = vpop.permute.xlu0 %284
      %288 = vset.pattern.permute.xlu0 0
      %289 = vperm.xlu0 %288, %v241
      %v290 = vpop.permute.xlu0 %289
      %vm292 = vcmask 31744
      %v294 = vsel %vm292, %v227, 0
      %v297 = vsel %vm292, %v228, 0
      %v300 = vsel %vm292, %v229, 0
      %v303 = vsel %vm292, %v230, 0
      %v306 = vsel %vm292, %v231, 0
      %vm308 = vcmask 1041408
      %v310 = vsel %vm308, %v215, 0
      %v313 = vsel %vm308, %v216, 0
      %315 = vmatprep.subr.bf16.mxu0 0
      %316 = vmatpush1.bf16.msra.mxu0 0
      %317 = vmatprep.subr.bf16.mxu0 0
      %318 = vmatpush1.bf16.msra.mxu0 0
      %319 = vmatprep.subr.bf16.mxu0 0
      %320 = vmatpush1.bf16.msra.mxu0 0
      %321 = vmatprep.subr.bf16.mxu0 0
      %322 = vmatpush1.bf16.msra.mxu0 0
      %323 = vmatprep.subr.bf16.mxu0 0
      %324 = vmatpush1.bf16.msra.mxu0 0
      %325 = vmatprep.subr.bf16.mxu0 0
      %326 = vmatpush1.bf16.msra.mxu0 0
      %327 = vmatprep.subr.bf16.mxu0 0
      %328 = vmatpush1.bf16.msra.mxu0 0
      %329 = vmatprep.subr.bf16.mxu0 %v313
      %330 = vmatpush1.bf16.msra.mxu0 %v310
      %331 = vmatprep.subr.bf16.mxu0 0
      %332 = vmatpush2.bf16.msra.mxu0 0
      %333 = vmatprep.subr.bf16.mxu0 0
      %334 = vmatpush2.bf16.msra.mxu0 0
      %335 = vmatprep.subr.bf16.mxu0 0
      %336 = vmatpush2.bf16.msra.mxu0 0
      %337 = vmatprep.subr.bf16.mxu0 0
      %338 = vmatpush2.bf16.msra.mxu0 0
      %339 = vmatprep.subr.bf16.mxu0 0
      %340 = vmatpush2.bf16.msra.mxu0 0
      %341 = vmatprep.subr.bf16.mxu0 0
      %342 = vmatpush2.bf16.msra.mxu0 0
      %343 = vmatprep.subr.bf16.mxu0 0
      %344 = vmatpush2.bf16.msra.mxu0 0
      %345 = vmatprep.subr.bf16.mxu0 0
      %346 = vmatpush2.bf16.msra.mxu0 0
      %347 = vmatprep.mubr.bf16.mxu0 0
      %348 = vmatmul.mubr.bf16.gmra.mxu0 %v294
      %v349 = vpop.f32.mrf.mxu0
      %v350 = vadd.f32 %v245, %v349
      %v351 = vpop.f32.mrf.mxu0
      %v352 = vadd.f32 %v245, %v351
      %v353 = vpop.f32.mrf.mxu0
      %v354 = vadd.f32 %v250, %v353
      %v355 = vpop.f32.mrf.mxu0
      %v356 = vadd.f32 %v250, %v355
      %357 = vmatprep.mubr.bf16.mxu0 0
      %358 = vmatmul.mubr.bf16.gmra.mxu0 %v297
      %v359 = vpop.f32.mrf.mxu0
      %v360 = vadd.f32 %v255, %v359
      %v361 = vpop.f32.mrf.mxu0
      %v362 = vadd.f32 %v255, %v361
      %v363 = vpop.f32.mrf.mxu0
      %v364 = vadd.f32 %v260, %v363
      %v365 = vpop.f32.mrf.mxu0
      %v366 = vadd.f32 %v260, %v365
      %367 = vmatprep.mubr.bf16.mxu0 0
      %368 = vmatmul.mubr.bf16.gmra.mxu0 %v300
      %v369 = vpop.f32.mrf.mxu0
      %v370 = vadd.f32 %v265, %v369
      %v371 = vpop.f32.mrf.mxu0
      %v372 = vadd.f32 %v265, %v371
      %v373 = vpop.f32.mrf.mxu0
      %v374 = vadd.f32 %v270, %v373
      %v375 = vpop.f32.mrf.mxu0
      %v376 = vadd.f32 %v270, %v375
      %377 = vmatprep.mubr.bf16.mxu0 0
      %378 = vmatmul.mubr.bf16.gmra.mxu0 %v303
      %v379 = vpop.f32.mrf.mxu0
      %v380 = vadd.f32 %v275, %v379
      %v381 = vpop.f32.mrf.mxu0
      %v382 = vadd.f32 %v275, %v381
      %v383 = vpop.f32.mrf.mxu0
      %v384 = vadd.f32 %v280, %v383
      %v385 = vpop.f32.mrf.mxu0
      %v386 = vadd.f32 %v280, %v385
      %387 = vmatprep.mubr.bf16.mxu0 0
      %388 = vmatmul.mubr.bf16.gmra.mxu0 %v306
      %v389 = vpop.f32.mrf.mxu0
      %v390 = vadd.f32 %v285, %v389
      %v391 = vpop.f32.mrf.mxu0
      %v392 = vadd.f32 %v285, %v391
      %v393 = vpop.f32.mrf.mxu0
      %v394 = vadd.f32 %v290, %v393
      %v395 = vpop.f32.mrf.mxu0
      %v396 = vadd.f32 %v290, %v395
      %397 = vdwg.mxu0
      %v398 = vpack.c.bf16 %v354, %v350
      %v399 = vpack.c.bf16 %v356, %v352
      %v400 = vpack.c.bf16 %v364, %v360
      %v401 = vpack.c.bf16 %v366, %v362
      %v402 = vpack.c.bf16 %v374, %v370
      %v403 = vpack.c.bf16 %v376, %v372
      %v404 = vpack.c.bf16 %v384, %v380
      %v405 = vpack.c.bf16 %v386, %v382
      %v406 = vpack.c.bf16 %v394, %v390
      %v407 = vpack.c.bf16 %v396, %v392
      %v418 = vunpack.c.l.b16 %v398
      %v419 = vunpack.c.l.b16 %v399
      %v420 = vunpack.c.h.b16 %v398
      %v421 = vunpack.c.h.b16 %v399
      %v422 = vunpack.c.l.b16 %v400
      %v423 = vunpack.c.l.b16 %v401
      %v424 = vunpack.c.h.b16 %v400
      %v425 = vunpack.c.h.b16 %v401
      %v426 = vunpack.c.l.b16 %v402
      %v427 = vunpack.c.l.b16 %v403
      %v428 = vunpack.c.h.b16 %v402
      %v429 = vunpack.c.h.b16 %v403
      %v430 = vunpack.c.l.b16 %v404
      %v431 = vunpack.c.l.b16 %v405
      %v432 = vunpack.c.h.b16 %v404
      %v433 = vunpack.c.h.b16 %v405
      %v434 = vunpack.c.l.b16 %v406
      %v435 = vunpack.c.l.b16 %v407
      %v436 = vunpack.c.h.b16 %v406
      %v437 = vunpack.c.h.b16 %v407
      %v438 = vpack.c.b16 %v419, %v418
      %v439 = vpack.c.b16 %v421, %v420
      %v440 = vpack.c.b16 %v423, %v422
      %v441 = vpack.c.b16 %v425, %v424
      %v442 = vpack.c.b16 %v427, %v426
      %v443 = vpack.c.b16 %v429, %v428
      %v444 = vpack.c.b16 %v431, %v430
      %v445 = vpack.c.b16 %v433, %v432
      %v446 = vpack.c.b16 %v435, %v434
      %v447 = vpack.c.b16 %v437, %v436
      %458 = vst [vmem:[%s208] sm:$0xff] %v438
      %459 = vst [vmem:[%s208 + $0x8] sm:$0xff] %v439
      %460 = vst [vmem:[%s208 + $0x10] sm:$0xff] %v440
      %461 = vst [vmem:[%s208 + $0x18] sm:$0xff] %v441
      %462 = vst [vmem:[%s208 + $0x20] sm:$0xff] %v442
      %463 = vst [vmem:[%s208 + $0x28] sm:$0xff] %v443
      %464 = vst [vmem:[%s208 + $0x30] sm:$0xff] %v444
      %465 = vst [vmem:[%s208 + $0x38] sm:$0xff] %v445
      %466 = vst [vmem:[%s208 + $0x40] sm:$0xff] %v446
      %467 = vst [vmem:[%s208 + $0x48] sm:$0x33] %v447
      %s468 = smul.u32 2, %s19
      %p469 = scmp.lt.s32.totalorder %s18, 1
      %s470 = scalar_select %p469, %s18, 1
      %p471 = scmp.lt.s32.totalorder %s468, 1
      %s472 = scalar_select %p471, %s468, 1
      %s473 = smul.addr %s470, 20
      %s474 = sadd.s32 %s472, %s473
      %s475 = smul.addr %s474, 4
      %s476 = scalar_lea.vmem %s3, %s475
      // Predicated region
      $region33: #{pixel_attention_forward.5} parent=31 // pred_check
        %p477 = pneg %p116
      $region34: #{pixel_attention_forward.5} parent=31 // pred_check_branch
        %479 = sbr.rel (%p477) target = $region36
      $region35: #{pixel_attention_forward.5} parent=31 // pred_region
        %s480 = smul.u32 2, %s19
      $region36: #{pixel_attention_forward.5} parent=31 // pred_fallthru
        _
    $region32: #{pixel_attention_forward.5} parent=5 // pred_fallthru
      _
    %p481 = scmp.le.s32.totalorder 2, %s9
    // Predicated region
    $region37: #{pixel_attention_forward.5} parent=5 // pred_check
      %p482 = pneg %p481
    $region38: #{pixel_attention_forward.5} parent=5 // pred_check_branch
      %484 = sbr.rel (%p482) target = $region40
    $region39: #{pixel_attention_forward.5} parent=5 // pred_region
      %s485 = ssub.s32 %s9, 2
      // Predicated region
      $region41: #{pixel_attention_forward.5} parent=39 // pred_check
        %p486 = pneg %p122
      $region42: #{pixel_attention_forward.5} parent=39 // pred_check_branch
        %488 = sbr.rel (%p486) target = $region44
      $region43: #{pixel_attention_forward.5} parent=39 // pred_region
        %s489 = smul.u32 2, %s21
        %p490 = scmp.lt.s32.totalorder %s20, 1
        %s491 = scalar_select %p490, %s20, 1
        %p492 = scmp.lt.s32.totalorder %s489, 1
        %s493 = scalar_select %p492, %s489, 1
        %s494 = smul.addr %s491, 20
        %s495 = sadd.s32 %s493, %s494
        %s496 = smul.addr %s495, 4
        %s497 = scalar_lea.vmem %s3, %s496
      $region44: #{pixel_attention_forward.5} parent=39 // pred_fallthru
        _
    $region40: #{pixel_attention_forward.5} parent=5 // pred_fallthru
      _
  $region6: #{pixel_attention_forward.5} parent=0 // loop_footer
    %s13 = sadd.s32 1, %s9
  $region7: #{pixel_attention_forward.5} parent=0 // loop_footer_branch
    %8 = sbr.rel target = $region3
  $region8: #{pixel_attention_forward.5} parent=0 // loop_exit
    _

// kernel: pixel_attention_forward.6
$region0: #{pixel_attention_forward.6}
  #allocation0 [shape = 'u32[]', space=smem, size = 0x4, offset = 0x4, fixed_abs, tag = 'smem constant byte address 0x4 - core index']
  #allocation1 [shape = 'u32[144,128]{1,0:T(1,128)}', space=vmem, size = 0x12000, scoped, tag = 'internal scratch']
  %s0 = inlined_call_operand.vmem [shape: bf16[9,4,512], index: 0, kind: input, shape index: {}]
  %s1 = inlined_call_operand.vmem [shape: bf16[9,4,512], index: 1, kind: input, shape index: {}]
  %s2 = inlined_call_operand.vmem [shape: bf16[4,512], index: 2, kind: input, shape index: {}]
  %s3 = inlined_call_operand.vmem [shape: bf16[9,512], index: 3, kind: input, shape index: {}]
  %s4 = inlined_call_operand.vmem [shape: bf16[4,512], index: 4, kind: output, shape index: {}]
  %s5 = sld [smem:[#allocation0]]
  $region169: #{pixel_attention_forward.6} parent=0
    _
  %s7 = ssub.s32 1, %s5
  %s8 = scalar_select 0, %s7, %s5
  $region1: #{pixel_attention_forward.6} parent=0
    #allocation2 [shape = 'u8[36864]{0}', space=vmem, size = 0x9000, scoped, tag = 'input window, operand 0']
    #allocation3 [shape = 'u8[36864]{0}', space=vmem, size = 0x9000, scoped, tag = 'input window, operand 1']
    #allocation4 [shape = 'u8[16384]{0}', space=vmem, size = 0x4000, scoped, tag = 'input window, operand 3']
    loop: start=0, step=1, limit=4
    $region2: #{pixel_attention_forward.6} parent=1 // loop_pre_header
      _
    $region3: #{pixel_attention_forward.6} parent=1 // loop_header
      %s10 = sphi 0, %s14
      %p11 = scmp.ge.s32.totalorder %s10, 4
      %s20 = sphi 0, %s22
      %s23 = sphi 0, %s20
      %s24 = sphi 0, %s23
      %s40 = sphi 0, %s24
      %s46 = sphi 0, %s48
      %s49 = sphi 0, %s46
      %s50 = sphi 0, %s49
      %s66 = sphi 0, %s50
      %s72 = sphi 0, %s74
      %s75 = sphi 0, %s72
      %s76 = sphi 0, %s75
      %s92 = sphi 0, %s76
      %s98 = sphi 0, %s100
      %s101 = sphi 0, %s98
      %s102 = sphi 0, %s101
      %s118 = sphi 0, %s102
      %s124 = sphi 0, %s126
      %s127 = sphi 0, %s124
      %s128 = sphi 0, %s127
      %s144 = sphi 0, %s128
    $region4: #{pixel_attention_forward.6} parent=1 // loop_header_branch
      %13 = sbr.rel (%p11) target = $region8
    $region5: #{pixel_attention_forward.6} parent=1 // loop_body
      %s15 = ssub.s32 %s10, 1
      %s16 = ssub.s32 %s10, 2
      %s17 = sadd.s32 %s10, 1
      %s18 = ssub.s32 %s10, %s17
      %p19 = scmp.eq.s32.totalorder %s18, 0
      %s21 = sadd.s32 %s20, 1
      %s22 = scalar_select %p19, %s20, %s21
      %p25 = pneg %p19
      %p26 = scmp.eq.s32.totalorder %s10, 1
      %p27 = por %p25, %p26
      %p28 = scmp.ne.s32.totalorder %s20, %s23
      %p29 = scmp.eq.s32.totalorder %s10, 0
      %p30 = por %p28, %p29
      %p31 = scmp.ne.s32.totalorder %s20, %s23
      %p32 = scmp.eq.s32.totalorder %s15, 1
      %p33 = por %p31, %p32
      %p34 = scmp.ne.s32.totalorder %s23, %s24
      %p35 = scmp.eq.s32.totalorder %s15, 0
      %p36 = por %p34, %p35
      %p37 = scmp.ne.s32.totalorder %s23, %s24
      %p38 = scmp.eq.s32.totalorder %s16, 1
      %p39 = por %p37, %p38
      %p41 = scmp.ne.s32.totalorder %s24, %s40
      %p42 = scmp.eq.s32.totalorder %s16, 0
      %p43 = por %p41, %p42
      %s44 = ssub.s32 %s10, %s17
      %p45 = scmp.eq.s32.totalorder %s44, 0
      %s47 = sadd.s32 %s46, 1
      %s48 = scalar_select %p45, %s46, %s47
      %p51 = pneg %p45
      %p52 = scmp.eq.s32.totalorder %s10, 1
      %p53 = por %p51, %p52
      %p54 = scmp.ne.s32.totalorder %s46, %s49
      %p55 = scmp.eq.s32.totalorder %s10, 0
      %p56 = por %p54, %p55
      %p57 = scmp.ne.s32.totalorder %s46, %s49
      %p58 = scmp.eq.s32.totalorder %s15, 1
      %p59 = por %p57, %p58
      %p60 = scmp.ne.s32.totalorder %s49, %s50
      %p61 = scmp.eq.s32.totalorder %s15, 0
      %p62 = por %p60, %p61
      %p63 = scmp.ne.s32.totalorder %s49, %s50
      %p64 = scmp.eq.s32.totalorder %s16, 1
      %p65 = por %p63, %p64
      %p67 = scmp.ne.s32.totalorder %s50, %s66
      %p68 = scmp.eq.s32.totalorder %s16, 0
      %p69 = por %p67, %p68
      %s70 = ssub.s32 %s10, %s17
      %p71 = scmp.eq.s32.totalorder %s70, 0
      %s73 = sadd.s32 %s72, 1
      %s74 = scalar_select %p71, %s72, %s73
      %p77 = pneg %p71
      %p78 = scmp.eq.s32.totalorder %s10, 1
      %p79 = por %p77, %p78
      %p80 = scmp.ne.s32.totalorder %s72, %s75
      %p81 = scmp.eq.s32.totalorder %s10, 0
      %p82 = por %p80, %p81
      %p83 = scmp.ne.s32.totalorder %s72, %s75
      %p84 = scmp.eq.s32.totalorder %s15, 1
      %p85 = por %p83, %p84
      %p86 = scmp.ne.s32.totalorder %s75, %s76
      %p87 = scmp.eq.s32.totalorder %s15, 0
      %p88 = por %p86, %p87
      %p89 = scmp.ne.s32.totalorder %s75, %s76
      %p90 = scmp.eq.s32.totalorder %s16, 1
      %p91 = por %p89, %p90
      %p93 = scmp.ne.s32.totalorder %s76, %s92
      %p94 = scmp.eq.s32.totalorder %s16, 0
      %p95 = por %p93, %p94
      %s96 = ssub.s32 %s10, %s17
      %p97 = scmp.eq.s32.totalorder %s96, 0
      %s99 = sadd.s32 %s98, 1
      %s100 = scalar_select %p97, %s98, %s99
      %p103 = pneg %p97
      %p104 = scmp.eq.s32.totalorder %s10, 1
      %p105 = por %p103, %p104
      %p106 = scmp.ne.s32.totalorder %s98, %s101
      %p107 = scmp.eq.s32.totalorder %s10, 0
      %p108 = por %p106, %p107
      %p109 = scmp.ne.s32.totalorder %s98, %s101
      %p110 = scmp.eq.s32.totalorder %s15, 1
      %p111 = por %p109, %p110
      %p112 = scmp.ne.s32.totalorder %s101, %s102
      %p113 = scmp.eq.s32.totalorder %s15, 0
      %p114 = por %p112, %p113
      %p115 = scmp.ne.s32.totalorder %s101, %s102
      %p116 = scmp.eq.s32.totalorder %s16, 1
      %p117 = por %p115, %p116
      %p119 = scmp.ne.s32.totalorder %s102, %s118
      %p120 = scmp.eq.s32.totalorder %s16, 0
      %p121 = por %p119, %p120
      %s122 = ssub.s32 %s10, %s17
      %p123 = scmp.eq.s32.totalorder %s122, 0
      %s125 = sadd.s32 %s124, 1
      %s126 = scalar_select %p123, %s124, %s125
      %p129 = pneg %p123
      %p130 = scmp.eq.s32.totalorder %s10, 1
      %p131 = por %p129, %p130
      %p132 = scmp.ne.s32.totalorder %s124, %s127
      %p133 = scmp.eq.s32.totalorder %s10, 0
      %p134 = por %p132, %p133
      %p135 = scmp.ne.s32.totalorder %s124, %s127
      %p136 = scmp.eq.s32.totalorder %s15, 1
      %p137 = por %p135, %p136
      %p138 = scmp.ne.s32.totalorder %s127, %s128
      %p139 = scmp.eq.s32.totalorder %s15, 0
      %p140 = por %p138, %p139
      %p141 = scmp.ne.s32.totalorder %s127, %s128
      %p142 = scmp.eq.s32.totalorder %s16, 1
      %p143 = por %p141, %p142
      %p145 = scmp.ne.s32.totalorder %s128, %s144
      %p146 = scmp.eq.s32.totalorder %s16, 0
      %p147 = por %p145, %p146
      %p148 = scmp.le.s32.totalorder 1, %s10
      %p149 = scmp.lt.s32.totalorder %s10, 3
      %p150 = pnand %p148, %p149
      %p151 = pneg %p150
      // Predicated region
      $region9: #{pixel_attention_forward.6} parent=5 // pred_check
        _
      $region10: #{pixel_attention_forward.6} parent=5 // pred_check_branch
        %153 = sbr.rel (%p150) target = $region12
      $region11: #{pixel_attention_forward.6} parent=5 // pred_region
        %s154 = ssub.s32 %s10, 1
      $region12: #{pixel_attention_forward.6} parent=5 // pred_fallthru
        _
      %p155 = scmp.lt.s32.totalorder %s10, 2
      // Predicated region
      $region13: #{pixel_attention_forward.6} parent=5 // pred_check
        %p156 = pneg %p155
      $region14: #{pixel_attention_forward.6} parent=5 // pred_check_branch
        %158 = sbr.rel (%p156) target = $region16
      $region15: #{pixel_attention_forward.6} parent=5 // pred_region
        // Predicated region
        $region17: #{pixel_attention_forward.6} parent=15 // pred_check
          %p159 = pneg %p30
        $region18: #{pixel_attention_forward.6} parent=15 // pred_check_branch
          %161 = sbr.rel (%p159) target = $region20
        $region19: #{pixel_attention_forward.6} parent=15 // pred_region
          %s162 = sand.u32 %s20, 1
          %s163 = sand.u32 %s20, 1
          %s164 = smul.addr %s163, 36
          %s165 = scalar_lea.vmem [#allocation2], %s164
          %s166 = smul.u32 2, %s10
          %s167 = smul.addr %s166, 2
          %s168 = scalar_lea.vmem %s0, %s167
          // Predicated region
          $region21: #{pixel_attention_forward.6} parent=19 // pred_check
            _
          $region22: #{pixel_attention_forward.6} parent=19 // pred_check_branch
            %170 = sbr.rel (0) target = $region24
          $region23: #{pixel_attention_forward.6} parent=19 // pred_region
            // Predicated region
            $region25: #{pixel_attention_forward.6} parent=23 // pred_check
              _
            $region26: #{pixel_attention_forward.6} parent=23 // pred_check_branch
              %172 = sbr.rel target = $region28
            $region27: #{pixel_attention_forward.6} parent=23 // pred_region
              // Predicated region
              $region40: #{pixel_attention_forward.6} parent=27 // pred_check
                _
              $region41: #{pixel_attention_forward.6} parent=27 // pred_check_branch
                %204 = sbr.rel (0) target = $region43
              $region42: #{pixel_attention_forward.6} parent=27 // pred_region
                loop: start=0, step=1, limit=1
                $region44: #{pixel_attention_forward.6} parent=42 // loop_pre_header
                  _
                $region45: #{pixel_attention_forward.6} parent=42 // loop_header
                  %s206 = sphi 0, %s210
                  %p207 = scmp.ge.s32.totalorder %s206, 1
                  %s211 = sphi %s168, %s168
                  %s212 = sphi %s165, %s165
                $region46: #{pixel_attention_forward.6} parent=42 // loop_header_branch
                  %209 = sbr.rel (%p207) target = $region50
                $region47: #{pixel_attention_forward.6} parent=42 // loop_body
                  _
                $region48: #{pixel_attention_forward.6} parent=42 // loop_footer
                  %s210 = sadd.s32 1, %s206
                $region49: #{pixel_attention_forward.6} parent=42 // loop_footer_branch
                  %205 = sbr.rel target = $region45
                $region50: #{pixel_attention_forward.6} parent=42 // loop_exit
                  _
                %s214 = ssub.s32 16, 1
                loop: start=0, step=1, limit=1
                $region51: #{pixel_attention_forward.6} parent=42 // loop_pre_header
                  _
                $region52: #{pixel_attention_forward.6} parent=42 // loop_header
                  %s216 = sphi 0, %s220
                  %p217 = scmp.ge.s32.totalorder %s216, 1
                  %s221 = sphi %s168, %s168
                  %s222 = sphi %s165, %s165
                $region53: #{pixel_attention_forward.6} parent=42 // loop_header_branch
                  %219 = sbr.rel (%p217) target = $region57
                $region54: #{pixel_attention_forward.6} parent=42 // loop_body
                  %v223 = vld [vmem:[%s221] sm:%s214]
                  %224 = vst [vmem:[%s222] sm:%s214] %v223
                  %v225 = vld [vmem:[%s221 + $0x8] sm:%s214]
                  %226 = vst [vmem:[%s222 + $0x4] sm:%s214] %v225
                  %v227 = vld [vmem:[%s221 + $0x10] sm:%s214]
                  %228 = vst [vmem:[%s222 + $0x8] sm:%s214] %v227
                  %v229 = vld [vmem:[%s221 + $0x18] sm:%s214]
                  %230 = vst [vmem:[%s222 + $0xc] sm:%s214] %v229
                  %v231 = vld [vmem:[%s221 + $0x20] sm:%s214]
                  %232 = vst [vmem:[%s222 + $0x10] sm:%s214] %v231
                  %v233 = vld [vmem:[%s221 + $0x28] sm:%s214]
                  %234 = vst [vmem:[%s222 + $0x14] sm:%s214] %v233
                  %v235 = vld [vmem:[%s221 + $0x30] sm:%s214]
                  %236 = vst [vmem:[%s222 + $0x18] sm:%s214] %v235
                  %v237 = vld [vmem:[%s221 + $0x38] sm:%s214]
                  %238 = vst [vmem:[%s222 + $0x1c] sm:%s214] %v237
                  %v239 = vld [vmem:[%s221 + $0x40] sm:%s214]
                  %240 = vst [vmem:[%s222 + $0x20] sm:%s214] %v239
                $region55: #{pixel_attention_forward.6} parent=42 // loop_footer
                  %s220 = sadd.s32 1, %s216
                $region56: #{pixel_attention_forward.6} parent=42 // loop_footer_branch
                  %215 = sbr.rel target = $region52
                $region57: #{pixel_attention_forward.6} parent=42 // loop_exit
                  _
              $region43: #{pixel_attention_forward.6} parent=27 // pred_fallthru
                _
            $region28: #{pixel_attention_forward.6} parent=23 // pred_fallthru
              _
            // Predicated region
            $region29: #{pixel_attention_forward.6} parent=23 // pred_check
              _
            $region30: #{pixel_attention_forward.6} parent=23 // pred_check_branch
              %174 = sbr.rel (0) target = $region32
            $region31: #{pixel_attention_forward.6} parent=23 // pred_region
              %s176 = ssub.s32 16, 1
              loop: start=0, step=1, limit=1
              $region33: #{pixel_attention_forward.6} parent=31 // loop_pre_header
                _
              $region34: #{pixel_attention_forward.6} parent=31 // loop_header
                %s178 = sphi 0, %s182
                %p179 = scmp.ge.s32.totalorder %s178, 1
                %s183 = sphi %s168, %s168
                %s184 = sphi %s165, %s165
              $region35: #{pixel_attention_forward.6} parent=31 // loop_header_branch
                %181 = sbr.rel (%p179) target = $region39
              $region36: #{pixel_attention_forward.6} parent=31 // loop_body
                %v185 = vld [vmem:[%s183] sm:%s176]
                %186 = vst [vmem:[%s184] sm:%s176] %v185
                %v187 = vld [vmem:[%s183 + $0x8] sm:%s176]
                %188 = vst [vmem:[%s184 + $0x4] sm:%s176] %v187
                %v189 = vld [vmem:[%s183 + $0x10] sm:%s176]
                %190 = vst [vmem:[%s184 + $0x8] sm:%s176] %v189
                %v191 = vld [vmem:[%s183 + $0x18] sm:%s176]
                %192 = vst [vmem:[%s184 + $0xc] sm:%s176] %v191
                %v193 = vld [vmem:[%s183 + $0x20] sm:%s176]
                %194 = vst [vmem:[%s184 + $0x10] sm:%s176] %v193
                %v195 = vld [vmem:[%s183 + $0x28] sm:%s176]
                %196 = vst [vmem:[%s184 + $0x14] sm:%s176] %v195
                %v197 = vld [vmem:[%s183 + $0x30] sm:%s176]
                %198 = vst [vmem:[%s184 + $0x18] sm:%s176] %v197
                %v199 = vld [vmem:[%s183 + $0x38] sm:%s176]
                %200 = vst [vmem:[%s184 + $0x1c] sm:%s176] %v199
                %v201 = vld [vmem:[%s183 + $0x40] sm:%s176]
                %202 = vst [vmem:[%s184 + $0x20] sm:%s176] %v201
              $region37: #{pixel_attention_forward.6} parent=31 // loop_footer
                %s182 = sadd.s32 1, %s178
              $region38: #{pixel_attention_forward.6} parent=31 // loop_footer_branch
                %177 = sbr.rel target = $region34
              $region39: #{pixel_attention_forward.6} parent=31 // loop_exit
                _
            $region32: #{pixel_attention_forward.6} parent=23 // pred_fallthru
              _
          $region24: #{pixel_attention_forward.6} parent=19 // pred_fallthru
            _
          %241 = vnop
        $region20: #{pixel_attention_forward.6} parent=15 // pred_fallthru
          _
        // Predicated region
        $region58: #{pixel_attention_forward.6} parent=15 // pred_check
          %p242 = pneg %p56
        $region59: #{pixel_attention_forward.6} parent=15 // pred_check_branch
          %244 = sbr.rel (%p242) target = $region61
        $region60: #{pixel_attention_forward.6} parent=15 // pred_region
          %s245 = sand.u32 %s46, 1
          %s246 = sand.u32 %s46, 1
          %s247 = smul.addr %s246, 36
          %s248 = scalar_lea.vmem [#allocation3], %s247
          %s249 = smul.u32 2, %s10
          %s250 = smul.addr %s249, 2
          %s251 = scalar_lea.vmem %s1, %s250
          // Predicated region
          $region62: #{pixel_attention_forward.6} parent=60 // pred_check
            _
          $region63: #{pixel_attention_forward.6} parent=60 // pred_check_branch
            %253 = sbr.rel (0) target = $region65
          $region64: #{pixel_attention_forward.6} parent=60 // pred_region
            // Predicated region
            $region66: #{pixel_attention_forward.6} parent=64 // pred_check
              _
            $region67: #{pixel_attention_forward.6} parent=64 // pred_check_branch
              %255 = sbr.rel target = $region69
            $region68: #{pixel_attention_forward.6} parent=64 // pred_region
              // Predicated region
              $region81: #{pixel_attention_forward.6} parent=68 // pred_check
                _
              $region82: #{pixel_attention_forward.6} parent=68 // pred_check_branch
                %287 = sbr.rel (0) target = $region84
              $region83: #{pixel_attention_forward.6} parent=68 // pred_region
                loop: start=0, step=1, limit=1
                $region85: #{pixel_attention_forward.6} parent=83 // loop_pre_header
                  _
                $region86: #{pixel_attention_forward.6} parent=83 // loop_header
                  %s289 = sphi 0, %s293
                  %p290 = scmp.ge.s32.totalorder %s289, 1
                  %s294 = sphi %s251, %s251
                  %s295 = sphi %s248, %s248
                $region87: #{pixel_attention_forward.6} parent=83 // loop_header_branch
                  %292 = sbr.rel (%p290) target = $region91
                $region88: #{pixel_attention_forward.6} parent=83 // loop_body
                  _
                $region89: #{pixel_attention_forward.6} parent=83 // loop_footer
                  %s293 = sadd.s32 1, %s289
                $region90: #{pixel_attention_forward.6} parent=83 // loop_footer_branch
                  %288 = sbr.rel target = $region86
                $region91: #{pixel_attention_forward.6} parent=83 // loop_exit
                  _
                %s297 = ssub.s32 16, 1
                loop: start=0, step=1, limit=1
                $region92: #{pixel_attention_forward.6} parent=83 // loop_pre_header
                  _
                $region93: #{pixel_attention_forward.6} parent=83 // loop_header
                  %s299 = sphi 0, %s303
                  %p300 = scmp.ge.s32.totalorder %s299, 1
                  %s304 = sphi %s251, %s251
                  %s305 = sphi %s248, %s248
                $region94: #{pixel_attention_forward.6} parent=83 // loop_header_branch
                  %302 = sbr.rel (%p300) target = $region98
                $region95: #{pixel_attention_forward.6} parent=83 // loop_body
                  %v306 = vld [vmem:[%s304] sm:%s297]
                  %307 = vst [vmem:[%s305] sm:%s297] %v306
                  %v308 = vld [vmem:[%s304 + $0x8] sm:%s297]
                  %309 = vst [vmem:[%s305 + $0x4] sm:%s297] %v308
                  %v310 = vld [vmem:[%s304 + $0x10] sm:%s297]
                  %311 = vst [vmem:[%s305 + $0x8] sm:%s297] %v310
                  %v312 = vld [vmem:[%s304 + $0x18] sm:%s297]
                  %313 = vst [vmem:[%s305 + $0xc] sm:%s297] %v312
                  %v314 = vld [vmem:[%s304 + $0x20] sm:%s297]
                  %315 = vst [vmem:[%s305 + $0x10] sm:%s297] %v314
                  %v316 = vld [vmem:[%s304 + $0x28] sm:%s297]
                  %317 = vst [vmem:[%s305 + $0x14] sm:%s297] %v316
                  %v318 = vld [vmem:[%s304 + $0x30] sm:%s297]
                  %319 = vst [vmem:[%s305 + $0x18] sm:%s297] %v318
                  %v320 = vld [vmem:[%s304 + $0x38] sm:%s297]
                  %321 = vst [vmem:[%s305 + $0x1c] sm:%s297] %v320
                  %v322 = vld [vmem:[%s304 + $0x40] sm:%s297]
                  %323 = vst [vmem:[%s305 + $0x20] sm:%s297] %v322
                $region96: #{pixel_attention_forward.6} parent=83 // loop_footer
                  %s303 = sadd.s32 1, %s299
                $region97: #{pixel_attention_forward.6} parent=83 // loop_footer_branch
                  %298 = sbr.rel target = $region93
                $region98: #{pixel_attention_forward.6} parent=83 // loop_exit
                  _
              $region84: #{pixel_attention_forward.6} parent=68 // pred_fallthru
                _
            $region69: #{pixel_attention_forward.6} parent=64 // pred_fallthru
              _
            // Predicated region
            $region70: #{pixel_attention_forward.6} parent=64 // pred_check
              _
            $region71: #{pixel_attention_forward.6} parent=64 // pred_check_branch
              %257 = sbr.rel (0) target = $region73
            $region72: #{pixel_attention_forward.6} parent=64 // pred_region
              %s259 = ssub.s32 16, 1
              loop: start=0, step=1, limit=1
              $region74: #{pixel_attention_forward.6} parent=72 // loop_pre_header
                _
              $region75: #{pixel_attention_forward.6} parent=72 // loop_header
                %s261 = sphi 0, %s265
                %p262 = scmp.ge.s32.totalorder %s261, 1
                %s266 = sphi %s251, %s251
                %s267 = sphi %s248, %s248
              $region76: #{pixel_attention_forward.6} parent=72 // loop_header_branch
                %264 = sbr.rel (%p262) target = $region80
              $region77: #{pixel_attention_forward.6} parent=72 // loop_body
                %v268 = vld [vmem:[%s266] sm:%s259]
                %269 = vst [vmem:[%s267] sm:%s259] %v268
                %v270 = vld [vmem:[%s266 + $0x8] sm:%s259]
                %271 = vst [vmem:[%s267 + $0x4] sm:%s259] %v270
                %v272 = vld [vmem:[%s266 + $0x10] sm:%s259]
                %273 = vst [vmem:[%s267 + $0x8] sm:%s259] %v272
                %v274 = vld [vmem:[%s266 + $0x18] sm:%s259]
                %275 = vst [vmem:[%s267 + $0xc] sm:%s259] %v274
                %v276 = vld [vmem:[%s266 + $0x20] sm:%s259]
                %277 = vst [vmem:[%s267 + $0x10] sm:%s259] %v276
                %v278 = vld [vmem:[%s266 + $0x28] sm:%s259]
                %279 = vst [vmem:[%s267 + $0x14] sm:%s259] %v278
                %v280 = vld [vmem:[%s266 + $0x30] sm:%s259]
                %281 = vst [vmem:[%s267 + $0x18] sm:%s259] %v280
                %v282 = vld [vmem:[%s266 + $0x38] sm:%s259]
                %283 = vst [vmem:[%s267 + $0x1c] sm:%s259] %v282
                %v284 = vld [vmem:[%s266 + $0x40] sm:%s259]
                %285 = vst [vmem:[%s267 + $0x20] sm:%s259] %v284
              $region78: #{pixel_attention_forward.6} parent=72 // loop_footer
                %s265 = sadd.s32 1, %s261
              $region79: #{pixel_attention_forward.6} parent=72 // loop_footer_branch
                %260 = sbr.rel target = $region75
              $region80: #{pixel_attention_forward.6} parent=72 // loop_exit
                _
            $region73: #{pixel_attention_forward.6} parent=64 // pred_fallthru
              _
          $region65: #{pixel_attention_forward.6} parent=60 // pred_fallthru
            _
          %324 = vnop
        $region61: #{pixel_attention_forward.6} parent=15 // pred_fallthru
          _
        // Predicated region
        $region99: #{pixel_attention_forward.6} parent=15 // pred_check
          %p325 = pneg %p82
        $region100: #{pixel_attention_forward.6} parent=15 // pred_check_branch
          %327 = sbr.rel (%p325) target = $region102
        $region101: #{pixel_attention_forward.6} parent=15 // pred_region
          %s328 = smul.u32 2, %s10
          %p329 = scmp.lt.s32.totalorder %s328, 3
          %s330 = scalar_select %p329, %s328, 3
          %s331 = smul.addr %s330, 2
          %s332 = scalar_lea.vmem %s2, %s331
          %s333 = smul.u32 2, %s10
        $region102: #{pixel_attention_forward.6} parent=15 // pred_fallthru
          _
        // Predicated region
        $region103: #{pixel_attention_forward.6} parent=15 // pred_check
          %p334 = pneg %p108
        $region104: #{pixel_attention_forward.6} parent=15 // pred_check_branch
          %336 = sbr.rel (%p334) target = $region106
        $region105: #{pixel_attention_forward.6} parent=15 // pred_region
          %s337 = sand.u32 %s98, 1
          %s338 = sand.u32 %s98, 1
          %s339 = smul.addr %s338, 16
          %s340 = scalar_lea.vmem [#allocation4], %s339
          %s341 = smul.u32 2, %s10
          %s342 = smul.addr %s341, 4
          %s343 = scalar_lea.vmem %s3, %s342
          // Predicated region
          $region107: #{pixel_attention_forward.6} parent=105 // pred_check
            _
          $region108: #{pixel_attention_forward.6} parent=105 // pred_check_branch
            %345 = sbr.rel (0) target = $region110
          $region109: #{pixel_attention_forward.6} parent=105 // pred_region
            // Predicated region
            $region111: #{pixel_attention_forward.6} parent=109 // pred_check
              _
            $region112: #{pixel_attention_forward.6} parent=109 // pred_check_branch
              %347 = sbr.rel (0) target = $region114
            $region113: #{pixel_attention_forward.6} parent=109 // pred_region
              // Predicated region
              $region126: #{pixel_attention_forward.6} parent=113 // pred_check
                _
              $region127: #{pixel_attention_forward.6} parent=113 // pred_check_branch
                %365 = sbr.rel (0) target = $region129
              $region128: #{pixel_attention_forward.6} parent=113 // pred_region
                loop: start=0, step=1, limit=1
                $region130: #{pixel_attention_forward.6} parent=128 // loop_pre_header
                  _
                $region131: #{pixel_attention_forward.6} parent=128 // loop_header
                  %s367 = sphi 0, %s371
                  %p368 = scmp.ge.s32.totalorder %s367, 1
                  %s372 = sphi %s343, %s343
                  %s373 = sphi %s340, %s340
                $region132: #{pixel_attention_forward.6} parent=128 // loop_header_branch
                  %370 = sbr.rel (%p368) target = $region136
                $region133: #{pixel_attention_forward.6} parent=128 // loop_body
                  %v374 = vld [vmem:[%s372] sm:$0xff]
                  %375 = vst [vmem:[%s373] sm:$0xff] %v374
                  %v376 = vld [vmem:[%s372 + $0x10] sm:$0xff]
                  %377 = vst [vmem:[%s373 + $0x8] sm:$0xff] %v376
                $region134: #{pixel_attention_forward.6} parent=128 // loop_footer
                  %s371 = sadd.s32 1, %s367
                $region135: #{pixel_attention_forward.6} parent=128 // loop_footer_branch
                  %366 = sbr.rel target = $region131
                $region136: #{pixel_attention_forward.6} parent=128 // loop_exit
                  _
              $region129: #{pixel_attention_forward.6} parent=113 // pred_fallthru
                _
              // Predicated region
              $region137: #{pixel_attention_forward.6} parent=113 // pred_check
                _
              $region138: #{pixel_attention_forward.6} parent=113 // pred_check_branch
                %379 = sbr.rel target = $region140
              $region139: #{pixel_attention_forward.6} parent=113 // pred_region
                _
              $region140: #{pixel_attention_forward.6} parent=113 // pred_fallthru
                _
            $region114: #{pixel_attention_forward.6} parent=109 // pred_fallthru
              _
            // Predicated region
            $region115: #{pixel_attention_forward.6} parent=109 // pred_check
              _
            $region116: #{pixel_attention_forward.6} parent=109 // pred_check_branch
              %349 = sbr.rel target = $region118
            $region117: #{pixel_attention_forward.6} parent=109 // pred_region
              %s351 = ssub.s32 256, 1
              loop: start=0, step=1, limit=1
              $region119: #{pixel_attention_forward.6} parent=117 // loop_pre_header
                _
              $region120: #{pixel_attention_forward.6} parent=117 // loop_header
                %s353 = sphi 0, %s357
                %p354 = scmp.ge.s32.totalorder %s353, 1
                %s358 = sphi %s343, %s343
                %s359 = sphi %s340, %s340
              $region121: #{pixel_attention_forward.6} parent=117 // loop_header_branch
                %356 = sbr.rel (%p354) target = $region125
              $region122: #{pixel_attention_forward.6} parent=117 // loop_body
                %v360 = vld [vmem:[%s358] sm:%s351]
                %361 = vst [vmem:[%s359] sm:%s351] %v360
                %v362 = vld [vmem:[%s358 + $0x10] sm:%s351]
                %363 = vst [vmem:[%s359 + $0x8] sm:%s351] %v362
              $region123: #{pixel_attention_forward.6} parent=117 // loop_footer
                %s357 = sadd.s32 1, %s353
              $region124: #{pixel_attention_forward.6} parent=117 // loop_footer_branch
                %352 = sbr.rel target = $region120
              $region125: #{pixel_attention_forward.6} parent=117 // loop_exit
                _
            $region118: #{pixel_attention_forward.6} parent=109 // pred_fallthru
              _
          $region110: #{pixel_attention_forward.6} parent=105 // pred_fallthru
            _
          %380 = vnop
        $region106: #{pixel_attention_forward.6} parent=15 // pred_fallthru
          _
      $region16: #{pixel_attention_forward.6} parent=5 // pred_fallthru
        _
      %p381 = scmp.le.s32.totalorder 1, %s10
      %p382 = scmp.lt.s32.totalorder %s10, 3
      %p383 = pnand %p381, %p382
      %p384 = pneg %p383
      // Predicated region
      $region141: #{pixel_attention_forward.6} parent=5 // pred_check
        _
      $region142: #{pixel_attention_forward.6} parent=5 // pred_check_branch
        %386 = sbr.rel (%p383) target = $region144
      $region143: #{pixel_attention_forward.6} parent=5 // pred_region
        %s387 = ssub.s32 %s10, 1
        %s388 = sand.u32 %s23, 1
        %s389 = sand.u32 %s23, 1
        %s390 = smul.addr %s389, 36
        %s391 = scalar_lea.vmem [#allocation2], %s390
        // Predicated region
        $region145: #{pixel_attention_forward.6} parent=143 // pred_check
          %p392 = pneg %p36
        $region146: #{pixel_attention_forward.6} parent=143 // pred_check_branch
          %394 = sbr.rel (%p392) target = $region148
        $region147: #{pixel_attention_forward.6} parent=143 // pred_region
          _
        $region148: #{pixel_attention_forward.6} parent=143 // pred_fallthru
          _
        %s395 = sand.u32 %s49, 1
        %s396 = sand.u32 %s49, 1
        %s397 = smul.addr %s396, 36
        %s398 = scalar_lea.vmem [#allocation3], %s397
        // Predicated region
        $region149: #{pixel_attention_forward.6} parent=143 // pred_check
          %p399 = pneg %p62
        $region150: #{pixel_attention_forward.6} parent=143 // pred_check_branch
          %401 = sbr.rel (%p399) target = $region152
        $region151: #{pixel_attention_forward.6} parent=143 // pred_region
          _
        $region152: #{pixel_attention_forward.6} parent=143 // pred_fallthru
          _
        %s402 = sand.u32 %s101, 1
        %s403 = sand.u32 %s101, 1
        %s404 = smul.addr %s403, 16
        %s405 = scalar_lea.vmem [#allocation4], %s404
        // Predicated region
        $region153: #{pixel_attention_forward.6} parent=143 // pred_check
          %p406 = pneg %p114
        $region154: #{pixel_attention_forward.6} parent=143 // pred_check_branch
          %408 = sbr.rel (%p406) target = $region156
        $region155: #{pixel_attention_forward.6} parent=143 // pred_region
          _
        $region156: #{pixel_attention_forward.6} parent=143 // pred_fallthru
          _
        %s409 = sand.u32 %s23, 1
        %s410 = sand.u32 %s23, 1
        %s411 = smul.addr %s410, 36
        %s412 = scalar_lea.vmem [#allocation2], %s411
        %p413 = pneg %p36
        %p414 = pneg %p33
        %s415 = sand.u32 %s49, 1
        %s416 = sand.u32 %s49, 1
        %s417 = smul.addr %s416, 36
        %s418 = scalar_lea.vmem [#allocation3], %s417
        %p419 = pneg %p62
        %p420 = pneg %p59
        %s421 = smul.u32 2, %s15
        %p422 = scmp.lt.s32.totalorder %s421, 3
        %s423 = scalar_select %p422, %s421, 3
        %s424 = smul.addr %s423, 2
        %s425 = scalar_lea.vmem %s2, %s424
        %p426 = pneg %p88
        %p427 = pneg %p85
        %s428 = sand.u32 %s101, 1
        %s429 = sand.u32 %s101, 1
        %s430 = smul.addr %s429, 16
        %s431 = scalar_lea.vmem [#allocation4], %s430
        %p432 = pneg %p114
        %p433 = pneg %p111
        %p434 = pneg %p140
        %p435 = pneg %p137
        %s436 = smul.u32 2, %s15
        %p437 = scmp.lt.s32.totalorder %s436, 3
        %s438 = scalar_select %p437, %s436, 3
        %s439 = smul.addr %s438, 2
        %s440 = scalar_lea.vmem %s4, %s439
        %s441 = smul.u32 2, %s15
        %s442 = smul.u32 2, %s15
        %s443 = smul.u32 2, %s15
        %p444 = scmp.lt.s32.totalorder %s443, 3
        %s445 = scalar_select %p444, %s443, 3
        %s446 = smul.addr %s445, 2
        %s447 = scalar_lea.vmem %s2, %s446
        %s448 = smul.u32 2, %s15
        %s449 = smul.u32 2, %s15
        %s450 = smul.u32 2, %s15
        %p451 = scmp.lt.s32.totalorder %s450, 3
        %s452 = scalar_select %p451, %s450, 3
        %s453 = smul.addr %s452, 2
        %s454 = scalar_lea.vmem %s4, %s453
        %s455 = smul.u32 2, %s15
        %v456 = vld [vmem:[%s447] sm:$0xf]
        %v457 = vunpack.c.l.bf16 %v456
        %v458 = vld [vmem:[%s391] sm:$0xf]
        %v459 = vunpack.c.l.bf16 %v458
        %v460 = vmul.f32 %v459, %v457
        %v462 = vcombine.high %v460, %v460
        %vm464 = vcmask 1043456
        %v465 = vsel %vm464, %v460, 0.0
        %v466 = vrot.slane %v465, 4
        %v467 = vadd.f32 %v465, %v466
        %v468 = vrot.slane %v467, 2
        %v469 = vadd.f32 %v467, %v468
        %v470 = vrot.slane %v469, 1
        %v471 = vadd.f32 %v469, %v470
        %v472 = vsel %vm464, %v462, 0.0
        %v473 = vrot.slane %v472, 4
        %v474 = vadd.f32 %v472, %v473
        %v475 = vrot.slane %v474, 2
        %v476 = vadd.f32 %v474, %v475
        %v477 = vrot.slane %v476, 1
        %v478 = vadd.f32 %v476, %v477
        %s479 = scalar_lea.vmem %s391, 4 [#allocation2]
        %v480 = vld [vmem:[%s479] sm:$0xf]
        %v481 = vunpack.c.l.bf16 %v480
        %v482 = vmul.f32 %v481, %v457
        %v484 = vcombine.high %v482, %v482
        %v486 = vsel %vm464, %v482, 0.0
        %v487 = vrot.slane %v486, 4
        %v488 = vadd.f32 %v486, %v487
        %v489 = vrot.slane %v488, 2
        %v490 = vadd.f32 %v488, %v489
        %v491 = vrot.slane %v490, 1
        %v492 = vadd.f32 %v490, %v491
        %v493 = vsel %vm464, %v484, 0.0
        %v494 = vrot.slane %v493, 4
        %v495 = vadd.f32 %v493, %v494
        %v496 = vrot.slane %v495, 2
        %v497 = vadd.f32 %v495, %v496
        %v498 = vrot.slane %v497, 1
        %v499 = vadd.f32 %v497, %v498
        %s500 = scalar_lea.vmem %s391, 8 [#allocation2]
        %v501 = vld [vmem:[%s500] sm:$0xf]
        %v502 = vunpack.c.l.bf16 %v501
        %v503 = vmul.f32 %v502, %v457
        %v505 = vcombine.high %v503, %v503
        %v507 = vsel %vm464, %v503, 0.0
        %v508 = vrot.slane %v507, 4
        %v509 = vadd.f32 %v507, %v508
        %v510 = vrot.slane %v509, 2
        %v511 = vadd.f32 %v509, %v510
        %v512 = vrot.slane %v511, 1
        %v513 = vadd.f32 %v511, %v512
        %v514 = vsel %vm464, %v505, 0.0
        %v515 = vrot.slane %v514, 4
        %v516 = vadd.f32 %v514, %v515
        %v517 = vrot.slane %v516, 2
        %v518 = vadd.f32 %v516, %v517
        %v519 = vrot.slane %v518, 1
        %v520 = vadd.f32 %v518, %v519
        %s521 = scalar_lea.vmem %s391, 12 [#allocation2]
        %v522 = vld [vmem:[%s521] sm:$0xf]
        %v523 = vunpack.c.l.bf16 %v522
        %v524 = vmul.f32 %v523, %v457
        %v526 = vcombine.high %v524, %v524
        %v528 = vsel %vm464, %v524, 0.0
        %v529 = vrot.slane %v528, 4
        %v530 = vadd.f32 %v528, %v529
        %v531 = vrot.slane %v530, 2
        %v532 = vadd.f32 %v530, %v531
        %v533 = vrot.slane %v532, 1
        %v534 = vadd.f32 %v532, %v533
        %v535 = vsel %vm464, %v526, 0.0
        %v536 = vrot.slane %v535, 4
        %v537 = vadd.f32 %v535, %v536
        %v538 = vrot.slane %v537, 2
        %v539 = vadd.f32 %v537, %v538
        %v540 = vrot.slane %v539, 1
        %v541 = vadd.f32 %v539, %v540
        %s542 = scalar_lea.vmem %s391, 16 [#allocation2]
        %v543 = vld [vmem:[%s542] sm:$0xf]
        %v544 = vunpack.c.l.bf16 %v543
        %v545 = vmul.f32 %v544, %v457
        %v547 = vcombine.high %v545, %v545
        %v549 = vsel %vm464, %v545, 0.0
        %v550 = vrot.slane %v549, 4
        %v551 = vadd.f32 %v549, %v550
        %v552 = vrot.slane %v551, 2
        %v553 = vadd.f32 %v551, %v552
        %v554 = vrot.slane %v553, 1
        %v555 = vadd.f32 %v553, %v554
        %v556 = vsel %vm464, %v547, 0.0
        %v557 = vrot.slane %v556, 4
        %v558 = vadd.f32 %v556, %v557
        %v559 = vrot.slane %v558, 2
        %v560 = vadd.f32 %v558, %v559
        %v561 = vrot.slane %v560, 1
        %v562 = vadd.f32 %v560, %v561
        %s563 = scalar_lea.vmem %s391, 20 [#allocation2]
        %v564 = vld [vmem:[%s563] sm:$0xf]
        %v565 = vunpack.c.l.bf16 %v564
        %v566 = vmul.f32 %v565, %v457
        %v568 = vcombine.high %v566, %v566
        %v570 = vsel %vm464, %v566, 0.0
        %v571 = vrot.slane %v570, 4
        %v572 = vadd.f32 %v570, %v571
        %v573 = vrot.slane %v572, 2
        %v574 = vadd.f32 %v572, %v573
        %v575 = vrot.slane %v574, 1
        %v576 = vadd.f32 %v574, %v575
        %v577 = vsel %vm464, %v568, 0.0
        %v578 = vrot.slane %v577, 4
        %v579 = vadd.f32 %v577, %v578
        %v580 = vrot.slane %v579, 2
        %v581 = vadd.f32 %v579, %v580
        %v582 = vrot.slane %v581, 1
        %v583 = vadd.f32 %v581, %v582
        %s584 = scalar_lea.vmem %s391, 24 [#allocation2]
        %v585 = vld [vmem:[%s584] sm:$0xf]
        %v586 = vunpack.c.l.bf16 %v585
        %v587 = vmul.f32 %v586, %v457
        %v589 = vcombine.high %v587, %v587
        %v591 = vsel %vm464, %v587, 0.0
        %v592 = vrot.slane %v591, 4
        %v593 = vadd.f32 %v591, %v592
        %v594 = vrot.slane %v593, 2
        %v595 = vadd.f32 %v593, %v594
        %v596 = vrot.slane %v595, 1
        %v597 = vadd.f32 %v595, %v596
        %v598 = vsel %vm464, %v589, 0.0
        %v599 = vrot.slane %v598, 4
        %v600 = vadd.f32 %v598, %v599
        %v601 = vrot.slane %v600, 2
        %v602 = vadd.f32 %v600, %v601
        %v603 = vrot.slane %v602, 1
        %v604 = vadd.f32 %v602, %v603
        %s605 = scalar_lea.vmem %s391, 28 [#allocation2]
        %v606 = vld [vmem:[%s605] sm:$0xf]
        %v607 = vunpack.c.l.bf16 %v606
        %v608 = vmul.f32 %v607, %v457
        %v610 = vcombine.high %v608, %v608
        %v612 = vsel %vm464, %v608, 0.0
        %v613 = vrot.slane %v612, 4
        %v614 = vadd.f32 %v612, %v613
        %v615 = vrot.slane %v614, 2
        %v616 = vadd.f32 %v614, %v615
        %v617 = vrot.slane %v616, 1
        %v618 = vadd.f32 %v616, %v617
        %v619 = vsel %vm464, %v610, 0.0
        %v620 = vrot.slane %v619, 4
        %v621 = vadd.f32 %v619, %v620
        %v622 = vrot.slane %v621, 2
        %v623 = vadd.f32 %v621, %v622
        %v624 = vrot.slane %v623, 1
        %v625 = vadd.f32 %v623, %v624
        %s626 = scalar_lea.vmem %s391, 32 [#allocation2]
        %v627 = vld [vmem:[%s626] sm:$0xf]
        %v628 = vunpack.c.l.bf16 %v627
        %v629 = vmul.f32 %v628, %v457
        %v631 = vcombine.high %v629, %v629
        %v633 = vsel %vm464, %v629, 0.0
        %v634 = vrot.slane %v633, 4
        %v635 = vadd.f32 %v633, %v634
        %v636 = vrot.slane %v635, 2
        %v637 = vadd.f32 %v635, %v636
        %v638 = vrot.slane %v637, 1
        %v639 = vadd.f32 %v637, %v638
        %v640 = vsel %vm464, %v631, 0.0
        %v641 = vrot.slane %v640, 4
        %v642 = vadd.f32 %v640, %v641
        %v643 = vrot.slane %v642, 2
        %v644 = vadd.f32 %v642, %v643
        %v645 = vrot.slane %v644, 1
        %v646 = vadd.f32 %v644, %v645
        %vm647 = vcmask 1040384
        %v648 = vsel %vm647, %v471, %v492
        %v649 = vsel %vm647, %v478, %v499
        %vm650 = vcmask 1041408
        %v651 = vsel %vm650, %v648, %v513
        %v652 = vsel %vm650, %v649, %v520
        %vm653 = vcmask 1042432
        %v654 = vsel %vm653, %v651, %v534
        %v655 = vsel %vm653, %v652, %v541
        %v656 = vsel %vm464, %v654, %v555
        %v657 = vsel %vm464, %v655, %v562
        %vm658 = vcmask 1044480
        %v659 = vsel %vm658, %v656, %v576
        %v660 = vsel %vm658, %v657, %v583
        %vm661 = vcmask 1045504
        %v662 = vsel %vm661, %v659, %v597
        %v663 = vsel %vm661, %v660, %v604
        %vm664 = vcmask 1046528
        %v665 = vsel %vm664, %v662, %v618
        %v666 = vsel %vm664, %v663, %v625
        %v667 = vld [vmem:[%s405] sm:$0xff]
        %v668 = vld [vmem:[%s405 + $0x8] sm:$0x11]
        %v669 = vunpack.c.l.bf16 %v667
        %v670 = vunpack.c.h.bf16 %v667
        %v671 = vunpack.c.l.bf16 %v668
        %v672 = vunpack.c.h.bf16 %v668
        %v673 = vmul.f32 %v665, %v669
        %v674 = vmul.f32 %v666, %v670
        %v675 = vmul.f32 %v639, %v671
        %v676 = vmul.f32 %v646, %v672
        %v677 = vmul.f32 %v673, 0.125
        %v678 = vmul.f32 %v674, 0.125
        %v679 = vmul.f32 %v675, 0.125
        %v680 = vmul.f32 %v676, 0.125
        %v681 = vsel %vm647, %v679, -inf
        %v682 = vmax.f32 %v677, %v681
        %v683 = vrot.slane %v682, 4
        %v684 = vmax.f32 %v682, %v683
        %v685 = vrot.slane %v684, 2
        %v686 = vmax.f32 %v684, %v685
        %v687 = vrot.slane %v686, 1
        %v688 = vmax.f32 %v686, %v687
        %v689 = vsel %vm647, %v680, -inf
        %v690 = vmax.f32 %v678, %v689
        %v691 = vrot.slane %v690, 4
        %v692 = vmax.f32 %v690, %v691
        %v693 = vrot.slane %v692, 2
        %v694 = vmax.f32 %v692, %v693
        %v695 = vrot.slane %v694, 1
        %v696 = vmax.f32 %v694, %v695
        %v697 = vsub.f32 %v677, %v688
        %v698 = vsub.f32 %v678, %v696
        %v699 = vsub.f32 %v679, %v688
        %v700 = vsub.f32 %v680, %v696
        %v701 = vmul.f32 %v697, 1.442695
        %v702 = vpow.pop %v701
        %v703 = vmul.f32 %v698, 1.442695
        %v704 = vpow.pop %v703
        %v705 = vmul.f32 %v699, 1.442695
        %v706 = vpow.pop %v705
        %v707 = vmul.f32 %v700, 1.442695
        %v708 = vpow.pop %v707
        %v709 = vsel %vm647, %v706, 0.0
        %v710 = vadd.f32 %v702, %v709
        %v711 = vrot.slane %v710, 4
        %v712 = vadd.f32 %v710, %v711
        %v713 = vrot.slane %v712, 2
        %v714 = vadd.f32 %v712, %v713
        %v715 = vrot.slane %v714, 1
        %v716 = vadd.f32 %v714, %v715
        %v717 = vsel %vm647, %v708, 0.0
        %v718 = vadd.f32 %v704, %v717
        %v719 = vrot.slane %v718, 4
        %v720 = vadd.f32 %v718, %v719
        %v721 = vrot.slane %v720, 2
        %v722 = vadd.f32 %v720, %v721
        %v723 = vrot.slane %v722, 1
        %v724 = vadd.f32 %v722, %v723
        %v725 = vrcp.pop %v716
        %v726 = vrcp.pop %v724
        %v727 = vmul.f32 %v702, %v725
        %v728 = vmul.f32 %v704, %v726
        %v729 = vmul.f32 %v706, %v725
        %v730 = vmul.f32 %v708, %v726
        %v731 = vld [vmem:[%s398] sm:$0xf]
        %v732 = vunpack.c.l.bf16 %v731
        %v733 = vlaneseq
        %v734 = vshrl.u32 %v733, 7
        %v735 = vsub.s32 0, %v734
        %v736 = vrot.slane %v727, %v735
        %v737 = vlaneseq
        %v738 = vshrl.u32 %v737, 7
        %v739 = vsub.s32 0, %v738
        %v740 = vrot.slane %v728, %v739
        %v742 = vcombine.high %v732, %v732
        %v744 = vmul.f32 %v736, %v732
        %v745 = vmul.f32 %v740, %v742
        %s746 = scalar_lea.vmem %s398, 4 [#allocation3]
        %v747 = vld [vmem:[%s746] sm:$0xf]
        %v748 = vunpack.c.l.bf16 %v747
        %v749 = vlaneseq
        %v750 = vshrl.u32 %v749, 7
        %v751 = vsub.s32 1, %v750
        %v752 = vrot.slane %v727, %v751
        %v753 = vlaneseq
        %v754 = vshrl.u32 %v753, 7
        %v755 = vsub.s32 1, %v754
        %v756 = vrot.slane %v728, %v755
        %v758 = vcombine.high %v748, %v748
        %v760 = vmul.f32 %v752, %v748
        %v761 = vmul.f32 %v756, %v758
        %v762 = vadd.f32 %v744, %v760
        %v763 = vadd.f32 %v745, %v761
        %s764 = scalar_lea.vmem %s398, 8 [#allocation3]
        %v765 = vld [vmem:[%s764] sm:$0xf]
        %v766 = vunpack.c.l.bf16 %v765
        %v767 = vlaneseq
        %v768 = vshrl.u32 %v767, 7
        %v769 = vsub.s32 2, %v768
        %v770 = vrot.slane %v727, %v769
        %v771 = vlaneseq
        %v772 = vshrl.u32 %v771, 7
        %v773 = vsub.s32 2, %v772
        %v774 = vrot.slane %v728, %v773
        %v776 = vcombine.high %v766, %v766
        %v778 = vmul.f32 %v770, %v766
        %v779 = vmul.f32 %v774, %v776
        %v780 = vadd.f32 %v762, %v778
        %v781 = vadd.f32 %v763, %v779
        %s782 = scalar_lea.vmem %s398, 12 [#allocation3]
        %v783 = vld [vmem:[%s782] sm:$0xf]
        %v784 = vunpack.c.l.bf16 %v783
        %v785 = vlaneseq
        %v786 = vshrl.u32 %v785, 7
        %v787 = vsub.s32 3, %v786
        %v788 = vrot.slane %v727, %v787
        %v789 = vlaneseq
        %v790 = vshrl.u32 %v789, 7
        %v791 = vsub.s32 3, %v790
        %v792 = vrot.slane %v728, %v791
        %v794 = vcombine.high %v784, %v784
        %v796 = vmul.f32 %v788, %v784
        %v797 = vmul.f32 %v792, %v794
        %v798 = vadd.f32 %v780, %v796
        %v799 = vadd.f32 %v781, %v797
        %s800 = scalar_lea.vmem %s398, 16 [#allocation3]
        %v801 = vld [vmem:[%s800] sm:$0xf]
        %v802 = vunpack.c.l.bf16 %v801
        %v803 = vlaneseq
        %v804 = vshrl.u32 %v803, 7
        %v805 = vsub.s32 4, %v804
        %v806 = vrot.slane %v727, %v805
        %v807 = vlaneseq
        %v808 = vshrl.u32 %v807, 7
        %v809 = vsub.s32 4, %v808
        %v810 = vrot.slane %v728, %v809
        %v812 = vcombine.high %v802, %v802
        %v814 = vmul.f32 %v806, %v802
        %v815 = vmul.f32 %v810, %v812
        %v816 = vadd.f32 %v798, %v814
        %v817 = vadd.f32 %v799, %v815
        %s818 = scalar_lea.vmem %s398, 20 [#allocation3]
        %v819 = vld [vmem:[%s818] sm:$0xf]
        %v820 = vunpack.c.l.bf16 %v819
        %v821 = vlaneseq
        %v822 = vshrl.u32 %v821, 7
        %v823 = vsub.s32 5, %v822
        %v824 = vrot.slane %v727, %v823
        %v825 = vlaneseq
        %v826 = vshrl.u32 %v825, 7
        %v827 = vsub.s32 5, %v826
        %v828 = vrot.slane %v728, %v827
        %v830 = vcombine.high %v820, %v820
        %v832 = vmul.f32 %v824, %v820
        %v833 = vmul.f32 %v828, %v830
        %v834 = vadd.f32 %v816, %v832
        %v835 = vadd.f32 %v817, %v833
        %s836 = scalar_lea.vmem %s398, 24 [#allocation3]
        %v837 = vld [vmem:[%s836] sm:$0xf]
        %v838 = vunpack.c.l.bf16 %v837
        %v839 = vlaneseq
        %v840 = vshrl.u32 %v839, 7
        %v841 = vsub.s32 6, %v840
        %v842 = vrot.slane %v727, %v841
        %v843 = vlaneseq
        %v844 = vshrl.u32 %v843, 7
        %v845 = vsub.s32 6, %v844
        %v846 = vrot.slane %v728, %v845
        %v848 = vcombine.high %v838, %v838
        %v850 = vmul.f32 %v842, %v838
        %v851 = vmul.f32 %v846, %v848
        %v852 = vadd.f32 %v834, %v850
        %v853 = vadd.f32 %v835, %v851
        %s854 = scalar_lea.vmem %s398, 28 [#allocation3]
        %v855 = vld [vmem:[%s854] sm:$0xf]
        %v856 = vunpack.c.l.bf16 %v855
        %v857 = vlaneseq
        %v858 = vshrl.u32 %v857, 7
        %v859 = vsub.s32 7, %v858
        %v860 = vrot.slane %v727, %v859
        %v861 = vlaneseq
        %v862 = vshrl.u32 %v861, 7
        %v863 = vsub.s32 7, %v862
        %v864 = vrot.slane %v728, %v863
        %v866 = vcombine.high %v856, %v856
        %v868 = vmul.f32 %v860, %v856
        %v869 = vmul.f32 %v864, %v866
        %v870 = vadd.f32 %v852, %v868
        %v871 = vadd.f32 %v853, %v869
        %s872 = scalar_lea.vmem %s398, 32 [#allocation3]
        %v873 = vld [vmem:[%s872] sm:$0xf]
        %v874 = vunpack.c.l.bf16 %v873
        %v875 = vlaneseq
        %v876 = vshrl.u32 %v875, 7
        %v877 = vsub.s32 0, %v876
        %v878 = vrot.slane %v729, %v877
        %v879 = vlaneseq
        %v880 = vshrl.u32 %v879, 7
        %v881 = vsub.s32 0, %v880
        %v882 = vrot.slane %v730, %v881
        %v884 = vcombine.high %v874, %v874
        %v886 = vmul.f32 %v878, %v874
        %v887 = vmul.f32 %v882, %v884
        %v888 = vadd.f32 %v870, %v886
        %v889 = vadd.f32 %v871, %v887
        %v890 = vpack.c.bf16 %v888, %v888
        %v891 = vpack.c.bf16 %v889, %v889
        %v894 = vcombine.low %v890, %v891
        %v896 = vunpack.c.l.s4 1983009808
        %v897 = vunpack.c.0.s8 %v896
        %v898 = vlaneseq
        %v899 = vshrl.u32 %v898, 7
        %v900 = vsub.s32 %v897, %v899
        %v901 = vrot.slane %v894, %v900
        %903 = vst [vmem:[%s454] sm:$0xf] %v901
        %s904 = smul.u32 2, %s15
        %p905 = scmp.lt.s32.totalorder %s904, 3
        %s906 = scalar_select %p905, %s904, 3
        %s907 = smul.addr %s906, 2
        %s908 = scalar_lea.vmem %s4, %s907
        // Predicated region
        $region157: #{pixel_attention_forward.6} parent=143 // pred_check
          %p909 = pneg %p137
        $region158: #{pixel_attention_forward.6} parent=143 // pred_check_branch
          %911 = sbr.rel (%p909) target = $region160
        $region159: #{pixel_attention_forward.6} parent=143 // pred_region
          %s912 = smul.u32 2, %s15
        $region160: #{pixel_attention_forward.6} parent=143 // pred_fallthru
          _
      $region144: #{pixel_attention_forward.6} parent=5 // pred_fallthru
        _
      %p913 = scmp.le.s32.totalorder 2, %s10
      // Predicated region
      $region161: #{pixel_attention_forward.6} parent=5 // pred_check
        %p914 = pneg %p913
      $region162: #{pixel_attention_forward.6} parent=5 // pred_check_branch
        %916 = sbr.rel (%p914) target = $region164
      $region163: #{pixel_attention_forward.6} parent=5 // pred_region
        %s917 = ssub.s32 %s10, 2
        // Predicated region
        $region165: #{pixel_attention_forward.6} parent=163 // pred_check
          %p918 = pneg %p143
        $region166: #{pixel_attention_forward.6} parent=163 // pred_check_branch
          %920 = sbr.rel (%p918) target = $region168
        $region167: #{pixel_attention_forward.6} parent=163 // pred_region
          %s921 = smul.u32 2, %s16
          %p922 = scmp.lt.s32.totalorder %s921, 3
          %s923 = scalar_select %p922, %s921, 3
          %s924 = smul.addr %s923, 2
          %s925 = scalar_lea.vmem %s4, %s924
        $region168: #{pixel_attention_forward.6} parent=163 // pred_fallthru
          _
      $region164: #{pixel_attention_forward.6} parent=5 // pred_fallthru
        _
    $region6: #{pixel_attention_forward.6} parent=1 // loop_footer
      %s14 = sadd.s32 1, %s10
    $region7: #{pixel_attention_forward.6} parent=1 // loop_footer_branch
      %9 = sbr.rel target = $region3
    $region8: #{pixel_attention_forward.6} parent=1 // loop_exit
      _

// kernel: pixel_attention_forward.8
$region0: #{pixel_attention_forward.8}
  #allocation0 [shape = 'u32[]', space=smem, size = 0x4, offset = 0x4, fixed_abs, tag = 'smem constant byte address 0x4 - core index']
  #allocation1 [shape = 'u32[144,128]{1,0:T(1,128)}', space=vmem, size = 0x12000, scoped, tag = 'internal scratch']
  %s0 = inlined_call_operand.vmem [shape: bf16[2,4,32,18], index: 0, kind: input, shape index: {}, may-alias: {0,1}]
  %s1 = inlined_call_operand.vmem [shape: bf16[2,4,32,18], index: 1, kind: input, shape index: {}, may-alias: {0,1}]
  %s2 = inlined_call_operand.vmem [shape: f32[8,36], index: 2, kind: input, shape index: {}]
  %s3 = inlined_call_operand.vmem [shape: f32[8,1], index: 3, kind: input, shape index: {}]
  %s4 = inlined_call_operand.vmem [shape: bf16[2,8,256], index: 4, kind: output, shape index: {}]
  %s5 = sld [smem:[#allocation0]]
  $region131: #{pixel_attention_forward.8} parent=0
    _
  %s7 = ssub.s32 1, %s5
  %s8 = scalar_select 0, %s7, %s5
  $region1: #{pixel_attention_forward.8} parent=0
    #allocation2 [shape = 'u8[32768]{0}', space=vmem, size = 0x8000, scoped, tag = 'input window, operand 0']
    #allocation3 [shape = 'u8[32768]{0}', space=vmem, size = 0x8000, scoped, tag = 'input window, operand 1']
    loop: start=0, step=1, limit=4
    $region2: #{pixel_attention_forward.8} parent=1 // loop_pre_header
      _
    $region3: #{pixel_attention_forward.8} parent=1 // loop_header
      %s10 = sphi 0, %s14
      %p11 = scmp.ge.s32.totalorder %s10, 4
      %s17 = sphi 0, %s29
      %s18 = sphi 0, %s25
      %s19 = sphi 0, %s17
      %s20 = sphi 0, %s18
      %s21 = sphi 0, %s19
      %s22 = sphi 0, %s20
      %s34 = sphi 0, %s36
      %s37 = sphi 0, %s34
      %s38 = sphi 0, %s37
      %s54 = sphi 0, %s38
      %s64 = sphi 0, %s66
      %s67 = sphi 0, %s64
      %s68 = sphi 0, %s67
      %s84 = sphi 0, %s68
      %s88 = sphi 0, %s88
      %s90 = sphi 0, %s88
      %s91 = sphi 0, %s90
      %s105 = sphi 0, %s91
      %s109 = sphi 0, %s109
      %s111 = sphi 0, %s109
      %s112 = sphi 0, %s111
      %s126 = sphi 0, %s112
      %s134 = sphi 0, %s136
      %s137 = sphi 0, %s134
      %s138 = sphi 0, %s137
      %s154 = sphi 0, %s138
    $region4: #{pixel_attention_forward.8} parent=1 // loop_header_branch
      %13 = sbr.rel (%p11) target = $region8
    $region5: #{pixel_attention_forward.8} parent=1 // loop_body
      %s15 = ssub.s32 %s10, 1
      %s16 = ssub.s32 %s10, 2
      %s23 = sadd.s32 1, %s18
      %p24 = scmp.ge.s32.totalorder %s23, 1
      %s25 = scalar_select %p24, 0, %s23
      %s26 = sadd.s32 1, %s17
      %s27 = scalar_select %p24, %s26, %s17
      %p28 = scmp.ge.s32.totalorder %s27, 2
      %s29 = scalar_select %p28, 0, %s27
      %s30 = ssub.s32 %s17, %s29
      %s31 = ssub.s32 %s18, %s25
      %s32 = sor.u32 %s30, %s31
      %p33 = scmp.eq.s32.totalorder %s32, 0
      %s35 = sadd.s32 %s34, 1
      %s36 = scalar_select %p33, %s34, %s35
      %p39 = pneg %p33
      %p40 = scmp.eq.s32.totalorder %s10, 1
      %p41 = por %p39, %p40
      %p42 = scmp.ne.s32.totalorder %s34, %s37
      %p43 = scmp.eq.s32.totalorder %s10, 0
      %p44 = por %p42, %p43
      %p45 = scmp.ne.s32.totalorder %s34, %s37
      %p46 = scmp.eq.s32.totalorder %s15, 1
      %p47 = por %p45, %p46
      %p48 = scmp.ne.s32.totalorder %s37, %s38
      %p49 = scmp.eq.s32.totalorder %s15, 0
      %p50 = por %p48, %p49
      %p51 = scmp.ne.s32.totalorder %s37, %s38
      %p52 = scmp.eq.s32.totalorder %s16, 1
      %p53 = por %p51, %p52
      %p55 = scmp.ne.s32.totalorder %s38, %s54
      %p56 = scmp.eq.s32.totalorder %s16, 0
      %p57 = por %p55, %p56
      %s58 = sadd.s32 %s18, 1
      %s59 = sadd.s32 %s25, 1
      %s60 = ssub.s32 %s17, %s29
      %s61 = ssub.s32 %s58, %s59
      %s62 = sor.u32 %s60, %s61
      %p63 = scmp.eq.s32.totalorder %s62, 0
      %s65 = sadd.s32 %s64, 1
      %s66 = scalar_select %p63, %s64, %s65
      %p69 = pneg %p63
      %p70 = scmp.eq.s32.totalorder %s10, 1
      %p71 = por %p69, %p70
      %p72 = scmp.ne.s32.totalorder %s64, %s67
      %p73 = scmp.eq.s32.totalorder %s10, 0
      %p74 = por %p72, %p73
      %p75 = scmp.ne.s32.totalorder %s64, %s67
      %p76 = scmp.eq.s32.totalorder %s15, 1
      %p77 = por %p75, %p76
      %p78 = scmp.ne.s32.totalorder %s67, %s68
      %p79 = scmp.eq.s32.totalorder %s15, 0
      %p80 = por %p78, %p79
      %p81 = scmp.ne.s32.totalorder %s67, %s68
      %p82 = scmp.eq.s32.totalorder %s16, 1
      %p83 = por %p81, %p82
      %p85 = scmp.ne.s32.totalorder %s68, %s84
      %p86 = scmp.eq.s32.totalorder %s16, 0
      %p87 = por %p85, %p86
      %s89 = sadd.s32 %s88, 1
      %p92 = scmp.eq.s32.totalorder %s10, 1
      %p93 = scmp.ne.s32.totalorder %s88, %s90
      %p94 = scmp.eq.s32.totalorder %s10, 0
      %p95 = por %p93, %p94
      %p96 = scmp.ne.s32.totalorder %s88, %s90
      %p97 = scmp.eq.s32.totalorder %s15, 1
      %p98 = por %p96, %p97
      %p99 = scmp.ne.s32.totalorder %s90, %s91
      %p100 = scmp.eq.s32.totalorder %s15, 0
      %p101 = por %p99, %p100
      %p102 = scmp.ne.s32.totalorder %s90, %s91
      %p103 = scmp.eq.s32.totalorder %s16, 1
      %p104 = por %p102, %p103
      %p106 = scmp.ne.s32.totalorder %s91, %s105
      %p107 = scmp.eq.s32.totalorder %s16, 0
      %p108 = por %p106, %p107
      %s110 = sadd.s32 %s109, 1
      %p113 = scmp.eq.s32.totalorder %s10, 1
      %p114 = scmp.ne.s32.totalorder %s109, %s111
      %p115 = scmp.eq.s32.totalorder %s10, 0
      %p116 = por %p114, %p115
      %p117 = scmp.ne.s32.totalorder %s109, %s111
      %p118 = scmp.eq.s32.totalorder %s15, 1
      %p119 = por %p117, %p118
      %p120 = scmp.ne.s32.totalorder %s111, %s112
      %p121 = scmp.eq.s32.totalorder %s15, 0
      %p122 = por %p120, %p121
      %p123 = scmp.ne.s32.totalorder %s111, %s112
      %p124 = scmp.eq.s32.totalorder %s16, 1
      %p125 = por %p123, %p124
      %p127 = scmp.ne.s32.totalorder %s112, %s126
      %p128 = scmp.eq.s32.totalorder %s16, 0
      %p129 = por %p127, %p128
      %s130 = ssub.s32 %s17, %s29
      %s131 = ssub.s32 %s18, %s25
      %s132 = sor.u32 %s130, %s131
      %p133 = scmp.eq.s32.totalorder %s132, 0
      %s135 = sadd.s32 %s134, 1
      %s136 = scalar_select %p133, %s134, %s135
      %p139 = pneg %p133
      %p140 = scmp.eq.s32.totalorder %s10, 1
      %p141 = por %p139, %p140
      %p142 = scmp.ne.s32.totalorder %s134, %s137
      %p143 = scmp.eq.s32.totalorder %s10, 0
      %p144 = por %p142, %p143
      %p145 = scmp.ne.s32.totalorder %s134, %s137
      %p146 = scmp.eq.s32.totalorder %s15, 1
      %p147 = por %p145, %p146
      %p148 = scmp.ne.s32.totalorder %s137, %s138
      %p149 = scmp.eq.s32.totalorder %s15, 0
      %p150 = por %p148, %p149
      %p151 = scmp.ne.s32.totalorder %s137, %s138
      %p152 = scmp.eq.s32.totalorder %s16, 1
      %p153 = por %p151, %p152
      %p155 = scmp.ne.s32.totalorder %s138, %s154
      %p156 = scmp.eq.s32.totalorder %s16, 0
      %p157 = por %p155, %p156
      %p158 = scmp.le.s32.totalorder 1, %s10
      %p159 = scmp.lt.s32.totalorder %s10, 3
      %p160 = pnand %p158, %p159
      %p161 = pneg %p160
      // Predicated region
      $region9: #{pixel_attention_forward.8} parent=5 // pred_check
        _
      $region10: #{pixel_attention_forward.8} parent=5 // pred_check_branch
        %163 = sbr.rel (%p160) target = $region12
      $region11: #{pixel_attention_forward.8} parent=5 // pred_region
        %s164 = ssub.s32 %s10, 1
        // Predicated region
        $region13: #{pixel_attention_forward.8} parent=11 // pred_check
          %p165 = pneg %p101
        $region14: #{pixel_attention_forward.8} parent=11 // pred_check_branch
          %167 = sbr.rel (%p165) target = $region16
        $region15: #{pixel_attention_forward.8} parent=11 // pred_region
          _
        $region16: #{pixel_attention_forward.8} parent=11 // pred_fallthru
          _
        // Predicated region
        $region17: #{pixel_attention_forward.8} parent=11 // pred_check
          %p168 = pneg %p122
        $region18: #{pixel_attention_forward.8} parent=11 // pred_check_branch
          %170 = sbr.rel (%p168) target = $region20
        $region19: #{pixel_attention_forward.8} parent=11 // pred_region
          _
        $region20: #{pixel_attention_forward.8} parent=11 // pred_fallthru
          _
      $region12: #{pixel_attention_forward.8} parent=5 // pred_fallthru
        _
      %p171 = scmp.lt.s32.totalorder %s10, 2
      // Predicated region
      $region21: #{pixel_attention_forward.8} parent=5 // pred_check
        %p172 = pneg %p171
      $region22: #{pixel_attention_forward.8} parent=5 // pred_check_branch
        %174 = sbr.rel (%p172) target = $region24
      $region23: #{pixel_attention_forward.8} parent=5 // pred_region
        // Predicated region
        $region25: #{pixel_attention_forward.8} parent=23 // pred_check
          %p175 = pneg %p44
        $region26: #{pixel_attention_forward.8} parent=23 // pred_check_branch
          %177 = sbr.rel (%p175) target = $region28
        $region27: #{pixel_attention_forward.8} parent=23 // pred_region
          %s178 = sand.u32 %s34, 1
          %s179 = sand.u32 %s34, 1
          %s180 = smul.addr %s179, 32
          %s181 = scalar_lea.vmem [#allocation2], %s180
          %s182 = smul.u32 2, %s18
          %s183 = smul.addr %s17, 16
          %s184 = sadd.s32 %s182, %s183
          %s185 = smul.addr %s184, 4
          %s186 = scalar_lea.vmem %s0, %s185
          // Predicated region
          $region29: #{pixel_attention_forward.8} parent=27 // pred_check
            _
          $region30: #{pixel_attention_forward.8} parent=27 // pred_check_branch
            %188 = sbr.rel (0) target = $region32
          $region31: #{pixel_attention_forward.8} parent=27 // pred_region
            // Predicated region
            $region33: #{pixel_attention_forward.8} parent=31 // pred_check
              _
            $region34: #{pixel_attention_forward.8} parent=31 // pred_check_branch
              %190 = sbr.rel target = $region36
            $region35: #{pixel_attention_forward.8} parent=31 // pred_region
              // Predicated region
              $region48: #{pixel_attention_forward.8} parent=35 // pred_check
                _
              $region49: #{pixel_attention_forward.8} parent=35 // pred_check_branch
                %220 = sbr.rel (0) target = $region51
              $region50: #{pixel_attention_forward.8} parent=35 // pred_region
                loop: start=0, step=1, limit=1
                $region52: #{pixel_attention_forward.8} parent=50 // loop_pre_header
                  _
                $region53: #{pixel_attention_forward.8} parent=50 // loop_header
                  %s222 = sphi 0, %s226
                  %p223 = scmp.ge.s32.totalorder %s222, 1
                  %s227 = sphi %s186, %s186
                  %s228 = sphi %s181, %s181
                $region54: #{pixel_attention_forward.8} parent=50 // loop_header_branch
                  %225 = sbr.rel (%p223) target = $region58
                $region55: #{pixel_attention_forward.8} parent=50 // loop_body
                  _
                $region56: #{pixel_attention_forward.8} parent=50 // loop_footer
                  %s226 = sadd.s32 1, %s222
                $region57: #{pixel_attention_forward.8} parent=50 // loop_footer_branch
                  %221 = sbr.rel target = $region53
                $region58: #{pixel_attention_forward.8} parent=50 // loop_exit
                  _
                %s230 = ssub.s32 16, 1
                loop: start=0, step=1, limit=1
                $region59: #{pixel_attention_forward.8} parent=50 // loop_pre_header
                  _
                $region60: #{pixel_attention_forward.8} parent=50 // loop_header
                  %s232 = sphi 0, %s236
                  %p233 = scmp.ge.s32.totalorder %s232, 1
                  %s237 = sphi %s186, %s186
                  %s238 = sphi %s181, %s181
                $region61: #{pixel_attention_forward.8} parent=50 // loop_header_branch
                  %235 = sbr.rel (%p233) target = $region65
                $region62: #{pixel_attention_forward.8} parent=50 // loop_body
                  %v239 = vld [vmem:[%s237] sm:%s230]
                  %240 = vst [vmem:[%s238] sm:%s230] %v239
                  %v241 = vld [vmem:[%s237 + $0x4] sm:%s230]
                  %242 = vst [vmem:[%s238 + $0x4] sm:%s230] %v241
                  %v243 = vld [vmem:[%s237 + $0x10] sm:%s230]
                  %244 = vst [vmem:[%s238 + $0x8] sm:%s230] %v243
                  %v245 = vld [vmem:[%s237 + $0x14] sm:%s230]
                  %246 = vst [vmem:[%s238 + $0xc] sm:%s230] %v245
                  %v247 = vld [vmem:[%s237 + $0x20] sm:%s230]
                  %248 = vst [vmem:[%s238 + $0x10] sm:%s230] %v247
                  %v249 = vld [vmem:[%s237 + $0x24] sm:%s230]
                  %250 = vst [vmem:[%s238 + $0x14] sm:%s230] %v249
                  %v251 = vld [vmem:[%s237 + $0x30] sm:%s230]
                  %252 = vst [vmem:[%s238 + $0x18] sm:%s230] %v251
                  %v253 = vld [vmem:[%s237 + $0x34] sm:%s230]
                  %254 = vst [vmem:[%s238 + $0x1c] sm:%s230] %v253
                $region63: #{pixel_attention_forward.8} parent=50 // loop_footer
                  %s236 = sadd.s32 1, %s232
                $region64: #{pixel_attention_forward.8} parent=50 // loop_footer_branch
                  %231 = sbr.rel target = $region60
                $region65: #{pixel_attention_forward.8} parent=50 // loop_exit
                  _
              $region51: #{pixel_attention_forward.8} parent=35 // pred_fallthru
                _
            $region36: #{pixel_attention_forward.8} parent=31 // pred_fallthru
              _
            // Predicated region
            $region37: #{pixel_attention_forward.8} parent=31 // pred_check
              _
            $region38: #{pixel_attention_forward.8} parent=31 // pred_check_branch
              %192 = sbr.rel (0) target = $region40
            $region39: #{pixel_attention_forward.8} parent=31 // pred_region
              %s194 = ssub.s32 16, 1
              loop: start=0, step=1, limit=1
              $region41: #{pixel_attention_forward.8} parent=39 // loop_pre_header
                _
              $region42: #{pixel_attention_forward.8} parent=39 // loop_header
                %s196 = sphi 0, %s200
                %p197 = scmp.ge.s32.totalorder %s196, 1
                %s201 = sphi %s186, %s186
                %s202 = sphi %s181, %s181
              $region43: #{pixel_attention_forward.8} parent=39 // loop_header_branch
                %199 = sbr.rel (%p197) target = $region47
              $region44: #{pixel_attention_forward.8} parent=39 // loop_body
                %v203 = vld [vmem:[%s201] sm:%s194]
                %204 = vst [vmem:[%s202] sm:%s194] %v203
                %v205 = vld [vmem:[%s201 + $0x4] sm:%s194]
                %206 = vst [vmem:[%s202 + $0x4] sm:%s194] %v205
                %v207 = vld [vmem:[%s201 + $0x10] sm:%s194]
                %208 = vst [vmem:[%s202 + $0x8] sm:%s194] %v207
                %v209 = vld [vmem:[%s201 + $0x14] sm:%s194]
                %210 = vst [vmem:[%s202 + $0xc] sm:%s194] %v209
                %v211 = vld [vmem:[%s201 + $0x20] sm:%s194]
                %212 = vst [vmem:[%s202 + $0x10] sm:%s194] %v211
                %v213 = vld [vmem:[%s201 + $0x24] sm:%s194]
                %214 = vst [vmem:[%s202 + $0x14] sm:%s194] %v213
                %v215 = vld [vmem:[%s201 + $0x30] sm:%s194]
                %216 = vst [vmem:[%s202 + $0x18] sm:%s194] %v215
                %v217 = vld [vmem:[%s201 + $0x34] sm:%s194]
                %218 = vst [vmem:[%s202 + $0x1c] sm:%s194] %v217
              $region45: #{pixel_attention_forward.8} parent=39 // loop_footer
                %s200 = sadd.s32 1, %s196
              $region46: #{pixel_attention_forward.8} parent=39 // loop_footer_branch
                %195 = sbr.rel target = $region42
              $region47: #{pixel_attention_forward.8} parent=39 // loop_exit
                _
            $region40: #{pixel_attention_forward.8} parent=31 // pred_fallthru
              _
          $region32: #{pixel_attention_forward.8} parent=27 // pred_fallthru
            _
          %255 = vnop
        $region28: #{pixel_attention_forward.8} parent=23 // pred_fallthru
          _
        // Predicated region
        $region66: #{pixel_attention_forward.8} parent=23 // pred_check
          %p256 = pneg %p74
        $region67: #{pixel_attention_forward.8} parent=23 // pred_check_branch
          %258 = sbr.rel (%p256) target = $region69
        $region68: #{pixel_attention_forward.8} parent=23 // pred_region
          %s259 = sand.u32 %s64, 1
          %s260 = sand.u32 %s64, 1
          %s261 = smul.addr %s260, 32
          %s262 = scalar_lea.vmem [#allocation3], %s261
          %s263 = sadd.s32 %s18, 1
          %s264 = smul.u32 2, %s263
          %s265 = smul.addr %s17, 16
          %s266 = sadd.s32 %s264, %s265
          %s267 = smul.addr %s266, 4
          %s268 = scalar_lea.vmem %s1, %s267
          // Predicated region
          $region70: #{pixel_attention_forward.8} parent=68 // pred_check
            _
          $region71: #{pixel_attention_forward.8} parent=68 // pred_check_branch
            %270 = sbr.rel (0) target = $region73
          $region72: #{pixel_attention_forward.8} parent=68 // pred_region
            // Predicated region
            $region74: #{pixel_attention_forward.8} parent=72 // pred_check
              _
            $region75: #{pixel_attention_forward.8} parent=72 // pred_check_branch
              %272 = sbr.rel target = $region77
            $region76: #{pixel_attention_forward.8} parent=72 // pred_region
              // Predicated region
              $region89: #{pixel_attention_forward.8} parent=76 // pred_check
                _
              $region90: #{pixel_attention_forward.8} parent=76 // pred_check_branch
                %302 = sbr.rel (0) target = $region92
              $region91: #{pixel_attention_forward.8} parent=76 // pred_region
                loop: start=0, step=1, limit=1
                $region93: #{pixel_attention_forward.8} parent=91 // loop_pre_header
                  _
                $region94: #{pixel_attention_forward.8} parent=91 // loop_header
                  %s304 = sphi 0, %s308
                  %p305 = scmp.ge.s32.totalorder %s304, 1
                  %s309 = sphi %s268, %s268
                  %s310 = sphi %s262, %s262
                $region95: #{pixel_attention_forward.8} parent=91 // loop_header_branch
                  %307 = sbr.rel (%p305) target = $region99
                $region96: #{pixel_attention_forward.8} parent=91 // loop_body
                  _
                $region97: #{pixel_attention_forward.8} parent=91 // loop_footer
                  %s308 = sadd.s32 1, %s304
                $region98: #{pixel_attention_forward.8} parent=91 // loop_footer_branch
                  %303 = sbr.rel target = $region94
                $region99: #{pixel_attention_forward.8} parent=91 // loop_exit
                  _
                %s312 = ssub.s32 16, 1
                loop: start=0, step=1, limit=1
                $region100: #{pixel_attention_forward.8} parent=91 // loop_pre_header
                  _
                $region101: #{pixel_attention_forward.8} parent=91 // loop_header
                  %s314 = sphi 0, %s318
                  %p315 = scmp.ge.s32.totalorder %s314, 1
                  %s319 = sphi %s268, %s268
                  %s320 = sphi %s262, %s262
                $region102: #{pixel_attention_forward.8} parent=91 // loop_header_branch
                  %317 = sbr.rel (%p315) target = $region106
                $region103: #{pixel_attention_forward.8} parent=91 // loop_body
                  %v321 = vld [vmem:[%s319] sm:%s312]
                  %322 = vst [vmem:[%s320] sm:%s312] %v321
                  %v323 = vld [vmem:[%s319 + $0x4] sm:%s312]
                  %324 = vst [vmem:[%s320 + $0x4] sm:%s312] %v323
                  %v325 = vld [vmem:[%s319 + $0x10] sm:%s312]
                  %326 = vst [vmem:[%s320 + $0x8] sm:%s312] %v325
                  %v327 = vld [vmem:[%s319 + $0x14] sm:%s312]
                  %328 = vst [vmem:[%s320 + $0xc] sm:%s312] %v327
                  %v329 = vld [vmem:[%s319 + $0x20] sm:%s312]
                  %330 = vst [vmem:[%s320 + $0x10] sm:%s312] %v329
                  %v331 = vld [vmem:[%s319 + $0x24] sm:%s312]
                  %332 = vst [vmem:[%s320 + $0x14] sm:%s312] %v331
                  %v333 = vld [vmem:[%s319 + $0x30] sm:%s312]
                  %334 = vst [vmem:[%s320 + $0x18] sm:%s312] %v333
                  %v335 = vld [vmem:[%s319 + $0x34] sm:%s312]
                  %336 = vst [vmem:[%s320 + $0x1c] sm:%s312] %v335
                $region104: #{pixel_attention_forward.8} parent=91 // loop_footer
                  %s318 = sadd.s32 1, %s314
                $region105: #{pixel_attention_forward.8} parent=91 // loop_footer_branch
                  %313 = sbr.rel target = $region101
                $region106: #{pixel_attention_forward.8} parent=91 // loop_exit
                  _
              $region92: #{pixel_attention_forward.8} parent=76 // pred_fallthru
                _
            $region77: #{pixel_attention_forward.8} parent=72 // pred_fallthru
              _
            // Predicated region
            $region78: #{pixel_attention_forward.8} parent=72 // pred_check
              _
            $region79: #{pixel_attention_forward.8} parent=72 // pred_check_branch
              %274 = sbr.rel (0) target = $region81
            $region80: #{pixel_attention_forward.8} parent=72 // pred_region
              %s276 = ssub.s32 16, 1
              loop: start=0, step=1, limit=1
              $region82: #{pixel_attention_forward.8} parent=80 // loop_pre_header
                _
              $region83: #{pixel_attention_forward.8} parent=80 // loop_header
                %s278 = sphi 0, %s282
                %p279 = scmp.ge.s32.totalorder %s278, 1
                %s283 = sphi %s268, %s268
                %s284 = sphi %s262, %s262
              $region84: #{pixel_attention_forward.8} parent=80 // loop_header_branch
                %281 = sbr.rel (%p279) target = $region88
              $region85: #{pixel_attention_forward.8} parent=80 // loop_body
                %v285 = vld [vmem:[%s283] sm:%s276]
                %286 = vst [vmem:[%s284] sm:%s276] %v285
                %v287 = vld [vmem:[%s283 + $0x4] sm:%s276]
                %288 = vst [vmem:[%s284 + $0x4] sm:%s276] %v287
                %v289 = vld [vmem:[%s283 + $0x10] sm:%s276]
                %290 = vst [vmem:[%s284 + $0x8] sm:%s276] %v289
                %v291 = vld [vmem:[%s283 + $0x14] sm:%s276]
                %292 = vst [vmem:[%s284 + $0xc] sm:%s276] %v291
                %v293 = vld [vmem:[%s283 + $0x20] sm:%s276]
                %294 = vst [vmem:[%s284 + $0x10] sm:%s276] %v293
                %v295 = vld [vmem:[%s283 + $0x24] sm:%s276]
                %296 = vst [vmem:[%s284 + $0x14] sm:%s276] %v295
                %v297 = vld [vmem:[%s283 + $0x30] sm:%s276]
                %298 = vst [vmem:[%s284 + $0x18] sm:%s276] %v297
                %v299 = vld [vmem:[%s283 + $0x34] sm:%s276]
                %300 = vst [vmem:[%s284 + $0x1c] sm:%s276] %v299
              $region86: #{pixel_attention_forward.8} parent=80 // loop_footer
                %s282 = sadd.s32 1, %s278
              $region87: #{pixel_attention_forward.8} parent=80 // loop_footer_branch
                %277 = sbr.rel target = $region83
              $region88: #{pixel_attention_forward.8} parent=80 // loop_exit
                _
            $region81: #{pixel_attention_forward.8} parent=72 // pred_fallthru
              _
          $region73: #{pixel_attention_forward.8} parent=68 // pred_fallthru
            _
          %337 = vnop
        $region69: #{pixel_attention_forward.8} parent=23 // pred_fallthru
          _
      $region24: #{pixel_attention_forward.8} parent=5 // pred_fallthru
        _
      %p338 = scmp.le.s32.totalorder 1, %s10
      %p339 = scmp.lt.s32.totalorder %s10, 3
      %p340 = pnand %p338, %p339
      %p341 = pneg %p340
      // Predicated region
      $region107: #{pixel_attention_forward.8} parent=5 // pred_check
        _
      $region108: #{pixel_attention_forward.8} parent=5 // pred_check_branch
        %343 = sbr.rel (%p340) target = $region110
      $region109: #{pixel_attention_forward.8} parent=5 // pred_region
        %s344 = ssub.s32 %s10, 1
        %s345 = sand.u32 %s37, 1
        %s346 = sand.u32 %s37, 1
        %s347 = smul.addr %s346, 32
        %s348 = scalar_lea.vmem [#allocation2], %s347
        // Predicated region
        $region111: #{pixel_attention_forward.8} parent=109 // pred_check
          %p349 = pneg %p50
        $region112: #{pixel_attention_forward.8} parent=109 // pred_check_branch
          %351 = sbr.rel (%p349) target = $region114
        $region113: #{pixel_attention_forward.8} parent=109 // pred_region
          _
        $region114: #{pixel_attention_forward.8} parent=109 // pred_fallthru
          _
        %s352 = sand.u32 %s67, 1
        %s353 = sand.u32 %s67, 1
        %s354 = smul.addr %s353, 32
        %s355 = scalar_lea.vmem [#allocation3], %s354
        // Predicated region
        $region115: #{pixel_attention_forward.8} parent=109 // pred_check
          %p356 = pneg %p80
        $region116: #{pixel_attention_forward.8} parent=109 // pred_check_branch
          %358 = sbr.rel (%p356) target = $region118
        $region117: #{pixel_attention_forward.8} parent=109 // pred_region
          _
        $region118: #{pixel_attention_forward.8} parent=109 // pred_fallthru
          _
        %s359 = sand.u32 %s37, 1
        %s360 = sand.u32 %s37, 1
        %s361 = smul.addr %s360, 32
        %s362 = scalar_lea.vmem [#allocation2], %s361
        %p363 = pneg %p50
        %p364 = pneg %p47
        %s365 = sand.u32 %s67, 1
        %s366 = sand.u32 %s67, 1
        %s367 = smul.addr %s366, 32
        %s368 = scalar_lea.vmem [#allocation3], %s367
        %p369 = pneg %p80
        %p370 = pneg %p77
        %p371 = pneg %p101
        %p372 = pneg %p98
        %p373 = pneg %p122
        %p374 = pneg %p119
        %p375 = pneg %p150
        %p376 = pneg %p147
        %s377 = smul.u32 2, %s20
        %p378 = scmp.lt.s32.totalorder %s19, 1
        %s379 = scalar_select %p378, %s19, 1
        %p380 = scmp.lt.s32.totalorder %s377, 1
        %s381 = scalar_select %p380, %s377, 1
        %s382 = smul.addr %s379, 2
        %s383 = sadd.s32 %s381, %s382
        %s384 = smul.addr %s383, 4
        %s385 = scalar_lea.vmem %s4, %s384
        %s386 = smul.u32 2, %s20
        %s387 = sadd.s32 %s20, 1
        %s388 = smul.u32 2, %s387
        %s389 = smul.u32 2, %s20
        %p390 = scmp.lt.s32.totalorder %s19, 1
        %s391 = scalar_select %p390, %s19, 1
        %p392 = scmp.lt.s32.totalorder %s389, 1
        %s393 = scalar_select %p392, %s389, 1
        %s394 = smul.addr %s391, 2
        %s395 = sadd.s32 %s393, %s394
        %s396 = smul.addr %s395, 4
        %s397 = scalar_lea.vmem %s4, %s396
        %s398 = smul.u32 2, %s20
        %v400 = vld [vmem:[%s348] sm:$0xf]
        %v401 = vld [vmem:[%s348 + $0x4] sm:$0xf]
        %v402 = vld [vmem:[%s348 + $0x8] sm:$0xf]
        %v403 = vld [vmem:[%s348 + $0xc] sm:$0xf]
        %v404 = vld [vmem:[%s348 + $0x10] sm:$0xf]
        %v405 = vld [vmem:[%s348 + $0x14] sm:$0xf]
        %v406 = vld [vmem:[%s348 + $0x18] sm:$0xf]
        %v407 = vld [vmem:[%s348 + $0x1c] sm:$0xf]
        %v408 = vld [vmem:[%s355] sm:$0xf]
        %v409 = vld [vmem:[%s355 + $0x8] sm:$0xf]
        %v410 = vld [vmem:[%s355 + $0x10] sm:$0xf]
        %v411 = vld [vmem:[%s355 + $0x18] sm:$0xf]
        %v420 = vunpack.c.l.b16 %v400
        %v421 = vunpack.c.l.b16 %v401
        %v422 = vunpack.c.l.b16 %v402
        %v423 = vunpack.c.l.b16 %v403
        %v424 = vunpack.c.l.b16 %v404
        %v425 = vunpack.c.l.b16 %v405
        %v426 = vunpack.c.l.b16 %v406
        %v427 = vunpack.c.l.b16 %v407
        %v428 = vpack.c.b16 %v421, %v420
        %v429 = vpack.c.b16 %v423, %v422
        %v430 = vpack.c.b16 %v425, %v424
        %v431 = vpack.c.b16 %v427, %v426
        %432 = vrot.lane.b32.xlu0 %v428, 127
        %v433 = vpop.permute.xlu0 %432
        %434 = vrot.lane.b32.xlu0 %v429, 127
        %v435 = vpop.permute.xlu0 %434
        %436 = vrot.lane.b32.xlu0 %v430, 127
        %v437 = vpop.permute.xlu0 %436
        %438 = vrot.lane.b32.xlu0 %v431, 127
        %v439 = vpop.permute.xlu0 %438
        %440 = vrot.lane.b32.xlu0 %v428, 126
        %v441 = vpop.permute.xlu0 %440
        %442 = vrot.lane.b32.xlu0 %v429, 126
        %v443 = vpop.permute.xlu0 %442
        %444 = vrot.lane.b32.xlu0 %v430, 126
        %v445 = vpop.permute.xlu0 %444
        %446 = vrot.lane.b32.xlu0 %v431, 126
        %v447 = vpop.permute.xlu0 %446
        %vm448 = vsmask.f32 7424
        %v450 = vshrl.u32 %v428, 16
        %v452 = vshll.u32 %v428, 16
        %v454 = vrot.slane %v452, 1
        %v455 = vor.u32 %v450, %v454
        %v457 = vshll.u32 %v408, 16
        %v459 = vrot.slane %v457, 1
        %v460 = vsel %vm448, %v455, %v459
        %v462 = vshrl.u32 %v429, 16
        %v464 = vshll.u32 %v429, 16
        %v466 = vrot.slane %v464, 1
        %v467 = vor.u32 %v462, %v466
        %v469 = vshll.u32 %v409, 16
        %v471 = vrot.slane %v469, 1
        %v472 = vsel %vm448, %v467, %v471
        %v474 = vshrl.u32 %v430, 16
        %v476 = vshll.u32 %v430, 16
        %v478 = vrot.slane %v476, 1
        %v479 = vor.u32 %v474, %v478
        %v481 = vshll.u32 %v410, 16
        %v483 = vrot.slane %v481, 1
        %v484 = vsel %vm448, %v479, %v483
        %v486 = vshrl.u32 %v431, 16
        %v488 = vshll.u32 %v431, 16
        %v490 = vrot.slane %v488, 1
        %v491 = vor.u32 %v486, %v490
        %v493 = vshll.u32 %v411, 16
        %v495 = vrot.slane %v493, 1
        %v496 = vsel %vm448, %v491, %v495
        %497 = vrot.lane.b32.xlu0 %v460, 127
        %v498 = vpop.permute.xlu0 %497
        %499 = vrot.lane.b32.xlu0 %v472, 127
        %v500 = vpop.permute.xlu0 %499
        %501 = vrot.lane.b32.xlu0 %v484, 127
        %v502 = vpop.permute.xlu0 %501
        %503 = vrot.lane.b32.xlu0 %v496, 127
        %v504 = vpop.permute.xlu0 %503
        %505 = vrot.lane.b32.xlu0 %v460, 126
        %v506 = vpop.permute.xlu0 %505
        %507 = vrot.lane.b32.xlu0 %v472, 126
        %v508 = vpop.permute.xlu0 %507
        %509 = vrot.lane.b32.xlu0 %v484, 126
        %v510 = vpop.permute.xlu0 %509
        %511 = vrot.lane.b32.xlu0 %v496, 126
        %v512 = vpop.permute.xlu0 %511
        %vm517 = vcmask 1046528
        %v518 = vrot.slane %v428, 1
        %v519 = vrot.slane %v408, 1
        %v520 = vsel %vm517, %v518, %v519
        %v521 = vrot.slane %v429, 1
        %v522 = vrot.slane %v409, 1
        %v523 = vsel %vm517, %v521, %v522
        %v524 = vrot.slane %v430, 1
        %v525 = vrot.slane %v410, 1
        %v526 = vsel %vm517, %v524, %v525
        %v527 = vrot.slane %v431, 1
        %v528 = vrot.slane %v411, 1
        %v529 = vsel %vm517, %v527, %v528
        %530 = vrot.lane.b32.xlu0 %v520, 127
        %v531 = vpop.permute.xlu0 %530
        %532 = vrot.lane.b32.xlu0 %v523, 127
        %v533 = vpop.permute.xlu0 %532
        %534 = vrot.lane.b32.xlu0 %v526, 127
        %v535 = vpop.permute.xlu0 %534
        %536 = vrot.lane.b32.xlu0 %v529, 127
        %v537 = vpop.permute.xlu0 %536
        %538 = vrot.lane.b32.xlu0 %v520, 126
        %v539 = vpop.permute.xlu0 %538
        %540 = vrot.lane.b32.xlu0 %v523, 126
        %v541 = vpop.permute.xlu0 %540
        %542 = vrot.lane.b32.xlu0 %v526, 126
        %v543 = vpop.permute.xlu0 %542
        %544 = vrot.lane.b32.xlu0 %v529, 126
        %v545 = vpop.permute.xlu0 %544
        %v546 = vpack.i.b16 %v429, %v428
        %v548 = vpack.i.b16 %v462, %v450
        %v550 = vpack.i.b16 %v431, %v430
        %v552 = vpack.i.b16 %v486, %v474
        %v556 = vpack.i.b16 %v435, %v433
        %v558 = vshrl.u32 %v433, 16
        %v559 = vshrl.u32 %v435, 16
        %v560 = vpack.i.b16 %v559, %v558
        %v564 = vpack.i.b16 %v439, %v437
        %v566 = vshrl.u32 %v437, 16
        %v567 = vshrl.u32 %v439, 16
        %v568 = vpack.i.b16 %v567, %v566
        %v572 = vpack.i.b16 %v443, %v441
        %v574 = vshrl.u32 %v441, 16
        %v575 = vshrl.u32 %v443, 16
        %v576 = vpack.i.b16 %v575, %v574
        %v580 = vpack.i.b16 %v447, %v445
        %v582 = vshrl.u32 %v445, 16
        %v583 = vshrl.u32 %v447, 16
        %v584 = vpack.i.b16 %v583, %v582
        %v588 = vpack.i.b16 %v472, %v460
        %v590 = vshrl.u32 %v460, 16
        %v591 = vshrl.u32 %v472, 16
        %v592 = vpack.i.b16 %v591, %v590
        %v596 = vpack.i.b16 %v496, %v484
        %v598 = vshrl.u32 %v484, 16
        %v599 = vshrl.u32 %v496, 16
        %v600 = vpack.i.b16 %v599, %v598
        %v604 = vpack.i.b16 %v500, %v498
        %v606 = vshrl.u32 %v498, 16
        %v607 = vshrl.u32 %v500, 16
        %v608 = vpack.i.b16 %v607, %v606
        %v612 = vpack.i.b16 %v504, %v502
        %v614 = vshrl.u32 %v502, 16
        %v615 = vshrl.u32 %v504, 16
        %v616 = vpack.i.b16 %v615, %v614
        %v620 = vpack.i.b16 %v508, %v506
        %v622 = vshrl.u32 %v506, 16
        %v623 = vshrl.u32 %v508, 16
        %v624 = vpack.i.b16 %v623, %v622
        %v628 = vpack.i.b16 %v512, %v510
        %v630 = vshrl.u32 %v510, 16
        %v631 = vshrl.u32 %v512, 16
        %v632 = vpack.i.b16 %v631, %v630
        %v636 = vpack.i.b16 %v523, %v520
        %v638 = vshrl.u32 %v520, 16
        %v639 = vshrl.u32 %v523, 16
        %v640 = vpack.i.b16 %v639, %v638
        %v644 = vpack.i.b16 %v529, %v526
        %v646 = vshrl.u32 %v526, 16
        %v647 = vshrl.u32 %v529, 16
        %v648 = vpack.i.b16 %v647, %v646
        %v652 = vpack.i.b16 %v533, %v531
        %v654 = vshrl.u32 %v531, 16
        %v655 = vshrl.u32 %v533, 16
        %v656 = vpack.i.b16 %v655, %v654
        %v660 = vpack.i.b16 %v537, %v535
        %v662 = vshrl.u32 %v535, 16
        %v663 = vshrl.u32 %v537, 16
        %v664 = vpack.i.b16 %v663, %v662
        %v668 = vpack.i.b16 %v541, %v539
        %v670 = vshrl.u32 %v539, 16
        %v671 = vshrl.u32 %v541, 16
        %v672 = vpack.i.b16 %v671, %v670
        %v676 = vpack.i.b16 %v545, %v543
        %v678 = vshrl.u32 %v543, 16
        %v679 = vshrl.u32 %v545, 16
        %v680 = vpack.i.b16 %v679, %v678
        %v683 = vpack.i.b16 0, 0
        %v685 = vshrl.u32 0, 16
        %v686 = vpack.i.b16 %v685, %v685
        %v688 = vcombine.low %v546, %v556
        %v689 = vcombine.high %v546, %v556
        %v691 = vunpack.c.l.s4 1983009808
        %v692 = vunpack.c.0.s8 %v691
        %v693 = vlaneseq
        %v694 = vshrl.u32 %v693, 7
        %v695 = vsub.s32 %v692, %v694
        %v696 = vrot.slane %v688, %v695
        %v698 = vunpack.c.l.s4 1983009808
        %v699 = vunpack.c.0.s8 %v698
        %v700 = vlaneseq
        %v701 = vshrl.u32 %v700, 7
        %v702 = vsub.s32 %v699, %v701
        %v703 = vrot.slane %v689, %v702
        %v704 = vcombine.low %v550, %v564
        %v705 = vcombine.high %v550, %v564
        %v707 = vunpack.c.l.s4 1983009808
        %v708 = vunpack.c.0.s8 %v707
        %v709 = vlaneseq
        %v710 = vshrl.u32 %v709, 7
        %v711 = vsub.s32 %v708, %v710
        %v712 = vrot.slane %v704, %v711
        %v714 = vunpack.c.l.s4 1983009808
        %v715 = vunpack.c.0.s8 %v714
        %v716 = vlaneseq
        %v717 = vshrl.u32 %v716, 7
        %v718 = vsub.s32 %v715, %v717
        %v719 = vrot.slane %v705, %v718
        %v720 = vcombine.low %v572, %v588
        %v721 = vcombine.high %v572, %v588
        %v723 = vunpack.c.l.s4 1983009808
        %v724 = vunpack.c.0.s8 %v723
        %v725 = vlaneseq
        %v726 = vshrl.u32 %v725, 7
        %v727 = vsub.s32 %v724, %v726
        %v728 = vrot.slane %v720, %v727
        %v730 = vunpack.c.l.s4 1983009808
        %v731 = vunpack.c.0.s8 %v730
        %v732 = vlaneseq
        %v733 = vshrl.u32 %v732, 7
        %v734 = vsub.s32 %v731, %v733
        %v735 = vrot.slane %v721, %v734
        %v736 = vcombine.low %v580, %v596
        %v737 = vcombine.high %v580, %v596
        %v739 = vunpack.c.l.s4 1983009808
        %v740 = vunpack.c.0.s8 %v739
        %v741 = vlaneseq
        %v742 = vshrl.u32 %v741, 7
        %v743 = vsub.s32 %v740, %v742
        %v744 = vrot.slane %v736, %v743
        %v746 = vunpack.c.l.s4 1983009808
        %v747 = vunpack.c.0.s8 %v746
        %v748 = vlaneseq
        %v749 = vshrl.u32 %v748, 7
        %v750 = vsub.s32 %v747, %v749
        %v751 = vrot.slane %v737, %v750
        %v752 = vcombine.low %v696, %v712
        %v753 = vcombine.high %v696, %v712
        %v755 = vunpack.c.l.s4 1934713408
        %v756 = vunpack.c.0.s8 %v755
        %v757 = vlaneseq
        %v758 = vshrl.u32 %v757, 7
        %v759 = vsub.s32 %v756, %v758
        %v760 = vrot.slane %v752, %v759
        %v762 = vunpack.c.l.s4 1934713408
        %v763 = vunpack.c.0.s8 %v762
        %v764 = vlaneseq
        %v765 = vshrl.u32 %v764, 7
        %v766 = vsub.s32 %v763, %v765
        %v767 = vrot.slane %v753, %v766
        %v768 = vcombine.low %v703, %v719
        %v769 = vcombine.high %v703, %v719
        %v771 = vunpack.c.l.s4 1934713408
        %v772 = vunpack.c.0.s8 %v771
        %v773 = vlaneseq
        %v774 = vshrl.u32 %v773, 7
        %v775 = vsub.s32 %v772, %v774
        %v776 = vrot.slane %v768, %v775
        %v778 = vunpack.c.l.s4 1934713408
        %v779 = vunpack.c.0.s8 %v778
        %v780 = vlaneseq
        %v781 = vshrl.u32 %v780, 7
        %v782 = vsub.s32 %v779, %v781
        %v783 = vrot.slane %v769, %v782
        %v784 = vcombine.low %v728, %v744
        %v785 = vcombine.high %v728, %v744
        %v787 = vunpack.c.l.s4 1934713408
        %v788 = vunpack.c.0.s8 %v787
        %v789 = vlaneseq
        %v790 = vshrl.u32 %v789, 7
        %v791 = vsub.s32 %v788, %v790
        %v792 = vrot.slane %v784, %v791
        %v794 = vunpack.c.l.s4 1934713408
        %v795 = vunpack.c.0.s8 %v794
        %v796 = vlaneseq
        %v797 = vshrl.u32 %v796, 7
        %v798 = vsub.s32 %v795, %v797
        %v799 = vrot.slane %v785, %v798
        %v800 = vcombine.low %v735, %v751
        %v801 = vcombine.high %v735, %v751
        %v803 = vunpack.c.l.s4 1934713408
        %v804 = vunpack.c.0.s8 %v803
        %v805 = vlaneseq
        %v806 = vshrl.u32 %v805, 7
        %v807 = vsub.s32 %v804, %v806
        %v808 = vrot.slane %v800, %v807
        %v810 = vunpack.c.l.s4 1934713408
        %v811 = vunpack.c.0.s8 %v810
        %v812 = vlaneseq
        %v813 = vshrl.u32 %v812, 7
        %v814 = vsub.s32 %v811, %v813
        %v815 = vrot.slane %v801, %v814
        %v816 = vcombine.low %v760, %v792
        %v817 = vcombine.high %v760, %v792
        %v818 = vcombine.low %v767, %v799
        %v819 = vcombine.high %v767, %v799
        %v820 = vcombine.low %v776, %v808
        %v821 = vcombine.high %v776, %v808
        %v822 = vcombine.low %v783, %v815
        %v823 = vcombine.high %v783, %v815
        %v824 = vcombine.low %v548, %v560
        %v825 = vcombine.high %v548, %v560
        %v827 = vunpack.c.l.s4 1983009808
        %v828 = vunpack.c.0.s8 %v827
        %v829 = vlaneseq
        %v830 = vshrl.u32 %v829, 7
        %v831 = vsub.s32 %v828, %v830
        %v832 = vrot.slane %v824, %v831
        %v834 = vunpack.c.l.s4 1983009808
        %v835 = vunpack.c.0.s8 %v834
        %v836 = vlaneseq
        %v837 = vshrl.u32 %v836, 7
        %v838 = vsub.s32 %v835, %v837
        %v839 = vrot.slane %v825, %v838
        %v840 = vcombine.low %v552, %v568
        %v841 = vcombine.high %v552, %v568
        %v843 = vunpack.c.l.s4 1983009808
        %v844 = vunpack.c.0.s8 %v843
        %v845 = vlaneseq
        %v846 = vshrl.u32 %v845, 7
        %v847 = vsub.s32 %v844, %v846
        %v848 = vrot.slane %v840, %v847
        %v850 = vunpack.c.l.s4 1983009808
        %v851 = vunpack.c.0.s8 %v850
        %v852 = vlaneseq
        %v853 = vshrl.u32 %v852, 7
        %v854 = vsub.s32 %v851, %v853
        %v855 = vrot.slane %v841, %v854
        %v856 = vcombine.low %v576, %v592
        %v857 = vcombine.high %v576, %v592
        %v859 = vunpack.c.l.s4 1983009808
        %v860 = vunpack.c.0.s8 %v859
        %v861 = vlaneseq
        %v862 = vshrl.u32 %v861, 7
        %v863 = vsub.s32 %v860, %v862
        %v864 = vrot.slane %v856, %v863
        %v866 = vunpack.c.l.s4 1983009808
        %v867 = vunpack.c.0.s8 %v866
        %v868 = vlaneseq
        %v869 = vshrl.u32 %v868, 7
        %v870 = vsub.s32 %v867, %v869
        %v871 = vrot.slane %v857, %v870
        %v872 = vcombine.low %v584, %v600
        %v873 = vcombine.high %v584, %v600
        %v875 = vunpack.c.l.s4 1983009808
        %v876 = vunpack.c.0.s8 %v875
        %v877 = vlaneseq
        %v878 = vshrl.u32 %v877, 7
        %v879 = vsub.s32 %v876, %v878
        %v880 = vrot.slane %v872, %v879
        %v882 = vunpack.c.l.s4 1983009808
        %v883 = vunpack.c.0.s8 %v882
        %v884 = vlaneseq
        %v885 = vshrl.u32 %v884, 7
        %v886 = vsub.s32 %v883, %v885
        %v887 = vrot.slane %v873, %v886
        %v888 = vcombine.low %v832, %v848
        %v889 = vcombine.high %v832, %v848
        %v891 = vunpack.c.l.s4 1934713408
        %v892 = vunpack.c.0.s8 %v891
        %v893 = vlaneseq
        %v894 = vshrl.u32 %v893, 7
        %v895 = vsub.s32 %v892, %v894
        %v896 = vrot.slane %v888, %v895
        %v898 = vunpack.c.l.s4 1934713408
        %v899 = vunpack.c.0.s8 %v898
        %v900 = vlaneseq
        %v901 = vshrl.u32 %v900, 7
        %v902 = vsub.s32 %v899, %v901
        %v903 = vrot.slane %v889, %v902
        %v904 = vcombine.low %v839, %v855
        %v905 = vcombine.high %v839, %v855
        %v907 = vunpack.c.l.s4 1934713408
        %v908 = vunpack.c.0.s8 %v907
        %v909 = vlaneseq
        %v910 = vshrl.u32 %v909, 7
        %v911 = vsub.s32 %v908, %v910
        %v912 = vrot.slane %v904, %v911
        %v914 = vunpack.c.l.s4 1934713408
        %v915 = vunpack.c.0.s8 %v914
        %v916 = vlaneseq
        %v917 = vshrl.u32 %v916, 7
        %v918 = vsub.s32 %v915, %v917
        %v919 = vrot.slane %v905, %v918
        %v920 = vcombine.low %v864, %v880
        %v921 = vcombine.high %v864, %v880
        %v923 = vunpack.c.l.s4 1934713408
        %v924 = vunpack.c.0.s8 %v923
        %v925 = vlaneseq
        %v926 = vshrl.u32 %v925, 7
        %v927 = vsub.s32 %v924, %v926
        %v928 = vrot.slane %v920, %v927
        %v930 = vunpack.c.l.s4 1934713408
        %v931 = vunpack.c.0.s8 %v930
        %v932 = vlaneseq
        %v933 = vshrl.u32 %v932, 7
        %v934 = vsub.s32 %v931, %v933
        %v935 = vrot.slane %v921, %v934
        %v936 = vcombine.low %v871, %v887
        %v937 = vcombine.high %v871, %v887
        %v939 = vunpack.c.l.s4 1934713408
        %v940 = vunpack.c.0.s8 %v939
        %v941 = vlaneseq
        %v942 = vshrl.u32 %v941, 7
        %v943 = vsub.s32 %v940, %v942
        %v944 = vrot.slane %v936, %v943
        %v946 = vunpack.c.l.s4 1934713408
        %v947 = vunpack.c.0.s8 %v946
        %v948 = vlaneseq
        %v949 = vshrl.u32 %v948, 7
        %v950 = vsub.s32 %v947, %v949
        %v951 = vrot.slane %v937, %v950
        %v952 = vcombine.low %v896, %v928
        %v953 = vcombine.high %v896, %v928
        %v954 = vcombine.low %v903, %v935
        %v955 = vcombine.high %v903, %v935
        %v956 = vcombine.low %v912, %v944
        %v957 = vcombine.high %v912, %v944
        %v958 = vcombine.low %v919, %v951
        %v959 = vcombine.high %v919, %v951
        %v960 = vcombine.low %v604, %v620
        %v961 = vcombine.high %v604, %v620
        %v963 = vunpack.c.l.s4 1983009808
        %v964 = vunpack.c.0.s8 %v963
        %v965 = vlaneseq
        %v966 = vshrl.u32 %v965, 7
        %v967 = vsub.s32 %v964, %v966
        %v968 = vrot.slane %v960, %v967
        %v970 = vunpack.c.l.s4 1983009808
        %v971 = vunpack.c.0.s8 %v970
        %v972 = vlaneseq
        %v973 = vshrl.u32 %v972, 7
        %v974 = vsub.s32 %v971, %v973
        %v975 = vrot.slane %v961, %v974
        %v976 = vcombine.low %v612, %v628
        %v977 = vcombine.high %v612, %v628
        %v979 = vunpack.c.l.s4 1983009808
        %v980 = vunpack.c.0.s8 %v979
        %v981 = vlaneseq
        %v982 = vshrl.u32 %v981, 7
        %v983 = vsub.s32 %v980, %v982
        %v984 = vrot.slane %v976, %v983
        %v986 = vunpack.c.l.s4 1983009808
        %v987 = vunpack.c.0.s8 %v986
        %v988 = vlaneseq
        %v989 = vshrl.u32 %v988, 7
        %v990 = vsub.s32 %v987, %v989
        %v991 = vrot.slane %v977, %v990
        %v992 = vcombine.low %v636, %v652
        %v993 = vcombine.high %v636, %v652
        %v995 = vunpack.c.l.s4 1983009808
        %v996 = vunpack.c.0.s8 %v995
        %v997 = vlaneseq
        %v998 = vshrl.u32 %v997, 7
        %v999 = vsub.s32 %v996, %v998
        %v1000 = vrot.slane %v992, %v999
        %v1002 = vunpack.c.l.s4 1983009808
        %v1003 = vunpack.c.0.s8 %v1002
        %v1004 = vlaneseq
        %v1005 = vshrl.u32 %v1004, 7
        %v1006 = vsub.s32 %v1003, %v1005
        %v1007 = vrot.slane %v993, %v1006
        %v1008 = vcombine.low %v644, %v660
        %v1009 = vcombine.high %v644, %v660
        %v1011 = vunpack.c.l.s4 1983009808
        %v1012 = vunpack.c.0.s8 %v1011
        %v1013 = vlaneseq
        %v1014 = vshrl.u32 %v1013, 7
        %v1015 = vsub.s32 %v1012, %v1014
        %v1016 = vrot.slane %v1008, %v1015
        %v1018 = vunpack.c.l.s4 1983009808
        %v1019 = vunpack.c.0.s8 %v1018
        %v1020 = vlaneseq
        %v1021 = vshrl.u32 %v1020, 7
        %v1022 = vsub.s32 %v1019, %v1021
        %v1023 = vrot.slane %v1009, %v1022
        %v1024 = vcombine.low %v968, %v984
        %v1025 = vcombine.high %v968, %v984
        %v1027 = vunpack.c.l.s4 1934713408
        %v1028 = vunpack.c.0.s8 %v1027
        %v1029 = vlaneseq
        %v1030 = vshrl.u32 %v1029, 7
        %v1031 = vsub.s32 %v1028, %v1030
        %v1032 = vrot.slane %v1024, %v1031
        %v1034 = vunpack.c.l.s4 1934713408
        %v1035 = vunpack.c.0.s8 %v1034
        %v1036 = vlaneseq
        %v1037 = vshrl.u32 %v1036, 7
        %v1038 = vsub.s32 %v1035, %v1037
        %v1039 = vrot.slane %v1025, %v1038
        %v1040 = vcombine.low %v975, %v991
        %v1041 = vcombine.high %v975, %v991
        %v1043 = vunpack.c.l.s4 1934713408
        %v1044 = vunpack.c.0.s8 %v1043
        %v1045 = vlaneseq
        %v1046 = vshrl.u32 %v1045, 7
        %v1047 = vsub.s32 %v1044, %v1046
        %v1048 = vrot.slane %v1040, %v1047
        %v1050 = vunpack.c.l.s4 1934713408
        %v1051 = vunpack.c.0.s8 %v1050
        %v1052 = vlaneseq
        %v1053 = vshrl.u32 %v1052, 7
        %v1054 = vsub.s32 %v1051, %v1053
        %v1055 = vrot.slane %v1041, %v1054
        %v1056 = vcombine.low %v1000, %v1016
        %v1057 = vcombine.high %v1000, %v1016
        %v1059 = vunpack.c.l.s4 1934713408
        %v1060 = vunpack.c.0.s8 %v1059
        %v1061 = vlaneseq
        %v1062 = vshrl.u32 %v1061, 7
        %v1063 = vsub.s32 %v1060, %v1062
        %v1064 = vrot.slane %v1056, %v1063
        %v1066 = vunpack.c.l.s4 1934713408
        %v1067 = vunpack.c.0.s8 %v1066
        %v1068 = vlaneseq
        %v1069 = vshrl.u32 %v1068, 7
        %v1070 = vsub.s32 %v1067, %v1069
        %v1071 = vrot.slane %v1057, %v1070
        %v1072 = vcombine.low %v1007, %v1023
        %v1073 = vcombine.high %v1007, %v1023
        %v1075 = vunpack.c.l.s4 1934713408
        %v1076 = vunpack.c.0.s8 %v1075
        %v1077 = vlaneseq
        %v1078 = vshrl.u32 %v1077, 7
        %v1079 = vsub.s32 %v1076, %v1078
        %v1080 = vrot.slane %v1072, %v1079
        %v1082 = vunpack.c.l.s4 1934713408
        %v1083 = vunpack.c.0.s8 %v1082
        %v1084 = vlaneseq
        %v1085 = vshrl.u32 %v1084, 7
        %v1086 = vsub.s32 %v1083, %v1085
        %v1087 = vrot.slane %v1073, %v1086
        %v1088 = vcombine.low %v1032, %v1064
        %v1089 = vcombine.high %v1032, %v1064
        %v1090 = vcombine.low %v1039, %v1071
        %v1091 = vcombine.high %v1039, %v1071
        %v1092 = vcombine.low %v1048, %v1080
        %v1093 = vcombine.high %v1048, %v1080
        %v1094 = vcombine.low %v1055, %v1087
        %v1095 = vcombine.high %v1055, %v1087
        %v1096 = vcombine.low %v608, %v624
        %v1097 = vcombine.high %v608, %v624
        %v1099 = vunpack.c.l.s4 1983009808
        %v1100 = vunpack.c.0.s8 %v1099
        %v1101 = vlaneseq
        %v1102 = vshrl.u32 %v1101, 7
        %v1103 = vsub.s32 %v1100, %v1102
        %v1104 = vrot.slane %v1096, %v1103
        %v1106 = vunpack.c.l.s4 1983009808
        %v1107 = vunpack.c.0.s8 %v1106
        %v1108 = vlaneseq
        %v1109 = vshrl.u32 %v1108, 7
        %v1110 = vsub.s32 %v1107, %v1109
        %v1111 = vrot.slane %v1097, %v1110
        %v1112 = vcombine.low %v616, %v632
        %v1113 = vcombine.high %v616, %v632
        %v1115 = vunpack.c.l.s4 1983009808
        %v1116 = vunpack.c.0.s8 %v1115
        %v1117 = vlaneseq
        %v1118 = vshrl.u32 %v1117, 7
        %v1119 = vsub.s32 %v1116, %v1118
        %v1120 = vrot.slane %v1112, %v1119
        %v1122 = vunpack.c.l.s4 1983009808
        %v1123 = vunpack.c.0.s8 %v1122
        %v1124 = vlaneseq
        %v1125 = vshrl.u32 %v1124, 7
        %v1126 = vsub.s32 %v1123, %v1125
        %v1127 = vrot.slane %v1113, %v1126
        %v1128 = vcombine.low %v640, %v656
        %v1129 = vcombine.high %v640, %v656
        %v1131 = vunpack.c.l.s4 1983009808
        %v1132 = vunpack.c.0.s8 %v1131
        %v1133 = vlaneseq
        %v1134 = vshrl.u32 %v1133, 7
        %v1135 = vsub.s32 %v1132, %v1134
        %v1136 = vrot.slane %v1128, %v1135
        %v1138 = vunpack.c.l.s4 1983009808
        %v1139 = vunpack.c.0.s8 %v1138
        %v1140 = vlaneseq
        %v1141 = vshrl.u32 %v1140, 7
        %v1142 = vsub.s32 %v1139, %v1141
        %v1143 = vrot.slane %v1129, %v1142
        %v1144 = vcombine.low %v648, %v664
        %v1145 = vcombine.high %v648, %v664
        %v1147 = vunpack.c.l.s4 1983009808
        %v1148 = vunpack.c.0.s8 %v1147
        %v1149 = vlaneseq
        %v1150 = vshrl.u32 %v1149, 7
        %v1151 = vsub.s32 %v1148, %v1150
        %v1152 = vrot.slane %v1144, %v1151
        %v1154 = vunpack.c.l.s4 1983009808
        %v1155 = vunpack.c.0.s8 %v1154
        %v1156 = vlaneseq
        %v1157 = vshrl.u32 %v1156, 7
        %v1158 = vsub.s32 %v1155, %v1157
        %v1159 = vrot.slane %v1145, %v1158
        %v1160 = vcombine.low %v1104, %v1120
        %v1161 = vcombine.high %v1104, %v1120
        %v1163 = vunpack.c.l.s4 1934713408
        %v1164 = vunpack.c.0.s8 %v1163
        %v1165 = vlaneseq
        %v1166 = vshrl.u32 %v1165, 7
        %v1167 = vsub.s32 %v1164, %v1166
        %v1168 = vrot.slane %v1160, %v1167
        %v1170 = vunpack.c.l.s4 1934713408
        %v1171 = vunpack.c.0.s8 %v1170
        %v1172 = vlaneseq
        %v1173 = vshrl.u32 %v1172, 7
        %v1174 = vsub.s32 %v1171, %v1173
        %v1175 = vrot.slane %v1161, %v1174
        %v1176 = vcombine.low %v1111, %v1127
        %v1177 = vcombine.high %v1111, %v1127
        %v1179 = vunpack.c.l.s4 1934713408
        %v1180 = vunpack.c.0.s8 %v1179
        %v1181 = vlaneseq
        %v1182 = vshrl.u32 %v1181, 7
        %v1183 = vsub.s32 %v1180, %v1182
        %v1184 = vrot.slane %v1176, %v1183
        %v1186 = vunpack.c.l.s4 1934713408
        %v1187 = vunpack.c.0.s8 %v1186
        %v1188 = vlaneseq
        %v1189 = vshrl.u32 %v1188, 7
        %v1190 = vsub.s32 %v1187, %v1189
        %v1191 = vrot.slane %v1177, %v1190
        %v1192 = vcombine.low %v1136, %v1152
        %v1193 = vcombine.high %v1136, %v1152
        %v1195 = vunpack.c.l.s4 1934713408
        %v1196 = vunpack.c.0.s8 %v1195
        %v1197 = vlaneseq
        %v1198 = vshrl.u32 %v1197, 7
        %v1199 = vsub.s32 %v1196, %v1198
        %v1200 = vrot.slane %v1192, %v1199
        %v1202 = vunpack.c.l.s4 1934713408
        %v1203 = vunpack.c.0.s8 %v1202
        %v1204 = vlaneseq
        %v1205 = vshrl.u32 %v1204, 7
        %v1206 = vsub.s32 %v1203, %v1205
        %v1207 = vrot.slane %v1193, %v1206
        %v1208 = vcombine.low %v1143, %v1159
        %v1209 = vcombine.high %v1143, %v1159
        %v1211 = vunpack.c.l.s4 1934713408
        %v1212 = vunpack.c.0.s8 %v1211
        %v1213 = vlaneseq
        %v1214 = vshrl.u32 %v1213, 7
        %v1215 = vsub.s32 %v1212, %v1214
        %v1216 = vrot.slane %v1208, %v1215
        %v1218 = vunpack.c.l.s4 1934713408
        %v1219 = vunpack.c.0.s8 %v1218
        %v1220 = vlaneseq
        %v1221 = vshrl.u32 %v1220, 7
        %v1222 = vsub.s32 %v1219, %v1221
        %v1223 = vrot.slane %v1209, %v1222
        %v1224 = vcombine.low %v1168, %v1200
        %v1225 = vcombine.high %v1168, %v1200
        %v1226 = vcombine.low %v1175, %v1207
        %v1227 = vcombine.high %v1175, %v1207
        %v1228 = vcombine.low %v1184, %v1216
        %v1229 = vcombine.high %v1184, %v1216
        %v1230 = vcombine.low %v1191, %v1223
        %v1231 = vcombine.high %v1191, %v1223
        %v1232 = vcombine.high %v668, %v683
        %v1234 = vunpack.c.l.s4 1983009808
        %v1235 = vunpack.c.0.s8 %v1234
        %v1236 = vlaneseq
        %v1237 = vshrl.u32 %v1236, 7
        %v1238 = vsub.s32 %v1235, %v1237
        %v1239 = vrot.slane %v668, %v1238
        %v1241 = vunpack.c.l.s4 1983009808
        %v1242 = vunpack.c.0.s8 %v1241
        %v1243 = vlaneseq
        %v1244 = vshrl.u32 %v1243, 7
        %v1245 = vsub.s32 %v1242, %v1244
        %v1246 = vrot.slane %v1232, %v1245
        %v1247 = vcombine.high %v676, %v683
        %v1249 = vunpack.c.l.s4 1983009808
        %v1250 = vunpack.c.0.s8 %v1249
        %v1251 = vlaneseq
        %v1252 = vshrl.u32 %v1251, 7
        %v1253 = vsub.s32 %v1250, %v1252
        %v1254 = vrot.slane %v676, %v1253
        %v1256 = vunpack.c.l.s4 1983009808
        %v1257 = vunpack.c.0.s8 %v1256
        %v1258 = vlaneseq
        %v1259 = vshrl.u32 %v1258, 7
        %v1260 = vsub.s32 %v1257, %v1259
        %v1261 = vrot.slane %v1247, %v1260
        %v1262 = vcombine.low %v1239, %v1254
        %v1263 = vcombine.high %v1239, %v1254
        %v1265 = vunpack.c.l.s4 1934713408
        %v1266 = vunpack.c.0.s8 %v1265
        %v1267 = vlaneseq
        %v1268 = vshrl.u32 %v1267, 7
        %v1269 = vsub.s32 %v1266, %v1268
        %v1270 = vrot.slane %v1262, %v1269
        %v1272 = vunpack.c.l.s4 1934713408
        %v1273 = vunpack.c.0.s8 %v1272
        %v1274 = vlaneseq
        %v1275 = vshrl.u32 %v1274, 7
        %v1276 = vsub.s32 %v1273, %v1275
        %v1277 = vrot.slane %v1263, %v1276
        %v1278 = vcombine.low %v1246, %v1261
        %v1279 = vcombine.high %v1246, %v1261
        %v1281 = vunpack.c.l.s4 1934713408
        %v1282 = vunpack.c.0.s8 %v1281
        %v1283 = vlaneseq
        %v1284 = vshrl.u32 %v1283, 7
        %v1285 = vsub.s32 %v1282, %v1284
        %v1286 = vrot.slane %v1278, %v1285
        %v1288 = vunpack.c.l.s4 1934713408
        %v1289 = vunpack.c.0.s8 %v1288
        %v1290 = vlaneseq
        %v1291 = vshrl.u32 %v1290, 7
        %v1292 = vsub.s32 %v1289, %v1291
        %v1293 = vrot.slane %v1279, %v1292
        %v1294 = vcombine.high %v1270, 0
        %v1295 = vcombine.high %v1277, 0
        %v1296 = vcombine.high %v1286, 0
        %v1297 = vcombine.high %v1293, 0
        %v1298 = vcombine.high %v672, %v686
        %v1300 = vunpack.c.l.s4 1983009808
        %v1301 = vunpack.c.0.s8 %v1300
        %v1302 = vlaneseq
        %v1303 = vshrl.u32 %v1302, 7
        %v1304 = vsub.s32 %v1301, %v1303
        %v1305 = vrot.slane %v672, %v1304
        %v1307 = vunpack.c.l.s4 1983009808
        %v1308 = vunpack.c.0.s8 %v1307
        %v1309 = vlaneseq
        %v1310 = vshrl.u32 %v1309, 7
        %v1311 = vsub.s32 %v1308, %v1310
        %v1312 = vrot.slane %v1298, %v1311
        %v1313 = vcombine.high %v680, %v686
        %v1315 = vunpack.c.l.s4 1983009808
        %v1316 = vunpack.c.0.s8 %v1315
        %v1317 = vlaneseq
        %v1318 = vshrl.u32 %v1317, 7
        %v1319 = vsub.s32 %v1316, %v1318
        %v1320 = vrot.slane %v680, %v1319
        %v1322 = vunpack.c.l.s4 1983009808
        %v1323 = vunpack.c.0.s8 %v1322
        %v1324 = vlaneseq
        %v1325 = vshrl.u32 %v1324, 7
        %v1326 = vsub.s32 %v1323, %v1325
        %v1327 = vrot.slane %v1313, %v1326
        %v1328 = vcombine.low %v1305, %v1320
        %v1329 = vcombine.high %v1305, %v1320
        %v1331 = vunpack.c.l.s4 1934713408
        %v1332 = vunpack.c.0.s8 %v1331
        %v1333 = vlaneseq
        %v1334 = vshrl.u32 %v1333, 7
        %v1335 = vsub.s32 %v1332, %v1334
        %v1336 = vrot.slane %v1328, %v1335
        %v1338 = vunpack.c.l.s4 1934713408
        %v1339 = vunpack.c.0.s8 %v1338
        %v1340 = vlaneseq
        %v1341 = vshrl.u32 %v1340, 7
        %v1342 = vsub.s32 %v1339, %v1341
        %v1343 = vrot.slane %v1329, %v1342
        %v1344 = vcombine.low %v1312, %v1327
        %v1345 = vcombine.high %v1312, %v1327
        %v1347 = vunpack.c.l.s4 1934713408
        %v1348 = vunpack.c.0.s8 %v1347
        %v1349 = vlaneseq
        %v1350 = vshrl.u32 %v1349, 7
        %v1351 = vsub.s32 %v1348, %v1350
        %v1352 = vrot.slane %v1344, %v1351
        %v1354 = vunpack.c.l.s4 1934713408
        %v1355 = vunpack.c.0.s8 %v1354
        %v1356 = vlaneseq
        %v1357 = vshrl.u32 %v1356, 7
        %v1358 = vsub.s32 %v1355, %v1357
        %v1359 = vrot.slane %v1345, %v1358
        %v1360 = vcombine.high %v1336, 0
        %v1361 = vcombine.high %v1343, 0
        %v1362 = vcombine.high %v1352, 0
        %v1363 = vcombine.high %v1359, 0
        %1367 = vrot.lane.b32.xlu0 %v952, 16
        %v1368 = vpop.permute.xlu0 %1367
        %1369 = vrot.lane.b32.xlu0 %v1224, 16
        %v1370 = vpop.permute.xlu0 %1369
        %1371 = vrot.lane.b32.xlu0 %v1336, 16
        %v1372 = vpop.permute.xlu0 %1371
        %1376 = vrot.lane.b32.xlu0 %v817, 32
        %v1377 = vpop.permute.xlu0 %1376
        %1378 = vrot.lane.b32.xlu0 %v1089, 32
        %v1379 = vpop.permute.xlu0 %1378
        %1380 = vrot.lane.b32.xlu0 %v1294, 32
        %v1381 = vpop.permute.xlu0 %1380
        %1385 = vrot.lane.b32.xlu0 %v953, 48
        %v1386 = vpop.permute.xlu0 %1385
        %1387 = vrot.lane.b32.xlu0 %v1225, 48
        %v1388 = vpop.permute.xlu0 %1387
        %1389 = vrot.lane.b32.xlu0 %v1360, 48
        %v1390 = vpop.permute.xlu0 %1389
        %1394 = vrot.lane.b32.xlu0 %v818, 64
        %v1395 = vpop.permute.xlu0 %1394
        %1396 = vrot.lane.b32.xlu0 %v1090, 64
        %v1397 = vpop.permute.xlu0 %1396
        %1398 = vrot.lane.b32.xlu0 %v1277, 64
        %v1399 = vpop.permute.xlu0 %1398
        %1403 = vrot.lane.b32.xlu0 %v954, 80
        %v1404 = vpop.permute.xlu0 %1403
        %1405 = vrot.lane.b32.xlu0 %v1226, 80
        %v1406 = vpop.permute.xlu0 %1405
        %1407 = vrot.lane.b32.xlu0 %v1343, 80
        %v1408 = vpop.permute.xlu0 %1407
        %1412 = vrot.lane.b32.xlu0 %v819, 96
        %v1413 = vpop.permute.xlu0 %1412
        %1414 = vrot.lane.b32.xlu0 %v1091, 96
        %v1415 = vpop.permute.xlu0 %1414
        %1416 = vrot.lane.b32.xlu0 %v1295, 96
        %v1417 = vpop.permute.xlu0 %1416
        %1421 = vrot.lane.b32.xlu0 %v955, 112
        %v1422 = vpop.permute.xlu0 %1421
        %1423 = vrot.lane.b32.xlu0 %v1227, 112
        %v1424 = vpop.permute.xlu0 %1423
        %1425 = vrot.lane.b32.xlu0 %v1361, 112
        %v1426 = vpop.permute.xlu0 %1425
        %1430 = vrot.lane.b32.xlu0 %v956, 16
        %v1431 = vpop.permute.xlu0 %1430
        %1432 = vrot.lane.b32.xlu0 %v1228, 16
        %v1433 = vpop.permute.xlu0 %1432
        %1434 = vrot.lane.b32.xlu0 %v1352, 16
        %v1435 = vpop.permute.xlu0 %1434
        %1439 = vrot.lane.b32.xlu0 %v821, 32
        %v1440 = vpop.permute.xlu0 %1439
        %1441 = vrot.lane.b32.xlu0 %v1093, 32
        %v1442 = vpop.permute.xlu0 %1441
        %1443 = vrot.lane.b32.xlu0 %v1296, 32
        %v1444 = vpop.permute.xlu0 %1443
        %1448 = vrot.lane.b32.xlu0 %v957, 48
        %v1449 = vpop.permute.xlu0 %1448
        %1450 = vrot.lane.b32.xlu0 %v1229, 48
        %v1451 = vpop.permute.xlu0 %1450
        %1452 = vrot.lane.b32.xlu0 %v1362, 48
        %v1453 = vpop.permute.xlu0 %1452
        %1457 = vrot.lane.b32.xlu0 %v822, 64
        %v1458 = vpop.permute.xlu0 %1457
        %1459 = vrot.lane.b32.xlu0 %v1094, 64
        %v1460 = vpop.permute.xlu0 %1459
        %1461 = vrot.lane.b32.xlu0 %v1293, 64
        %v1462 = vpop.permute.xlu0 %1461
        %1466 = vrot.lane.b32.xlu0 %v958, 80
        %v1467 = vpop.permute.xlu0 %1466
        %1468 = vrot.lane.b32.xlu0 %v1230, 80
        %v1469 = vpop.permute.xlu0 %1468
        %1470 = vrot.lane.b32.xlu0 %v1359, 80
        %v1471 = vpop.permute.xlu0 %1470
        %1475 = vrot.lane.b32.xlu0 %v823, 96
        %v1476 = vpop.permute.xlu0 %1475
        %1477 = vrot.lane.b32.xlu0 %v1095, 96
        %v1478 = vpop.permute.xlu0 %1477
        %1479 = vrot.lane.b32.xlu0 %v1297, 96
        %v1480 = vpop.permute.xlu0 %1479
        %1484 = vrot.lane.b32.xlu0 %v959, 112
        %v1485 = vpop.permute.xlu0 %1484
        %1486 = vrot.lane.b32.xlu0 %v1231, 112
        %v1487 = vpop.permute.xlu0 %1486
        %1488 = vrot.lane.b32.xlu0 %v1363, 112
        %v1489 = vpop.permute.xlu0 %1488
        %vm1490 = vcmask 130048
        %v1493 = vsel %vm1490, %v816, %v1368
        %v1496 = vsel %vm1490, %v1088, %v1370
        %v1499 = vsel %vm1490, %v1270, %v1372
        %vm1500 = vcmask 261120
        %v1502 = vsel %vm1500, %v1493, %v1377
        %v1504 = vsel %vm1500, %v1496, %v1379
        %v1506 = vsel %vm1500, %v1499, %v1381
        %vm1507 = vcmask 392192
        %v1509 = vsel %vm1507, %v1502, %v1386
        %v1511 = vsel %vm1507, %v1504, %v1388
        %v1513 = vsel %vm1507, %v1506, %v1390
        %vm1514 = vcmask 523264
        %v1516 = vsel %vm1514, %v1509, %v1395
        %v1518 = vsel %vm1514, %v1511, %v1397
        %v1520 = vsel %vm1514, %v1513, %v1399
        %vm1521 = vcmask 654336
        %v1523 = vsel %vm1521, %v1516, %v1404
        %v1525 = vsel %vm1521, %v1518, %v1406
        %v1527 = vsel %vm1521, %v1520, %v1408
        %vm1528 = vcmask 785408
        %v1530 = vsel %vm1528, %v1523, %v1413
        %v1532 = vsel %vm1528, %v1525, %v1415
        %v1534 = vsel %vm1528, %v1527, %v1417
        %vm1535 = vcmask 916480
        %v1537 = vsel %vm1535, %v1530, %v1422
        %v1540 = vsel %vm1535, %v1532, %v1424
        %v1543 = vsel %vm1535, %v1534, %v1426
        %v1546 = vsel %vm1490, %v820, %v1431
        %v1549 = vsel %vm1490, %v1092, %v1433
        %v1552 = vsel %vm1490, %v1286, %v1435
        %v1554 = vsel %vm1500, %v1546, %v1440
        %v1556 = vsel %vm1500, %v1549, %v1442
        %v1558 = vsel %vm1500, %v1552, %v1444
        %v1560 = vsel %vm1507, %v1554, %v1449
        %v1562 = vsel %vm1507, %v1556, %v1451
        %v1564 = vsel %vm1507, %v1558, %v1453
        %v1566 = vsel %vm1514, %v1560, %v1458
        %v1568 = vsel %vm1514, %v1562, %v1460
        %v1570 = vsel %vm1514, %v1564, %v1462
        %v1572 = vsel %vm1521, %v1566, %v1467
        %v1574 = vsel %vm1521, %v1568, %v1469
        %v1576 = vsel %vm1521, %v1570, %v1471
        %v1578 = vsel %vm1528, %v1572, %v1476
        %v1580 = vsel %vm1528, %v1574, %v1478
        %v1582 = vsel %vm1528, %v1576, %v1480
        %v1584 = vsel %vm1535, %v1578, %v1485
        %v1587 = vsel %vm1535, %v1580, %v1487
        %v1590 = vsel %vm1535, %v1582, %v1489
        %v1591 = vld [vmem:[%s2] sm:$0xff]
        %v1592 = vpack.c.bf16 %v1591, %v1591
        %v1593 = vld [vmem:[%s3] sm:$0xff]
        %1595 = vset.pattern.permute.xlu0 0
        %1596 = vperm.xlu0 %1595, %v1593
        %v1597 = vpop.permute.xlu0 %1596
        %vm1599 = vcmask 293888
        %v1601 = vsel %vm1599, %v1592, 0
        %vm1603 = vcmask 1041408
        %v1604 = vsel %vm1603, %v1543, 0
        %v1606 = vsel %vm1603, %v1590, 0
        %1608 = vmatprep.subr.bf16.mxu0 0
        %1609 = vmatpush1.bf16.msra.mxu0 0
        %1610 = vmatprep.subr.bf16.mxu0 0
        %1611 = vmatpush1.bf16.msra.mxu0 0
        %1612 = vmatprep.subr.bf16.mxu0 0
        %1613 = vmatpush1.bf16.msra.mxu0 0
        %1614 = vmatprep.subr.bf16.mxu0 0
        %1615 = vmatpush1.bf16.msra.mxu0 0
        %1616 = vmatprep.subr.bf16.mxu0 0
        %1617 = vmatpush1.bf16.msra.mxu0 0
        %1618 = vmatprep.subr.bf16.mxu0 %v1606
        %1619 = vmatpush1.bf16.msra.mxu0 %v1604
        %1620 = vmatprep.subr.bf16.mxu0 %v1587
        %1621 = vmatpush1.bf16.msra.mxu0 %v1540
        %1622 = vmatprep.subr.bf16.mxu0 %v1584
        %1623 = vmatpush1.bf16.msra.mxu0 %v1537
        %1624 = vmatprep.subr.bf16.mxu0 0
        %1625 = vmatpush2.bf16.msra.mxu0 0
        %1626 = vmatprep.subr.bf16.mxu0 0
        %1627 = vmatpush2.bf16.msra.mxu0 0
        %1628 = vmatprep.subr.bf16.mxu0 0
        %1629 = vmatpush2.bf16.msra.mxu0 0
        %1630 = vmatprep.subr.bf16.mxu0 0
        %1631 = vmatpush2.bf16.msra.mxu0 0
        %1632 = vmatprep.subr.bf16.mxu0 0
        %1633 = vmatpush2.bf16.msra.mxu0 0
        %1634 = vmatprep.subr.bf16.mxu0 0
        %1635 = vmatpush2.bf16.msra.mxu0 0
        %1636 = vmatprep.subr.bf16.mxu0 0
        %1637 = vmatpush2.bf16.msra.mxu0 0
        %1638 = vmatprep.subr.bf16.mxu0 0
        %1639 = vmatpush2.bf16.msra.mxu0 0
        %1640 = vmatprep.mubr.bf16.mxu0 0
        %1641 = vmatmul.mubr.bf16.gmra.mxu0 %v1601
        %v1642 = vpop.f32.mrf.mxu0
        %v1643 = vadd.f32 %v1597, %v1642
        %v1644 = vpop.f32.mrf.mxu0
        %v1645 = vadd.f32 %v1597, %v1644
        %v1646 = vpop.f32.mrf.mxu0
        %v1647 = vpop.f32.mrf.mxu0
        %1648 = vdwg.mxu0
        %v1649 = vmax.f32 %v1643, 0.0
        %v1650 = vmax.f32 %v1645, 0.0
        %v1651 = vpack.c.bf16 %v1649, %v1649
        %v1652 = vpack.c.bf16 %v1650, %v1650
        %v1655 = vunpack.c.l.b16 %v1651
        %v1656 = vunpack.c.l.b16 %v1652
        %v1657 = vpack.c.b16 %v1656, %v1655
        %1659 = vst [vmem:[%s397] sm:$0xff] %v1657
        %s1660 = smul.u32 2, %s20
        %p1661 = scmp.lt.s32.totalorder %s19, 1
        %s1662 = scalar_select %p1661, %s19, 1
        %p1663 = scmp.lt.s32.totalorder %s1660, 1
        %s1664 = scalar_select %p1663, %s1660, 1
        %s1665 = smul.addr %s1662, 2
        %s1666 = sadd.s32 %s1664, %s1665
        %s1667 = smul.addr %s1666, 4
        %s1668 = scalar_lea.vmem %s4, %s1667
        // Predicated region
        $region119: #{pixel_attention_forward.8} parent=109 // pred_check
          %p1669 = pneg %p147
        $region120: #{pixel_attention_forward.8} parent=109 // pred_check_branch
          %1671 = sbr.rel (%p1669) target = $region122
        $region121: #{pixel_attention_forward.8} parent=109 // pred_region
          %s1672 = smul.u32 2, %s20
        $region122: #{pixel_attention_forward.8} parent=109 // pred_fallthru
          _
      $region110: #{pixel_attention_forward.8} parent=5 // pred_fallthru
        _
      %p1673 = scmp.le.s32.totalorder 2, %s10
      // Predicated region
      $region123: #{pixel_attention_forward.8} parent=5 // pred_check
        %p1674 = pneg %p1673
      $region124: #{pixel_attention_forward.8} parent=5 // pred_check_branch
        %1676 = sbr.rel (%p1674) target = $region126
      $region125: #{pixel_attention_forward.8} parent=5 // pred_region
        %s1677 = ssub.s32 %s10, 2
        // Predicated region
        $region127: #{pixel_attention_forward.8} parent=125 // pred_check
          %p1678 = pneg %p153
        $region128: #{pixel_attention_forward.8} parent=125 // pred_check_branch
          %1680 = sbr.rel (%p1678) target = $region130
        $region129: #{pixel_attention_forward.8} parent=125 // pred_region
          %s1681 = smul.u32 2, %s22
          %p1682 = scmp.lt.s32.totalorder %s21, 1
          %s1683 = scalar_select %p1682, %s21, 1
          %p1684 = scmp.lt.s32.totalorder %s1681, 1
          %s1685 = scalar_select %p1684, %s1681, 1
          %s1686 = smul.addr %s1683, 2
          %s1687 = sadd.s32 %s1685, %s1686
          %s1688 = smul.addr %s1687, 4
          %s1689 = scalar_lea.vmem %s4, %s1688
        $region130: #{pixel_attention_forward.8} parent=125 // pred_fallthru
          _
      $region126: #{pixel_attention_forward.8} parent=5 // pred_fallthru
        _
    $region6: #{pixel_attention_forward.8} parent=1 // loop_footer
      %s14 = sadd.s32 1, %s10
    $region7: #{pixel_attention_forward.8} parent=1 // loop_footer_branch
      %9 = sbr.rel target = $region3
    $region8: #{pixel_attention_forward.8} parent=1 // loop_exit
      _

// kernel: pixel_attention_forward.7
$region0: #{pixel_attention_forward.7}
  #allocation0 [shape = 'u32[]', space=smem, size = 0x4, offset = 0x4, fixed_abs, tag = 'smem constant byte address 0x4 - core index']
  #allocation1 [shape = 'u32[144,128]{1,0:T(1,128)}', space=vmem, size = 0x12000, scoped, tag = 'internal scratch']
  %s0 = inlined_call_operand.vmem [shape: bf16[2,4,32,18], index: 0, kind: input, shape index: {}, may-alias: {0,1}]
  %s1 = inlined_call_operand.vmem [shape: bf16[2,4,32,18], index: 1, kind: input, shape index: {}, may-alias: {0,1}]
  %s2 = inlined_call_operand.vmem [shape: f32[4,36], index: 2, kind: input, shape index: {}]
  %s3 = inlined_call_operand.vmem [shape: f32[4,1], index: 3, kind: input, shape index: {}]
  %s4 = inlined_call_operand.vmem [shape: bf16[2,4,256], index: 4, kind: output, shape index: {}]
  %s5 = sld [smem:[#allocation0]]
  $region131: #{pixel_attention_forward.7} parent=0
    _
  %s7 = ssub.s32 1, %s5
  %s8 = scalar_select 0, %s7, %s5
  $region1: #{pixel_attention_forward.7} parent=0
    #allocation2 [shape = 'u8[32768]{0}', space=vmem, size = 0x8000, scoped, tag = 'input window, operand 0']
    #allocation3 [shape = 'u8[32768]{0}', space=vmem, size = 0x8000, scoped, tag = 'input window, operand 1']
    loop: start=0, step=1, limit=4
    $region2: #{pixel_attention_forward.7} parent=1 // loop_pre_header
      _
    $region3: #{pixel_attention_forward.7} parent=1 // loop_header
      %s10 = sphi 0, %s14
      %p11 = scmp.ge.s32.totalorder %s10, 4
      %s17 = sphi 0, %s29
      %s18 = sphi 0, %s25
      %s19 = sphi 0, %s17
      %s20 = sphi 0, %s18
      %s21 = sphi 0, %s19
      %s22 = sphi 0, %s20
      %s34 = sphi 0, %s36
      %s37 = sphi 0, %s34
      %s38 = sphi 0, %s37
      %s54 = sphi 0, %s38
      %s64 = sphi 0, %s66
      %s67 = sphi 0, %s64
      %s68 = sphi 0, %s67
      %s84 = sphi 0, %s68
      %s88 = sphi 0, %s88
      %s90 = sphi 0, %s88
      %s91 = sphi 0, %s90
      %s105 = sphi 0, %s91
      %s109 = sphi 0, %s109
      %s111 = sphi 0, %s109
      %s112 = sphi 0, %s111
      %s126 = sphi 0, %s112
      %s134 = sphi 0, %s136
      %s137 = sphi 0, %s134
      %s138 = sphi 0, %s137
      %s154 = sphi 0, %s138
    $region4: #{pixel_attention_forward.7} parent=1 // loop_header_branch
      %13 = sbr.rel (%p11) target = $region8
    $region5: #{pixel_attention_forward.7} parent=1 // loop_body
      %s15 = ssub.s32 %s10, 1
      %s16 = ssub.s32 %s10, 2
      %s23 = sadd.s32 1, %s18
      %p24 = scmp.ge.s32.totalorder %s23, 1
      %s25 = scalar_select %p24, 0, %s23
      %s26 = sadd.s32 1, %s17
      %s27 = scalar_select %p24, %s26, %s17
      %p28 = scmp.ge.s32.totalorder %s27, 2
      %s29 = scalar_select %p28, 0, %s27
      %s30 = ssub.s32 %s17, %s29
      %s31 = ssub.s32 %s18, %s25
      %s32 = sor.u32 %s30, %s31
      %p33 = scmp.eq.s32.totalorder %s32, 0
      %s35 = sadd.s32 %s34, 1
      %s36 = scalar_select %p33, %s34, %s35
      %p39 = pneg %p33
      %p40 = scmp.eq.s32.totalorder %s10, 1
      %p41 = por %p39, %p40
      %p42 = scmp.ne.s32.totalorder %s34, %s37
      %p43 = scmp.eq.s32.totalorder %s10, 0
      %p44 = por %p42, %p43
      %p45 = scmp.ne.s32.totalorder %s34, %s37
      %p46 = scmp.eq.s32.totalorder %s15, 1
      %p47 = por %p45, %p46
      %p48 = scmp.ne.s32.totalorder %s37, %s38
      %p49 = scmp.eq.s32.totalorder %s15, 0
      %p50 = por %p48, %p49
      %p51 = scmp.ne.s32.totalorder %s37, %s38
      %p52 = scmp.eq.s32.totalorder %s16, 1
      %p53 = por %p51, %p52
      %p55 = scmp.ne.s32.totalorder %s38, %s54
      %p56 = scmp.eq.s32.totalorder %s16, 0
      %p57 = por %p55, %p56
      %s58 = sadd.s32 %s18, 1
      %s59 = sadd.s32 %s25, 1
      %s60 = ssub.s32 %s17, %s29
      %s61 = ssub.s32 %s58, %s59
      %s62 = sor.u32 %s60, %s61
      %p63 = scmp.eq.s32.totalorder %s62, 0
      %s65 = sadd.s32 %s64, 1
      %s66 = scalar_select %p63, %s64, %s65
      %p69 = pneg %p63
      %p70 = scmp.eq.s32.totalorder %s10, 1
      %p71 = por %p69, %p70
      %p72 = scmp.ne.s32.totalorder %s64, %s67
      %p73 = scmp.eq.s32.totalorder %s10, 0
      %p74 = por %p72, %p73
      %p75 = scmp.ne.s32.totalorder %s64, %s67
      %p76 = scmp.eq.s32.totalorder %s15, 1
      %p77 = por %p75, %p76
      %p78 = scmp.ne.s32.totalorder %s67, %s68
      %p79 = scmp.eq.s32.totalorder %s15, 0
      %p80 = por %p78, %p79
      %p81 = scmp.ne.s32.totalorder %s67, %s68
      %p82 = scmp.eq.s32.totalorder %s16, 1
      %p83 = por %p81, %p82
      %p85 = scmp.ne.s32.totalorder %s68, %s84
      %p86 = scmp.eq.s32.totalorder %s16, 0
      %p87 = por %p85, %p86
      %s89 = sadd.s32 %s88, 1
      %p92 = scmp.eq.s32.totalorder %s10, 1
      %p93 = scmp.ne.s32.totalorder %s88, %s90
      %p94 = scmp.eq.s32.totalorder %s10, 0
      %p95 = por %p93, %p94
      %p96 = scmp.ne.s32.totalorder %s88, %s90
      %p97 = scmp.eq.s32.totalorder %s15, 1
      %p98 = por %p96, %p97
      %p99 = scmp.ne.s32.totalorder %s90, %s91
      %p100 = scmp.eq.s32.totalorder %s15, 0
      %p101 = por %p99, %p100
      %p102 = scmp.ne.s32.totalorder %s90, %s91
      %p103 = scmp.eq.s32.totalorder %s16, 1
      %p104 = por %p102, %p103
      %p106 = scmp.ne.s32.totalorder %s91, %s105
      %p107 = scmp.eq.s32.totalorder %s16, 0
      %p108 = por %p106, %p107
      %s110 = sadd.s32 %s109, 1
      %p113 = scmp.eq.s32.totalorder %s10, 1
      %p114 = scmp.ne.s32.totalorder %s109, %s111
      %p115 = scmp.eq.s32.totalorder %s10, 0
      %p116 = por %p114, %p115
      %p117 = scmp.ne.s32.totalorder %s109, %s111
      %p118 = scmp.eq.s32.totalorder %s15, 1
      %p119 = por %p117, %p118
      %p120 = scmp.ne.s32.totalorder %s111, %s112
      %p121 = scmp.eq.s32.totalorder %s15, 0
      %p122 = por %p120, %p121
      %p123 = scmp.ne.s32.totalorder %s111, %s112
      %p124 = scmp.eq.s32.totalorder %s16, 1
      %p125 = por %p123, %p124
      %p127 = scmp.ne.s32.totalorder %s112, %s126
      %p128 = scmp.eq.s32.totalorder %s16, 0
      %p129 = por %p127, %p128
      %s130 = ssub.s32 %s17, %s29
      %s131 = ssub.s32 %s18, %s25
      %s132 = sor.u32 %s130, %s131
      %p133 = scmp.eq.s32.totalorder %s132, 0
      %s135 = sadd.s32 %s134, 1
      %s136 = scalar_select %p133, %s134, %s135
      %p139 = pneg %p133
      %p140 = scmp.eq.s32.totalorder %s10, 1
      %p141 = por %p139, %p140
      %p142 = scmp.ne.s32.totalorder %s134, %s137
      %p143 = scmp.eq.s32.totalorder %s10, 0
      %p144 = por %p142, %p143
      %p145 = scmp.ne.s32.totalorder %s134, %s137
      %p146 = scmp.eq.s32.totalorder %s15, 1
      %p147 = por %p145, %p146
      %p148 = scmp.ne.s32.totalorder %s137, %s138
      %p149 = scmp.eq.s32.totalorder %s15, 0
      %p150 = por %p148, %p149
      %p151 = scmp.ne.s32.totalorder %s137, %s138
      %p152 = scmp.eq.s32.totalorder %s16, 1
      %p153 = por %p151, %p152
      %p155 = scmp.ne.s32.totalorder %s138, %s154
      %p156 = scmp.eq.s32.totalorder %s16, 0
      %p157 = por %p155, %p156
      %p158 = scmp.le.s32.totalorder 1, %s10
      %p159 = scmp.lt.s32.totalorder %s10, 3
      %p160 = pnand %p158, %p159
      %p161 = pneg %p160
      // Predicated region
      $region9: #{pixel_attention_forward.7} parent=5 // pred_check
        _
      $region10: #{pixel_attention_forward.7} parent=5 // pred_check_branch
        %163 = sbr.rel (%p160) target = $region12
      $region11: #{pixel_attention_forward.7} parent=5 // pred_region
        %s164 = ssub.s32 %s10, 1
        // Predicated region
        $region13: #{pixel_attention_forward.7} parent=11 // pred_check
          %p165 = pneg %p101
        $region14: #{pixel_attention_forward.7} parent=11 // pred_check_branch
          %167 = sbr.rel (%p165) target = $region16
        $region15: #{pixel_attention_forward.7} parent=11 // pred_region
          _
        $region16: #{pixel_attention_forward.7} parent=11 // pred_fallthru
          _
        // Predicated region
        $region17: #{pixel_attention_forward.7} parent=11 // pred_check
          %p168 = pneg %p122
        $region18: #{pixel_attention_forward.7} parent=11 // pred_check_branch
          %170 = sbr.rel (%p168) target = $region20
        $region19: #{pixel_attention_forward.7} parent=11 // pred_region
          _
        $region20: #{pixel_attention_forward.7} parent=11 // pred_fallthru
          _
      $region12: #{pixel_attention_forward.7} parent=5 // pred_fallthru
        _
      %p171 = scmp.lt.s32.totalorder %s10, 2
      // Predicated region
      $region21: #{pixel_attention_forward.7} parent=5 // pred_check
        %p172 = pneg %p171
      $region22: #{pixel_attention_forward.7} parent=5 // pred_check_branch
        %174 = sbr.rel (%p172) target = $region24
      $region23: #{pixel_attention_forward.7} parent=5 // pred_region
        // Predicated region
        $region25: #{pixel_attention_forward.7} parent=23 // pred_check
          %p175 = pneg %p44
        $region26: #{pixel_attention_forward.7} parent=23 // pred_check_branch
          %177 = sbr.rel (%p175) target = $region28
        $region27: #{pixel_attention_forward.7} parent=23 // pred_region
          %s178 = sand.u32 %s34, 1
          %s179 = sand.u32 %s34, 1
          %s180 = smul.addr %s179, 32
          %s181 = scalar_lea.vmem [#allocation2], %s180
          %s182 = smul.u32 2, %s18
          %s183 = smul.addr %s17, 16
          %s184 = sadd.s32 %s182, %s183
          %s185 = smul.addr %s184, 4
          %s186 = scalar_lea.vmem %s0, %s185
          // Predicated region
          $region29: #{pixel_attention_forward.7} parent=27 // pred_check
            _
          $region30: #{pixel_attention_forward.7} parent=27 // pred_check_branch
            %188 = sbr.rel (0) target = $region32
          $region31: #{pixel_attention_forward.7} parent=27 // pred_region
            // Predicated region
            $region33: #{pixel_attention_forward.7} parent=31 // pred_check
              _
            $region34: #{pixel_attention_forward.7} parent=31 // pred_check_branch
              %190 = sbr.rel target = $region36
            $region35: #{pixel_attention_forward.7} parent=31 // pred_region
              // Predicated region
              $region48: #{pixel_attention_forward.7} parent=35 // pred_check
                _
              $region49: #{pixel_attention_forward.7} parent=35 // pred_check_branch
                %220 = sbr.rel (0) target = $region51
              $region50: #{pixel_attention_forward.7} parent=35 // pred_region
                loop: start=0, step=1, limit=1
                $region52: #{pixel_attention_forward.7} parent=50 // loop_pre_header
                  _
                $region53: #{pixel_attention_forward.7} parent=50 // loop_header
                  %s222 = sphi 0, %s226
                  %p223 = scmp.ge.s32.totalorder %s222, 1
                  %s227 = sphi %s186, %s186
                  %s228 = sphi %s181, %s181
                $region54: #{pixel_attention_forward.7} parent=50 // loop_header_branch
                  %225 = sbr.rel (%p223) target = $region58
                $region55: #{pixel_attention_forward.7} parent=50 // loop_body
                  _
                $region56: #{pixel_attention_forward.7} parent=50 // loop_footer
                  %s226 = sadd.s32 1, %s222
                $region57: #{pixel_attention_forward.7} parent=50 // loop_footer_branch
                  %221 = sbr.rel target = $region53
                $region58: #{pixel_attention_forward.7} parent=50 // loop_exit
                  _
                %s230 = ssub.s32 16, 1
                loop: start=0, step=1, limit=1
                $region59: #{pixel_attention_forward.7} parent=50 // loop_pre_header
                  _
                $region60: #{pixel_attention_forward.7} parent=50 // loop_header
                  %s232 = sphi 0, %s236
                  %p233 = scmp.ge.s32.totalorder %s232, 1
                  %s237 = sphi %s186, %s186
                  %s238 = sphi %s181, %s181
                $region61: #{pixel_attention_forward.7} parent=50 // loop_header_branch
                  %235 = sbr.rel (%p233) target = $region65
                $region62: #{pixel_attention_forward.7} parent=50 // loop_body
                  %v239 = vld [vmem:[%s237] sm:%s230]
                  %240 = vst [vmem:[%s238] sm:%s230] %v239
                  %v241 = vld [vmem:[%s237 + $0x4] sm:%s230]
                  %242 = vst [vmem:[%s238 + $0x4] sm:%s230] %v241
                  %v243 = vld [vmem:[%s237 + $0x10] sm:%s230]
                  %244 = vst [vmem:[%s238 + $0x8] sm:%s230] %v243
                  %v245 = vld [vmem:[%s237 + $0x14] sm:%s230]
                  %246 = vst [vmem:[%s238 + $0xc] sm:%s230] %v245
                  %v247 = vld [vmem:[%s237 + $0x20] sm:%s230]
                  %248 = vst [vmem:[%s238 + $0x10] sm:%s230] %v247
                  %v249 = vld [vmem:[%s237 + $0x24] sm:%s230]
                  %250 = vst [vmem:[%s238 + $0x14] sm:%s230] %v249
                  %v251 = vld [vmem:[%s237 + $0x30] sm:%s230]
                  %252 = vst [vmem:[%s238 + $0x18] sm:%s230] %v251
                  %v253 = vld [vmem:[%s237 + $0x34] sm:%s230]
                  %254 = vst [vmem:[%s238 + $0x1c] sm:%s230] %v253
                $region63: #{pixel_attention_forward.7} parent=50 // loop_footer
                  %s236 = sadd.s32 1, %s232
                $region64: #{pixel_attention_forward.7} parent=50 // loop_footer_branch
                  %231 = sbr.rel target = $region60
                $region65: #{pixel_attention_forward.7} parent=50 // loop_exit
                  _
              $region51: #{pixel_attention_forward.7} parent=35 // pred_fallthru
                _
            $region36: #{pixel_attention_forward.7} parent=31 // pred_fallthru
              _
            // Predicated region
            $region37: #{pixel_attention_forward.7} parent=31 // pred_check
              _
            $region38: #{pixel_attention_forward.7} parent=31 // pred_check_branch
              %192 = sbr.rel (0) target = $region40
            $region39: #{pixel_attention_forward.7} parent=31 // pred_region
              %s194 = ssub.s32 16, 1
              loop: start=0, step=1, limit=1
              $region41: #{pixel_attention_forward.7} parent=39 // loop_pre_header
                _
              $region42: #{pixel_attention_forward.7} parent=39 // loop_header
                %s196 = sphi 0, %s200
                %p197 = scmp.ge.s32.totalorder %s196, 1
                %s201 = sphi %s186, %s186
                %s202 = sphi %s181, %s181
              $region43: #{pixel_attention_forward.7} parent=39 // loop_header_branch
                %199 = sbr.rel (%p197) target = $region47
              $region44: #{pixel_attention_forward.7} parent=39 // loop_body
                %v203 = vld [vmem:[%s201] sm:%s194]
                %204 = vst [vmem:[%s202] sm:%s194] %v203
                %v205 = vld [vmem:[%s201 + $0x4] sm:%s194]
                %206 = vst [vmem:[%s202 + $0x4] sm:%s194] %v205
                %v207 = vld [vmem:[%s201 + $0x10] sm:%s194]
                %208 = vst [vmem:[%s202 + $0x8] sm:%s194] %v207
                %v209 = vld [vmem:[%s201 + $0x14] sm:%s194]
                %210 = vst [vmem:[%s202 + $0xc] sm:%s194] %v209
                %v211 = vld [vmem:[%s201 + $0x20] sm:%s194]
                %212 = vst [vmem:[%s202 + $0x10] sm:%s194] %v211
                %v213 = vld [vmem:[%s201 + $0x24] sm:%s194]
                %214 = vst [vmem:[%s202 + $0x14] sm:%s194] %v213
                %v215 = vld [vmem:[%s201 + $0x30] sm:%s194]
                %216 = vst [vmem:[%s202 + $0x18] sm:%s194] %v215
                %v217 = vld [vmem:[%s201 + $0x34] sm:%s194]
                %218 = vst [vmem:[%s202 + $0x1c] sm:%s194] %v217
              $region45: #{pixel_attention_forward.7} parent=39 // loop_footer
                %s200 = sadd.s32 1, %s196
              $region46: #{pixel_attention_forward.7} parent=39 // loop_footer_branch
                %195 = sbr.rel target = $region42
              $region47: #{pixel_attention_forward.7} parent=39 // loop_exit
                _
            $region40: #{pixel_attention_forward.7} parent=31 // pred_fallthru
              _
          $region32: #{pixel_attention_forward.7} parent=27 // pred_fallthru
            _
          %255 = vnop
        $region28: #{pixel_attention_forward.7} parent=23 // pred_fallthru
          _
        // Predicated region
        $region66: #{pixel_attention_forward.7} parent=23 // pred_check
          %p256 = pneg %p74
        $region67: #{pixel_attention_forward.7} parent=23 // pred_check_branch
          %258 = sbr.rel (%p256) target = $region69
        $region68: #{pixel_attention_forward.7} parent=23 // pred_region
          %s259 = sand.u32 %s64, 1
          %s260 = sand.u32 %s64, 1
          %s261 = smul.addr %s260, 32
          %s262 = scalar_lea.vmem [#allocation3], %s261
          %s263 = sadd.s32 %s18, 1
          %s264 = smul.u32 2, %s263
          %s265 = smul.addr %s17, 16
          %s266 = sadd.s32 %s264, %s265
          %s267 = smul.addr %s266, 4
          %s268 = scalar_lea.vmem %s1, %s267
          // Predicated region
          $region70: #{pixel_attention_forward.7} parent=68 // pred_check
            _
          $region71: #{pixel_attention_forward.7} parent=68 // pred_check_branch
            %270 = sbr.rel (0) target = $region73
          $region72: #{pixel_attention_forward.7} parent=68 // pred_region
            // Predicated region
            $region74: #{pixel_attention_forward.7} parent=72 // pred_check
              _
            $region75: #{pixel_attention_forward.7} parent=72 // pred_check_branch
              %272 = sbr.rel target = $region77
            $region76: #{pixel_attention_forward.7} parent=72 // pred_region
              // Predicated region
              $region89: #{pixel_attention_forward.7} parent=76 // pred_check
                _
              $region90: #{pixel_attention_forward.7} parent=76 // pred_check_branch
                %302 = sbr.rel (0) target = $region92
              $region91: #{pixel_attention_forward.7} parent=76 // pred_region
                loop: start=0, step=1, limit=1
                $region93: #{pixel_attention_forward.7} parent=91 // loop_pre_header
                  _
                $region94: #{pixel_attention_forward.7} parent=91 // loop_header
                  %s304 = sphi 0, %s308
                  %p305 = scmp.ge.s32.totalorder %s304, 1
                  %s309 = sphi %s268, %s268
                  %s310 = sphi %s262, %s262
                $region95: #{pixel_attention_forward.7} parent=91 // loop_header_branch
                  %307 = sbr.rel (%p305) target = $region99
                $region96: #{pixel_attention_forward.7} parent=91 // loop_body
                  _
                $region97: #{pixel_attention_forward.7} parent=91 // loop_footer
                  %s308 = sadd.s32 1, %s304
                $region98: #{pixel_attention_forward.7} parent=91 // loop_footer_branch
                  %303 = sbr.rel target = $region94
                $region99: #{pixel_attention_forward.7} parent=91 // loop_exit
                  _
                %s312 = ssub.s32 16, 1
                loop: start=0, step=1, limit=1
                $region100: #{pixel_attention_forward.7} parent=91 // loop_pre_header
                  _
                $region101: #{pixel_attention_forward.7} parent=91 // loop_header
                  %s314 = sphi 0, %s318
                  %p315 = scmp.ge.s32.totalorder %s314, 1
                  %s319 = sphi %s268, %s268
                  %s320 = sphi %s262, %s262
                $region102: #{pixel_attention_forward.7} parent=91 // loop_header_branch
                  %317 = sbr.rel (%p315) target = $region106
                $region103: #{pixel_attention_forward.7} parent=91 // loop_body
                  %v321 = vld [vmem:[%s319] sm:%s312]
                  %322 = vst [vmem:[%s320] sm:%s312] %v321
                  %v323 = vld [vmem:[%s319 + $0x4] sm:%s312]
                  %324 = vst [vmem:[%s320 + $0x4] sm:%s312] %v323
                  %v325 = vld [vmem:[%s319 + $0x10] sm:%s312]
                  %326 = vst [vmem:[%s320 + $0x8] sm:%s312] %v325
                  %v327 = vld [vmem:[%s319 + $0x14] sm:%s312]
                  %328 = vst [vmem:[%s320 + $0xc] sm:%s312] %v327
                  %v329 = vld [vmem:[%s319 + $0x20] sm:%s312]
                  %330 = vst [vmem:[%s320 + $0x10] sm:%s312] %v329
                  %v331 = vld [vmem:[%s319 + $0x24] sm:%s312]
                  %332 = vst [vmem:[%s320 + $0x14] sm:%s312] %v331
                  %v333 = vld [vmem:[%s319 + $0x30] sm:%s312]
                  %334 = vst [vmem:[%s320 + $0x18] sm:%s312] %v333
                  %v335 = vld [vmem:[%s319 + $0x34] sm:%s312]
                  %336 = vst [vmem:[%s320 + $0x1c] sm:%s312] %v335
                $region104: #{pixel_attention_forward.7} parent=91 // loop_footer
                  %s318 = sadd.s32 1, %s314
                $region105: #{pixel_attention_forward.7} parent=91 // loop_footer_branch
                  %313 = sbr.rel target = $region101
                $region106: #{pixel_attention_forward.7} parent=91 // loop_exit
                  _
              $region92: #{pixel_attention_forward.7} parent=76 // pred_fallthru
                _
            $region77: #{pixel_attention_forward.7} parent=72 // pred_fallthru
              _
            // Predicated region
            $region78: #{pixel_attention_forward.7} parent=72 // pred_check
              _
            $region79: #{pixel_attention_forward.7} parent=72 // pred_check_branch
              %274 = sbr.rel (0) target = $region81
            $region80: #{pixel_attention_forward.7} parent=72 // pred_region
              %s276 = ssub.s32 16, 1
              loop: start=0, step=1, limit=1
              $region82: #{pixel_attention_forward.7} parent=80 // loop_pre_header
                _
              $region83: #{pixel_attention_forward.7} parent=80 // loop_header
                %s278 = sphi 0, %s282
                %p279 = scmp.ge.s32.totalorder %s278, 1
                %s283 = sphi %s268, %s268
                %s284 = sphi %s262, %s262
              $region84: #{pixel_attention_forward.7} parent=80 // loop_header_branch
                %281 = sbr.rel (%p279) target = $region88
              $region85: #{pixel_attention_forward.7} parent=80 // loop_body
                %v285 = vld [vmem:[%s283] sm:%s276]
                %286 = vst [vmem:[%s284] sm:%s276] %v285
                %v287 = vld [vmem:[%s283 + $0x4] sm:%s276]
                %288 = vst [vmem:[%s284 + $0x4] sm:%s276] %v287
                %v289 = vld [vmem:[%s283 + $0x10] sm:%s276]
                %290 = vst [vmem:[%s284 + $0x8] sm:%s276] %v289
                %v291 = vld [vmem:[%s283 + $0x14] sm:%s276]
                %292 = vst [vmem:[%s284 + $0xc] sm:%s276] %v291
                %v293 = vld [vmem:[%s283 + $0x20] sm:%s276]
                %294 = vst [vmem:[%s284 + $0x10] sm:%s276] %v293
                %v295 = vld [vmem:[%s283 + $0x24] sm:%s276]
                %296 = vst [vmem:[%s284 + $0x14] sm:%s276] %v295
                %v297 = vld [vmem:[%s283 + $0x30] sm:%s276]
                %298 = vst [vmem:[%s284 + $0x18] sm:%s276] %v297
                %v299 = vld [vmem:[%s283 + $0x34] sm:%s276]
                %300 = vst [vmem:[%s284 + $0x1c] sm:%s276] %v299
              $region86: #{pixel_attention_forward.7} parent=80 // loop_footer
                %s282 = sadd.s32 1, %s278
              $region87: #{pixel_attention_forward.7} parent=80 // loop_footer_branch
                %277 = sbr.rel target = $region83
              $region88: #{pixel_attention_forward.7} parent=80 // loop_exit
                _
            $region81: #{pixel_attention_forward.7} parent=72 // pred_fallthru
              _
          $region73: #{pixel_attention_forward.7} parent=68 // pred_fallthru
            _
          %337 = vnop
        $region69: #{pixel_attention_forward.7} parent=23 // pred_fallthru
          _
      $region24: #{pixel_attention_forward.7} parent=5 // pred_fallthru
        _
      %p338 = scmp.le.s32.totalorder 1, %s10
      %p339 = scmp.lt.s32.totalorder %s10, 3
      %p340 = pnand %p338, %p339
      %p341 = pneg %p340
      // Predicated region
      $region107: #{pixel_attention_forward.7} parent=5 // pred_check
        _
      $region108: #{pixel_attention_forward.7} parent=5 // pred_check_branch
        %343 = sbr.rel (%p340) target = $region110
      $region109: #{pixel_attention_forward.7} parent=5 // pred_region
        %s344 = ssub.s32 %s10, 1
        %s345 = sand.u32 %s37, 1
        %s346 = sand.u32 %s37, 1
        %s347 = smul.addr %s346, 32
        %s348 = scalar_lea.vmem [#allocation2], %s347
        // Predicated region
        $region111: #{pixel_attention_forward.7} parent=109 // pred_check
          %p349 = pneg %p50
        $region112: #{pixel_attention_forward.7} parent=109 // pred_check_branch
          %351 = sbr.rel (%p349) target = $region114
        $region113: #{pixel_attention_forward.7} parent=109 // pred_region
          _
        $region114: #{pixel_attention_forward.7} parent=109 // pred_fallthru
          _
        %s352 = sand.u32 %s67, 1
        %s353 = sand.u32 %s67, 1
        %s354 = smul.addr %s353, 32
        %s355 = scalar_lea.vmem [#allocation3], %s354
        // Predicated region
        $region115: #{pixel_attention_forward.7} parent=109 // pred_check
          %p356 = pneg %p80
        $region116: #{pixel_attention_forward.7} parent=109 // pred_check_branch
          %358 = sbr.rel (%p356) target = $region118
        $region117: #{pixel_attention_forward.7} parent=109 // pred_region
          _
        $region118: #{pixel_attention_forward.7} parent=109 // pred_fallthru
          _
        %s359 = sand.u32 %s37, 1
        %s360 = sand.u32 %s37, 1
        %s361 = smul.addr %s360, 32
        %s362 = scalar_lea.vmem [#allocation2], %s361
        %p363 = pneg %p50
        %p364 = pneg %p47
        %s365 = sand.u32 %s67, 1
        %s366 = sand.u32 %s67, 1
        %s367 = smul.addr %s366, 32
        %s368 = scalar_lea.vmem [#allocation3], %s367
        %p369 = pneg %p80
        %p370 = pneg %p77
        %p371 = pneg %p101
        %p372 = pneg %p98
        %p373 = pneg %p122
        %p374 = pneg %p119
        %p375 = pneg %p150
        %p376 = pneg %p147
        %s377 = smul.u32 2, %s20
        %p378 = scmp.lt.s32.totalorder %s19, 1
        %s379 = scalar_select %p378, %s19, 1
        %p380 = scmp.lt.s32.totalorder %s377, 1
        %s381 = scalar_select %p380, %s377, 1
        %s382 = smul.addr %s379, 2
        %s383 = sadd.s32 %s381, %s382
        %s384 = smul.addr %s383, 2
        %s385 = scalar_lea.vmem %s4, %s384
        %s386 = smul.u32 2, %s20
        %s387 = sadd.s32 %s20, 1
        %s388 = smul.u32 2, %s387
        %s389 = smul.u32 2, %s20
        %p390 = scmp.lt.s32.totalorder %s19, 1
        %s391 = scalar_select %p390, %s19, 1
        %p392 = scmp.lt.s32.totalorder %s389, 1
        %s393 = scalar_select %p392, %s389, 1
        %s394 = smul.addr %s391, 2
        %s395 = sadd.s32 %s393, %s394
        %s396 = smul.addr %s395, 2
        %s397 = scalar_lea.vmem %s4, %s396
        %s398 = smul.u32 2, %s20
        %v400 = vld [vmem:[%s348] sm:$0xf]
        %v401 = vld [vmem:[%s348 + $0x4] sm:$0xf]
        %v402 = vld [vmem:[%s348 + $0x8] sm:$0xf]
        %v403 = vld [vmem:[%s348 + $0xc] sm:$0xf]
        %v404 = vld [vmem:[%s348 + $0x10] sm:$0xf]
        %v405 = vld [vmem:[%s348 + $0x14] sm:$0xf]
        %v406 = vld [vmem:[%s348 + $0x18] sm:$0xf]
        %v407 = vld [vmem:[%s348 + $0x1c] sm:$0xf]
        %v408 = vld [vmem:[%s355] sm:$0xf]
        %v409 = vld [vmem:[%s355 + $0x8] sm:$0xf]
        %v410 = vld [vmem:[%s355 + $0x10] sm:$0xf]
        %v411 = vld [vmem:[%s355 + $0x18] sm:$0xf]
        %v420 = vunpack.c.l.b16 %v400
        %v421 = vunpack.c.l.b16 %v401
        %v422 = vunpack.c.l.b16 %v402
        %v423 = vunpack.c.l.b16 %v403
        %v424 = vunpack.c.l.b16 %v404
        %v425 = vunpack.c.l.b16 %v405
        %v426 = vunpack.c.l.b16 %v406
        %v427 = vunpack.c.l.b16 %v407
        %v428 = vpack.c.b16 %v421, %v420
        %v429 = vpack.c.b16 %v423, %v422
        %v430 = vpack.c.b16 %v425, %v424
        %v431 = vpack.c.b16 %v427, %v426
        %432 = vrot.lane.b32.xlu0 %v428, 127
        %v433 = vpop.permute.xlu0 %432
        %434 = vrot.lane.b32.xlu0 %v429, 127
        %v435 = vpop.permute.xlu0 %434
        %436 = vrot.lane.b32.xlu0 %v430, 127
        %v437 = vpop.permute.xlu0 %436
        %438 = vrot.lane.b32.xlu0 %v431, 127
        %v439 = vpop.permute.xlu0 %438
        %440 = vrot.lane.b32.xlu0 %v428, 126
        %v441 = vpop.permute.xlu0 %440
        %442 = vrot.lane.b32.xlu0 %v429, 126
        %v443 = vpop.permute.xlu0 %442
        %444 = vrot.lane.b32.xlu0 %v430, 126
        %v445 = vpop.permute.xlu0 %444
        %446 = vrot.lane.b32.xlu0 %v431, 126
        %v447 = vpop.permute.xlu0 %446
        %vm448 = vsmask.f32 7424
        %v450 = vshrl.u32 %v428, 16
        %v452 = vshll.u32 %v428, 16
        %v454 = vrot.slane %v452, 1
        %v455 = vor.u32 %v450, %v454
        %v457 = vshll.u32 %v408, 16
        %v459 = vrot.slane %v457, 1
        %v460 = vsel %vm448, %v455, %v459
        %v462 = vshrl.u32 %v429, 16
        %v464 = vshll.u32 %v429, 16
        %v466 = vrot.slane %v464, 1
        %v467 = vor.u32 %v462, %v466
        %v469 = vshll.u32 %v409, 16
        %v471 = vrot.slane %v469, 1
        %v472 = vsel %vm448, %v467, %v471
        %v474 = vshrl.u32 %v430, 16
        %v476 = vshll.u32 %v430, 16
        %v478 = vrot.slane %v476, 1
        %v479 = vor.u32 %v474, %v478
        %v481 = vshll.u32 %v410, 16
        %v483 = vrot.slane %v481, 1
        %v484 = vsel %vm448, %v479, %v483
        %v486 = vshrl.u32 %v431, 16
        %v488 = vshll.u32 %v431, 16
        %v490 = vrot.slane %v488, 1
        %v491 = vor.u32 %v486, %v490
        %v493 = vshll.u32 %v411, 16
        %v495 = vrot.slane %v493, 1
        %v496 = vsel %vm448, %v491, %v495
        %497 = vrot.lane.b32.xlu0 %v460, 127
        %v498 = vpop.permute.xlu0 %497
        %499 = vrot.lane.b32.xlu0 %v472, 127
        %v500 = vpop.permute.xlu0 %499
        %501 = vrot.lane.b32.xlu0 %v484, 127
        %v502 = vpop.permute.xlu0 %501
        %503 = vrot.lane.b32.xlu0 %v496, 127
        %v504 = vpop.permute.xlu0 %503
        %505 = vrot.lane.b32.xlu0 %v460, 126
        %v506 = vpop.permute.xlu0 %505
        %507 = vrot.lane.b32.xlu0 %v472, 126
        %v508 = vpop.permute.xlu0 %507
        %509 = vrot.lane.b32.xlu0 %v484, 126
        %v510 = vpop.permute.xlu0 %509
        %511 = vrot.lane.b32.xlu0 %v496, 126
        %v512 = vpop.permute.xlu0 %511
        %vm517 = vcmask 1046528
        %v518 = vrot.slane %v428, 1
        %v519 = vrot.slane %v408, 1
        %v520 = vsel %vm517, %v518, %v519
        %v521 = vrot.slane %v429, 1
        %v522 = vrot.slane %v409, 1
        %v523 = vsel %vm517, %v521, %v522
        %v524 = vrot.slane %v430, 1
        %v525 = vrot.slane %v410, 1
        %v526 = vsel %vm517, %v524, %v525
        %v527 = vrot.slane %v431, 1
        %v528 = vrot.slane %v411, 1
        %v529 = vsel %vm517, %v527, %v528
        %530 = vrot.lane.b32.xlu0 %v520, 127
        %v531 = vpop.permute.xlu0 %530
        %532 = vrot.lane.b32.xlu0 %v523, 127
        %v533 = vpop.permute.xlu0 %532
        %534 = vrot.lane.b32.xlu0 %v526, 127
        %v535 = vpop.permute.xlu0 %534
        %536 = vrot.lane.b32.xlu0 %v529, 127
        %v537 = vpop.permute.xlu0 %536
        %538 = vrot.lane.b32.xlu0 %v520, 126
        %v539 = vpop.permute.xlu0 %538
        %540 = vrot.lane.b32.xlu0 %v523, 126
        %v541 = vpop.permute.xlu0 %540
        %542 = vrot.lane.b32.xlu0 %v526, 126
        %v543 = vpop.permute.xlu0 %542
        %544 = vrot.lane.b32.xlu0 %v529, 126
        %v545 = vpop.permute.xlu0 %544
        %v546 = vpack.i.b16 %v429, %v428
        %v548 = vpack.i.b16 %v462, %v450
        %v550 = vpack.i.b16 %v431, %v430
        %v552 = vpack.i.b16 %v486, %v474
        %v556 = vpack.i.b16 %v435, %v433
        %v558 = vshrl.u32 %v433, 16
        %v559 = vshrl.u32 %v435, 16
        %v560 = vpack.i.b16 %v559, %v558
        %v564 = vpack.i.b16 %v439, %v437
        %v566 = vshrl.u32 %v437, 16
        %v567 = vshrl.u32 %v439, 16
        %v568 = vpack.i.b16 %v567, %v566
        %v572 = vpack.i.b16 %v443, %v441
        %v574 = vshrl.u32 %v441, 16
        %v575 = vshrl.u32 %v443, 16
        %v576 = vpack.i.b16 %v575, %v574
        %v580 = vpack.i.b16 %v447, %v445
        %v582 = vshrl.u32 %v445, 16
        %v583 = vshrl.u32 %v447, 16
        %v584 = vpack.i.b16 %v583, %v582
        %v588 = vpack.i.b16 %v472, %v460
        %v590 = vshrl.u32 %v460, 16
        %v591 = vshrl.u32 %v472, 16
        %v592 = vpack.i.b16 %v591, %v590
        %v596 = vpack.i.b16 %v496, %v484
        %v598 = vshrl.u32 %v484, 16
        %v599 = vshrl.u32 %v496, 16
        %v600 = vpack.i.b16 %v599, %v598
        %v604 = vpack.i.b16 %v500, %v498
        %v606 = vshrl.u32 %v498, 16
        %v607 = vshrl.u32 %v500, 16
        %v608 = vpack.i.b16 %v607, %v606
        %v612 = vpack.i.b16 %v504, %v502
        %v614 = vshrl.u32 %v502, 16
        %v615 = vshrl.u32 %v504, 16
        %v616 = vpack.i.b16 %v615, %v614
        %v620 = vpack.i.b16 %v508, %v506
        %v622 = vshrl.u32 %v506, 16
        %v623 = vshrl.u32 %v508, 16
        %v624 = vpack.i.b16 %v623, %v622
        %v628 = vpack.i.b16 %v512, %v510
        %v630 = vshrl.u32 %v510, 16
        %v631 = vshrl.u32 %v512, 16
        %v632 = vpack.i.b16 %v631, %v630
        %v636 = vpack.i.b16 %v523, %v520
        %v638 = vshrl.u32 %v520, 16
        %v639 = vshrl.u32 %v523, 16
        %v640 = vpack.i.b16 %v639, %v638
        %v644 = vpack.i.b16 %v529, %v526
        %v646 = vshrl.u32 %v526, 16
        %v647 = vshrl.u32 %v529, 16
        %v648 = vpack.i.b16 %v647, %v646
        %v652 = vpack.i.b16 %v533, %v531
        %v654 = vshrl.u32 %v531, 16
        %v655 = vshrl.u32 %v533, 16
        %v656 = vpack.i.b16 %v655, %v654
        %v660 = vpack.i.b16 %v537, %v535
        %v662 = vshrl.u32 %v535, 16
        %v663 = vshrl.u32 %v537, 16
        %v664 = vpack.i.b16 %v663, %v662
        %v668 = vpack.i.b16 %v541, %v539
        %v670 = vshrl.u32 %v539, 16
        %v671 = vshrl.u32 %v541, 16
        %v672 = vpack.i.b16 %v671, %v670
        %v676 = vpack.i.b16 %v545, %v543
        %v678 = vshrl.u32 %v543, 16
        %v679 = vshrl.u32 %v545, 16
        %v680 = vpack.i.b16 %v679, %v678
        %v683 = vpack.i.b16 0, 0
        %v685 = vshrl.u32 0, 16
        %v686 = vpack.i.b16 %v685, %v685
        %v688 = vcombine.low %v546, %v556
        %v689 = vcombine.high %v546, %v556
        %v691 = vunpack.c.l.s4 1983009808
        %v692 = vunpack.c.0.s8 %v691
        %v693 = vlaneseq
        %v694 = vshrl.u32 %v693, 7
        %v695 = vsub.s32 %v692, %v694
        %v696 = vrot.slane %v688, %v695
        %v698 = vunpack.c.l.s4 1983009808
        %v699 = vunpack.c.0.s8 %v698
        %v700 = vlaneseq
        %v701 = vshrl.u32 %v700, 7
        %v702 = vsub.s32 %v699, %v701
        %v703 = vrot.slane %v689, %v702
        %v704 = vcombine.low %v550, %v564
        %v705 = vcombine.high %v550, %v564
        %v707 = vunpack.c.l.s4 1983009808
        %v708 = vunpack.c.0.s8 %v707
        %v709 = vlaneseq
        %v710 = vshrl.u32 %v709, 7
        %v711 = vsub.s32 %v708, %v710
        %v712 = vrot.slane %v704, %v711
        %v714 = vunpack.c.l.s4 1983009808
        %v715 = vunpack.c.0.s8 %v714
        %v716 = vlaneseq
        %v717 = vshrl.u32 %v716, 7
        %v718 = vsub.s32 %v715, %v717
        %v719 = vrot.slane %v705, %v718
        %v720 = vcombine.low %v572, %v588
        %v721 = vcombine.high %v572, %v588
        %v723 = vunpack.c.l.s4 1983009808
        %v724 = vunpack.c.0.s8 %v723
        %v725 = vlaneseq
        %v726 = vshrl.u32 %v725, 7
        %v727 = vsub.s32 %v724, %v726
        %v728 = vrot.slane %v720, %v727
        %v730 = vunpack.c.l.s4 1983009808
        %v731 = vunpack.c.0.s8 %v730
        %v732 = vlaneseq
        %v733 = vshrl.u32 %v732, 7
        %v734 = vsub.s32 %v731, %v733
        %v735 = vrot.slane %v721, %v734
        %v736 = vcombine.low %v580, %v596
        %v737 = vcombine.high %v580, %v596
        %v739 = vunpack.c.l.s4 1983009808
        %v740 = vunpack.c.0.s8 %v739
        %v741 = vlaneseq
        %v742 = vshrl.u32 %v741, 7
        %v743 = vsub.s32 %v740, %v742
        %v744 = vrot.slane %v736, %v743
        %v746 = vunpack.c.l.s4 1983009808
        %v747 = vunpack.c.0.s8 %v746
        %v748 = vlaneseq
        %v749 = vshrl.u32 %v748, 7
        %v750 = vsub.s32 %v747, %v749
        %v751 = vrot.slane %v737, %v750
        %v752 = vcombine.low %v696, %v712
        %v753 = vcombine.high %v696, %v712
        %v755 = vunpack.c.l.s4 1934713408
        %v756 = vunpack.c.0.s8 %v755
        %v757 = vlaneseq
        %v758 = vshrl.u32 %v757, 7
        %v759 = vsub.s32 %v756, %v758
        %v760 = vrot.slane %v752, %v759
        %v762 = vunpack.c.l.s4 1934713408
        %v763 = vunpack.c.0.s8 %v762
        %v764 = vlaneseq
        %v765 = vshrl.u32 %v764, 7
        %v766 = vsub.s32 %v763, %v765
        %v767 = vrot.slane %v753, %v766
        %v768 = vcombine.low %v703, %v719
        %v769 = vcombine.high %v703, %v719
        %v771 = vunpack.c.l.s4 1934713408
        %v772 = vunpack.c.0.s8 %v771
        %v773 = vlaneseq
        %v774 = vshrl.u32 %v773, 7
        %v775 = vsub.s32 %v772, %v774
        %v776 = vrot.slane %v768, %v775
        %v778 = vunpack.c.l.s4 1934713408
        %v779 = vunpack.c.0.s8 %v778
        %v780 = vlaneseq
        %v781 = vshrl.u32 %v780, 7
        %v782 = vsub.s32 %v779, %v781
        %v783 = vrot.slane %v769, %v782
        %v784 = vcombine.low %v728, %v744
        %v785 = vcombine.high %v728, %v744
        %v787 = vunpack.c.l.s4 1934713408
        %v788 = vunpack.c.0.s8 %v787
        %v789 = vlaneseq
        %v790 = vshrl.u32 %v789, 7
        %v791 = vsub.s32 %v788, %v790
        %v792 = vrot.slane %v784, %v791
        %v794 = vunpack.c.l.s4 1934713408
        %v795 = vunpack.c.0.s8 %v794
        %v796 = vlaneseq
        %v797 = vshrl.u32 %v796, 7
        %v798 = vsub.s32 %v795, %v797
        %v799 = vrot.slane %v785, %v798
        %v800 = vcombine.low %v735, %v751
        %v801 = vcombine.high %v735, %v751
        %v803 = vunpack.c.l.s4 1934713408
        %v804 = vunpack.c.0.s8 %v803
        %v805 = vlaneseq
        %v806 = vshrl.u32 %v805, 7
        %v807 = vsub.s32 %v804, %v806
        %v808 = vrot.slane %v800, %v807
        %v810 = vunpack.c.l.s4 1934713408
        %v811 = vunpack.c.0.s8 %v810
        %v812 = vlaneseq
        %v813 = vshrl.u32 %v812, 7
        %v814 = vsub.s32 %v811, %v813
        %v815 = vrot.slane %v801, %v814
        %v816 = vcombine.low %v760, %v792
        %v817 = vcombine.high %v760, %v792
        %v818 = vcombine.low %v767, %v799
        %v819 = vcombine.high %v767, %v799
        %v820 = vcombine.low %v776, %v808
        %v821 = vcombine.high %v776, %v808
        %v822 = vcombine.low %v783, %v815
        %v823 = vcombine.high %v783, %v815
        %v824 = vcombine.low %v548, %v560
        %v825 = vcombine.high %v548, %v560
        %v827 = vunpack.c.l.s4 1983009808
        %v828 = vunpack.c.0.s8 %v827
        %v829 = vlaneseq
        %v830 = vshrl.u32 %v829, 7
        %v831 = vsub.s32 %v828, %v830
        %v832 = vrot.slane %v824, %v831
        %v834 = vunpack.c.l.s4 1983009808
        %v835 = vunpack.c.0.s8 %v834
        %v836 = vlaneseq
        %v837 = vshrl.u32 %v836, 7
        %v838 = vsub.s32 %v835, %v837
        %v839 = vrot.slane %v825, %v838
        %v840 = vcombine.low %v552, %v568
        %v841 = vcombine.high %v552, %v568
        %v843 = vunpack.c.l.s4 1983009808
        %v844 = vunpack.c.0.s8 %v843
        %v845 = vlaneseq
        %v846 = vshrl.u32 %v845, 7
        %v847 = vsub.s32 %v844, %v846
        %v848 = vrot.slane %v840, %v847
        %v850 = vunpack.c.l.s4 1983009808
        %v851 = vunpack.c.0.s8 %v850
        %v852 = vlaneseq
        %v853 = vshrl.u32 %v852, 7
        %v854 = vsub.s32 %v851, %v853
        %v855 = vrot.slane %v841, %v854
        %v856 = vcombine.low %v576, %v592
        %v857 = vcombine.high %v576, %v592
        %v859 = vunpack.c.l.s4 1983009808
        %v860 = vunpack.c.0.s8 %v859
        %v861 = vlaneseq
        %v862 = vshrl.u32 %v861, 7
        %v863 = vsub.s32 %v860, %v862
        %v864 = vrot.slane %v856, %v863
        %v866 = vunpack.c.l.s4 1983009808
        %v867 = vunpack.c.0.s8 %v866
        %v868 = vlaneseq
        %v869 = vshrl.u32 %v868, 7
        %v870 = vsub.s32 %v867, %v869
        %v871 = vrot.slane %v857, %v870
        %v872 = vcombine.low %v584, %v600
        %v873 = vcombine.high %v584, %v600
        %v875 = vunpack.c.l.s4 1983009808
        %v876 = vunpack.c.0.s8 %v875
        %v877 = vlaneseq
        %v878 = vshrl.u32 %v877, 7
        %v879 = vsub.s32 %v876, %v878
        %v880 = vrot.slane %v872, %v879
        %v882 = vunpack.c.l.s4 1983009808
        %v883 = vunpack.c.0.s8 %v882
        %v884 = vlaneseq
        %v885 = vshrl.u32 %v884, 7
        %v886 = vsub.s32 %v883, %v885
        %v887 = vrot.slane %v873, %v886
        %v888 = vcombine.low %v832, %v848
        %v889 = vcombine.high %v832, %v848
        %v891 = vunpack.c.l.s4 1934713408
        %v892 = vunpack.c.0.s8 %v891
        %v893 = vlaneseq
        %v894 = vshrl.u32 %v893, 7
        %v895 = vsub.s32 %v892, %v894
        %v896 = vrot.slane %v888, %v895
        %v898 = vunpack.c.l.s4 1934713408
        %v899 = vunpack.c.0.s8 %v898
        %v900 = vlaneseq
        %v901 = vshrl.u32 %v900, 7
        %v902 = vsub.s32 %v899, %v901
        %v903 = vrot.slane %v889, %v902
        %v904 = vcombine.low %v839, %v855
        %v905 = vcombine.high %v839, %v855
        %v907 = vunpack.c.l.s4 1934713408
        %v908 = vunpack.c.0.s8 %v907
        %v909 = vlaneseq
        %v910 = vshrl.u32 %v909, 7
        %v911 = vsub.s32 %v908, %v910
        %v912 = vrot.slane %v904, %v911
        %v914 = vunpack.c.l.s4 1934713408
        %v915 = vunpack.c.0.s8 %v914
        %v916 = vlaneseq
        %v917 = vshrl.u32 %v916, 7
        %v918 = vsub.s32 %v915, %v917
        %v919 = vrot.slane %v905, %v918
        %v920 = vcombine.low %v864, %v880
        %v921 = vcombine.high %v864, %v880
        %v923 = vunpack.c.l.s4 1934713408
        %v924 = vunpack.c.0.s8 %v923
        %v925 = vlaneseq
        %v926 = vshrl.u32 %v925, 7
        %v927 = vsub.s32 %v924, %v926
        %v928 = vrot.slane %v920, %v927
        %v930 = vunpack.c.l.s4 1934713408
        %v931 = vunpack.c.0.s8 %v930
        %v932 = vlaneseq
        %v933 = vshrl.u32 %v932, 7
        %v934 = vsub.s32 %v931, %v933
        %v935 = vrot.slane %v921, %v934
        %v936 = vcombine.low %v871, %v887
        %v937 = vcombine.high %v871, %v887
        %v939 = vunpack.c.l.s4 1934713408
        %v940 = vunpack.c.0.s8 %v939
        %v941 = vlaneseq
        %v942 = vshrl.u32 %v941, 7
        %v943 = vsub.s32 %v940, %v942
        %v944 = vrot.slane %v936, %v943
        %v946 = vunpack.c.l.s4 1934713408
        %v947 = vunpack.c.0.s8 %v946
        %v948 = vlaneseq
        %v949 = vshrl.u32 %v948, 7
        %v950 = vsub.s32 %v947, %v949
        %v951 = vrot.slane %v937, %v950
        %v952 = vcombine.low %v896, %v928
        %v953 = vcombine.high %v896, %v928
        %v954 = vcombine.low %v903, %v935
        %v955 = vcombine.high %v903, %v935
        %v956 = vcombine.low %v912, %v944
        %v957 = vcombine.high %v912, %v944
        %v958 = vcombine.low %v919, %v951
        %v959 = vcombine.high %v919, %v951
        %v960 = vcombine.low %v604, %v620
        %v961 = vcombine.high %v604, %v620
        %v963 = vunpack.c.l.s4 1983009808
        %v964 = vunpack.c.0.s8 %v963
        %v965 = vlaneseq
        %v966 = vshrl.u32 %v965, 7
        %v967 = vsub.s32 %v964, %v966
        %v968 = vrot.slane %v960, %v967
        %v970 = vunpack.c.l.s4 1983009808
        %v971 = vunpack.c.0.s8 %v970
        %v972 = vlaneseq
        %v973 = vshrl.u32 %v972, 7
        %v974 = vsub.s32 %v971, %v973
        %v975 = vrot.slane %v961, %v974
        %v976 = vcombine.low %v612, %v628
        %v977 = vcombine.high %v612, %v628
        %v979 = vunpack.c.l.s4 1983009808
        %v980 = vunpack.c.0.s8 %v979
        %v981 = vlaneseq
        %v982 = vshrl.u32 %v981, 7
        %v983 = vsub.s32 %v980, %v982
        %v984 = vrot.slane %v976, %v983
        %v986 = vunpack.c.l.s4 1983009808
        %v987 = vunpack.c.0.s8 %v986
        %v988 = vlaneseq
        %v989 = vshrl.u32 %v988, 7
        %v990 = vsub.s32 %v987, %v989
        %v991 = vrot.slane %v977, %v990
        %v992 = vcombine.low %v636, %v652
        %v993 = vcombine.high %v636, %v652
        %v995 = vunpack.c.l.s4 1983009808
        %v996 = vunpack.c.0.s8 %v995
        %v997 = vlaneseq
        %v998 = vshrl.u32 %v997, 7
        %v999 = vsub.s32 %v996, %v998
        %v1000 = vrot.slane %v992, %v999
        %v1002 = vunpack.c.l.s4 1983009808
        %v1003 = vunpack.c.0.s8 %v1002
        %v1004 = vlaneseq
        %v1005 = vshrl.u32 %v1004, 7
        %v1006 = vsub.s32 %v1003, %v1005
        %v1007 = vrot.slane %v993, %v1006
        %v1008 = vcombine.low %v644, %v660
        %v1009 = vcombine.high %v644, %v660
        %v1011 = vunpack.c.l.s4 1983009808
        %v1012 = vunpack.c.0.s8 %v1011
        %v1013 = vlaneseq
        %v1014 = vshrl.u32 %v1013, 7
        %v1015 = vsub.s32 %v1012, %v1014
        %v1016 = vrot.slane %v1008, %v1015
        %v1018 = vunpack.c.l.s4 1983009808
        %v1019 = vunpack.c.0.s8 %v1018
        %v1020 = vlaneseq
        %v1021 = vshrl.u32 %v1020, 7
        %v1022 = vsub.s32 %v1019, %v1021
        %v1023 = vrot.slane %v1009, %v1022
        %v1024 = vcombine.low %v968, %v984
        %v1025 = vcombine.high %v968, %v984
        %v1027 = vunpack.c.l.s4 1934713408
        %v1028 = vunpack.c.0.s8 %v1027
        %v1029 = vlaneseq
        %v1030 = vshrl.u32 %v1029, 7
        %v1031 = vsub.s32 %v1028, %v1030
        %v1032 = vrot.slane %v1024, %v1031
        %v1034 = vunpack.c.l.s4 1934713408
        %v1035 = vunpack.c.0.s8 %v1034
        %v1036 = vlaneseq
        %v1037 = vshrl.u32 %v1036, 7
        %v1038 = vsub.s32 %v1035, %v1037
        %v1039 = vrot.slane %v1025, %v1038
        %v1040 = vcombine.low %v975, %v991
        %v1041 = vcombine.high %v975, %v991
        %v1043 = vunpack.c.l.s4 1934713408
        %v1044 = vunpack.c.0.s8 %v1043
        %v1045 = vlaneseq
        %v1046 = vshrl.u32 %v1045, 7
        %v1047 = vsub.s32 %v1044, %v1046
        %v1048 = vrot.slane %v1040, %v1047
        %v1050 = vunpack.c.l.s4 1934713408
        %v1051 = vunpack.c.0.s8 %v1050
        %v1052 = vlaneseq
        %v1053 = vshrl.u32 %v1052, 7
        %v1054 = vsub.s32 %v1051, %v1053
        %v1055 = vrot.slane %v1041, %v1054
        %v1056 = vcombine.low %v1000, %v1016
        %v1057 = vcombine.high %v1000, %v1016
        %v1059 = vunpack.c.l.s4 1934713408
        %v1060 = vunpack.c.0.s8 %v1059
        %v1061 = vlaneseq
        %v1062 = vshrl.u32 %v1061, 7
        %v1063 = vsub.s32 %v1060, %v1062
        %v1064 = vrot.slane %v1056, %v1063
        %v1066 = vunpack.c.l.s4 1934713408
        %v1067 = vunpack.c.0.s8 %v1066
        %v1068 = vlaneseq
        %v1069 = vshrl.u32 %v1068, 7
        %v1070 = vsub.s32 %v1067, %v1069
        %v1071 = vrot.slane %v1057, %v1070
        %v1072 = vcombine.low %v1007, %v1023
        %v1073 = vcombine.high %v1007, %v1023
        %v1075 = vunpack.c.l.s4 1934713408
        %v1076 = vunpack.c.0.s8 %v1075
        %v1077 = vlaneseq
        %v1078 = vshrl.u32 %v1077, 7
        %v1079 = vsub.s32 %v1076, %v1078
        %v1080 = vrot.slane %v1072, %v1079
        %v1082 = vunpack.c.l.s4 1934713408
        %v1083 = vunpack.c.0.s8 %v1082
        %v1084 = vlaneseq
        %v1085 = vshrl.u32 %v1084, 7
        %v1086 = vsub.s32 %v1083, %v1085
        %v1087 = vrot.slane %v1073, %v1086
        %v1088 = vcombine.low %v1032, %v1064
        %v1089 = vcombine.high %v1032, %v1064
        %v1090 = vcombine.low %v1039, %v1071
        %v1091 = vcombine.high %v1039, %v1071
        %v1092 = vcombine.low %v1048, %v1080
        %v1093 = vcombine.high %v1048, %v1080
        %v1094 = vcombine.low %v1055, %v1087
        %v1095 = vcombine.high %v1055, %v1087
        %v1096 = vcombine.low %v608, %v624
        %v1097 = vcombine.high %v608, %v624
        %v1099 = vunpack.c.l.s4 1983009808
        %v1100 = vunpack.c.0.s8 %v1099
        %v1101 = vlaneseq
        %v1102 = vshrl.u32 %v1101, 7
        %v1103 = vsub.s32 %v1100, %v1102
        %v1104 = vrot.slane %v1096, %v1103
        %v1106 = vunpack.c.l.s4 1983009808
        %v1107 = vunpack.c.0.s8 %v1106
        %v1108 = vlaneseq
        %v1109 = vshrl.u32 %v1108, 7
        %v1110 = vsub.s32 %v1107, %v1109
        %v1111 = vrot.slane %v1097, %v1110
        %v1112 = vcombine.low %v616, %v632
        %v1113 = vcombine.high %v616, %v632
        %v1115 = vunpack.c.l.s4 1983009808
        %v1116 = vunpack.c.0.s8 %v1115
        %v1117 = vlaneseq
        %v1118 = vshrl.u32 %v1117, 7
        %v1119 = vsub.s32 %v1116, %v1118
        %v1120 = vrot.slane %v1112, %v1119
        %v1122 = vunpack.c.l.s4 1983009808
        %v1123 = vunpack.c.0.s8 %v1122
        %v1124 = vlaneseq
        %v1125 = vshrl.u32 %v1124, 7
        %v1126 = vsub.s32 %v1123, %v1125
        %v1127 = vrot.slane %v1113, %v1126
        %v1128 = vcombine.low %v640, %v656
        %v1129 = vcombine.high %v640, %v656
        %v1131 = vunpack.c.l.s4 1983009808
        %v1132 = vunpack.c.0.s8 %v1131
        %v1133 = vlaneseq
        %v1134 = vshrl.u32 %v1133, 7
        %v1135 = vsub.s32 %v1132, %v1134
        %v1136 = vrot.slane %v1128, %v1135
        %v1138 = vunpack.c.l.s4 1983009808
        %v1139 = vunpack.c.0.s8 %v1138
        %v1140 = vlaneseq
        %v1141 = vshrl.u32 %v1140, 7
        %v1142 = vsub.s32 %v1139, %v1141
        %v1143 = vrot.slane %v1129, %v1142
        %v1144 = vcombine.low %v648, %v664
        %v1145 = vcombine.high %v648, %v664
        %v1147 = vunpack.c.l.s4 1983009808
        %v1148 = vunpack.c.0.s8 %v1147
        %v1149 = vlaneseq
        %v1150 = vshrl.u32 %v1149, 7
        %v1151 = vsub.s32 %v1148, %v1150
        %v1152 = vrot.slane %v1144, %v1151
        %v1154 = vunpack.c.l.s4 1983009808
        %v1155 = vunpack.c.0.s8 %v1154
        %v1156 = vlaneseq
        %v1157 = vshrl.u32 %v1156, 7
        %v1158 = vsub.s32 %v1155, %v1157
        %v1159 = vrot.slane %v1145, %v1158
        %v1160 = vcombine.low %v1104, %v1120
        %v1161 = vcombine.high %v1104, %v1120
        %v1163 = vunpack.c.l.s4 1934713408
        %v1164 = vunpack.c.0.s8 %v1163
        %v1165 = vlaneseq
        %v1166 = vshrl.u32 %v1165, 7
        %v1167 = vsub.s32 %v1164, %v1166
        %v1168 = vrot.slane %v1160, %v1167
        %v1170 = vunpack.c.l.s4 1934713408
        %v1171 = vunpack.c.0.s8 %v1170
        %v1172 = vlaneseq
        %v1173 = vshrl.u32 %v1172, 7
        %v1174 = vsub.s32 %v1171, %v1173
        %v1175 = vrot.slane %v1161, %v1174
        %v1176 = vcombine.low %v1111, %v1127
        %v1177 = vcombine.high %v1111, %v1127
        %v1179 = vunpack.c.l.s4 1934713408
        %v1180 = vunpack.c.0.s8 %v1179
        %v1181 = vlaneseq
        %v1182 = vshrl.u32 %v1181, 7
        %v1183 = vsub.s32 %v1180, %v1182
        %v1184 = vrot.slane %v1176, %v1183
        %v1186 = vunpack.c.l.s4 1934713408
        %v1187 = vunpack.c.0.s8 %v1186
        %v1188 = vlaneseq
        %v1189 = vshrl.u32 %v1188, 7
        %v1190 = vsub.s32 %v1187, %v1189
        %v1191 = vrot.slane %v1177, %v1190
        %v1192 = vcombine.low %v1136, %v1152
        %v1193 = vcombine.high %v1136, %v1152
        %v1195 = vunpack.c.l.s4 1934713408
        %v1196 = vunpack.c.0.s8 %v1195
        %v1197 = vlaneseq
        %v1198 = vshrl.u32 %v1197, 7
        %v1199 = vsub.s32 %v1196, %v1198
        %v1200 = vrot.slane %v1192, %v1199
        %v1202 = vunpack.c.l.s4 1934713408
        %v1203 = vunpack.c.0.s8 %v1202
        %v1204 = vlaneseq
        %v1205 = vshrl.u32 %v1204, 7
        %v1206 = vsub.s32 %v1203, %v1205
        %v1207 = vrot.slane %v1193, %v1206
        %v1208 = vcombine.low %v1143, %v1159
        %v1209 = vcombine.high %v1143, %v1159
        %v1211 = vunpack.c.l.s4 1934713408
        %v1212 = vunpack.c.0.s8 %v1211
        %v1213 = vlaneseq
        %v1214 = vshrl.u32 %v1213, 7
        %v1215 = vsub.s32 %v1212, %v1214
        %v1216 = vrot.slane %v1208, %v1215
        %v1218 = vunpack.c.l.s4 1934713408
        %v1219 = vunpack.c.0.s8 %v1218
        %v1220 = vlaneseq
        %v1221 = vshrl.u32 %v1220, 7
        %v1222 = vsub.s32 %v1219, %v1221
        %v1223 = vrot.slane %v1209, %v1222
        %v1224 = vcombine.low %v1168, %v1200
        %v1225 = vcombine.high %v1168, %v1200
        %v1226 = vcombine.low %v1175, %v1207
        %v1227 = vcombine.high %v1175, %v1207
        %v1228 = vcombine.low %v1184, %v1216
        %v1229 = vcombine.high %v1184, %v1216
        %v1230 = vcombine.low %v1191, %v1223
        %v1231 = vcombine.high %v1191, %v1223
        %v1232 = vcombine.high %v668, %v683
        %v1234 = vunpack.c.l.s4 1983009808
        %v1235 = vunpack.c.0.s8 %v1234
        %v1236 = vlaneseq
        %v1237 = vshrl.u32 %v1236, 7
        %v1238 = vsub.s32 %v1235, %v1237
        %v1239 = vrot.slane %v668, %v1238
        %v1241 = vunpack.c.l.s4 1983009808
        %v1242 = vunpack.c.0.s8 %v1241
        %v1243 = vlaneseq
        %v1244 = vshrl.u32 %v1243, 7
        %v1245 = vsub.s32 %v1242, %v1244
        %v1246 = vrot.slane %v1232, %v1245
        %v1247 = vcombine.high %v676, %v683
        %v1249 = vunpack.c.l.s4 1983009808
        %v1250 = vunpack.c.0.s8 %v1249
        %v1251 = vlaneseq
        %v1252 = vshrl.u32 %v1251, 7
        %v1253 = vsub.s32 %v1250, %v1252
        %v1254 = vrot.slane %v676, %v1253
        %v1256 = vunpack.c.l.s4 1983009808
        %v1257 = vunpack.c.0.s8 %v1256
        %v1258 = vlaneseq
        %v1259 = vshrl.u32 %v1258, 7
        %v1260 = vsub.s32 %v1257, %v1259
        %v1261 = vrot.slane %v1247, %v1260
        %v1262 = vcombine.low %v1239, %v1254
        %v1263 = vcombine.high %v1239, %v1254
        %v1265 = vunpack.c.l.s4 1934713408
        %v1266 = vunpack.c.0.s8 %v1265
        %v1267 = vlaneseq
        %v1268 = vshrl.u32 %v1267, 7
        %v1269 = vsub.s32 %v1266, %v1268
        %v1270 = vrot.slane %v1262, %v1269
        %v1272 = vunpack.c.l.s4 1934713408
        %v1273 = vunpack.c.0.s8 %v1272
        %v1274 = vlaneseq
        %v1275 = vshrl.u32 %v1274, 7
        %v1276 = vsub.s32 %v1273, %v1275
        %v1277 = vrot.slane %v1263, %v1276
        %v1278 = vcombine.low %v1246, %v1261
        %v1279 = vcombine.high %v1246, %v1261
        %v1281 = vunpack.c.l.s4 1934713408
        %v1282 = vunpack.c.0.s8 %v1281
        %v1283 = vlaneseq
        %v1284 = vshrl.u32 %v1283, 7
        %v1285 = vsub.s32 %v1282, %v1284
        %v1286 = vrot.slane %v1278, %v1285
        %v1288 = vunpack.c.l.s4 1934713408
        %v1289 = vunpack.c.0.s8 %v1288
        %v1290 = vlaneseq
        %v1291 = vshrl.u32 %v1290, 7
        %v1292 = vsub.s32 %v1289, %v1291
        %v1293 = vrot.slane %v1279, %v1292
        %v1294 = vcombine.high %v1270, 0
        %v1295 = vcombine.high %v1277, 0
        %v1296 = vcombine.high %v1286, 0
        %v1297 = vcombine.high %v1293, 0
        %v1298 = vcombine.high %v672, %v686
        %v1300 = vunpack.c.l.s4 1983009808
        %v1301 = vunpack.c.0.s8 %v1300
        %v1302 = vlaneseq
        %v1303 = vshrl.u32 %v1302, 7
        %v1304 = vsub.s32 %v1301, %v1303
        %v1305 = vrot.slane %v672, %v1304
        %v1307 = vunpack.c.l.s4 1983009808
        %v1308 = vunpack.c.0.s8 %v1307
        %v1309 = vlaneseq
        %v1310 = vshrl.u32 %v1309, 7
        %v1311 = vsub.s32 %v1308, %v1310
        %v1312 = vrot.slane %v1298, %v1311
        %v1313 = vcombine.high %v680, %v686
        %v1315 = vunpack.c.l.s4 1983009808
        %v1316 = vunpack.c.0.s8 %v1315
        %v1317 = vlaneseq
        %v1318 = vshrl.u32 %v1317, 7
        %v1319 = vsub.s32 %v1316, %v1318
        %v1320 = vrot.slane %v680, %v1319
        %v1322 = vunpack.c.l.s4 1983009808
        %v1323 = vunpack.c.0.s8 %v1322
        %v1324 = vlaneseq
        %v1325 = vshrl.u32 %v1324, 7
        %v1326 = vsub.s32 %v1323, %v1325
        %v1327 = vrot.slane %v1313, %v1326
        %v1328 = vcombine.low %v1305, %v1320
        %v1329 = vcombine.high %v1305, %v1320
        %v1331 = vunpack.c.l.s4 1934713408
        %v1332 = vunpack.c.0.s8 %v1331
        %v1333 = vlaneseq
        %v1334 = vshrl.u32 %v1333, 7
        %v1335 = vsub.s32 %v1332, %v1334
        %v1336 = vrot.slane %v1328, %v1335
        %v1338 = vunpack.c.l.s4 1934713408
        %v1339 = vunpack.c.0.s8 %v1338
        %v1340 = vlaneseq
        %v1341 = vshrl.u32 %v1340, 7
        %v1342 = vsub.s32 %v1339, %v1341
        %v1343 = vrot.slane %v1329, %v1342
        %v1344 = vcombine.low %v1312, %v1327
        %v1345 = vcombine.high %v1312, %v1327
        %v1347 = vunpack.c.l.s4 1934713408
        %v1348 = vunpack.c.0.s8 %v1347
        %v1349 = vlaneseq
        %v1350 = vshrl.u32 %v1349, 7
        %v1351 = vsub.s32 %v1348, %v1350
        %v1352 = vrot.slane %v1344, %v1351
        %v1354 = vunpack.c.l.s4 1934713408
        %v1355 = vunpack.c.0.s8 %v1354
        %v1356 = vlaneseq
        %v1357 = vshrl.u32 %v1356, 7
        %v1358 = vsub.s32 %v1355, %v1357
        %v1359 = vrot.slane %v1345, %v1358
        %v1360 = vcombine.high %v1336, 0
        %v1361 = vcombine.high %v1343, 0
        %v1362 = vcombine.high %v1352, 0
        %v1363 = vcombine.high %v1359, 0
        %1367 = vrot.lane.b32.xlu0 %v952, 16
        %v1368 = vpop.permute.xlu0 %1367
        %1369 = vrot.lane.b32.xlu0 %v1224, 16
        %v1370 = vpop.permute.xlu0 %1369
        %1371 = vrot.lane.b32.xlu0 %v1336, 16
        %v1372 = vpop.permute.xlu0 %1371
        %1376 = vrot.lane.b32.xlu0 %v817, 32
        %v1377 = vpop.permute.xlu0 %1376
        %1378 = vrot.lane.b32.xlu0 %v1089, 32
        %v1379 = vpop.permute.xlu0 %1378
        %1380 = vrot.lane.b32.xlu0 %v1294, 32
        %v1381 = vpop.permute.xlu0 %1380
        %1385 = vrot.lane.b32.xlu0 %v953, 48
        %v1386 = vpop.permute.xlu0 %1385
        %1387 = vrot.lane.b32.xlu0 %v1225, 48
        %v1388 = vpop.permute.xlu0 %1387
        %1389 = vrot.lane.b32.xlu0 %v1360, 48
        %v1390 = vpop.permute.xlu0 %1389
        %1394 = vrot.lane.b32.xlu0 %v818, 64
        %v1395 = vpop.permute.xlu0 %1394
        %1396 = vrot.lane.b32.xlu0 %v1090, 64
        %v1397 = vpop.permute.xlu0 %1396
        %1398 = vrot.lane.b32.xlu0 %v1277, 64
        %v1399 = vpop.permute.xlu0 %1398
        %1403 = vrot.lane.b32.xlu0 %v954, 80
        %v1404 = vpop.permute.xlu0 %1403
        %1405 = vrot.lane.b32.xlu0 %v1226, 80
        %v1406 = vpop.permute.xlu0 %1405
        %1407 = vrot.lane.b32.xlu0 %v1343, 80
        %v1408 = vpop.permute.xlu0 %1407
        %1412 = vrot.lane.b32.xlu0 %v819, 96
        %v1413 = vpop.permute.xlu0 %1412
        %1414 = vrot.lane.b32.xlu0 %v1091, 96
        %v1415 = vpop.permute.xlu0 %1414
        %1416 = vrot.lane.b32.xlu0 %v1295, 96
        %v1417 = vpop.permute.xlu0 %1416
        %1421 = vrot.lane.b32.xlu0 %v955, 112
        %v1422 = vpop.permute.xlu0 %1421
        %1423 = vrot.lane.b32.xlu0 %v1227, 112
        %v1424 = vpop.permute.xlu0 %1423
        %1425 = vrot.lane.b32.xlu0 %v1361, 112
        %v1426 = vpop.permute.xlu0 %1425
        %1430 = vrot.lane.b32.xlu0 %v956, 16
        %v1431 = vpop.permute.xlu0 %1430
        %1432 = vrot.lane.b32.xlu0 %v1228, 16
        %v1433 = vpop.permute.xlu0 %1432
        %1434 = vrot.lane.b32.xlu0 %v1352, 16
        %v1435 = vpop.permute.xlu0 %1434
        %1439 = vrot.lane.b32.xlu0 %v821, 32
        %v1440 = vpop.permute.xlu0 %1439
        %1441 = vrot.lane.b32.xlu0 %v1093, 32
        %v1442 = vpop.permute.xlu0 %1441
        %1443 = vrot.lane.b32.xlu0 %v1296, 32
        %v1444 = vpop.permute.xlu0 %1443
        %1448 = vrot.lane.b32.xlu0 %v957, 48
        %v1449 = vpop.permute.xlu0 %1448
        %1450 = vrot.lane.b32.xlu0 %v1229, 48
        %v1451 = vpop.permute.xlu0 %1450
        %1452 = vrot.lane.b32.xlu0 %v1362, 48
        %v1453 = vpop.permute.xlu0 %1452
        %1457 = vrot.lane.b32.xlu0 %v822, 64
        %v1458 = vpop.permute.xlu0 %1457
        %1459 = vrot.lane.b32.xlu0 %v1094, 64
        %v1460 = vpop.permute.xlu0 %1459
        %1461 = vrot.lane.b32.xlu0 %v1293, 64
        %v1462 = vpop.permute.xlu0 %1461
        %1466 = vrot.lane.b32.xlu0 %v958, 80
        %v1467 = vpop.permute.xlu0 %1466
        %1468 = vrot.lane.b32.xlu0 %v1230, 80
        %v1469 = vpop.permute.xlu0 %1468
        %1470 = vrot.lane.b32.xlu0 %v1359, 80
        %v1471 = vpop.permute.xlu0 %1470
        %1475 = vrot.lane.b32.xlu0 %v823, 96
        %v1476 = vpop.permute.xlu0 %1475
        %1477 = vrot.lane.b32.xlu0 %v1095, 96
        %v1478 = vpop.permute.xlu0 %1477
        %1479 = vrot.lane.b32.xlu0 %v1297, 96
        %v1480 = vpop.permute.xlu0 %1479
        %1484 = vrot.lane.b32.xlu0 %v959, 112
        %v1485 = vpop.permute.xlu0 %1484
        %1486 = vrot.lane.b32.xlu0 %v1231, 112
        %v1487 = vpop.permute.xlu0 %1486
        %1488 = vrot.lane.b32.xlu0 %v1363, 112
        %v1489 = vpop.permute.xlu0 %1488
        %vm1490 = vcmask 130048
        %v1493 = vsel %vm1490, %v816, %v1368
        %v1496 = vsel %vm1490, %v1088, %v1370
        %v1499 = vsel %vm1490, %v1270, %v1372
        %vm1500 = vcmask 261120
        %v1502 = vsel %vm1500, %v1493, %v1377
        %v1504 = vsel %vm1500, %v1496, %v1379
        %v1506 = vsel %vm1500, %v1499, %v1381
        %vm1507 = vcmask 392192
        %v1509 = vsel %vm1507, %v1502, %v1386
        %v1511 = vsel %vm1507, %v1504, %v1388
        %v1513 = vsel %vm1507, %v1506, %v1390
        %vm1514 = vcmask 523264
        %v1516 = vsel %vm1514, %v1509, %v1395
        %v1518 = vsel %vm1514, %v1511, %v1397
        %v1520 = vsel %vm1514, %v1513, %v1399
        %vm1521 = vcmask 654336
        %v1523 = vsel %vm1521, %v1516, %v1404
        %v1525 = vsel %vm1521, %v1518, %v1406
        %v1527 = vsel %vm1521, %v1520, %v1408
        %vm1528 = vcmask 785408
        %v1530 = vsel %vm1528, %v1523, %v1413
        %v1532 = vsel %vm1528, %v1525, %v1415
        %v1534 = vsel %vm1528, %v1527, %v1417
        %vm1535 = vcmask 916480
        %v1537 = vsel %vm1535, %v1530, %v1422
        %v1540 = vsel %vm1535, %v1532, %v1424
        %v1543 = vsel %vm1535, %v1534, %v1426
        %v1546 = vsel %vm1490, %v820, %v1431
        %v1549 = vsel %vm1490, %v1092, %v1433
        %v1552 = vsel %vm1490, %v1286, %v1435
        %v1554 = vsel %vm1500, %v1546, %v1440
        %v1556 = vsel %vm1500, %v1549, %v1442
        %v1558 = vsel %vm1500, %v1552, %v1444
        %v1560 = vsel %vm1507, %v1554, %v1449
        %v1562 = vsel %vm1507, %v1556, %v1451
        %v1564 = vsel %vm1507, %v1558, %v1453
        %v1566 = vsel %vm1514, %v1560, %v1458
        %v1568 = vsel %vm1514, %v1562, %v1460
        %v1570 = vsel %vm1514, %v1564, %v1462
        %v1572 = vsel %vm1521, %v1566, %v1467
        %v1574 = vsel %vm1521, %v1568, %v1469
        %v1576 = vsel %vm1521, %v1570, %v1471
        %v1578 = vsel %vm1528, %v1572, %v1476
        %v1580 = vsel %vm1528, %v1574, %v1478
        %v1582 = vsel %vm1528, %v1576, %v1480
        %v1584 = vsel %vm1535, %v1578, %v1485
        %v1587 = vsel %vm1535, %v1580, %v1487
        %v1590 = vsel %vm1535, %v1582, %v1489
        %v1591 = vld [vmem:[%s2] sm:$0xf]
        %v1592 = vpack.c.bf16 %v1591, %v1591
        %v1593 = vld [vmem:[%s3] sm:$0xf]
        %1595 = vset.pattern.permute.xlu0 0
        %1596 = vperm.xlu0 %1595, %v1593
        %v1597 = vpop.permute.xlu0 %1596
        %vm1599 = vcmask 293888
        %v1601 = vsel %vm1599, %v1592, 0
        %vm1603 = vcmask 1041408
        %v1604 = vsel %vm1603, %v1543, 0
        %v1606 = vsel %vm1603, %v1590, 0
        %1608 = vmatprep.subr.bf16.mxu0 0
        %1609 = vmatpush1.bf16.msra.mxu0 0
        %1610 = vmatprep.subr.bf16.mxu0 0
        %1611 = vmatpush1.bf16.msra.mxu0 0
        %1612 = vmatprep.subr.bf16.mxu0 0
        %1613 = vmatpush1.bf16.msra.mxu0 0
        %1614 = vmatprep.subr.bf16.mxu0 0
        %1615 = vmatpush1.bf16.msra.mxu0 0
        %1616 = vmatprep.subr.bf16.mxu0 0
        %1617 = vmatpush1.bf16.msra.mxu0 0
        %1618 = vmatprep.subr.bf16.mxu0 %v1606
        %1619 = vmatpush1.bf16.msra.mxu0 %v1604
        %1620 = vmatprep.subr.bf16.mxu0 %v1587
        %1621 = vmatpush1.bf16.msra.mxu0 %v1540
        %1622 = vmatprep.subr.bf16.mxu0 %v1584
        %1623 = vmatpush1.bf16.msra.mxu0 %v1537
        %1624 = vmatprep.subr.bf16.mxu0 0
        %1625 = vmatpush2.bf16.msra.mxu0 0
        %1626 = vmatprep.subr.bf16.mxu0 0
        %1627 = vmatpush2.bf16.msra.mxu0 0
        %1628 = vmatprep.subr.bf16.mxu0 0
        %1629 = vmatpush2.bf16.msra.mxu0 0
        %1630 = vmatprep.subr.bf16.mxu0 0
        %1631 = vmatpush2.bf16.msra.mxu0 0
        %1632 = vmatprep.subr.bf16.mxu0 0
        %1633 = vmatpush2.bf16.msra.mxu0 0
        %1634 = vmatprep.subr.bf16.mxu0 0
        %1635 = vmatpush2.bf16.msra.mxu0 0
        %1636 = vmatprep.subr.bf16.mxu0 0
        %1637 = vmatpush2.bf16.msra.mxu0 0
        %1638 = vmatprep.subr.bf16.mxu0 0
        %1639 = vmatpush2.bf16.msra.mxu0 0
        %1640 = vmatprep.mubr.bf16.mxu0 0
        %1641 = vmatmul.mubr.bf16.gmra.mxu0 %v1601
        %v1642 = vpop.f32.mrf.mxu0
        %v1643 = vadd.f32 %v1597, %v1642
        %v1644 = vpop.f32.mrf.mxu0
        %v1645 = vadd.f32 %v1597, %v1644
        %v1646 = vpop.f32.mrf.mxu0
        %v1647 = vpop.f32.mrf.mxu0
        %1648 = vdwg.mxu0
        %v1649 = vmax.f32 %v1643, 0.0
        %v1650 = vmax.f32 %v1645, 0.0
        %v1651 = vpack.c.bf16 %v1649, %v1649
        %v1652 = vpack.c.bf16 %v1650, %v1650
        %v1655 = vcombine.low %v1651, %v1652
        %v1657 = vunpack.c.l.s4 1983009808
        %v1658 = vunpack.c.0.s8 %v1657
        %v1659 = vlaneseq
        %v1660 = vshrl.u32 %v1659, 7
        %v1661 = vsub.s32 %v1658, %v1660
        %v1662 = vrot.slane %v1655, %v1661
        %1664 = vst [vmem:[%s397] sm:$0xf] %v1662
        %s1665 = smul.u32 2, %s20
        %p1666 = scmp.lt.s32.totalorder %s19, 1
        %s1667 = scalar_select %p1666, %s19, 1
        %p1668 = scmp.lt.s32.totalorder %s1665, 1
        %s1669 = scalar_select %p1668, %s1665, 1
        %s1670 = smul.addr %s1667, 2
        %s1671 = sadd.s32 %s1669, %s1670
        %s1672 = smul.addr %s1671, 2
        %s1673 = scalar_lea.vmem %s4, %s1672
        // Predicated region
        $region119: #{pixel_attention_forward.7} parent=109 // pred_check
          %p1674 = pneg %p147
        $region120: #{pixel_attention_forward.7} parent=109 // pred_check_branch
          %1676 = sbr.rel (%p1674) target = $region122
        $region121: #{pixel_attention_forward.7} parent=109 // pred_region
          %s1677 = smul.u32 2, %s20
        $region122: #{pixel_attention_forward.7} parent=109 // pred_fallthru
          _
      $region110: #{pixel_attention_forward.7} parent=5 // pred_fallthru
        _
      %p1678 = scmp.le.s32.totalorder 2, %s10
      // Predicated region
      $region123: #{pixel_attention_forward.7} parent=5 // pred_check
        %p1679 = pneg %p1678
      $region124: #{pixel_attention_forward.7} parent=5 // pred_check_branch
        %1681 = sbr.rel (%p1679) target = $region126
      $region125: #{pixel_attention_forward.7} parent=5 // pred_region
        %s1682 = ssub.s32 %s10, 2
        // Predicated region
        $region127: #{pixel_attention_forward.7} parent=125 // pred_check
          %p1683 = pneg %p153
        $region128: #{pixel_attention_forward.7} parent=125 // pred_check_branch
          %1685 = sbr.rel (%p1683) target = $region130
        $region129: #{pixel_attention_forward.7} parent=125 // pred_region
          %s1686 = smul.u32 2, %s22
          %p1687 = scmp.lt.s32.totalorder %s21, 1
          %s1688 = scalar_select %p1687, %s21, 1
          %p1689 = scmp.lt.s32.totalorder %s1686, 1
          %s1690 = scalar_select %p1689, %s1686, 1
          %s1691 = smul.addr %s1688, 2
          %s1692 = sadd.s32 %s1690, %s1691
          %s1693 = smul.addr %s1692, 2
          %s1694 = scalar_lea.vmem %s4, %s1693
        $region130: #{pixel_attention_forward.7} parent=125 // pred_fallthru
          _
      $region126: #{pixel_attention_forward.7} parent=5 // pred_fallthru
        _
    $region6: #{pixel_attention_forward.7} parent=1 // loop_footer
      %s14 = sadd.s32 1, %s10
    $region7: #{pixel_attention_forward.7} parent=1 // loop_footer_branch
      %9 = sbr.rel target = $region3
    $region8: #{pixel_attention_forward.7} parent=1 // loop_exit
      _

// kernel: pixel_attention_forward.9
$region0: #{pixel_attention_forward.9}
  #allocation0 [shape = 'u32[]', space=smem, size = 0x4, offset = 0x4, fixed_abs, tag = 'smem constant byte address 0x4 - core index']
  #allocation1 [shape = 'u32[144,128]{1,0:T(1,128)}', space=vmem, size = 0x12000, scoped, tag = 'internal scratch']
  %s0 = inlined_call_operand.vmem [shape: bf16[2,8,32,18], index: 0, kind: input, shape index: {}, may-alias: {0,1}]
  %s1 = inlined_call_operand.vmem [shape: bf16[2,8,32,18], index: 1, kind: input, shape index: {}, may-alias: {0,1}]
  %s2 = inlined_call_operand.vmem [shape: f32[4,72], index: 2, kind: input, shape index: {}]
  %s3 = inlined_call_operand.vmem [shape: f32[4,1], index: 3, kind: input, shape index: {}]
  %s4 = inlined_call_operand.vmem [shape: f32[2,4,256], index: 4, kind: output, shape index: {}]
  %s5 = sld [smem:[#allocation0]]
  $region131: #{pixel_attention_forward.9} parent=0
    _
  %s7 = ssub.s32 1, %s5
  %s8 = scalar_select 0, %s7, %s5
  $region1: #{pixel_attention_forward.9} parent=0
    #allocation2 [shape = 'u8[65536]{0}', space=vmem, size = 0x10000, scoped, tag = 'input window, operand 0']
    #allocation3 [shape = 'u8[65536]{0}', space=vmem, size = 0x10000, scoped, tag = 'input window, operand 1']
    loop: start=0, step=1, limit=4
    $region2: #{pixel_attention_forward.9} parent=1 // loop_pre_header
      _
    $region3: #{pixel_attention_forward.9} parent=1 // loop_header
      %s10 = sphi 0, %s14
      %p11 = scmp.ge.s32.totalorder %s10, 4
      %s17 = sphi 0, %s29
      %s18 = sphi 0, %s25
      %s19 = sphi 0, %s17
      %s20 = sphi 0, %s18
      %s21 = sphi 0, %s19
      %s22 = sphi 0, %s20
      %s34 = sphi 0, %s36
      %s37 = sphi 0, %s34
      %s38 = sphi 0, %s37
      %s54 = sphi 0, %s38
      %s64 = sphi 0, %s66
      %s67 = sphi 0, %s64
      %s68 = sphi 0, %s67
      %s84 = sphi 0, %s68
      %s88 = sphi 0, %s88
      %s90 = sphi 0, %s88
      %s91 = sphi 0, %s90
      %s105 = sphi 0, %s91
      %s109 = sphi 0, %s109
      %s111 = sphi 0, %s109
      %s112 = sphi 0, %s111
      %s126 = sphi 0, %s112
      %s134 = sphi 0, %s136
      %s137 = sphi 0, %s134
      %s138 = sphi 0, %s137
      %s154 = sphi 0, %s138
    $region4: #{pixel_attention_forward.9} parent=1 // loop_header_branch
      %13 = sbr.rel (%p11) target = $region8
    $region5: #{pixel_attention_forward.9} parent=1 // loop_body
      %s15 = ssub.s32 %s10, 1
      %s16 = ssub.s32 %s10, 2
      %s23 = sadd.s32 1, %s18
      %p24 = scmp.ge.s32.totalorder %s23, 1
      %s25 = scalar_select %p24, 0, %s23
      %s26 = sadd.s32 1, %s17
      %s27 = scalar_select %p24, %s26, %s17
      %p28 = scmp.ge.s32.totalorder %s27, 2
      %s29 = scalar_select %p28, 0, %s27
      %s30 = ssub.s32 %s17, %s29
      %s31 = ssub.s32 %s18, %s25
      %s32 = sor.u32 %s30, %s31
      %p33 = scmp.eq.s32.totalorder %s32, 0
      %s35 = sadd.s32 %s34, 1
      %s36 = scalar_select %p33, %s34, %s35
      %p39 = pneg %p33
      %p40 = scmp.eq.s32.totalorder %s10, 1
      %p41 = por %p39, %p40
      %p42 = scmp.ne.s32.totalorder %s34, %s37
      %p43 = scmp.eq.s32.totalorder %s10, 0
      %p44 = por %p42, %p43
      %p45 = scmp.ne.s32.totalorder %s34, %s37
      %p46 = scmp.eq.s32.totalorder %s15, 1
      %p47 = por %p45, %p46
      %p48 = scmp.ne.s32.totalorder %s37, %s38
      %p49 = scmp.eq.s32.totalorder %s15, 0
      %p50 = por %p48, %p49
      %p51 = scmp.ne.s32.totalorder %s37, %s38
      %p52 = scmp.eq.s32.totalorder %s16, 1
      %p53 = por %p51, %p52
      %p55 = scmp.ne.s32.totalorder %s38, %s54
      %p56 = scmp.eq.s32.totalorder %s16, 0
      %p57 = por %p55, %p56
      %s58 = sadd.s32 %s18, 1
      %s59 = sadd.s32 %s25, 1
      %s60 = ssub.s32 %s17, %s29
      %s61 = ssub.s32 %s58, %s59
      %s62 = sor.u32 %s60, %s61
      %p63 = scmp.eq.s32.totalorder %s62, 0
      %s65 = sadd.s32 %s64, 1
      %s66 = scalar_select %p63, %s64, %s65
      %p69 = pneg %p63
      %p70 = scmp.eq.s32.totalorder %s10, 1
      %p71 = por %p69, %p70
      %p72 = scmp.ne.s32.totalorder %s64, %s67
      %p73 = scmp.eq.s32.totalorder %s10, 0
      %p74 = por %p72, %p73
      %p75 = scmp.ne.s32.totalorder %s64, %s67
      %p76 = scmp.eq.s32.totalorder %s15, 1
      %p77 = por %p75, %p76
      %p78 = scmp.ne.s32.totalorder %s67, %s68
      %p79 = scmp.eq.s32.totalorder %s15, 0
      %p80 = por %p78, %p79
      %p81 = scmp.ne.s32.totalorder %s67, %s68
      %p82 = scmp.eq.s32.totalorder %s16, 1
      %p83 = por %p81, %p82
      %p85 = scmp.ne.s32.totalorder %s68, %s84
      %p86 = scmp.eq.s32.totalorder %s16, 0
      %p87 = por %p85, %p86
      %s89 = sadd.s32 %s88, 1
      %p92 = scmp.eq.s32.totalorder %s10, 1
      %p93 = scmp.ne.s32.totalorder %s88, %s90
      %p94 = scmp.eq.s32.totalorder %s10, 0
      %p95 = por %p93, %p94
      %p96 = scmp.ne.s32.totalorder %s88, %s90
      %p97 = scmp.eq.s32.totalorder %s15, 1
      %p98 = por %p96, %p97
      %p99 = scmp.ne.s32.totalorder %s90, %s91
      %p100 = scmp.eq.s32.totalorder %s15, 0
      %p101 = por %p99, %p100
      %p102 = scmp.ne.s32.totalorder %s90, %s91
      %p103 = scmp.eq.s32.totalorder %s16, 1
      %p104 = por %p102, %p103
      %p106 = scmp.ne.s32.totalorder %s91, %s105
      %p107 = scmp.eq.s32.totalorder %s16, 0
      %p108 = por %p106, %p107
      %s110 = sadd.s32 %s109, 1
      %p113 = scmp.eq.s32.totalorder %s10, 1
      %p114 = scmp.ne.s32.totalorder %s109, %s111
      %p115 = scmp.eq.s32.totalorder %s10, 0
      %p116 = por %p114, %p115
      %p117 = scmp.ne.s32.totalorder %s109, %s111
      %p118 = scmp.eq.s32.totalorder %s15, 1
      %p119 = por %p117, %p118
      %p120 = scmp.ne.s32.totalorder %s111, %s112
      %p121 = scmp.eq.s32.totalorder %s15, 0
      %p122 = por %p120, %p121
      %p123 = scmp.ne.s32.totalorder %s111, %s112
      %p124 = scmp.eq.s32.totalorder %s16, 1
      %p125 = por %p123, %p124
      %p127 = scmp.ne.s32.totalorder %s112, %s126
      %p128 = scmp.eq.s32.totalorder %s16, 0
      %p129 = por %p127, %p128
      %s130 = ssub.s32 %s17, %s29
      %s131 = ssub.s32 %s18, %s25
      %s132 = sor.u32 %s130, %s131
      %p133 = scmp.eq.s32.totalorder %s132, 0
      %s135 = sadd.s32 %s134, 1
      %s136 = scalar_select %p133, %s134, %s135
      %p139 = pneg %p133
      %p140 = scmp.eq.s32.totalorder %s10, 1
      %p141 = por %p139, %p140
      %p142 = scmp.ne.s32.totalorder %s134, %s137
      %p143 = scmp.eq.s32.totalorder %s10, 0
      %p144 = por %p142, %p143
      %p145 = scmp.ne.s32.totalorder %s134, %s137
      %p146 = scmp.eq.s32.totalorder %s15, 1
      %p147 = por %p145, %p146
      %p148 = scmp.ne.s32.totalorder %s137, %s138
      %p149 = scmp.eq.s32.totalorder %s15, 0
      %p150 = por %p148, %p149
      %p151 = scmp.ne.s32.totalorder %s137, %s138
      %p152 = scmp.eq.s32.totalorder %s16, 1
      %p153 = por %p151, %p152
      %p155 = scmp.ne.s32.totalorder %s138, %s154
      %p156 = scmp.eq.s32.totalorder %s16, 0
      %p157 = por %p155, %p156
      %p158 = scmp.le.s32.totalorder 1, %s10
      %p159 = scmp.lt.s32.totalorder %s10, 3
      %p160 = pnand %p158, %p159
      %p161 = pneg %p160
      // Predicated region
      $region9: #{pixel_attention_forward.9} parent=5 // pred_check
        _
      $region10: #{pixel_attention_forward.9} parent=5 // pred_check_branch
        %163 = sbr.rel (%p160) target = $region12
      $region11: #{pixel_attention_forward.9} parent=5 // pred_region
        %s164 = ssub.s32 %s10, 1
        // Predicated region
        $region13: #{pixel_attention_forward.9} parent=11 // pred_check
          %p165 = pneg %p101
        $region14: #{pixel_attention_forward.9} parent=11 // pred_check_branch
          %167 = sbr.rel (%p165) target = $region16
        $region15: #{pixel_attention_forward.9} parent=11 // pred_region
          _
        $region16: #{pixel_attention_forward.9} parent=11 // pred_fallthru
          _
        // Predicated region
        $region17: #{pixel_attention_forward.9} parent=11 // pred_check
          %p168 = pneg %p122
        $region18: #{pixel_attention_forward.9} parent=11 // pred_check_branch
          %170 = sbr.rel (%p168) target = $region20
        $region19: #{pixel_attention_forward.9} parent=11 // pred_region
          _
        $region20: #{pixel_attention_forward.9} parent=11 // pred_fallthru
          _
      $region12: #{pixel_attention_forward.9} parent=5 // pred_fallthru
        _
      %p171 = scmp.lt.s32.totalorder %s10, 2
      // Predicated region
      $region21: #{pixel_attention_forward.9} parent=5 // pred_check
        %p172 = pneg %p171
      $region22: #{pixel_attention_forward.9} parent=5 // pred_check_branch
        %174 = sbr.rel (%p172) target = $region24
      $region23: #{pixel_attention_forward.9} parent=5 // pred_region
        // Predicated region
        $region25: #{pixel_attention_forward.9} parent=23 // pred_check
          %p175 = pneg %p44
        $region26: #{pixel_attention_forward.9} parent=23 // pred_check_branch
          %177 = sbr.rel (%p175) target = $region28
        $region27: #{pixel_attention_forward.9} parent=23 // pred_region
          %s178 = sand.u32 %s34, 1
          %s179 = sand.u32 %s34, 1
          %s180 = smul.addr %s179, 64
          %s181 = scalar_lea.vmem [#allocation2], %s180
          %s182 = smul.u32 2, %s18
          %s183 = smul.addr %s17, 32
          %s184 = sadd.s32 %s182, %s183
          %s185 = smul.addr %s184, 4
          %s186 = scalar_lea.vmem %s0, %s185
          // Predicated region
          $region29: #{pixel_attention_forward.9} parent=27 // pred_check
            _
          $region30: #{pixel_attention_forward.9} parent=27 // pred_check_branch
            %188 = sbr.rel (0) target = $region32
          $region31: #{pixel_attention_forward.9} parent=27 // pred_region
            // Predicated region
            $region33: #{pixel_attention_forward.9} parent=31 // pred_check
              _
            $region34: #{pixel_attention_forward.9} parent=31 // pred_check_branch
              %190 = sbr.rel target = $region36
            $region35: #{pixel_attention_forward.9} parent=31 // pred_region
              // Predicated region
              $region48: #{pixel_attention_forward.9} parent=35 // pred_check
                _
              $region49: #{pixel_attention_forward.9} parent=35 // pred_check_branch
                %236 = sbr.rel (0) target = $region51
              $region50: #{pixel_attention_forward.9} parent=35 // pred_region
                loop: start=0, step=1, limit=1
                $region52: #{pixel_attention_forward.9} parent=50 // loop_pre_header
                  _
                $region53: #{pixel_attention_forward.9} parent=50 // loop_header
                  %s238 = sphi 0, %s242
                  %p239 = scmp.ge.s32.totalorder %s238, 1
                  %s243 = sphi %s186, %s186
                  %s244 = sphi %s181, %s181
                $region54: #{pixel_attention_forward.9} parent=50 // loop_header_branch
                  %241 = sbr.rel (%p239) target = $region58
                $region55: #{pixel_attention_forward.9} parent=50 // loop_body
                  _
                $region56: #{pixel_attention_forward.9} parent=50 // loop_footer
                  %s242 = sadd.s32 1, %s238
                $region57: #{pixel_attention_forward.9} parent=50 // loop_footer_branch
                  %237 = sbr.rel target = $region53
                $region58: #{pixel_attention_forward.9} parent=50 // loop_exit
                  _
                %s246 = ssub.s32 16, 1
                loop: start=0, step=1, limit=1
                $region59: #{pixel_attention_forward.9} parent=50 // loop_pre_header
                  _
                $region60: #{pixel_attention_forward.9} parent=50 // loop_header
                  %s248 = sphi 0, %s252
                  %p249 = scmp.ge.s32.totalorder %s248, 1
                  %s253 = sphi %s186, %s186
                  %s254 = sphi %s181, %s181
                $region61: #{pixel_attention_forward.9} parent=50 // loop_header_branch
                  %251 = sbr.rel (%p249) target = $region65
                $region62: #{pixel_attention_forward.9} parent=50 // loop_body
                  %v255 = vld [vmem:[%s253] sm:%s246]
                  %256 = vst [vmem:[%s254] sm:%s246] %v255
                  %v257 = vld [vmem:[%s253 + $0x4] sm:%s246]
                  %258 = vst [vmem:[%s254 + $0x4] sm:%s246] %v257
                  %v259 = vld [vmem:[%s253 + $0x10] sm:%s246]
                  %260 = vst [vmem:[%s254 + $0x8] sm:%s246] %v259
                  %v261 = vld [vmem:[%s253 + $0x14] sm:%s246]
                  %262 = vst [vmem:[%s254 + $0xc] sm:%s246] %v261
                  %v263 = vld [vmem:[%s253 + $0x20] sm:%s246]
                  %264 = vst [vmem:[%s254 + $0x10] sm:%s246] %v263
                  %v265 = vld [vmem:[%s253 + $0x24] sm:%s246]
                  %266 = vst [vmem:[%s254 + $0x14] sm:%s246] %v265
                  %v267 = vld [vmem:[%s253 + $0x30] sm:%s246]
                  %268 = vst [vmem:[%s254 + $0x18] sm:%s246] %v267
                  %v269 = vld [vmem:[%s253 + $0x34] sm:%s246]
                  %270 = vst [vmem:[%s254 + $0x1c] sm:%s246] %v269
                  %v271 = vld [vmem:[%s253 + $0x40] sm:%s246]
                  %272 = vst [vmem:[%s254 + $0x20] sm:%s246] %v271
                  %v273 = vld [vmem:[%s253 + $0x44] sm:%s246]
                  %274 = vst [vmem:[%s254 + $0x24] sm:%s246] %v273
                  %v275 = vld [vmem:[%s253 + $0x50] sm:%s246]
                  %276 = vst [vmem:[%s254 + $0x28] sm:%s246] %v275
                  %v277 = vld [vmem:[%s253 + $0x54] sm:%s246]
                  %278 = vst [vmem:[%s254 + $0x2c] sm:%s246] %v277
                  %v279 = vld [vmem:[%s253 + $0x60] sm:%s246]
                  %280 = vst [vmem:[%s254 + $0x30] sm:%s246] %v279
                  %v281 = vld [vmem:[%s253 + $0x64] sm:%s246]
                  %282 = vst [vmem:[%s254 + $0x34] sm:%s246] %v281
                  %v283 = vld [vmem:[%s253 + $0x70] sm:%s246]
                  %284 = vst [vmem:[%s254 + $0x38] sm:%s246] %v283
                  %v285 = vld [vmem:[%s253 + $0x74] sm:%s246]
                  %286 = vst [vmem:[%s254 + $0x3c] sm:%s246] %v285
                $region63: #{pixel_attention_forward.9} parent=50 // loop_footer
                  %s252 = sadd.s32 1, %s248
                $region64: #{pixel_attention_forward.9} parent=50 // loop_footer_branch
                  %247 = sbr.rel target = $region60
                $region65: #{pixel_attention_forward.9} parent=50 // loop_exit
                  _
              $region51: #{pixel_attention_forward.9} parent=35 // pred_fallthru
                _
            $region36: #{pixel_attention_forward.9} parent=31 // pred_fallthru
              _
            // Predicated region
            $region37: #{pixel_attention_forward.9} parent=31 // pred_check
              _
            $region38: #{pixel_attention_forward.9} parent=31 // pred_check_branch
              %192 = sbr.rel (0) target = $region40
            $region39: #{pixel_attention_forward.9} parent=31 // pred_region
              %s194 = ssub.s32 16, 1
              loop: start=0, step=1, limit=1
              $region41: #{pixel_attention_forward.9} parent=39 // loop_pre_header
                _
              $region42: #{pixel_attention_forward.9} parent=39 // loop_header
                %s196 = sphi 0, %s200
                %p197 = scmp.ge.s32.totalorder %s196, 1
                %s201 = sphi %s186, %s186
                %s202 = sphi %s181, %s181
              $region43: #{pixel_attention_forward.9} parent=39 // loop_header_branch
                %199 = sbr.rel (%p197) target = $region47
              $region44: #{pixel_attention_forward.9} parent=39 // loop_body
                %v203 = vld [vmem:[%s201] sm:%s194]
                %204 = vst [vmem:[%s202] sm:%s194] %v203
                %v205 = vld [vmem:[%s201 + $0x4] sm:%s194]
                %206 = vst [vmem:[%s202 + $0x4] sm:%s194] %v205
                %v207 = vld [vmem:[%s201 + $0x10] sm:%s194]
                %208 = vst [vmem:[%s202 + $0x8] sm:%s194] %v207
                %v209 = vld [vmem:[%s201 + $0x14] sm:%s194]
                %210 = vst [vmem:[%s202 + $0xc] sm:%s194] %v209
                %v211 = vld [vmem:[%s201 + $0x20] sm:%s194]
                %212 = vst [vmem:[%s202 + $0x10] sm:%s194] %v211
                %v213 = vld [vmem:[%s201 + $0x24] sm:%s194]
                %214 = vst [vmem:[%s202 + $0x14] sm:%s194] %v213
                %v215 = vld [vmem:[%s201 + $0x30] sm:%s194]
                %216 = vst [vmem:[%s202 + $0x18] sm:%s194] %v215
                %v217 = vld [vmem:[%s201 + $0x34] sm:%s194]
                %218 = vst [vmem:[%s202 + $0x1c] sm:%s194] %v217
                %v219 = vld [vmem:[%s201 + $0x40] sm:%s194]
                %220 = vst [vmem:[%s202 + $0x20] sm:%s194] %v219
                %v221 = vld [vmem:[%s201 + $0x44] sm:%s194]
                %222 = vst [vmem:[%s202 + $0x24] sm:%s194] %v221
                %v223 = vld [vmem:[%s201 + $0x50] sm:%s194]
                %224 = vst [vmem:[%s202 + $0x28] sm:%s194] %v223
                %v225 = vld [vmem:[%s201 + $0x54] sm:%s194]
                %226 = vst [vmem:[%s202 + $0x2c] sm:%s194] %v225
                %v227 = vld [vmem:[%s201 + $0x60] sm:%s194]
                %228 = vst [vmem:[%s202 + $0x30] sm:%s194] %v227
                %v229 = vld [vmem:[%s201 + $0x64] sm:%s194]
                %230 = vst [vmem:[%s202 + $0x34] sm:%s194] %v229
                %v231 = vld [vmem:[%s201 + $0x70] sm:%s194]
                %232 = vst [vmem:[%s202 + $0x38] sm:%s194] %v231
                %v233 = vld [vmem:[%s201 + $0x74] sm:%s194]
                %234 = vst [vmem:[%s202 + $0x3c] sm:%s194] %v233
              $region45: #{pixel_attention_forward.9} parent=39 // loop_footer
                %s200 = sadd.s32 1, %s196
              $region46: #{pixel_attention_forward.9} parent=39 // loop_footer_branch
                %195 = sbr.rel target = $region42
              $region47: #{pixel_attention_forward.9} parent=39 // loop_exit
                _
            $region40: #{pixel_attention_forward.9} parent=31 // pred_fallthru
              _
          $region32: #{pixel_attention_forward.9} parent=27 // pred_fallthru
            _
          %287 = vnop
        $region28: #{pixel_attention_forward.9} parent=23 // pred_fallthru
          _
        // Predicated region
        $region66: #{pixel_attention_forward.9} parent=23 // pred_check
          %p288 = pneg %p74
        $region67: #{pixel_attention_forward.9} parent=23 // pred_check_branch
          %290 = sbr.rel (%p288) target = $region69
        $region68: #{pixel_attention_forward.9} parent=23 // pred_region
          %s291 = sand.u32 %s64, 1
          %s292 = sand.u32 %s64, 1
          %s293 = smul.addr %s292, 64
          %s294 = scalar_lea.vmem [#allocation3], %s293
          %s295 = sadd.s32 %s18, 1
          %s296 = smul.u32 2, %s295
          %s297 = smul.addr %s17, 32
          %s298 = sadd.s32 %s296, %s297
          %s299 = smul.addr %s298, 4
          %s300 = scalar_lea.vmem %s1, %s299
          // Predicated region
          $region70: #{pixel_attention_forward.9} parent=68 // pred_check
            _
          $region71: #{pixel_attention_forward.9} parent=68 // pred_check_branch
            %302 = sbr.rel (0) target = $region73
          $region72: #{pixel_attention_forward.9} parent=68 // pred_region
            // Predicated region
            $region74: #{pixel_attention_forward.9} parent=72 // pred_check
              _
            $region75: #{pixel_attention_forward.9} parent=72 // pred_check_branch
              %304 = sbr.rel target = $region77
            $region76: #{pixel_attention_forward.9} parent=72 // pred_region
              // Predicated region
              $region89: #{pixel_attention_forward.9} parent=76 // pred_check
                _
              $region90: #{pixel_attention_forward.9} parent=76 // pred_check_branch
                %350 = sbr.rel (0) target = $region92
              $region91: #{pixel_attention_forward.9} parent=76 // pred_region
                loop: start=0, step=1, limit=1
                $region93: #{pixel_attention_forward.9} parent=91 // loop_pre_header
                  _
                $region94: #{pixel_attention_forward.9} parent=91 // loop_header
                  %s352 = sphi 0, %s356
                  %p353 = scmp.ge.s32.totalorder %s352, 1
                  %s357 = sphi %s300, %s300
                  %s358 = sphi %s294, %s294
                $region95: #{pixel_attention_forward.9} parent=91 // loop_header_branch
                  %355 = sbr.rel (%p353) target = $region99
                $region96: #{pixel_attention_forward.9} parent=91 // loop_body
                  _
                $region97: #{pixel_attention_forward.9} parent=91 // loop_footer
                  %s356 = sadd.s32 1, %s352
                $region98: #{pixel_attention_forward.9} parent=91 // loop_footer_branch
                  %351 = sbr.rel target = $region94
                $region99: #{pixel_attention_forward.9} parent=91 // loop_exit
                  _
                %s360 = ssub.s32 16, 1
                loop: start=0, step=1, limit=1
                $region100: #{pixel_attention_forward.9} parent=91 // loop_pre_header
                  _
                $region101: #{pixel_attention_forward.9} parent=91 // loop_header
                  %s362 = sphi 0, %s366
                  %p363 = scmp.ge.s32.totalorder %s362, 1
                  %s367 = sphi %s300, %s300
                  %s368 = sphi %s294, %s294
                $region102: #{pixel_attention_forward.9} parent=91 // loop_header_branch
                  %365 = sbr.rel (%p363) target = $region106
                $region103: #{pixel_attention_forward.9} parent=91 // loop_body
                  %v369 = vld [vmem:[%s367] sm:%s360]
                  %370 = vst [vmem:[%s368] sm:%s360] %v369
                  %v371 = vld [vmem:[%s367 + $0x4] sm:%s360]
                  %372 = vst [vmem:[%s368 + $0x4] sm:%s360] %v371
                  %v373 = vld [vmem:[%s367 + $0x10] sm:%s360]
                  %374 = vst [vmem:[%s368 + $0x8] sm:%s360] %v373
                  %v375 = vld [vmem:[%s367 + $0x14] sm:%s360]
                  %376 = vst [vmem:[%s368 + $0xc] sm:%s360] %v375
                  %v377 = vld [vmem:[%s367 + $0x20] sm:%s360]
                  %378 = vst [vmem:[%s368 + $0x10] sm:%s360] %v377
                  %v379 = vld [vmem:[%s367 + $0x24] sm:%s360]
                  %380 = vst [vmem:[%s368 + $0x14] sm:%s360] %v379
                  %v381 = vld [vmem:[%s367 + $0x30] sm:%s360]
                  %382 = vst [vmem:[%s368 + $0x18] sm:%s360] %v381
                  %v383 = vld [vmem:[%s367 + $0x34] sm:%s360]
                  %384 = vst [vmem:[%s368 + $0x1c] sm:%s360] %v383
                  %v385 = vld [vmem:[%s367 + $0x40] sm:%s360]
                  %386 = vst [vmem:[%s368 + $0x20] sm:%s360] %v385
                  %v387 = vld [vmem:[%s367 + $0x44] sm:%s360]
                  %388 = vst [vmem:[%s368 + $0x24] sm:%s360] %v387
                  %v389 = vld [vmem:[%s367 + $0x50] sm:%s360]
                  %390 = vst [vmem:[%s368 + $0x28] sm:%s360] %v389
                  %v391 = vld [vmem:[%s367 + $0x54] sm:%s360]
                  %392 = vst [vmem:[%s368 + $0x2c] sm:%s360] %v391
                  %v393 = vld [vmem:[%s367 + $0x60] sm:%s360]
                  %394 = vst [vmem:[%s368 + $0x30] sm:%s360] %v393
                  %v395 = vld [vmem:[%s367 + $0x64] sm:%s360]
                  %396 = vst [vmem:[%s368 + $0x34] sm:%s360] %v395
                  %v397 = vld [vmem:[%s367 + $0x70] sm:%s360]
                  %398 = vst [vmem:[%s368 + $0x38] sm:%s360] %v397
                  %v399 = vld [vmem:[%s367 + $0x74] sm:%s360]
                  %400 = vst [vmem:[%s368 + $0x3c] sm:%s360] %v399
                $region104: #{pixel_attention_forward.9} parent=91 // loop_footer
                  %s366 = sadd.s32 1, %s362
                $region105: #{pixel_attention_forward.9} parent=91 // loop_footer_branch
                  %361 = sbr.rel target = $region101
                $region106: #{pixel_attention_forward.9} parent=91 // loop_exit
                  _
              $region92: #{pixel_attention_forward.9} parent=76 // pred_fallthru
                _
            $region77: #{pixel_attention_forward.9} parent=72 // pred_fallthru
              _
            // Predicated region
            $region78: #{pixel_attention_forward.9} parent=72 // pred_check
              _
            $region79: #{pixel_attention_forward.9} parent=72 // pred_check_branch
              %306 = sbr.rel (0) target = $region81
            $region80: #{pixel_attention_forward.9} parent=72 // pred_region
              %s308 = ssub.s32 16, 1
              loop: start=0, step=1, limit=1
              $region82: #{pixel_attention_forward.9} parent=80 // loop_pre_header
                _
              $region83: #{pixel_attention_forward.9} parent=80 // loop_header
                %s310 = sphi 0, %s314
                %p311 = scmp.ge.s32.totalorder %s310, 1
                %s315 = sphi %s300, %s300
                %s316 = sphi %s294, %s294
              $region84: #{pixel_attention_forward.9} parent=80 // loop_header_branch
                %313 = sbr.rel (%p311) target = $region88
              $region85: #{pixel_attention_forward.9} parent=80 // loop_body
                %v317 = vld [vmem:[%s315] sm:%s308]
                %318 = vst [vmem:[%s316] sm:%s308] %v317
                %v319 = vld [vmem:[%s315 + $0x4] sm:%s308]
                %320 = vst [vmem:[%s316 + $0x4] sm:%s308] %v319
                %v321 = vld [vmem:[%s315 + $0x10] sm:%s308]
                %322 = vst [vmem:[%s316 + $0x8] sm:%s308] %v321
                %v323 = vld [vmem:[%s315 + $0x14] sm:%s308]
                %324 = vst [vmem:[%s316 + $0xc] sm:%s308] %v323
                %v325 = vld [vmem:[%s315 + $0x20] sm:%s308]
                %326 = vst [vmem:[%s316 + $0x10] sm:%s308] %v325
                %v327 = vld [vmem:[%s315 + $0x24] sm:%s308]
                %328 = vst [vmem:[%s316 + $0x14] sm:%s308] %v327
                %v329 = vld [vmem:[%s315 + $0x30] sm:%s308]
                %330 = vst [vmem:[%s316 + $0x18] sm:%s308] %v329
                %v331 = vld [vmem:[%s315 + $0x34] sm:%s308]
                %332 = vst [vmem:[%s316 + $0x1c] sm:%s308] %v331
                %v333 = vld [vmem:[%s315 + $0x40] sm:%s308]
                %334 = vst [vmem:[%s316 + $0x20] sm:%s308] %v333
                %v335 = vld [vmem:[%s315 + $0x44] sm:%s308]
                %336 = vst [vmem:[%s316 + $0x24] sm:%s308] %v335
                %v337 = vld [vmem:[%s315 + $0x50] sm:%s308]
                %338 = vst [vmem:[%s316 + $0x28] sm:%s308] %v337
                %v339 = vld [vmem:[%s315 + $0x54] sm:%s308]
                %340 = vst [vmem:[%s316 + $0x2c] sm:%s308] %v339
                %v341 = vld [vmem:[%s315 + $0x60] sm:%s308]
                %342 = vst [vmem:[%s316 + $0x30] sm:%s308] %v341
                %v343 = vld [vmem:[%s315 + $0x64] sm:%s308]
                %344 = vst [vmem:[%s316 + $0x34] sm:%s308] %v343
                %v345 = vld [vmem:[%s315 + $0x70] sm:%s308]
                %346 = vst [vmem:[%s316 + $0x38] sm:%s308] %v345
                %v347 = vld [vmem:[%s315 + $0x74] sm:%s308]
                %348 = vst [vmem:[%s316 + $0x3c] sm:%s308] %v347
              $region86: #{pixel_attention_forward.9} parent=80 // loop_footer
                %s314 = sadd.s32 1, %s310
              $region87: #{pixel_attention_forward.9} parent=80 // loop_footer_branch
                %309 = sbr.rel target = $region83
              $region88: #{pixel_attention_forward.9} parent=80 // loop_exit
                _
            $region81: #{pixel_attention_forward.9} parent=72 // pred_fallthru
              _
          $region73: #{pixel_attention_forward.9} parent=68 // pred_fallthru
            _
          %401 = vnop
        $region69: #{pixel_attention_forward.9} parent=23 // pred_fallthru
          _
      $region24: #{pixel_attention_forward.9} parent=5 // pred_fallthru
        _
      %p402 = scmp.le.s32.totalorder 1, %s10
      %p403 = scmp.lt.s32.totalorder %s10, 3
      %p404 = pnand %p402, %p403
      %p405 = pneg %p404
      // Predicated region
      $region107: #{pixel_attention_forward.9} parent=5 // pred_check
        _
      $region108: #{pixel_attention_forward.9} parent=5 // pred_check_branch
        %407 = sbr.rel (%p404) target = $region110
      $region109: #{pixel_attention_forward.9} parent=5 // pred_region
        %s408 = ssub.s32 %s10, 1
        %s409 = sand.u32 %s37, 1
        %s410 = sand.u32 %s37, 1
        %s411 = smul.addr %s410, 64
        %s412 = scalar_lea.vmem [#allocation2], %s411
        // Predicated region
        $region111: #{pixel_attention_forward.9} parent=109 // pred_check
          %p413 = pneg %p50
        $region112: #{pixel_attention_forward.9} parent=109 // pred_check_branch
          %415 = sbr.rel (%p413) target = $region114
        $region113: #{pixel_attention_forward.9} parent=109 // pred_region
          _
        $region114: #{pixel_attention_forward.9} parent=109 // pred_fallthru
          _
        %s416 = sand.u32 %s67, 1
        %s417 = sand.u32 %s67, 1
        %s418 = smul.addr %s417, 64
        %s419 = scalar_lea.vmem [#allocation3], %s418
        // Predicated region
        $region115: #{pixel_attention_forward.9} parent=109 // pred_check
          %p420 = pneg %p80
        $region116: #{pixel_attention_forward.9} parent=109 // pred_check_branch
          %422 = sbr.rel (%p420) target = $region118
        $region117: #{pixel_attention_forward.9} parent=109 // pred_region
          _
        $region118: #{pixel_attention_forward.9} parent=109 // pred_fallthru
          _
        %s423 = sand.u32 %s37, 1
        %s424 = sand.u32 %s37, 1
        %s425 = smul.addr %s424, 64
        %s426 = scalar_lea.vmem [#allocation2], %s425
        %p427 = pneg %p50
        %p428 = pneg %p47
        %s429 = sand.u32 %s67, 1
        %s430 = sand.u32 %s67, 1
        %s431 = smul.addr %s430, 64
        %s432 = scalar_lea.vmem [#allocation3], %s431
        %p433 = pneg %p80
        %p434 = pneg %p77
        %p435 = pneg %p101
        %p436 = pneg %p98
        %p437 = pneg %p122
        %p438 = pneg %p119
        %p439 = pneg %p150
        %p440 = pneg %p147
        %s441 = smul.u32 2, %s20
        %p442 = scmp.lt.s32.totalorder %s19, 1
        %s443 = scalar_select %p442, %s19, 1
        %p444 = scmp.lt.s32.totalorder %s441, 1
        %s445 = scalar_select %p444, %s441, 1
        %s446 = smul.addr %s443, 2
        %s447 = sadd.s32 %s445, %s446
        %s448 = smul.addr %s447, 4
        %s449 = scalar_lea.vmem %s4, %s448
        %s450 = smul.u32 2, %s20
        %s451 = sadd.s32 %s20, 1
        %s452 = smul.u32 2, %s451
        %s453 = smul.u32 2, %s20
        %p454 = scmp.lt.s32.totalorder %s19, 1
        %s455 = scalar_select %p454, %s19, 1
        %p456 = scmp.lt.s32.totalorder %s453, 1
        %s457 = scalar_select %p456, %s453, 1
        %s458 = smul.addr %s455, 2
        %s459 = sadd.s32 %s457, %s458
        %s460 = smul.addr %s459, 4
        %s461 = scalar_lea.vmem %s4, %s460
        %s462 = smul.u32 2, %s20
        %v464 = vld [vmem:[%s412] sm:$0xf]
        %v465 = vld [vmem:[%s412 + $0x4] sm:$0xf]
        %v466 = vld [vmem:[%s412 + $0x8] sm:$0xf]
        %v467 = vld [vmem:[%s412 + $0xc] sm:$0xf]
        %v468 = vld [vmem:[%s412 + $0x10] sm:$0xf]
        %v469 = vld [vmem:[%s412 + $0x14] sm:$0xf]
        %v470 = vld [vmem:[%s412 + $0x18] sm:$0xf]
        %v471 = vld [vmem:[%s412 + $0x1c] sm:$0xf]
        %v472 = vld [vmem:[%s412 + $0x20] sm:$0xf]
        %v473 = vld [vmem:[%s412 + $0x24] sm:$0xf]
        %v474 = vld [vmem:[%s412 + $0x28] sm:$0xf]
        %v475 = vld [vmem:[%s412 + $0x2c] sm:$0xf]
        %v476 = vld [vmem:[%s412 + $0x30] sm:$0xf]
        %v477 = vld [vmem:[%s412 + $0x34] sm:$0xf]
        %v478 = vld [vmem:[%s412 + $0x38] sm:$0xf]
        %v479 = vld [vmem:[%s412 + $0x3c] sm:$0xf]
        %v480 = vld [vmem:[%s419] sm:$0xf]
        %v481 = vld [vmem:[%s419 + $0x8] sm:$0xf]
        %v482 = vld [vmem:[%s419 + $0x10] sm:$0xf]
        %v483 = vld [vmem:[%s419 + $0x18] sm:$0xf]
        %v484 = vld [vmem:[%s419 + $0x20] sm:$0xf]
        %v485 = vld [vmem:[%s419 + $0x28] sm:$0xf]
        %v486 = vld [vmem:[%s419 + $0x30] sm:$0xf]
        %v487 = vld [vmem:[%s419 + $0x38] sm:$0xf]
        %v504 = vunpack.c.l.b16 %v464
        %v505 = vunpack.c.l.b16 %v465
        %v506 = vunpack.c.l.b16 %v466
        %v507 = vunpack.c.l.b16 %v467
        %v508 = vunpack.c.l.b16 %v468
        %v509 = vunpack.c.l.b16 %v469
        %v510 = vunpack.c.l.b16 %v470
        %v511 = vunpack.c.l.b16 %v471
        %v512 = vunpack.c.l.b16 %v472
        %v513 = vunpack.c.l.b16 %v473
        %v514 = vunpack.c.l.b16 %v474
        %v515 = vunpack.c.l.b16 %v475
        %v516 = vunpack.c.l.b16 %v476
        %v517 = vunpack.c.l.b16 %v477
        %v518 = vunpack.c.l.b16 %v478
        %v519 = vunpack.c.l.b16 %v479
        %v520 = vpack.c.b16 %v505, %v504
        %v521 = vpack.c.b16 %v507, %v506
        %v522 = vpack.c.b16 %v509, %v508
        %v523 = vpack.c.b16 %v511, %v510
        %v524 = vpack.c.b16 %v513, %v512
        %v525 = vpack.c.b16 %v515, %v514
        %v526 = vpack.c.b16 %v517, %v516
        %v527 = vpack.c.b16 %v519, %v518
        %528 = vrot.lane.b32.xlu0 %v520, 127
        %v529 = vpop.permute.xlu0 %528
        %530 = vrot.lane.b32.xlu0 %v521, 127
        %v531 = vpop.permute.xlu0 %530
        %532 = vrot.lane.b32.xlu0 %v522, 127
        %v533 = vpop.permute.xlu0 %532
        %534 = vrot.lane.b32.xlu0 %v523, 127
        %v535 = vpop.permute.xlu0 %534
        %536 = vrot.lane.b32.xlu0 %v524, 127
        %v537 = vpop.permute.xlu0 %536
        %538 = vrot.lane.b32.xlu0 %v525, 127
        %v539 = vpop.permute.xlu0 %538
        %540 = vrot.lane.b32.xlu0 %v526, 127
        %v541 = vpop.permute.xlu0 %540
        %542 = vrot.lane.b32.xlu0 %v527, 127
        %v543 = vpop.permute.xlu0 %542
        %544 = vrot.lane.b32.xlu0 %v520, 126
        %v545 = vpop.permute.xlu0 %544
        %546 = vrot.lane.b32.xlu0 %v521, 126
        %v547 = vpop.permute.xlu0 %546
        %548 = vrot.lane.b32.xlu0 %v522, 126
        %v549 = vpop.permute.xlu0 %548
        %550 = vrot.lane.b32.xlu0 %v523, 126
        %v551 = vpop.permute.xlu0 %550
        %552 = vrot.lane.b32.xlu0 %v524, 126
        %v553 = vpop.permute.xlu0 %552
        %554 = vrot.lane.b32.xlu0 %v525, 126
        %v555 = vpop.permute.xlu0 %554
        %556 = vrot.lane.b32.xlu0 %v526, 126
        %v557 = vpop.permute.xlu0 %556
        %558 = vrot.lane.b32.xlu0 %v527, 126
        %v559 = vpop.permute.xlu0 %558
        %vm560 = vsmask.f32 7424
        %v562 = vshrl.u32 %v520, 16
        %v564 = vshll.u32 %v520, 16
        %v566 = vrot.slane %v564, 1
        %v567 = vor.u32 %v562, %v566
        %v569 = vshll.u32 %v480, 16
        %v571 = vrot.slane %v569, 1
        %v572 = vsel %vm560, %v567, %v571
        %v574 = vshrl.u32 %v521, 16
        %v576 = vshll.u32 %v521, 16
        %v578 = vrot.slane %v576, 1
        %v579 = vor.u32 %v574, %v578
        %v581 = vshll.u32 %v481, 16
        %v583 = vrot.slane %v581, 1
        %v584 = vsel %vm560, %v579, %v583
        %v586 = vshrl.u32 %v522, 16
        %v588 = vshll.u32 %v522, 16
        %v590 = vrot.slane %v588, 1
        %v591 = vor.u32 %v586, %v590
        %v593 = vshll.u32 %v482, 16
        %v595 = vrot.slane %v593, 1
        %v596 = vsel %vm560, %v591, %v595
        %v598 = vshrl.u32 %v523, 16
        %v600 = vshll.u32 %v523, 16
        %v602 = vrot.slane %v600, 1
        %v603 = vor.u32 %v598, %v602
        %v605 = vshll.u32 %v483, 16
        %v607 = vrot.slane %v605, 1
        %v608 = vsel %vm560, %v603, %v607
        %v610 = vshrl.u32 %v524, 16
        %v612 = vshll.u32 %v524, 16
        %v614 = vrot.slane %v612, 1
        %v615 = vor.u32 %v610, %v614
        %v617 = vshll.u32 %v484, 16
        %v619 = vrot.slane %v617, 1
        %v620 = vsel %vm560, %v615, %v619
        %v622 = vshrl.u32 %v525, 16
        %v624 = vshll.u32 %v525, 16
        %v626 = vrot.slane %v624, 1
        %v627 = vor.u32 %v622, %v626
        %v629 = vshll.u32 %v485, 16
        %v631 = vrot.slane %v629, 1
        %v632 = vsel %vm560, %v627, %v631
        %v634 = vshrl.u32 %v526, 16
        %v636 = vshll.u32 %v526, 16
        %v638 = vrot.slane %v636, 1
        %v639 = vor.u32 %v634, %v638
        %v641 = vshll.u32 %v486, 16
        %v643 = vrot.slane %v641, 1
        %v644 = vsel %vm560, %v639, %v643
        %v646 = vshrl.u32 %v527, 16
        %v648 = vshll.u32 %v527, 16
        %v650 = vrot.slane %v648, 1
        %v651 = vor.u32 %v646, %v650
        %v653 = vshll.u32 %v487, 16
        %v655 = vrot.slane %v653, 1
        %v656 = vsel %vm560, %v651, %v655
        %657 = vrot.lane.b32.xlu0 %v572, 127
        %v658 = vpop.permute.xlu0 %657
        %659 = vrot.lane.b32.xlu0 %v584, 127
        %v660 = vpop.permute.xlu0 %659
        %661 = vrot.lane.b32.xlu0 %v596, 127
        %v662 = vpop.permute.xlu0 %661
        %663 = vrot.lane.b32.xlu0 %v608, 127
        %v664 = vpop.permute.xlu0 %663
        %665 = vrot.lane.b32.xlu0 %v620, 127
        %v666 = vpop.permute.xlu0 %665
        %667 = vrot.lane.b32.xlu0 %v632, 127
        %v668 = vpop.permute.xlu0 %667
        %669 = vrot.lane.b32.xlu0 %v644, 127
        %v670 = vpop.permute.xlu0 %669
        %671 = vrot.lane.b32.xlu0 %v656, 127
        %v672 = vpop.permute.xlu0 %671
        %673 = vrot.lane.b32.xlu0 %v572, 126
        %v674 = vpop.permute.xlu0 %673
        %675 = vrot.lane.b32.xlu0 %v584, 126
        %v676 = vpop.permute.xlu0 %675
        %677 = vrot.lane.b32.xlu0 %v596, 126
        %v678 = vpop.permute.xlu0 %677
        %679 = vrot.lane.b32.xlu0 %v608, 126
        %v680 = vpop.permute.xlu0 %679
        %681 = vrot.lane.b32.xlu0 %v620, 126
        %v682 = vpop.permute.xlu0 %681
        %683 = vrot.lane.b32.xlu0 %v632, 126
        %v684 = vpop.permute.xlu0 %683
        %685 = vrot.lane.b32.xlu0 %v644, 126
        %v686 = vpop.permute.xlu0 %685
        %687 = vrot.lane.b32.xlu0 %v656, 126
        %v688 = vpop.permute.xlu0 %687
        %vm697 = vcmask 1046528
        %v698 = vrot.slane %v520, 1
        %v699 = vrot.slane %v480, 1
        %v700 = vsel %vm697, %v698, %v699
        %v701 = vrot.slane %v521, 1
        %v702 = vrot.slane %v481, 1
        %v703 = vsel %vm697, %v701, %v702
        %v704 = vrot.slane %v522, 1
        %v705 = vrot.slane %v482, 1
        %v706 = vsel %vm697, %v704, %v705
        %v707 = vrot.slane %v523, 1
        %v708 = vrot.slane %v483, 1
        %v709 = vsel %vm697, %v707, %v708
        %v710 = vrot.slane %v524, 1
        %v711 = vrot.slane %v484, 1
        %v712 = vsel %vm697, %v710, %v711
        %v713 = vrot.slane %v525, 1
        %v714 = vrot.slane %v485, 1
        %v715 = vsel %vm697, %v713, %v714
        %v716 = vrot.slane %v526, 1
        %v717 = vrot.slane %v486, 1
        %v718 = vsel %vm697, %v716, %v717
        %v719 = vrot.slane %v527, 1
        %v720 = vrot.slane %v487, 1
        %v721 = vsel %vm697, %v719, %v720
        %722 = vrot.lane.b32.xlu0 %v700, 127
        %v723 = vpop.permute.xlu0 %722
        %724 = vrot.lane.b32.xlu0 %v703, 127
        %v725 = vpop.permute.xlu0 %724
        %726 = vrot.lane.b32.xlu0 %v706, 127
        %v727 = vpop.permute.xlu0 %726
        %728 = vrot.lane.b32.xlu0 %v709, 127
        %v729 = vpop.permute.xlu0 %728
        %730 = vrot.lane.b32.xlu0 %v712, 127
        %v731 = vpop.permute.xlu0 %730
        %732 = vrot.lane.b32.xlu0 %v715, 127
        %v733 = vpop.permute.xlu0 %732
        %734 = vrot.lane.b32.xlu0 %v718, 127
        %v735 = vpop.permute.xlu0 %734
        %736 = vrot.lane.b32.xlu0 %v721, 127
        %v737 = vpop.permute.xlu0 %736
        %738 = vrot.lane.b32.xlu0 %v700, 126
        %v739 = vpop.permute.xlu0 %738
        %740 = vrot.lane.b32.xlu0 %v703, 126
        %v741 = vpop.permute.xlu0 %740
        %742 = vrot.lane.b32.xlu0 %v706, 126
        %v743 = vpop.permute.xlu0 %742
        %744 = vrot.lane.b32.xlu0 %v709, 126
        %v745 = vpop.permute.xlu0 %744
        %746 = vrot.lane.b32.xlu0 %v712, 126
        %v747 = vpop.permute.xlu0 %746
        %748 = vrot.lane.b32.xlu0 %v715, 126
        %v749 = vpop.permute.xlu0 %748
        %750 = vrot.lane.b32.xlu0 %v718, 126
        %v751 = vpop.permute.xlu0 %750
        %752 = vrot.lane.b32.xlu0 %v721, 126
        %v753 = vpop.permute.xlu0 %752
        %v754 = vpack.i.b16 %v521, %v520
        %v756 = vpack.i.b16 %v574, %v562
        %v758 = vpack.i.b16 %v523, %v522
        %v760 = vpack.i.b16 %v598, %v586
        %v762 = vpack.i.b16 %v525, %v524
        %v764 = vpack.i.b16 %v622, %v610
        %v766 = vpack.i.b16 %v527, %v526
        %v768 = vpack.i.b16 %v646, %v634
        %v772 = vpack.i.b16 %v531, %v529
        %v774 = vshrl.u32 %v529, 16
        %v775 = vshrl.u32 %v531, 16
        %v776 = vpack.i.b16 %v775, %v774
        %v780 = vpack.i.b16 %v535, %v533
        %v782 = vshrl.u32 %v533, 16
        %v783 = vshrl.u32 %v535, 16
        %v784 = vpack.i.b16 %v783, %v782
        %v788 = vpack.i.b16 %v539, %v537
        %v790 = vshrl.u32 %v537, 16
        %v791 = vshrl.u32 %v539, 16
        %v792 = vpack.i.b16 %v791, %v790
        %v796 = vpack.i.b16 %v543, %v541
        %v798 = vshrl.u32 %v541, 16
        %v799 = vshrl.u32 %v543, 16
        %v800 = vpack.i.b16 %v799, %v798
        %v804 = vpack.i.b16 %v547, %v545
        %v806 = vshrl.u32 %v545, 16
        %v807 = vshrl.u32 %v547, 16
        %v808 = vpack.i.b16 %v807, %v806
        %v812 = vpack.i.b16 %v551, %v549
        %v814 = vshrl.u32 %v549, 16
        %v815 = vshrl.u32 %v551, 16
        %v816 = vpack.i.b16 %v815, %v814
        %v820 = vpack.i.b16 %v555, %v553
        %v822 = vshrl.u32 %v553, 16
        %v823 = vshrl.u32 %v555, 16
        %v824 = vpack.i.b16 %v823, %v822
        %v828 = vpack.i.b16 %v559, %v557
        %v830 = vshrl.u32 %v557, 16
        %v831 = vshrl.u32 %v559, 16
        %v832 = vpack.i.b16 %v831, %v830
        %v836 = vpack.i.b16 %v584, %v572
        %v838 = vshrl.u32 %v572, 16
        %v839 = vshrl.u32 %v584, 16
        %v840 = vpack.i.b16 %v839, %v838
        %v844 = vpack.i.b16 %v608, %v596
        %v846 = vshrl.u32 %v596, 16
        %v847 = vshrl.u32 %v608, 16
        %v848 = vpack.i.b16 %v847, %v846
        %v852 = vpack.i.b16 %v632, %v620
        %v854 = vshrl.u32 %v620, 16
        %v855 = vshrl.u32 %v632, 16
        %v856 = vpack.i.b16 %v855, %v854
        %v860 = vpack.i.b16 %v656, %v644
        %v862 = vshrl.u32 %v644, 16
        %v863 = vshrl.u32 %v656, 16
        %v864 = vpack.i.b16 %v863, %v862
        %v868 = vpack.i.b16 %v660, %v658
        %v870 = vshrl.u32 %v658, 16
        %v871 = vshrl.u32 %v660, 16
        %v872 = vpack.i.b16 %v871, %v870
        %v876 = vpack.i.b16 %v664, %v662
        %v878 = vshrl.u32 %v662, 16
        %v879 = vshrl.u32 %v664, 16
        %v880 = vpack.i.b16 %v879, %v878
        %v884 = vpack.i.b16 %v668, %v666
        %v886 = vshrl.u32 %v666, 16
        %v887 = vshrl.u32 %v668, 16
        %v888 = vpack.i.b16 %v887, %v886
        %v892 = vpack.i.b16 %v672, %v670
        %v894 = vshrl.u32 %v670, 16
        %v895 = vshrl.u32 %v672, 16
        %v896 = vpack.i.b16 %v895, %v894
        %v900 = vpack.i.b16 %v676, %v674
        %v902 = vshrl.u32 %v674, 16
        %v903 = vshrl.u32 %v676, 16
        %v904 = vpack.i.b16 %v903, %v902
        %v908 = vpack.i.b16 %v680, %v678
        %v910 = vshrl.u32 %v678, 16
        %v911 = vshrl.u32 %v680, 16
        %v912 = vpack.i.b16 %v911, %v910
        %v916 = vpack.i.b16 %v684, %v682
        %v918 = vshrl.u32 %v682, 16
        %v919 = vshrl.u32 %v684, 16
        %v920 = vpack.i.b16 %v919, %v918
        %v924 = vpack.i.b16 %v688, %v686
        %v926 = vshrl.u32 %v686, 16
        %v927 = vshrl.u32 %v688, 16
        %v928 = vpack.i.b16 %v927, %v926
        %v932 = vpack.i.b16 %v703, %v700
        %v934 = vshrl.u32 %v700, 16
        %v935 = vshrl.u32 %v703, 16
        %v936 = vpack.i.b16 %v935, %v934
        %v940 = vpack.i.b16 %v709, %v706
        %v942 = vshrl.u32 %v706, 16
        %v943 = vshrl.u32 %v709, 16
        %v944 = vpack.i.b16 %v943, %v942
        %v948 = vpack.i.b16 %v715, %v712
        %v950 = vshrl.u32 %v712, 16
        %v951 = vshrl.u32 %v715, 16
        %v952 = vpack.i.b16 %v951, %v950
        %v956 = vpack.i.b16 %v721, %v718
        %v958 = vshrl.u32 %v718, 16
        %v959 = vshrl.u32 %v721, 16
        %v960 = vpack.i.b16 %v959, %v958
        %v964 = vpack.i.b16 %v725, %v723
        %v966 = vshrl.u32 %v723, 16
        %v967 = vshrl.u32 %v725, 16
        %v968 = vpack.i.b16 %v967, %v966
        %v972 = vpack.i.b16 %v729, %v727
        %v974 = vshrl.u32 %v727, 16
        %v975 = vshrl.u32 %v729, 16
        %v976 = vpack.i.b16 %v975, %v974
        %v980 = vpack.i.b16 %v733, %v731
        %v982 = vshrl.u32 %v731, 16
        %v983 = vshrl.u32 %v733, 16
        %v984 = vpack.i.b16 %v983, %v982
        %v988 = vpack.i.b16 %v737, %v735
        %v990 = vshrl.u32 %v735, 16
        %v991 = vshrl.u32 %v737, 16
        %v992 = vpack.i.b16 %v991, %v990
        %v996 = vpack.i.b16 %v741, %v739
        %v998 = vshrl.u32 %v739, 16
        %v999 = vshrl.u32 %v741, 16
        %v1000 = vpack.i.b16 %v999, %v998
        %v1004 = vpack.i.b16 %v745, %v743
        %v1006 = vshrl.u32 %v743, 16
        %v1007 = vshrl.u32 %v745, 16
        %v1008 = vpack.i.b16 %v1007, %v1006
        %v1012 = vpack.i.b16 %v749, %v747
        %v1014 = vshrl.u32 %v747, 16
        %v1015 = vshrl.u32 %v749, 16
        %v1016 = vpack.i.b16 %v1015, %v1014
        %v1020 = vpack.i.b16 %v753, %v751
        %v1022 = vshrl.u32 %v751, 16
        %v1023 = vshrl.u32 %v753, 16
        %v1024 = vpack.i.b16 %v1023, %v1022
        %v1026 = vcombine.low %v754, %v762
        %v1027 = vcombine.high %v754, %v762
        %v1029 = vunpack.c.l.s4 1983009808
        %v1030 = vunpack.c.0.s8 %v1029
        %v1031 = vlaneseq
        %v1032 = vshrl.u32 %v1031, 7
        %v1033 = vsub.s32 %v1030, %v1032
        %v1034 = vrot.slane %v1026, %v1033
        %v1036 = vunpack.c.l.s4 1983009808
        %v1037 = vunpack.c.0.s8 %v1036
        %v1038 = vlaneseq
        %v1039 = vshrl.u32 %v1038, 7
        %v1040 = vsub.s32 %v1037, %v1039
        %v1041 = vrot.slane %v1027, %v1040
        %v1042 = vcombine.low %v758, %v766
        %v1043 = vcombine.high %v758, %v766
        %v1045 = vunpack.c.l.s4 1983009808
        %v1046 = vunpack.c.0.s8 %v1045
        %v1047 = vlaneseq
        %v1048 = vshrl.u32 %v1047, 7
        %v1049 = vsub.s32 %v1046, %v1048
        %v1050 = vrot.slane %v1042, %v1049
        %v1052 = vunpack.c.l.s4 1983009808
        %v1053 = vunpack.c.0.s8 %v1052
        %v1054 = vlaneseq
        %v1055 = vshrl.u32 %v1054, 7
        %v1056 = vsub.s32 %v1053, %v1055
        %v1057 = vrot.slane %v1043, %v1056
        %v1058 = vcombine.low %v772, %v788
        %v1059 = vcombine.high %v772, %v788
        %v1061 = vunpack.c.l.s4 1983009808
        %v1062 = vunpack.c.0.s8 %v1061
        %v1063 = vlaneseq
        %v1064 = vshrl.u32 %v1063, 7
        %v1065 = vsub.s32 %v1062, %v1064
        %v1066 = vrot.slane %v1058, %v1065
        %v1068 = vunpack.c.l.s4 1983009808
        %v1069 = vunpack.c.0.s8 %v1068
        %v1070 = vlaneseq
        %v1071 = vshrl.u32 %v1070, 7
        %v1072 = vsub.s32 %v1069, %v1071
        %v1073 = vrot.slane %v1059, %v1072
        %v1074 = vcombine.low %v780, %v796
        %v1075 = vcombine.high %v780, %v796
        %v1077 = vunpack.c.l.s4 1983009808
        %v1078 = vunpack.c.0.s8 %v1077
        %v1079 = vlaneseq
        %v1080 = vshrl.u32 %v1079, 7
        %v1081 = vsub.s32 %v1078, %v1080
        %v1082 = vrot.slane %v1074, %v1081
        %v1084 = vunpack.c.l.s4 1983009808
        %v1085 = vunpack.c.0.s8 %v1084
        %v1086 = vlaneseq
        %v1087 = vshrl.u32 %v1086, 7
        %v1088 = vsub.s32 %v1085, %v1087
        %v1089 = vrot.slane %v1075, %v1088
        %v1090 = vcombine.low %v1034, %v1050
        %v1091 = vcombine.high %v1034, %v1050
        %v1093 = vunpack.c.l.s4 1934713408
        %v1094 = vunpack.c.0.s8 %v1093
        %v1095 = vlaneseq
        %v1096 = vshrl.u32 %v1095, 7
        %v1097 = vsub.s32 %v1094, %v1096
        %v1098 = vrot.slane %v1090, %v1097
        %v1100 = vunpack.c.l.s4 1934713408
        %v1101 = vunpack.c.0.s8 %v1100
        %v1102 = vlaneseq
        %v1103 = vshrl.u32 %v1102, 7
        %v1104 = vsub.s32 %v1101, %v1103
        %v1105 = vrot.slane %v1091, %v1104
        %v1106 = vcombine.low %v1041, %v1057
        %v1107 = vcombine.high %v1041, %v1057
        %v1109 = vunpack.c.l.s4 1934713408
        %v1110 = vunpack.c.0.s8 %v1109
        %v1111 = vlaneseq
        %v1112 = vshrl.u32 %v1111, 7
        %v1113 = vsub.s32 %v1110, %v1112
        %v1114 = vrot.slane %v1106, %v1113
        %v1116 = vunpack.c.l.s4 1934713408
        %v1117 = vunpack.c.0.s8 %v1116
        %v1118 = vlaneseq
        %v1119 = vshrl.u32 %v1118, 7
        %v1120 = vsub.s32 %v1117, %v1119
        %v1121 = vrot.slane %v1107, %v1120
        %v1122 = vcombine.low %v1066, %v1082
        %v1123 = vcombine.high %v1066, %v1082
        %v1125 = vunpack.c.l.s4 1934713408
        %v1126 = vunpack.c.0.s8 %v1125
        %v1127 = vlaneseq
        %v1128 = vshrl.u32 %v1127, 7
        %v1129 = vsub.s32 %v1126, %v1128
        %v1130 = vrot.slane %v1122, %v1129
        %v1132 = vunpack.c.l.s4 1934713408
        %v1133 = vunpack.c.0.s8 %v1132
        %v1134 = vlaneseq
        %v1135 = vshrl.u32 %v1134, 7
        %v1136 = vsub.s32 %v1133, %v1135
        %v1137 = vrot.slane %v1123, %v1136
        %v1138 = vcombine.low %v1073, %v1089
        %v1139 = vcombine.high %v1073, %v1089
        %v1141 = vunpack.c.l.s4 1934713408
        %v1142 = vunpack.c.0.s8 %v1141
        %v1143 = vlaneseq
        %v1144 = vshrl.u32 %v1143, 7
        %v1145 = vsub.s32 %v1142, %v1144
        %v1146 = vrot.slane %v1138, %v1145
        %v1148 = vunpack.c.l.s4 1934713408
        %v1149 = vunpack.c.0.s8 %v1148
        %v1150 = vlaneseq
        %v1151 = vshrl.u32 %v1150, 7
        %v1152 = vsub.s32 %v1149, %v1151
        %v1153 = vrot.slane %v1139, %v1152
        %v1154 = vcombine.low %v1098, %v1130
        %v1155 = vcombine.high %v1098, %v1130
        %v1156 = vcombine.low %v1105, %v1137
        %v1157 = vcombine.high %v1105, %v1137
        %v1158 = vcombine.low %v1114, %v1146
        %v1159 = vcombine.high %v1114, %v1146
        %v1160 = vcombine.low %v1121, %v1153
        %v1161 = vcombine.high %v1121, %v1153
        %v1162 = vcombine.low %v756, %v764
        %v1163 = vcombine.high %v756, %v764
        %v1165 = vunpack.c.l.s4 1983009808
        %v1166 = vunpack.c.0.s8 %v1165
        %v1167 = vlaneseq
        %v1168 = vshrl.u32 %v1167, 7
        %v1169 = vsub.s32 %v1166, %v1168
        %v1170 = vrot.slane %v1162, %v1169
        %v1172 = vunpack.c.l.s4 1983009808
        %v1173 = vunpack.c.0.s8 %v1172
        %v1174 = vlaneseq
        %v1175 = vshrl.u32 %v1174, 7
        %v1176 = vsub.s32 %v1173, %v1175
        %v1177 = vrot.slane %v1163, %v1176
        %v1178 = vcombine.low %v760, %v768
        %v1179 = vcombine.high %v760, %v768
        %v1181 = vunpack.c.l.s4 1983009808
        %v1182 = vunpack.c.0.s8 %v1181
        %v1183 = vlaneseq
        %v1184 = vshrl.u32 %v1183, 7
        %v1185 = vsub.s32 %v1182, %v1184
        %v1186 = vrot.slane %v1178, %v1185
        %v1188 = vunpack.c.l.s4 1983009808
        %v1189 = vunpack.c.0.s8 %v1188
        %v1190 = vlaneseq
        %v1191 = vshrl.u32 %v1190, 7
        %v1192 = vsub.s32 %v1189, %v1191
        %v1193 = vrot.slane %v1179, %v1192
        %v1194 = vcombine.low %v776, %v792
        %v1195 = vcombine.high %v776, %v792
        %v1197 = vunpack.c.l.s4 1983009808
        %v1198 = vunpack.c.0.s8 %v1197
        %v1199 = vlaneseq
        %v1200 = vshrl.u32 %v1199, 7
        %v1201 = vsub.s32 %v1198, %v1200
        %v1202 = vrot.slane %v1194, %v1201
        %v1204 = vunpack.c.l.s4 1983009808
        %v1205 = vunpack.c.0.s8 %v1204
        %v1206 = vlaneseq
        %v1207 = vshrl.u32 %v1206, 7
        %v1208 = vsub.s32 %v1205, %v1207
        %v1209 = vrot.slane %v1195, %v1208
        %v1210 = vcombine.low %v784, %v800
        %v1211 = vcombine.high %v784, %v800
        %v1213 = vunpack.c.l.s4 1983009808
        %v1214 = vunpack.c.0.s8 %v1213
        %v1215 = vlaneseq
        %v1216 = vshrl.u32 %v1215, 7
        %v1217 = vsub.s32 %v1214, %v1216
        %v1218 = vrot.slane %v1210, %v1217
        %v1220 = vunpack.c.l.s4 1983009808
        %v1221 = vunpack.c.0.s8 %v1220
        %v1222 = vlaneseq
        %v1223 = vshrl.u32 %v1222, 7
        %v1224 = vsub.s32 %v1221, %v1223
        %v1225 = vrot.slane %v1211, %v1224
        %v1226 = vcombine.low %v1170, %v1186
        %v1227 = vcombine.high %v1170, %v1186
        %v1229 = vunpack.c.l.s4 1934713408
        %v1230 = vunpack.c.0.s8 %v1229
        %v1231 = vlaneseq
        %v1232 = vshrl.u32 %v1231, 7
        %v1233 = vsub.s32 %v1230, %v1232
        %v1234 = vrot.slane %v1226, %v1233
        %v1236 = vunpack.c.l.s4 1934713408
        %v1237 = vunpack.c.0.s8 %v1236
        %v1238 = vlaneseq
        %v1239 = vshrl.u32 %v1238, 7
        %v1240 = vsub.s32 %v1237, %v1239
        %v1241 = vrot.slane %v1227, %v1240
        %v1242 = vcombine.low %v1177, %v1193
        %v1243 = vcombine.high %v1177, %v1193
        %v1245 = vunpack.c.l.s4 1934713408
        %v1246 = vunpack.c.0.s8 %v1245
        %v1247 = vlaneseq
        %v1248 = vshrl.u32 %v1247, 7
        %v1249 = vsub.s32 %v1246, %v1248
        %v1250 = vrot.slane %v1242, %v1249
        %v1252 = vunpack.c.l.s4 1934713408
        %v1253 = vunpack.c.0.s8 %v1252
        %v1254 = vlaneseq
        %v1255 = vshrl.u32 %v1254, 7
        %v1256 = vsub.s32 %v1253, %v1255
        %v1257 = vrot.slane %v1243, %v1256
        %v1258 = vcombine.low %v1202, %v1218
        %v1259 = vcombine.high %v1202, %v1218
        %v1261 = vunpack.c.l.s4 1934713408
        %v1262 = vunpack.c.0.s8 %v1261
        %v1263 = vlaneseq
        %v1264 = vshrl.u32 %v1263, 7
        %v1265 = vsub.s32 %v1262, %v1264
        %v1266 = vrot.slane %v1258, %v1265
        %v1268 = vunpack.c.l.s4 1934713408
        %v1269 = vunpack.c.0.s8 %v1268
        %v1270 = vlaneseq
        %v1271 = vshrl.u32 %v1270, 7
        %v1272 = vsub.s32 %v1269, %v1271
        %v1273 = vrot.slane %v1259, %v1272
        %v1274 = vcombine.low %v1209, %v1225
        %v1275 = vcombine.high %v1209, %v1225
        %v1277 = vunpack.c.l.s4 1934713408
        %v1278 = vunpack.c.0.s8 %v1277
        %v1279 = vlaneseq
        %v1280 = vshrl.u32 %v1279, 7
        %v1281 = vsub.s32 %v1278, %v1280
        %v1282 = vrot.slane %v1274, %v1281
        %v1284 = vunpack.c.l.s4 1934713408
        %v1285 = vunpack.c.0.s8 %v1284
        %v1286 = vlaneseq
        %v1287 = vshrl.u32 %v1286, 7
        %v1288 = vsub.s32 %v1285, %v1287
        %v1289 = vrot.slane %v1275, %v1288
        %v1290 = vcombine.low %v1234, %v1266
        %v1291 = vcombine.high %v1234, %v1266
        %v1292 = vcombine.low %v1241, %v1273
        %v1293 = vcombine.high %v1241, %v1273
        %v1294 = vcombine.low %v1250, %v1282
        %v1295 = vcombine.high %v1250, %v1282
        %v1296 = vcombine.low %v1257, %v1289
        %v1297 = vcombine.high %v1257, %v1289
        %v1298 = vcombine.low %v804, %v820
        %v1299 = vcombine.high %v804, %v820
        %v1301 = vunpack.c.l.s4 1983009808
        %v1302 = vunpack.c.0.s8 %v1301
        %v1303 = vlaneseq
        %v1304 = vshrl.u32 %v1303, 7
        %v1305 = vsub.s32 %v1302, %v1304
        %v1306 = vrot.slane %v1298, %v1305
        %v1308 = vunpack.c.l.s4 1983009808
        %v1309 = vunpack.c.0.s8 %v1308
        %v1310 = vlaneseq
        %v1311 = vshrl.u32 %v1310, 7
        %v1312 = vsub.s32 %v1309, %v1311
        %v1313 = vrot.slane %v1299, %v1312
        %v1314 = vcombine.low %v812, %v828
        %v1315 = vcombine.high %v812, %v828
        %v1317 = vunpack.c.l.s4 1983009808
        %v1318 = vunpack.c.0.s8 %v1317
        %v1319 = vlaneseq
        %v1320 = vshrl.u32 %v1319, 7
        %v1321 = vsub.s32 %v1318, %v1320
        %v1322 = vrot.slane %v1314, %v1321
        %v1324 = vunpack.c.l.s4 1983009808
        %v1325 = vunpack.c.0.s8 %v1324
        %v1326 = vlaneseq
        %v1327 = vshrl.u32 %v1326, 7
        %v1328 = vsub.s32 %v1325, %v1327
        %v1329 = vrot.slane %v1315, %v1328
        %v1330 = vcombine.low %v836, %v852
        %v1331 = vcombine.high %v836, %v852
        %v1333 = vunpack.c.l.s4 1983009808
        %v1334 = vunpack.c.0.s8 %v1333
        %v1335 = vlaneseq
        %v1336 = vshrl.u32 %v1335, 7
        %v1337 = vsub.s32 %v1334, %v1336
        %v1338 = vrot.slane %v1330, %v1337
        %v1340 = vunpack.c.l.s4 1983009808
        %v1341 = vunpack.c.0.s8 %v1340
        %v1342 = vlaneseq
        %v1343 = vshrl.u32 %v1342, 7
        %v1344 = vsub.s32 %v1341, %v1343
        %v1345 = vrot.slane %v1331, %v1344
        %v1346 = vcombine.low %v844, %v860
        %v1347 = vcombine.high %v844, %v860
        %v1349 = vunpack.c.l.s4 1983009808
        %v1350 = vunpack.c.0.s8 %v1349
        %v1351 = vlaneseq
        %v1352 = vshrl.u32 %v1351, 7
        %v1353 = vsub.s32 %v1350, %v1352
        %v1354 = vrot.slane %v1346, %v1353
        %v1356 = vunpack.c.l.s4 1983009808
        %v1357 = vunpack.c.0.s8 %v1356
        %v1358 = vlaneseq
        %v1359 = vshrl.u32 %v1358, 7
        %v1360 = vsub.s32 %v1357, %v1359
        %v1361 = vrot.slane %v1347, %v1360
        %v1362 = vcombine.low %v1306, %v1322
        %v1363 = vcombine.high %v1306, %v1322
        %v1365 = vunpack.c.l.s4 1934713408
        %v1366 = vunpack.c.0.s8 %v1365
        %v1367 = vlaneseq
        %v1368 = vshrl.u32 %v1367, 7
        %v1369 = vsub.s32 %v1366, %v1368
        %v1370 = vrot.slane %v1362, %v1369
        %v1372 = vunpack.c.l.s4 1934713408
        %v1373 = vunpack.c.0.s8 %v1372
        %v1374 = vlaneseq
        %v1375 = vshrl.u32 %v1374, 7
        %v1376 = vsub.s32 %v1373, %v1375
        %v1377 = vrot.slane %v1363, %v1376
        %v1378 = vcombine.low %v1313, %v1329
        %v1379 = vcombine.high %v1313, %v1329
        %v1381 = vunpack.c.l.s4 1934713408
        %v1382 = vunpack.c.0.s8 %v1381
        %v1383 = vlaneseq
        %v1384 = vshrl.u32 %v1383, 7
        %v1385 = vsub.s32 %v1382, %v1384
        %v1386 = vrot.slane %v1378, %v1385
        %v1388 = vunpack.c.l.s4 1934713408
        %v1389 = vunpack.c.0.s8 %v1388
        %v1390 = vlaneseq
        %v1391 = vshrl.u32 %v1390, 7
        %v1392 = vsub.s32 %v1389, %v1391
        %v1393 = vrot.slane %v1379, %v1392
        %v1394 = vcombine.low %v1338, %v1354
        %v1395 = vcombine.high %v1338, %v1354
        %v1397 = vunpack.c.l.s4 1934713408
        %v1398 = vunpack.c.0.s8 %v1397
        %v1399 = vlaneseq
        %v1400 = vshrl.u32 %v1399, 7
        %v1401 = vsub.s32 %v1398, %v1400
        %v1402 = vrot.slane %v1394, %v1401
        %v1404 = vunpack.c.l.s4 1934713408
        %v1405 = vunpack.c.0.s8 %v1404
        %v1406 = vlaneseq
        %v1407 = vshrl.u32 %v1406, 7
        %v1408 = vsub.s32 %v1405, %v1407
        %v1409 = vrot.slane %v1395, %v1408
        %v1410 = vcombine.low %v1345, %v1361
        %v1411 = vcombine.high %v1345, %v1361
        %v1413 = vunpack.c.l.s4 1934713408
        %v1414 = vunpack.c.0.s8 %v1413
        %v1415 = vlaneseq
        %v1416 = vshrl.u32 %v1415, 7
        %v1417 = vsub.s32 %v1414, %v1416
        %v1418 = vrot.slane %v1410, %v1417
        %v1420 = vunpack.c.l.s4 1934713408
        %v1421 = vunpack.c.0.s8 %v1420
        %v1422 = vlaneseq
        %v1423 = vshrl.u32 %v1422, 7
        %v1424 = vsub.s32 %v1421, %v1423
        %v1425 = vrot.slane %v1411, %v1424
        %v1426 = vcombine.low %v1370, %v1402
        %v1427 = vcombine.high %v1370, %v1402
        %v1428 = vcombine.low %v1377, %v1409
        %v1429 = vcombine.high %v1377, %v1409
        %v1430 = vcombine.low %v1386, %v1418
        %v1431 = vcombine.high %v1386, %v1418
        %v1432 = vcombine.low %v1393, %v1425
        %v1433 = vcombine.high %v1393, %v1425
        %v1434 = vcombine.low %v808, %v824
        %v1435 = vcombine.high %v808, %v824
        %v1437 = vunpack.c.l.s4 1983009808
        %v1438 = vunpack.c.0.s8 %v1437
        %v1439 = vlaneseq
        %v1440 = vshrl.u32 %v1439, 7
        %v1441 = vsub.s32 %v1438, %v1440
        %v1442 = vrot.slane %v1434, %v1441
        %v1444 = vunpack.c.l.s4 1983009808
        %v1445 = vunpack.c.0.s8 %v1444
        %v1446 = vlaneseq
        %v1447 = vshrl.u32 %v1446, 7
        %v1448 = vsub.s32 %v1445, %v1447
        %v1449 = vrot.slane %v1435, %v1448
        %v1450 = vcombine.low %v816, %v832
        %v1451 = vcombine.high %v816, %v832
        %v1453 = vunpack.c.l.s4 1983009808
        %v1454 = vunpack.c.0.s8 %v1453
        %v1455 = vlaneseq
        %v1456 = vshrl.u32 %v1455, 7
        %v1457 = vsub.s32 %v1454, %v1456
        %v1458 = vrot.slane %v1450, %v1457
        %v1460 = vunpack.c.l.s4 1983009808
        %v1461 = vunpack.c.0.s8 %v1460
        %v1462 = vlaneseq
        %v1463 = vshrl.u32 %v1462, 7
        %v1464 = vsub.s32 %v1461, %v1463
        %v1465 = vrot.slane %v1451, %v1464
        %v1466 = vcombine.low %v840, %v856
        %v1467 = vcombine.high %v840, %v856
        %v1469 = vunpack.c.l.s4 1983009808
        %v1470 = vunpack.c.0.s8 %v1469
        %v1471 = vlaneseq
        %v1472 = vshrl.u32 %v1471, 7
        %v1473 = vsub.s32 %v1470, %v1472
        %v1474 = vrot.slane %v1466, %v1473
        %v1476 = vunpack.c.l.s4 1983009808
        %v1477 = vunpack.c.0.s8 %v1476
        %v1478 = vlaneseq
        %v1479 = vshrl.u32 %v1478, 7
        %v1480 = vsub.s32 %v1477, %v1479
        %v1481 = vrot.slane %v1467, %v1480
        %v1482 = vcombine.low %v848, %v864
        %v1483 = vcombine.high %v848, %v864
        %v1485 = vunpack.c.l.s4 1983009808
        %v1486 = vunpack.c.0.s8 %v1485
        %v1487 = vlaneseq
        %v1488 = vshrl.u32 %v1487, 7
        %v1489 = vsub.s32 %v1486, %v1488
        %v1490 = vrot.slane %v1482, %v1489
        %v1492 = vunpack.c.l.s4 1983009808
        %v1493 = vunpack.c.0.s8 %v1492
        %v1494 = vlaneseq
        %v1495 = vshrl.u32 %v1494, 7
        %v1496 = vsub.s32 %v1493, %v1495
        %v1497 = vrot.slane %v1483, %v1496
        %v1498 = vcombine.low %v1442, %v1458
        %v1499 = vcombine.high %v1442, %v1458
        %v1501 = vunpack.c.l.s4 1934713408
        %v1502 = vunpack.c.0.s8 %v1501
        %v1503 = vlaneseq
        %v1504 = vshrl.u32 %v1503, 7
        %v1505 = vsub.s32 %v1502, %v1504
        %v1506 = vrot.slane %v1498, %v1505
        %v1508 = vunpack.c.l.s4 1934713408
        %v1509 = vunpack.c.0.s8 %v1508
        %v1510 = vlaneseq
        %v1511 = vshrl.u32 %v1510, 7
        %v1512 = vsub.s32 %v1509, %v1511
        %v1513 = vrot.slane %v1499, %v1512
        %v1514 = vcombine.low %v1449, %v1465
        %v1515 = vcombine.high %v1449, %v1465
        %v1517 = vunpack.c.l.s4 1934713408
        %v1518 = vunpack.c.0.s8 %v1517
        %v1519 = vlaneseq
        %v1520 = vshrl.u32 %v1519, 7
        %v1521 = vsub.s32 %v1518, %v1520
        %v1522 = vrot.slane %v1514, %v1521
        %v1524 = vunpack.c.l.s4 1934713408
        %v1525 = vunpack.c.0.s8 %v1524
        %v1526 = vlaneseq
        %v1527 = vshrl.u32 %v1526, 7
        %v1528 = vsub.s32 %v1525, %v1527
        %v1529 = vrot.slane %v1515, %v1528
        %v1530 = vcombine.low %v1474, %v1490
        %v1531 = vcombine.high %v1474, %v1490
        %v1533 = vunpack.c.l.s4 1934713408
        %v1534 = vunpack.c.0.s8 %v1533
        %v1535 = vlaneseq
        %v1536 = vshrl.u32 %v1535, 7
        %v1537 = vsub.s32 %v1534, %v1536
        %v1538 = vrot.slane %v1530, %v1537
        %v1540 = vunpack.c.l.s4 1934713408
        %v1541 = vunpack.c.0.s8 %v1540
        %v1542 = vlaneseq
        %v1543 = vshrl.u32 %v1542, 7
        %v1544 = vsub.s32 %v1541, %v1543
        %v1545 = vrot.slane %v1531, %v1544
        %v1546 = vcombine.low %v1481, %v1497
        %v1547 = vcombine.high %v1481, %v1497
        %v1549 = vunpack.c.l.s4 1934713408
        %v1550 = vunpack.c.0.s8 %v1549
        %v1551 = vlaneseq
        %v1552 = vshrl.u32 %v1551, 7
        %v1553 = vsub.s32 %v1550, %v1552
        %v1554 = vrot.slane %v1546, %v1553
        %v1556 = vunpack.c.l.s4 1934713408
        %v1557 = vunpack.c.0.s8 %v1556
        %v1558 = vlaneseq
        %v1559 = vshrl.u32 %v1558, 7
        %v1560 = vsub.s32 %v1557, %v1559
        %v1561 = vrot.slane %v1547, %v1560
        %v1562 = vcombine.low %v1506, %v1538
        %v1563 = vcombine.high %v1506, %v1538
        %v1564 = vcombine.low %v1513, %v1545
        %v1565 = vcombine.high %v1513, %v1545
        %v1566 = vcombine.low %v1522, %v1554
        %v1567 = vcombine.high %v1522, %v1554
        %v1568 = vcombine.low %v1529, %v1561
        %v1569 = vcombine.high %v1529, %v1561
        %v1570 = vcombine.low %v868, %v884
        %v1571 = vcombine.high %v868, %v884
        %v1573 = vunpack.c.l.s4 1983009808
        %v1574 = vunpack.c.0.s8 %v1573
        %v1575 = vlaneseq
        %v1576 = vshrl.u32 %v1575, 7
        %v1577 = vsub.s32 %v1574, %v1576
        %v1578 = vrot.slane %v1570, %v1577
        %v1580 = vunpack.c.l.s4 1983009808
        %v1581 = vunpack.c.0.s8 %v1580
        %v1582 = vlaneseq
        %v1583 = vshrl.u32 %v1582, 7
        %v1584 = vsub.s32 %v1581, %v1583
        %v1585 = vrot.slane %v1571, %v1584
        %v1586 = vcombine.low %v876, %v892
        %v1587 = vcombine.high %v876, %v892
        %v1589 = vunpack.c.l.s4 1983009808
        %v1590 = vunpack.c.0.s8 %v1589
        %v1591 = vlaneseq
        %v1592 = vshrl.u32 %v1591, 7
        %v1593 = vsub.s32 %v1590, %v1592
        %v1594 = vrot.slane %v1586, %v1593
        %v1596 = vunpack.c.l.s4 1983009808
        %v1597 = vunpack.c.0.s8 %v1596
        %v1598 = vlaneseq
        %v1599 = vshrl.u32 %v1598, 7
        %v1600 = vsub.s32 %v1597, %v1599
        %v1601 = vrot.slane %v1587, %v1600
        %v1602 = vcombine.low %v900, %v916
        %v1603 = vcombine.high %v900, %v916
        %v1605 = vunpack.c.l.s4 1983009808
        %v1606 = vunpack.c.0.s8 %v1605
        %v1607 = vlaneseq
        %v1608 = vshrl.u32 %v1607, 7
        %v1609 = vsub.s32 %v1606, %v1608
        %v1610 = vrot.slane %v1602, %v1609
        %v1612 = vunpack.c.l.s4 1983009808
        %v1613 = vunpack.c.0.s8 %v1612
        %v1614 = vlaneseq
        %v1615 = vshrl.u32 %v1614, 7
        %v1616 = vsub.s32 %v1613, %v1615
        %v1617 = vrot.slane %v1603, %v1616
        %v1618 = vcombine.low %v908, %v924
        %v1619 = vcombine.high %v908, %v924
        %v1621 = vunpack.c.l.s4 1983009808
        %v1622 = vunpack.c.0.s8 %v1621
        %v1623 = vlaneseq
        %v1624 = vshrl.u32 %v1623, 7
        %v1625 = vsub.s32 %v1622, %v1624
        %v1626 = vrot.slane %v1618, %v1625
        %v1628 = vunpack.c.l.s4 1983009808
        %v1629 = vunpack.c.0.s8 %v1628
        %v1630 = vlaneseq
        %v1631 = vshrl.u32 %v1630, 7
        %v1632 = vsub.s32 %v1629, %v1631
        %v1633 = vrot.slane %v1619, %v1632
        %v1634 = vcombine.low %v1578, %v1594
        %v1635 = vcombine.high %v1578, %v1594
        %v1637 = vunpack.c.l.s4 1934713408
        %v1638 = vunpack.c.0.s8 %v1637
        %v1639 = vlaneseq
        %v1640 = vshrl.u32 %v1639, 7
        %v1641 = vsub.s32 %v1638, %v1640
        %v1642 = vrot.slane %v1634, %v1641
        %v1644 = vunpack.c.l.s4 1934713408
        %v1645 = vunpack.c.0.s8 %v1644
        %v1646 = vlaneseq
        %v1647 = vshrl.u32 %v1646, 7
        %v1648 = vsub.s32 %v1645, %v1647
        %v1649 = vrot.slane %v1635, %v1648
        %v1650 = vcombine.low %v1585, %v1601
        %v1651 = vcombine.high %v1585, %v1601
        %v1653 = vunpack.c.l.s4 1934713408
        %v1654 = vunpack.c.0.s8 %v1653
        %v1655 = vlaneseq
        %v1656 = vshrl.u32 %v1655, 7
        %v1657 = vsub.s32 %v1654, %v1656
        %v1658 = vrot.slane %v1650, %v1657
        %v1660 = vunpack.c.l.s4 1934713408
        %v1661 = vunpack.c.0.s8 %v1660
        %v1662 = vlaneseq
        %v1663 = vshrl.u32 %v1662, 7
        %v1664 = vsub.s32 %v1661, %v1663
        %v1665 = vrot.slane %v1651, %v1664
        %v1666 = vcombine.low %v1610, %v1626
        %v1667 = vcombine.high %v1610, %v1626
        %v1669 = vunpack.c.l.s4 1934713408
        %v1670 = vunpack.c.0.s8 %v1669
        %v1671 = vlaneseq
        %v1672 = vshrl.u32 %v1671, 7
        %v1673 = vsub.s32 %v1670, %v1672
        %v1674 = vrot.slane %v1666, %v1673
        %v1676 = vunpack.c.l.s4 1934713408
        %v1677 = vunpack.c.0.s8 %v1676
        %v1678 = vlaneseq
        %v1679 = vshrl.u32 %v1678, 7
        %v1680 = vsub.s32 %v1677, %v1679
        %v1681 = vrot.slane %v1667, %v1680
        %v1682 = vcombine.low %v1617, %v1633
        %v1683 = vcombine.high %v1617, %v1633
        %v1685 = vunpack.c.l.s4 1934713408
        %v1686 = vunpack.c.0.s8 %v1685
        %v1687 = vlaneseq
        %v1688 = vshrl.u32 %v1687, 7
        %v1689 = vsub.s32 %v1686, %v1688
        %v1690 = vrot.slane %v1682, %v1689
        %v1692 = vunpack.c.l.s4 1934713408
        %v1693 = vunpack.c.0.s8 %v1692
        %v1694 = vlaneseq
        %v1695 = vshrl.u32 %v1694, 7
        %v1696 = vsub.s32 %v1693, %v1695
        %v1697 = vrot.slane %v1683, %v1696
        %v1698 = vcombine.low %v1642, %v1674
        %v1699 = vcombine.high %v1642, %v1674
        %v1700 = vcombine.low %v1649, %v1681
        %v1701 = vcombine.high %v1649, %v1681
        %v1702 = vcombine.low %v1658, %v1690
        %v1703 = vcombine.high %v1658, %v1690
        %v1704 = vcombine.low %v1665, %v1697
        %v1705 = vcombine.high %v1665, %v1697
        %v1706 = vcombine.low %v872, %v888
        %v1707 = vcombine.high %v872, %v888
        %v1709 = vunpack.c.l.s4 1983009808
        %v1710 = vunpack.c.0.s8 %v1709
        %v1711 = vlaneseq
        %v1712 = vshrl.u32 %v1711, 7
        %v1713 = vsub.s32 %v1710, %v1712
        %v1714 = vrot.slane %v1706, %v1713
        %v1716 = vunpack.c.l.s4 1983009808
        %v1717 = vunpack.c.0.s8 %v1716
        %v1718 = vlaneseq
        %v1719 = vshrl.u32 %v1718, 7
        %v1720 = vsub.s32 %v1717, %v1719
        %v1721 = vrot.slane %v1707, %v1720
        %v1722 = vcombine.low %v880, %v896
        %v1723 = vcombine.high %v880, %v896
        %v1725 = vunpack.c.l.s4 1983009808
        %v1726 = vunpack.c.0.s8 %v1725
        %v1727 = vlaneseq
        %v1728 = vshrl.u32 %v1727, 7
        %v1729 = vsub.s32 %v1726, %v1728
        %v1730 = vrot.slane %v1722, %v1729
        %v1732 = vunpack.c.l.s4 1983009808
        %v1733 = vunpack.c.0.s8 %v1732
        %v1734 = vlaneseq
        %v1735 = vshrl.u32 %v1734, 7
        %v1736 = vsub.s32 %v1733, %v1735
        %v1737 = vrot.slane %v1723, %v1736
        %v1738 = vcombine.low %v904, %v920
        %v1739 = vcombine.high %v904, %v920
        %v1741 = vunpack.c.l.s4 1983009808
        %v1742 = vunpack.c.0.s8 %v1741
        %v1743 = vlaneseq
        %v1744 = vshrl.u32 %v1743, 7
        %v1745 = vsub.s32 %v1742, %v1744
        %v1746 = vrot.slane %v1738, %v1745
        %v1748 = vunpack.c.l.s4 1983009808
        %v1749 = vunpack.c.0.s8 %v1748
        %v1750 = vlaneseq
        %v1751 = vshrl.u32 %v1750, 7
        %v1752 = vsub.s32 %v1749, %v1751
        %v1753 = vrot.slane %v1739, %v1752
        %v1754 = vcombine.low %v912, %v928
        %v1755 = vcombine.high %v912, %v928
        %v1757 = vunpack.c.l.s4 1983009808
        %v1758 = vunpack.c.0.s8 %v1757
        %v1759 = vlaneseq
        %v1760 = vshrl.u32 %v1759, 7
        %v1761 = vsub.s32 %v1758, %v1760
        %v1762 = vrot.slane %v1754, %v1761
        %v1764 = vunpack.c.l.s4 1983009808
        %v1765 = vunpack.c.0.s8 %v1764
        %v1766 = vlaneseq
        %v1767 = vshrl.u32 %v1766, 7
        %v1768 = vsub.s32 %v1765, %v1767
        %v1769 = vrot.slane %v1755, %v1768
        %v1770 = vcombine.low %v1714, %v1730
        %v1771 = vcombine.high %v1714, %v1730
        %v1773 = vunpack.c.l.s4 1934713408
        %v1774 = vunpack.c.0.s8 %v1773
        %v1775 = vlaneseq
        %v1776 = vshrl.u32 %v1775, 7
        %v1777 = vsub.s32 %v1774, %v1776
        %v1778 = vrot.slane %v1770, %v1777
        %v1780 = vunpack.c.l.s4 1934713408
        %v1781 = vunpack.c.0.s8 %v1780
        %v1782 = vlaneseq
        %v1783 = vshrl.u32 %v1782, 7
        %v1784 = vsub.s32 %v1781, %v1783
        %v1785 = vrot.slane %v1771, %v1784
        %v1786 = vcombine.low %v1721, %v1737
        %v1787 = vcombine.high %v1721, %v1737
        %v1789 = vunpack.c.l.s4 1934713408
        %v1790 = vunpack.c.0.s8 %v1789
        %v1791 = vlaneseq
        %v1792 = vshrl.u32 %v1791, 7
        %v1793 = vsub.s32 %v1790, %v1792
        %v1794 = vrot.slane %v1786, %v1793
        %v1796 = vunpack.c.l.s4 1934713408
        %v1797 = vunpack.c.0.s8 %v1796
        %v1798 = vlaneseq
        %v1799 = vshrl.u32 %v1798, 7
        %v1800 = vsub.s32 %v1797, %v1799
        %v1801 = vrot.slane %v1787, %v1800
        %v1802 = vcombine.low %v1746, %v1762
        %v1803 = vcombine.high %v1746, %v1762
        %v1805 = vunpack.c.l.s4 1934713408
        %v1806 = vunpack.c.0.s8 %v1805
        %v1807 = vlaneseq
        %v1808 = vshrl.u32 %v1807, 7
        %v1809 = vsub.s32 %v1806, %v1808
        %v1810 = vrot.slane %v1802, %v1809
        %v1812 = vunpack.c.l.s4 1934713408
        %v1813 = vunpack.c.0.s8 %v1812
        %v1814 = vlaneseq
        %v1815 = vshrl.u32 %v1814, 7
        %v1816 = vsub.s32 %v1813, %v1815
        %v1817 = vrot.slane %v1803, %v1816
        %v1818 = vcombine.low %v1753, %v1769
        %v1819 = vcombine.high %v1753, %v1769
        %v1821 = vunpack.c.l.s4 1934713408
        %v1822 = vunpack.c.0.s8 %v1821
        %v1823 = vlaneseq
        %v1824 = vshrl.u32 %v1823, 7
        %v1825 = vsub.s32 %v1822, %v1824
        %v1826 = vrot.slane %v1818, %v1825
        %v1828 = vunpack.c.l.s4 1934713408
        %v1829 = vunpack.c.0.s8 %v1828
        %v1830 = vlaneseq
        %v1831 = vshrl.u32 %v1830, 7
        %v1832 = vsub.s32 %v1829, %v1831
        %v1833 = vrot.slane %v1819, %v1832
        %v1834 = vcombine.low %v1778, %v1810
        %v1835 = vcombine.high %v1778, %v1810
        %v1836 = vcombine.low %v1785, %v1817
        %v1837 = vcombine.high %v1785, %v1817
        %v1838 = vcombine.low %v1794, %v1826
        %v1839 = vcombine.high %v1794, %v1826
        %v1840 = vcombine.low %v1801, %v1833
        %v1841 = vcombine.high %v1801, %v1833
        %v1842 = vcombine.low %v932, %v948
        %v1843 = vcombine.high %v932, %v948
        %v1845 = vunpack.c.l.s4 1983009808
        %v1846 = vunpack.c.0.s8 %v1845
        %v1847 = vlaneseq
        %v1848 = vshrl.u32 %v1847, 7
        %v1849 = vsub.s32 %v1846, %v1848
        %v1850 = vrot.slane %v1842, %v1849
        %v1852 = vunpack.c.l.s4 1983009808
        %v1853 = vunpack.c.0.s8 %v1852
        %v1854 = vlaneseq
        %v1855 = vshrl.u32 %v1854, 7
        %v1856 = vsub.s32 %v1853, %v1855
        %v1857 = vrot.slane %v1843, %v1856
        %v1858 = vcombine.low %v940, %v956
        %v1859 = vcombine.high %v940, %v956
        %v1861 = vunpack.c.l.s4 1983009808
        %v1862 = vunpack.c.0.s8 %v1861
        %v1863 = vlaneseq
        %v1864 = vshrl.u32 %v1863, 7
        %v1865 = vsub.s32 %v1862, %v1864
        %v1866 = vrot.slane %v1858, %v1865
        %v1868 = vunpack.c.l.s4 1983009808
        %v1869 = vunpack.c.0.s8 %v1868
        %v1870 = vlaneseq
        %v1871 = vshrl.u32 %v1870, 7
        %v1872 = vsub.s32 %v1869, %v1871
        %v1873 = vrot.slane %v1859, %v1872
        %v1874 = vcombine.low %v964, %v980
        %v1875 = vcombine.high %v964, %v980
        %v1877 = vunpack.c.l.s4 1983009808
        %v1878 = vunpack.c.0.s8 %v1877
        %v1879 = vlaneseq
        %v1880 = vshrl.u32 %v1879, 7
        %v1881 = vsub.s32 %v1878, %v1880
        %v1882 = vrot.slane %v1874, %v1881
        %v1884 = vunpack.c.l.s4 1983009808
        %v1885 = vunpack.c.0.s8 %v1884
        %v1886 = vlaneseq
        %v1887 = vshrl.u32 %v1886, 7
        %v1888 = vsub.s32 %v1885, %v1887
        %v1889 = vrot.slane %v1875, %v1888
        %v1890 = vcombine.low %v972, %v988
        %v1891 = vcombine.high %v972, %v988
        %v1893 = vunpack.c.l.s4 1983009808
        %v1894 = vunpack.c.0.s8 %v1893
        %v1895 = vlaneseq
        %v1896 = vshrl.u32 %v1895, 7
        %v1897 = vsub.s32 %v1894, %v1896
        %v1898 = vrot.slane %v1890, %v1897
        %v1900 = vunpack.c.l.s4 1983009808
        %v1901 = vunpack.c.0.s8 %v1900
        %v1902 = vlaneseq
        %v1903 = vshrl.u32 %v1902, 7
        %v1904 = vsub.s32 %v1901, %v1903
        %v1905 = vrot.slane %v1891, %v1904
        %v1906 = vcombine.low %v1850, %v1866
        %v1907 = vcombine.high %v1850, %v1866
        %v1909 = vunpack.c.l.s4 1934713408
        %v1910 = vunpack.c.0.s8 %v1909
        %v1911 = vlaneseq
        %v1912 = vshrl.u32 %v1911, 7
        %v1913 = vsub.s32 %v1910, %v1912
        %v1914 = vrot.slane %v1906, %v1913
        %v1916 = vunpack.c.l.s4 1934713408
        %v1917 = vunpack.c.0.s8 %v1916
        %v1918 = vlaneseq
        %v1919 = vshrl.u32 %v1918, 7
        %v1920 = vsub.s32 %v1917, %v1919
        %v1921 = vrot.slane %v1907, %v1920
        %v1922 = vcombine.low %v1857, %v1873
        %v1923 = vcombine.high %v1857, %v1873
        %v1925 = vunpack.c.l.s4 1934713408
        %v1926 = vunpack.c.0.s8 %v1925
        %v1927 = vlaneseq
        %v1928 = vshrl.u32 %v1927, 7
        %v1929 = vsub.s32 %v1926, %v1928
        %v1930 = vrot.slane %v1922, %v1929
        %v1932 = vunpack.c.l.s4 1934713408
        %v1933 = vunpack.c.0.s8 %v1932
        %v1934 = vlaneseq
        %v1935 = vshrl.u32 %v1934, 7
        %v1936 = vsub.s32 %v1933, %v1935
        %v1937 = vrot.slane %v1923, %v1936
        %v1938 = vcombine.low %v1882, %v1898
        %v1939 = vcombine.high %v1882, %v1898
        %v1941 = vunpack.c.l.s4 1934713408
        %v1942 = vunpack.c.0.s8 %v1941
        %v1943 = vlaneseq
        %v1944 = vshrl.u32 %v1943, 7
        %v1945 = vsub.s32 %v1942, %v1944
        %v1946 = vrot.slane %v1938, %v1945
        %v1948 = vunpack.c.l.s4 1934713408
        %v1949 = vunpack.c.0.s8 %v1948
        %v1950 = vlaneseq
        %v1951 = vshrl.u32 %v1950, 7
        %v1952 = vsub.s32 %v1949, %v1951
        %v1953 = vrot.slane %v1939, %v1952
        %v1954 = vcombine.low %v1889, %v1905
        %v1955 = vcombine.high %v1889, %v1905
        %v1957 = vunpack.c.l.s4 1934713408
        %v1958 = vunpack.c.0.s8 %v1957
        %v1959 = vlaneseq
        %v1960 = vshrl.u32 %v1959, 7
        %v1961 = vsub.s32 %v1958, %v1960
        %v1962 = vrot.slane %v1954, %v1961
        %v1964 = vunpack.c.l.s4 1934713408
        %v1965 = vunpack.c.0.s8 %v1964
        %v1966 = vlaneseq
        %v1967 = vshrl.u32 %v1966, 7
        %v1968 = vsub.s32 %v1965, %v1967
        %v1969 = vrot.slane %v1955, %v1968
        %v1970 = vcombine.low %v1914, %v1946
        %v1971 = vcombine.high %v1914, %v1946
        %v1972 = vcombine.low %v1921, %v1953
        %v1973 = vcombine.high %v1921, %v1953
        %v1974 = vcombine.low %v1930, %v1962
        %v1975 = vcombine.high %v1930, %v1962
        %v1976 = vcombine.low %v1937, %v1969
        %v1977 = vcombine.high %v1937, %v1969
        %v1978 = vcombine.low %v936, %v952
        %v1979 = vcombine.high %v936, %v952
        %v1981 = vunpack.c.l.s4 1983009808
        %v1982 = vunpack.c.0.s8 %v1981
        %v1983 = vlaneseq
        %v1984 = vshrl.u32 %v1983, 7
        %v1985 = vsub.s32 %v1982, %v1984
        %v1986 = vrot.slane %v1978, %v1985
        %v1988 = vunpack.c.l.s4 1983009808
        %v1989 = vunpack.c.0.s8 %v1988
        %v1990 = vlaneseq
        %v1991 = vshrl.u32 %v1990, 7
        %v1992 = vsub.s32 %v1989, %v1991
        %v1993 = vrot.slane %v1979, %v1992
        %v1994 = vcombine.low %v944, %v960
        %v1995 = vcombine.high %v944, %v960
        %v1997 = vunpack.c.l.s4 1983009808
        %v1998 = vunpack.c.0.s8 %v1997
        %v1999 = vlaneseq
        %v2000 = vshrl.u32 %v1999, 7
        %v2001 = vsub.s32 %v1998, %v2000
        %v2002 = vrot.slane %v1994, %v2001
        %v2004 = vunpack.c.l.s4 1983009808
        %v2005 = vunpack.c.0.s8 %v2004
        %v2006 = vlaneseq
        %v2007 = vshrl.u32 %v2006, 7
        %v2008 = vsub.s32 %v2005, %v2007
        %v2009 = vrot.slane %v1995, %v2008
        %v2010 = vcombine.low %v968, %v984
        %v2011 = vcombine.high %v968, %v984
        %v2013 = vunpack.c.l.s4 1983009808
        %v2014 = vunpack.c.0.s8 %v2013
        %v2015 = vlaneseq
        %v2016 = vshrl.u32 %v2015, 7
        %v2017 = vsub.s32 %v2014, %v2016
        %v2018 = vrot.slane %v2010, %v2017
        %v2020 = vunpack.c.l.s4 1983009808
        %v2021 = vunpack.c.0.s8 %v2020
        %v2022 = vlaneseq
        %v2023 = vshrl.u32 %v2022, 7
        %v2024 = vsub.s32 %v2021, %v2023
        %v2025 = vrot.slane %v2011, %v2024
        %v2026 = vcombine.low %v976, %v992
        %v2027 = vcombine.high %v976, %v992
        %v2029 = vunpack.c.l.s4 1983009808
        %v2030 = vunpack.c.0.s8 %v2029
        %v2031 = vlaneseq
        %v2032 = vshrl.u32 %v2031, 7
        %v2033 = vsub.s32 %v2030, %v2032
        %v2034 = vrot.slane %v2026, %v2033
        %v2036 = vunpack.c.l.s4 1983009808
        %v2037 = vunpack.c.0.s8 %v2036
        %v2038 = vlaneseq
        %v2039 = vshrl.u32 %v2038, 7
        %v2040 = vsub.s32 %v2037, %v2039
        %v2041 = vrot.slane %v2027, %v2040
        %v2042 = vcombine.low %v1986, %v2002
        %v2043 = vcombine.high %v1986, %v2002
        %v2045 = vunpack.c.l.s4 1934713408
        %v2046 = vunpack.c.0.s8 %v2045
        %v2047 = vlaneseq
        %v2048 = vshrl.u32 %v2047, 7
        %v2049 = vsub.s32 %v2046, %v2048
        %v2050 = vrot.slane %v2042, %v2049
        %v2052 = vunpack.c.l.s4 1934713408
        %v2053 = vunpack.c.0.s8 %v2052
        %v2054 = vlaneseq
        %v2055 = vshrl.u32 %v2054, 7
        %v2056 = vsub.s32 %v2053, %v2055
        %v2057 = vrot.slane %v2043, %v2056
        %v2058 = vcombine.low %v1993, %v2009
        %v2059 = vcombine.high %v1993, %v2009
        %v2061 = vunpack.c.l.s4 1934713408
        %v2062 = vunpack.c.0.s8 %v2061
        %v2063 = vlaneseq
        %v2064 = vshrl.u32 %v2063, 7
        %v2065 = vsub.s32 %v2062, %v2064
        %v2066 = vrot.slane %v2058, %v2065
        %v2068 = vunpack.c.l.s4 1934713408
        %v2069 = vunpack.c.0.s8 %v2068
        %v2070 = vlaneseq
        %v2071 = vshrl.u32 %v2070, 7
        %v2072 = vsub.s32 %v2069, %v2071
        %v2073 = vrot.slane %v2059, %v2072
        %v2074 = vcombine.low %v2018, %v2034
        %v2075 = vcombine.high %v2018, %v2034
        %v2077 = vunpack.c.l.s4 1934713408
        %v2078 = vunpack.c.0.s8 %v2077
        %v2079 = vlaneseq
        %v2080 = vshrl.u32 %v2079, 7
        %v2081 = vsub.s32 %v2078, %v2080
        %v2082 = vrot.slane %v2074, %v2081
        %v2084 = vunpack.c.l.s4 1934713408
        %v2085 = vunpack.c.0.s8 %v2084
        %v2086 = vlaneseq
        %v2087 = vshrl.u32 %v2086, 7
        %v2088 = vsub.s32 %v2085, %v2087
        %v2089 = vrot.slane %v2075, %v2088
        %v2090 = vcombine.low %v2025, %v2041
        %v2091 = vcombine.high %v2025, %v2041
        %v2093 = vunpack.c.l.s4 1934713408
        %v2094 = vunpack.c.0.s8 %v2093
        %v2095 = vlaneseq
        %v2096 = vshrl.u32 %v2095, 7
        %v2097 = vsub.s32 %v2094, %v2096
        %v2098 = vrot.slane %v2090, %v2097
        %v2100 = vunpack.c.l.s4 1934713408
        %v2101 = vunpack.c.0.s8 %v2100
        %v2102 = vlaneseq
        %v2103 = vshrl.u32 %v2102, 7
        %v2104 = vsub.s32 %v2101, %v2103
        %v2105 = vrot.slane %v2091, %v2104
        %v2106 = vcombine.low %v2050, %v2082
        %v2107 = vcombine.high %v2050, %v2082
        %v2108 = vcombine.low %v2057, %v2089
        %v2109 = vcombine.high %v2057, %v2089
        %v2110 = vcombine.low %v2066, %v2098
        %v2111 = vcombine.high %v2066, %v2098
        %v2112 = vcombine.low %v2073, %v2105
        %v2113 = vcombine.high %v2073, %v2105
        %v2114 = vcombine.low %v996, %v1012
        %v2115 = vcombine.high %v996, %v1012
        %v2117 = vunpack.c.l.s4 1983009808
        %v2118 = vunpack.c.0.s8 %v2117
        %v2119 = vlaneseq
        %v2120 = vshrl.u32 %v2119, 7
        %v2121 = vsub.s32 %v2118, %v2120
        %v2122 = vrot.slane %v2114, %v2121
        %v2124 = vunpack.c.l.s4 1983009808
        %v2125 = vunpack.c.0.s8 %v2124
        %v2126 = vlaneseq
        %v2127 = vshrl.u32 %v2126, 7
        %v2128 = vsub.s32 %v2125, %v2127
        %v2129 = vrot.slane %v2115, %v2128
        %v2130 = vcombine.low %v1004, %v1020
        %v2131 = vcombine.high %v1004, %v1020
        %v2133 = vunpack.c.l.s4 1983009808
        %v2134 = vunpack.c.0.s8 %v2133
        %v2135 = vlaneseq
        %v2136 = vshrl.u32 %v2135, 7
        %v2137 = vsub.s32 %v2134, %v2136
        %v2138 = vrot.slane %v2130, %v2137
        %v2140 = vunpack.c.l.s4 1983009808
        %v2141 = vunpack.c.0.s8 %v2140
        %v2142 = vlaneseq
        %v2143 = vshrl.u32 %v2142, 7
        %v2144 = vsub.s32 %v2141, %v2143
        %v2145 = vrot.slane %v2131, %v2144
        %v2146 = vcombine.low %v2122, %v2138
        %v2147 = vcombine.high %v2122, %v2138
        %v2149 = vunpack.c.l.s4 1934713408
        %v2150 = vunpack.c.0.s8 %v2149
        %v2151 = vlaneseq
        %v2152 = vshrl.u32 %v2151, 7
        %v2153 = vsub.s32 %v2150, %v2152
        %v2154 = vrot.slane %v2146, %v2153
        %v2156 = vunpack.c.l.s4 1934713408
        %v2157 = vunpack.c.0.s8 %v2156
        %v2158 = vlaneseq
        %v2159 = vshrl.u32 %v2158, 7
        %v2160 = vsub.s32 %v2157, %v2159
        %v2161 = vrot.slane %v2147, %v2160
        %v2162 = vcombine.low %v2129, %v2145
        %v2163 = vcombine.high %v2129, %v2145
        %v2165 = vunpack.c.l.s4 1934713408
        %v2166 = vunpack.c.0.s8 %v2165
        %v2167 = vlaneseq
        %v2168 = vshrl.u32 %v2167, 7
        %v2169 = vsub.s32 %v2166, %v2168
        %v2170 = vrot.slane %v2162, %v2169
        %v2172 = vunpack.c.l.s4 1934713408
        %v2173 = vunpack.c.0.s8 %v2172
        %v2174 = vlaneseq
        %v2175 = vshrl.u32 %v2174, 7
        %v2176 = vsub.s32 %v2173, %v2175
        %v2177 = vrot.slane %v2163, %v2176
        %v2178 = vcombine.high %v2154, 0
        %v2179 = vcombine.high %v2161, 0
        %v2180 = vcombine.high %v2170, 0
        %v2181 = vcombine.high %v2177, 0
        %v2182 = vcombine.low %v1000, %v1016
        %v2183 = vcombine.high %v1000, %v1016
        %v2185 = vunpack.c.l.s4 1983009808
        %v2186 = vunpack.c.0.s8 %v2185
        %v2187 = vlaneseq
        %v2188 = vshrl.u32 %v2187, 7
        %v2189 = vsub.s32 %v2186, %v2188
        %v2190 = vrot.slane %v2182, %v2189
        %v2192 = vunpack.c.l.s4 1983009808
        %v2193 = vunpack.c.0.s8 %v2192
        %v2194 = vlaneseq
        %v2195 = vshrl.u32 %v2194, 7
        %v2196 = vsub.s32 %v2193, %v2195
        %v2197 = vrot.slane %v2183, %v2196
        %v2198 = vcombine.low %v1008, %v1024
        %v2199 = vcombine.high %v1008, %v1024
        %v2201 = vunpack.c.l.s4 1983009808
        %v2202 = vunpack.c.0.s8 %v2201
        %v2203 = vlaneseq
        %v2204 = vshrl.u32 %v2203, 7
        %v2205 = vsub.s32 %v2202, %v2204
        %v2206 = vrot.slane %v2198, %v2205
        %v2208 = vunpack.c.l.s4 1983009808
        %v2209 = vunpack.c.0.s8 %v2208
        %v2210 = vlaneseq
        %v2211 = vshrl.u32 %v2210, 7
        %v2212 = vsub.s32 %v2209, %v2211
        %v2213 = vrot.slane %v2199, %v2212
        %v2214 = vcombine.low %v2190, %v2206
        %v2215 = vcombine.high %v2190, %v2206
        %v2217 = vunpack.c.l.s4 1934713408
        %v2218 = vunpack.c.0.s8 %v2217
        %v2219 = vlaneseq
        %v2220 = vshrl.u32 %v2219, 7
        %v2221 = vsub.s32 %v2218, %v2220
        %v2222 = vrot.slane %v2214, %v2221
        %v2224 = vunpack.c.l.s4 1934713408
        %v2225 = vunpack.c.0.s8 %v2224
        %v2226 = vlaneseq
        %v2227 = vshrl.u32 %v2226, 7
        %v2228 = vsub.s32 %v2225, %v2227
        %v2229 = vrot.slane %v2215, %v2228
        %v2230 = vcombine.low %v2197, %v2213
        %v2231 = vcombine.high %v2197, %v2213
        %v2233 = vunpack.c.l.s4 1934713408
        %v2234 = vunpack.c.0.s8 %v2233
        %v2235 = vlaneseq
        %v2236 = vshrl.u32 %v2235, 7
        %v2237 = vsub.s32 %v2234, %v2236
        %v2238 = vrot.slane %v2230, %v2237
        %v2240 = vunpack.c.l.s4 1934713408
        %v2241 = vunpack.c.0.s8 %v2240
        %v2242 = vlaneseq
        %v2243 = vshrl.u32 %v2242, 7
        %v2244 = vsub.s32 %v2241, %v2243
        %v2245 = vrot.slane %v2231, %v2244
        %v2246 = vcombine.high %v2222, 0
        %v2247 = vcombine.high %v2229, 0
        %v2248 = vcombine.high %v2238, 0
        %v2249 = vcombine.high %v2245, 0
        %2255 = vrot.lane.b32.xlu0 %v1290, 16
        %v2256 = vpop.permute.xlu0 %2255
        %2257 = vrot.lane.b32.xlu0 %v1562, 16
        %v2258 = vpop.permute.xlu0 %2257
        %2259 = vrot.lane.b32.xlu0 %v1834, 16
        %v2260 = vpop.permute.xlu0 %2259
        %2261 = vrot.lane.b32.xlu0 %v2106, 16
        %v2262 = vpop.permute.xlu0 %2261
        %2263 = vrot.lane.b32.xlu0 %v2222, 16
        %v2264 = vpop.permute.xlu0 %2263
        %2270 = vrot.lane.b32.xlu0 %v1155, 32
        %v2271 = vpop.permute.xlu0 %2270
        %2272 = vrot.lane.b32.xlu0 %v1427, 32
        %v2273 = vpop.permute.xlu0 %2272
        %2274 = vrot.lane.b32.xlu0 %v1699, 32
        %v2275 = vpop.permute.xlu0 %2274
        %2276 = vrot.lane.b32.xlu0 %v1971, 32
        %v2277 = vpop.permute.xlu0 %2276
        %2278 = vrot.lane.b32.xlu0 %v2178, 32
        %v2279 = vpop.permute.xlu0 %2278
        %2285 = vrot.lane.b32.xlu0 %v1291, 48
        %v2286 = vpop.permute.xlu0 %2285
        %2287 = vrot.lane.b32.xlu0 %v1563, 48
        %v2288 = vpop.permute.xlu0 %2287
        %2289 = vrot.lane.b32.xlu0 %v1835, 48
        %v2290 = vpop.permute.xlu0 %2289
        %2291 = vrot.lane.b32.xlu0 %v2107, 48
        %v2292 = vpop.permute.xlu0 %2291
        %2293 = vrot.lane.b32.xlu0 %v2246, 48
        %v2294 = vpop.permute.xlu0 %2293
        %2300 = vrot.lane.b32.xlu0 %v1156, 64
        %v2301 = vpop.permute.xlu0 %2300
        %2302 = vrot.lane.b32.xlu0 %v1428, 64
        %v2303 = vpop.permute.xlu0 %2302
        %2304 = vrot.lane.b32.xlu0 %v1700, 64
        %v2305 = vpop.permute.xlu0 %2304
        %2306 = vrot.lane.b32.xlu0 %v1972, 64
        %v2307 = vpop.permute.xlu0 %2306
        %2308 = vrot.lane.b32.xlu0 %v2161, 64
        %v2309 = vpop.permute.xlu0 %2308
        %2315 = vrot.lane.b32.xlu0 %v1292, 80
        %v2316 = vpop.permute.xlu0 %2315
        %2317 = vrot.lane.b32.xlu0 %v1564, 80
        %v2318 = vpop.permute.xlu0 %2317
        %2319 = vrot.lane.b32.xlu0 %v1836, 80
        %v2320 = vpop.permute.xlu0 %2319
        %2321 = vrot.lane.b32.xlu0 %v2108, 80
        %v2322 = vpop.permute.xlu0 %2321
        %2323 = vrot.lane.b32.xlu0 %v2229, 80
        %v2324 = vpop.permute.xlu0 %2323
        %2330 = vrot.lane.b32.xlu0 %v1157, 96
        %v2331 = vpop.permute.xlu0 %2330
        %2332 = vrot.lane.b32.xlu0 %v1429, 96
        %v2333 = vpop.permute.xlu0 %2332
        %2334 = vrot.lane.b32.xlu0 %v1701, 96
        %v2335 = vpop.permute.xlu0 %2334
        %2336 = vrot.lane.b32.xlu0 %v1973, 96
        %v2337 = vpop.permute.xlu0 %2336
        %2338 = vrot.lane.b32.xlu0 %v2179, 96
        %v2339 = vpop.permute.xlu0 %2338
        %2345 = vrot.lane.b32.xlu0 %v1293, 112
        %v2346 = vpop.permute.xlu0 %2345
        %2347 = vrot.lane.b32.xlu0 %v1565, 112
        %v2348 = vpop.permute.xlu0 %2347
        %2349 = vrot.lane.b32.xlu0 %v1837, 112
        %v2350 = vpop.permute.xlu0 %2349
        %2351 = vrot.lane.b32.xlu0 %v2109, 112
        %v2352 = vpop.permute.xlu0 %2351
        %2353 = vrot.lane.b32.xlu0 %v2247, 112
        %v2354 = vpop.permute.xlu0 %2353
        %2360 = vrot.lane.b32.xlu0 %v1294, 16
        %v2361 = vpop.permute.xlu0 %2360
        %2362 = vrot.lane.b32.xlu0 %v1566, 16
        %v2363 = vpop.permute.xlu0 %2362
        %2364 = vrot.lane.b32.xlu0 %v1838, 16
        %v2365 = vpop.permute.xlu0 %2364
        %2366 = vrot.lane.b32.xlu0 %v2110, 16
        %v2367 = vpop.permute.xlu0 %2366
        %2368 = vrot.lane.b32.xlu0 %v2238, 16
        %v2369 = vpop.permute.xlu0 %2368
        %2375 = vrot.lane.b32.xlu0 %v1159, 32
        %v2376 = vpop.permute.xlu0 %2375
        %2377 = vrot.lane.b32.xlu0 %v1431, 32
        %v2378 = vpop.permute.xlu0 %2377
        %2379 = vrot.lane.b32.xlu0 %v1703, 32
        %v2380 = vpop.permute.xlu0 %2379
        %2381 = vrot.lane.b32.xlu0 %v1975, 32
        %v2382 = vpop.permute.xlu0 %2381
        %2383 = vrot.lane.b32.xlu0 %v2180, 32
        %v2384 = vpop.permute.xlu0 %2383
        %2390 = vrot.lane.b32.xlu0 %v1295, 48
        %v2391 = vpop.permute.xlu0 %2390
        %2392 = vrot.lane.b32.xlu0 %v1567, 48
        %v2393 = vpop.permute.xlu0 %2392
        %2394 = vrot.lane.b32.xlu0 %v1839, 48
        %v2395 = vpop.permute.xlu0 %2394
        %2396 = vrot.lane.b32.xlu0 %v2111, 48
        %v2397 = vpop.permute.xlu0 %2396
        %2398 = vrot.lane.b32.xlu0 %v2248, 48
        %v2399 = vpop.permute.xlu0 %2398
        %2405 = vrot.lane.b32.xlu0 %v1160, 64
        %v2406 = vpop.permute.xlu0 %2405
        %2407 = vrot.lane.b32.xlu0 %v1432, 64
        %v2408 = vpop.permute.xlu0 %2407
        %2409 = vrot.lane.b32.xlu0 %v1704, 64
        %v2410 = vpop.permute.xlu0 %2409
        %2411 = vrot.lane.b32.xlu0 %v1976, 64
        %v2412 = vpop.permute.xlu0 %2411
        %2413 = vrot.lane.b32.xlu0 %v2177, 64
        %v2414 = vpop.permute.xlu0 %2413
        %2420 = vrot.lane.b32.xlu0 %v1296, 80
        %v2421 = vpop.permute.xlu0 %2420
        %2422 = vrot.lane.b32.xlu0 %v1568, 80
        %v2423 = vpop.permute.xlu0 %2422
        %2424 = vrot.lane.b32.xlu0 %v1840, 80
        %v2425 = vpop.permute.xlu0 %2424
        %2426 = vrot.lane.b32.xlu0 %v2112, 80
        %v2427 = vpop.permute.xlu0 %2426
        %2428 = vrot.lane.b32.xlu0 %v2245, 80
        %v2429 = vpop.permute.xlu0 %2428
        %2435 = vrot.lane.b32.xlu0 %v1161, 96
        %v2436 = vpop.permute.xlu0 %2435
        %2437 = vrot.lane.b32.xlu0 %v1433, 96
        %v2438 = vpop.permute.xlu0 %2437
        %2439 = vrot.lane.b32.xlu0 %v1705, 96
        %v2440 = vpop.permute.xlu0 %2439
        %2441 = vrot.lane.b32.xlu0 %v1977, 96
        %v2442 = vpop.permute.xlu0 %2441
        %2443 = vrot.lane.b32.xlu0 %v2181, 96
        %v2444 = vpop.permute.xlu0 %2443
        %2450 = vrot.lane.b32.xlu0 %v1297, 112
        %v2451 = vpop.permute.xlu0 %2450
        %2452 = vrot.lane.b32.xlu0 %v1569, 112
        %v2453 = vpop.permute.xlu0 %2452
        %2454 = vrot.lane.b32.xlu0 %v1841, 112
        %v2455 = vpop.permute.xlu0 %2454
        %2456 = vrot.lane.b32.xlu0 %v2113, 112
        %v2457 = vpop.permute.xlu0 %2456
        %2458 = vrot.lane.b32.xlu0 %v2249, 112
        %v2459 = vpop.permute.xlu0 %2458
        %vm2460 = vcmask 130048
        %v2463 = vsel %vm2460, %v1154, %v2256
        %v2466 = vsel %vm2460, %v1426, %v2258
        %v2469 = vsel %vm2460, %v1698, %v2260
        %v2472 = vsel %vm2460, %v1970, %v2262
        %v2475 = vsel %vm2460, %v2154, %v2264
        %vm2476 = vcmask 261120
        %v2478 = vsel %vm2476, %v2463, %v2271
        %v2480 = vsel %vm2476, %v2466, %v2273
        %v2482 = vsel %vm2476, %v2469, %v2275
        %v2484 = vsel %vm2476, %v2472, %v2277
        %v2486 = vsel %vm2476, %v2475, %v2279
        %vm2487 = vcmask 392192
        %v2489 = vsel %vm2487, %v2478, %v2286
        %v2491 = vsel %vm2487, %v2480, %v2288
        %v2493 = vsel %vm2487, %v2482, %v2290
        %v2495 = vsel %vm2487, %v2484, %v2292
        %v2497 = vsel %vm2487, %v2486, %v2294
        %vm2498 = vcmask 523264
        %v2500 = vsel %vm2498, %v2489, %v2301
        %v2502 = vsel %vm2498, %v2491, %v2303
        %v2504 = vsel %vm2498, %v2493, %v2305
        %v2506 = vsel %vm2498, %v2495, %v2307
        %v2508 = vsel %vm2498, %v2497, %v2309
        %vm2509 = vcmask 654336
        %v2511 = vsel %vm2509, %v2500, %v2316
        %v2513 = vsel %vm2509, %v2502, %v2318
        %v2515 = vsel %vm2509, %v2504, %v2320
        %v2517 = vsel %vm2509, %v2506, %v2322
        %v2519 = vsel %vm2509, %v2508, %v2324
        %vm2520 = vcmask 785408
        %v2522 = vsel %vm2520, %v2511, %v2331
        %v2524 = vsel %vm2520, %v2513, %v2333
        %v2526 = vsel %vm2520, %v2515, %v2335
        %v2528 = vsel %vm2520, %v2517, %v2337
        %v2530 = vsel %vm2520, %v2519, %v2339
        %vm2531 = vcmask 916480
        %v2533 = vsel %vm2531, %v2522, %v2346
        %v2536 = vsel %vm2531, %v2524, %v2348
        %v2539 = vsel %vm2531, %v2526, %v2350
        %v2542 = vsel %vm2531, %v2528, %v2352
        %v2545 = vsel %vm2531, %v2530, %v2354
        %v2548 = vsel %vm2460, %v1158, %v2361
        %v2551 = vsel %vm2460, %v1430, %v2363
        %v2554 = vsel %vm2460, %v1702, %v2365
        %v2557 = vsel %vm2460, %v1974, %v2367
        %v2560 = vsel %vm2460, %v2170, %v2369
        %v2562 = vsel %vm2476, %v2548, %v2376
        %v2564 = vsel %vm2476, %v2551, %v2378
        %v2566 = vsel %vm2476, %v2554, %v2380
        %v2568 = vsel %vm2476, %v2557, %v2382
        %v2570 = vsel %vm2476, %v2560, %v2384
        %v2572 = vsel %vm2487, %v2562, %v2391
        %v2574 = vsel %vm2487, %v2564, %v2393
        %v2576 = vsel %vm2487, %v2566, %v2395
        %v2578 = vsel %vm2487, %v2568, %v2397
        %v2580 = vsel %vm2487, %v2570, %v2399
        %v2582 = vsel %vm2498, %v2572, %v2406
        %v2584 = vsel %vm2498, %v2574, %v2408
        %v2586 = vsel %vm2498, %v2576, %v2410
        %v2588 = vsel %vm2498, %v2578, %v2412
        %v2590 = vsel %vm2498, %v2580, %v2414
        %v2592 = vsel %vm2509, %v2582, %v2421
        %v2594 = vsel %vm2509, %v2584, %v2423
        %v2596 = vsel %vm2509, %v2586, %v2425
        %v2598 = vsel %vm2509, %v2588, %v2427
        %v2600 = vsel %vm2509, %v2590, %v2429
        %v2602 = vsel %vm2520, %v2592, %v2436
        %v2604 = vsel %vm2520, %v2594, %v2438
        %v2606 = vsel %vm2520, %v2596, %v2440
        %v2608 = vsel %vm2520, %v2598, %v2442
        %v2610 = vsel %vm2520, %v2600, %v2444
        %v2612 = vsel %vm2531, %v2602, %v2451
        %v2615 = vsel %vm2531, %v2604, %v2453
        %v2618 = vsel %vm2531, %v2606, %v2455
        %v2621 = vsel %vm2531, %v2608, %v2457
        %v2624 = vsel %vm2531, %v2610, %v2459
        %v2625 = vld [vmem:[%s2] sm:$0xf]
        %v2626 = vpack.c.bf16 %v2625, %v2625
        %v2627 = vld [vmem:[%s3] sm:$0xf]
        %2629 = vset.pattern.permute.xlu0 0
        %2630 = vperm.xlu0 %2629, %v2627
        %v2631 = vpop.permute.xlu0 %2630
        %vm2633 = vcmask 588800
        %v2635 = vsel %vm2633, %v2626, 0
        %vm2637 = vcmask 1043456
        %v2638 = vsel %vm2637, %v2545, 0
        %v2640 = vsel %vm2637, %v2624, 0
        %2642 = vmatprep.subr.bf16.mxu0 0
        %2643 = vmatpush1.bf16.msra.mxu0 0
        %2644 = vmatprep.subr.bf16.mxu0 0
        %2645 = vmatpush1.bf16.msra.mxu0 0
        %2646 = vmatprep.subr.bf16.mxu0 0
        %2647 = vmatpush1.bf16.msra.mxu0 0
        %2648 = vmatprep.subr.bf16.mxu0 %v2640
        %2649 = vmatpush1.bf16.msra.mxu0 %v2638
        %2650 = vmatprep.subr.bf16.mxu0 %v2621
        %2651 = vmatpush1.bf16.msra.mxu0 %v2542
        %2652 = vmatprep.subr.bf16.mxu0 %v2618
        %2653 = vmatpush1.bf16.msra.mxu0 %v2539
        %2654 = vmatprep.subr.bf16.mxu0 %v2615
        %2655 = vmatpush1.bf16.msra.mxu0 %v2536
        %2656 = vmatprep.subr.bf16.mxu0 %v2612
        %2657 = vmatpush1.bf16.msra.mxu0 %v2533
        %2658 = vmatprep.subr.bf16.mxu0 0
        %2659 = vmatpush2.bf16.msra.mxu0 0
        %2660 = vmatprep.subr.bf16.mxu0 0
        %2661 = vmatpush2.bf16.msra.mxu0 0
        %2662 = vmatprep.subr.bf16.mxu0 0
        %2663 = vmatpush2.bf16.msra.mxu0 0
        %2664 = vmatprep.subr.bf16.mxu0 0
        %2665 = vmatpush2.bf16.msra.mxu0 0
        %2666 = vmatprep.subr.bf16.mxu0 0
        %2667 = vmatpush2.bf16.msra.mxu0 0
        %2668 = vmatprep.subr.bf16.mxu0 0
        %2669 = vmatpush2.bf16.msra.mxu0 0
        %2670 = vmatprep.subr.bf16.mxu0 0
        %2671 = vmatpush2.bf16.msra.mxu0 0
        %2672 = vmatprep.subr.bf16.mxu0 0
        %2673 = vmatpush2.bf16.msra.mxu0 0
        %2674 = vmatprep.mubr.bf16.mxu0 0
        %2675 = vmatmul.mubr.bf16.gmra.mxu0 %v2635
        %v2676 = vpop.f32.mrf.mxu0
        %v2677 = vadd.f32 %v2631, %v2676
        %v2678 = vpop.f32.mrf.mxu0
        %v2679 = vadd.f32 %v2631, %v2678
        %v2680 = vpop.f32.mrf.mxu0
        %v2681 = vpop.f32.mrf.mxu0
        %2682 = vdwg.mxu0
        %v2683 = vmax.f32 %v2677, 0.0
        %v2684 = vmax.f32 %v2679, 0.0
        %v2687 = vcombine.low %v2683, %v2684
        %2689 = vst [vmem:[%s461] sm:$0xff] %v2687
        %s2690 = smul.u32 2, %s20
        %p2691 = scmp.lt.s32.totalorder %s19, 1
        %s2692 = scalar_select %p2691, %s19, 1
        %p2693 = scmp.lt.s32.totalorder %s2690, 1
        %s2694 = scalar_select %p2693, %s2690, 1
        %s2695 = smul.addr %s2692, 2
        %s2696 = sadd.s32 %s2694, %s2695
        %s2697 = smul.addr %s2696, 4
        %s2698 = scalar_lea.vmem %s4, %s2697
        // Predicated region
        $region119: #{pixel_attention_forward.9} parent=109 // pred_check
          %p2699 = pneg %p147
        $region120: #{pixel_attention_forward.9} parent=109 // pred_check_branch
          %2701 = sbr.rel (%p2699) target = $region122
        $region121: #{pixel_attention_forward.9} parent=109 // pred_region
          %s2702 = smul.u32 2, %s20
        $region122: #{pixel_attention_forward.9} parent=109 // pred_fallthru
          _
      $region110: #{pixel_attention_forward.9} parent=5 // pred_fallthru
        _
      %p2703 = scmp.le.s32.totalorder 2, %s10
      // Predicated region
      $region123: #{pixel_attention_forward.9} parent=5 // pred_check
        %p2704 = pneg %p2703
      $region124: #{pixel_attention_forward.9} parent=5 // pred_check_branch
        %2706 = sbr.rel (%p2704) target = $region126
      $region125: #{pixel_attention_forward.9} parent=5 // pred_region
        %s2707 = ssub.s32 %s10, 2
        // Predicated region
        $region127: #{pixel_attention_forward.9} parent=125 // pred_check
          %p2708 = pneg %p153
        $region128: #{pixel_attention_forward.9} parent=125 // pred_check_branch
          %2710 = sbr.rel (%p2708) target = $region130
        $region129: #{pixel_attention_forward.9} parent=125 // pred_region
          %s2711 = smul.u32 2, %s22
          %p2712 = scmp.lt.s32.totalorder %s21, 1
          %s2713 = scalar_select %p2712, %s21, 1
          %p2714 = scmp.lt.s32.totalorder %s2711, 1
          %s2715 = scalar_select %p2714, %s2711, 1
          %s2716 = smul.addr %s2713, 2
          %s2717 = sadd.s32 %s2715, %s2716
          %s2718 = smul.addr %s2717, 4
          %s2719 = scalar_lea.vmem %s4, %s2718
        $region130: #{pixel_attention_forward.9} parent=125 // pred_fallthru
          _
      $region126: #{pixel_attention_forward.9} parent=5 // pred_fallthru
        _
    $region6: #{pixel_attention_forward.9} parent=1 // loop_footer
      %s14 = sadd.s32 1, %s10
    $region7: #{pixel_attention_forward.9} parent=1 // loop_footer_branch
      %9 = sbr.rel target = $region3
    $region8: #{pixel_attention_forward.9} parent=1 // loop_exit
      _

</llo_original>
